<compile_context>
chip_gen: v7x
topology: tpu7x:2x2x1
jax: 0.10.0
libtpu: 0.0.40
codegen_flags: <defaults>
</compile_context>

<pallas_src>
import jax
import jax.numpy as jnp
from jax import lax
from jax.experimental import pallas as pl
from jax.experimental.pallas import tpu as pltpu

EPS = 1e-5
MXU_DTYPE = jnp.float32  # set to jnp.bfloat16 for 2x MXU throughput / half DMA bytes
_TAPS = tuple((dh, dw) for dh in range(3) for dw in range(3))


# ----------------------------------------------------------------------------
# Kernel bodies
# ----------------------------------------------------------------------------
def _conv_taps(xpad_ref, w_ref, acc_ref, H, W, Cin):
    """3x3 conv on a zero-padded (H+2, W+2, Cin) VMEM tile.

    Nine per-tap MXU matmuls: (H*W, Cin) @ (Cin, Cout), accumulated in f32 in a
    VMEM scratch accumulator (bounded vreg pressure).
    """
    acc_ref[...] = jnp.zeros_like(acc_ref)
    for t, (dh, dw) in enumerate(_TAPS):
        patch = xpad_ref[dh:dh + H, dw:dw + W, :].reshape(H * W, Cin)
        w_tap = w_ref[t * Cin:(t + 1) * Cin, :]
        acc_ref[...] += jnp.dot(patch.astype(MXU_DTYPE), w_tap.astype(MXU_DTYPE),
                                preferred_element_type=jnp.float32)


def _channel_stats(acc):
    """Per-channel sum and sum-of-squares of a (rows, C) tile -> (2, C)."""
    s = jnp.sum(acc, axis=0, keepdims=True)
    ss = jnp.sum(acc * acc, axis=0, keepdims=True)
    return jnp.concatenate([s, ss], axis=0)


def _conv1_kernel(x_ref, w_ref, y_ref, stats_ref, xpad_ref, acc_ref):
    """conv1 (no bias: exact no-op under train-mode BN) + fused BN reduction."""
    _, H, W, Cin = x_ref.shape
    Cout = y_ref.shape[-1]
    # Zero-pad the input tile into VMEM scratch (no padded HBM copy).
    xpad_ref[...] = jnp.zeros_like(xpad_ref)
    xpad_ref[1:H + 1, 1:W + 1, :] = x_ref[0]
    _conv_taps(xpad_ref, w_ref, acc_ref, H, W, Cin)
    acc = acc_ref[...]
    y_ref[0] = acc.reshape(H, W, Cout)
    stats_ref[0] = _channel_stats(acc)


def _bn_relu_conv2_kernel(y1_ref, scale_ref, shift_ref, w_ref,
                          y2_ref, stats_ref, apad_ref, acc_ref):
    """Fused BN1+ReLU (input path) -> conv2 -> fused BN reduction."""
    _, H, W, C1 = y1_ref.shape
    C2 = y2_ref.shape[-1]
    # BN1 + ReLU on the loaded tile (per-channel scale/shift pre-folded).
    a = jnp.maximum(y1_ref[0] * scale_ref[...] + shift_ref[...], 0.0)
    apad_ref[...] = jnp.zeros_like(apad_ref)
    apad_ref[1:H + 1, 1:W + 1, :] = a
    _conv_taps(apad_ref, w_ref, acc_ref, H, W, C1)
    acc = acc_ref[...]
    y2_ref[0] = acc.reshape(H, W, C2)
    stats_ref[0] = _channel_stats(acc)


def _bn_relu_kernel(x_ref, scale_ref, shift_ref, o_ref):
    """Lane-dense BN + ReLU on a (1, H, W*C) block (unmasked vector stores)."""
    o_ref[...] = jnp.maximum(x_ref[...] * scale_ref[...] + shift_ref[...], 0.0)


# ----------------------------------------------------------------------------
# pallas_call wrappers
# ----------------------------------------------------------------------------
def _compiler_params():
    return pltpu.CompilerParams(
        dimension_semantics=("parallel",),      # v7x: both TensorCores split the grid
        vmem_limit_bytes=32 * 1024 * 1024,      # headroom for v7x's 64 MiB VMEM
    )


def _conv1(x_nhwc, w_flat):
    N, H, W, Cin = x_nhwc.shape
    Cout = w_flat.shape[1]
    return pl.pallas_call(
        _conv1_kernel,
        grid=(N,),
        in_specs=[
            pl.BlockSpec((1, H, W, Cin), lambda n: (n, 0, 0, 0)),
            pl.BlockSpec((9 * Cin, Cout), lambda n: (0, 0)),       # resident weights
        ],
        out_specs=(
            pl.BlockSpec((1, H, W, Cout), lambda n: (n, 0, 0, 0)),
            pl.BlockSpec((1, 2, Cout), lambda n: (n, 0, 0)),
        ),
        out_shape=(
            jax.ShapeDtypeStruct((N, H, W, Cout), jnp.float32),
            jax.ShapeDtypeStruct((N, 2, Cout), jnp.float32),
        ),
        scratch_shapes=[
            pltpu.VMEM((H + 2, W + 2, Cin), jnp.float32),   # zero-padded input tile
            pltpu.VMEM((H * W, Cout), jnp.float32),         # f32 accumulator
        ],
        compiler_params=_compiler_params(),
    )(x_nhwc, w_flat)


def _bn_relu_conv2(y1, scale1, shift1, w_flat):
    N, H, W, C1 = y1.shape
    C2 = w_flat.shape[1]
    return pl.pallas_call(
        _bn_relu_conv2_kernel,
        grid=(N,),
        in_specs=[
            pl.BlockSpec((1, H, W, C1), lambda n: (n, 0, 0, 0)),
            pl.BlockSpec((1, C1), lambda n: (0, 0)),
            pl.BlockSpec((1, C1), lambda n: (0, 0)),
            pl.BlockSpec((9 * C1, C2), lambda n: (0, 0)),
        ],
        out_specs=(
            pl.BlockSpec((1, H, W, C2), lambda n: (n, 0, 0, 0)),
            pl.BlockSpec((1, 2, C2), lambda n: (n, 0, 0)),
        ),
        out_shape=(
            jax.ShapeDtypeStruct((N, H, W, C2), jnp.float32),
            jax.ShapeDtypeStruct((N, 2, C2), jnp.float32),
        ),
        scratch_shapes=[
            pltpu.VMEM((H + 2, W + 2, C1), jnp.float32),
            pltpu.VMEM((H * W, C2), jnp.float32),
        ],
        compiler_params=_compiler_params(),
    )(y1, scale1.reshape(1, C1), shift1.reshape(1, C1), w_flat)


def _bn_relu_lane_dense(y, scale, shift):
    """Final BN+ReLU on a lane-dense (N, H, W*C) view of the NHWC tensor."""
    N, H, W, C = y.shape
    WC = W * C
    y_flat = y.reshape(N, H, WC)                      # free row-major view
    scale_t = jnp.tile(scale, W).reshape(1, WC)       # per-channel params, lane-tiled
    shift_t = jnp.tile(shift, W).reshape(1, WC)
    out = pl.pallas_call(
        _bn_relu_kernel,
        grid=(N,),
        in_specs=[
            pl.BlockSpec((1, H, WC), lambda n: (n, 0, 0)),
            pl.BlockSpec((1, WC), lambda n: (0, 0)),
            pl.BlockSpec((1, WC), lambda n: (0, 0)),
        ],
        out_specs=pl.BlockSpec((1, H, WC), lambda n: (n, 0, 0)),
        out_shape=jax.ShapeDtypeStruct((N, H, WC), jnp.float32),
        compiler_params=_compiler_params(),
    )(y_flat, scale_t, shift_t)
    return out.reshape(N, H, W, C)


def _affine_from_stats(stats, gamma, beta, count):
    """Fold (sum, sumsq) accumulated per image into BN scale/shift (train mode)."""
    s = jnp.sum(stats[:, 0, :], axis=0)
    ss = jnp.sum(stats[:, 1, :], axis=0)
    mean = s / count
    var = jnp.maximum(ss / count - mean * mean, 0.0)    # biased variance
    scale = gamma / jnp.sqrt(var + EPS)
    shift = beta - mean * scale
    return scale, shift


@jax.jit
def double_conv(x_nchw, params):
    """Pallas implementation of DoubleConv.forward.  Input/output are NCHW."""
    x = jnp.transpose(x_nchw, (0, 2, 3, 1)).astype(jnp.float32)      # -> NHWC
    N, H, W, Cin = x.shape
    C1 = params["w1"].shape[-1]
    C2 = params["w2"].shape[-1]
    w1 = params["w1"].reshape(9 * Cin, C1).astype(jnp.float32)
    w2 = params["w2"].reshape(9 * C1, C2).astype(jnp.float32)
    count = N * H * W

    # conv biases (params["b1"]/["b2"]) are intentionally unused: train-mode BN
    # mean-subtraction cancels them exactly.
    y1, stats1 = _conv1(x, w1)
    scale1, shift1 = _affine_from_stats(stats1, params["gamma1"], params["beta1"], count)
    y2, stats2 = _bn_relu_conv2(y1, scale1, shift1, w2)
    scale2, shift2 = _affine_from_stats(stats2, params["gamma2"], params["beta2"], count)
    out = _bn_relu_lane_dense(y2, scale2, shift2)
    return jnp.transpose(out, (0, 3, 1, 2))                           # -> NCHW


# ----------------------------------------------------------------------------
# Pure-JAX reference (faithful PyTorch semantics, including conv bias)
# ----------------------------------------------------------------------------
def _ref_double_conv(x_nchw, params):
    def conv(x, w, b):
        y = lax.conv_general_dilated(
            x, w, window_strides=(1, 1), padding="SAME",
            dimension_numbers=("NHWC", "HWIO", "NHWC"))
        return y + b

    def bn_relu(x, g, bta):
        m = jnp.mean(x, axis=(0, 1, 2))
        v = jnp.var(x, axis=(0, 1, 2))
        return jnp.maximum((x - m) / jnp.sqrt(v + EPS) * g + bta, 0.0)

    x = jnp.transpose(x_nchw, (0, 2, 3, 1)).astype(jnp.float32)
    h = bn_relu(conv(x, params["w1"], params["b1"]), params["gamma1"], params["beta1"])
    h = bn_relu(conv(h, params["w2"], params["b2"]), params["gamma2"], params["beta2"])
    return jnp.transpose(h, (0, 3, 1, 2))


# ----------------------------------------------------------------------------
# Main
# ----------------------------------------------------------------------------
if __name__ == "__main__":
    key = jax.random.PRNGKey(0)
    k_x, k_w1, k_b1, k_w2, k_b2, k_g1, k_be1, k_g2, k_be2 = jax.random.split(key, 9)

    N, C_in, C_out, Hs, Ws = 2, 4, 8, 16, 16

    params = {
        # conv weights in HWIO layout (3,3,Cin,Cout)
        "w1": 0.1 * jax.random.normal(k_w1, (3, 3, C_in, C_out), jnp.float32),
        "b1": 0.1 * jax.random.normal(k_b1, (C_out,), jnp.float32),
        "w2": 0.1 * jax.random.normal(k_w2, (3, 3, C_out, C_out), jnp.float32),
        "b2": 0.1 * jax.random.normal(k_b2, (C_out,), jnp.float32),
        # batchnorm affine params
        "gamma1": 1.0 + 0.05 * jax.random.normal(k_g1, (C_out,), jnp.float32),
        "beta1": 0.05 * jax.random.normal(k_be1, (C_out,), jnp.float32),
        "gamma2": 1.0 + 0.05 * jax.random.normal(k_g2, (C_out,), jnp.float32),
        "beta2": 0.05 * jax.random.normal(k_be2, (C_out,), jnp.float32),
    }

    x = jax.random.normal(k_x, (N, C_in, Hs, Ws), jnp.float32)

    out = jax.block_until_ready(double_conv(x, params))
    ref = jax.block_until_ready(_ref_double_conv(x, params))

    assert out.shape == (N, C_out, Hs, Ws), out.shape
    assert jnp.allclose(out, ref, rtol=1e-3, atol=1e-3), \
        float(jnp.max(jnp.abs(out - ref)))

    print("KERNEL_OK")
</pallas_src>

<mosaic_0001>
module attributes {stable_mosaic.version = 11 : i64} {
  func.func @_conv1_kernel(%arg0: i32, %arg1: memref<1x16x16x4xf32, #tpu.memory_space<vmem>>, %arg2: memref<36x8xf32, #tpu.memory_space<vmem>>, %arg3: memref<1x16x16x8xf32, #tpu.memory_space<vmem>>, %arg4: memref<1x2x8xf32, #tpu.memory_space<vmem>>, %arg5: memref<18x18x4xf32, #tpu.memory_space<vmem>>, %arg6: memref<256x8xf32, #tpu.memory_space<vmem>>) attributes {dimension_semantics = [#tpu.dimension_semantics<parallel>], iteration_bounds = array<i64: 2>, scalar_prefetch = 0 : i64, scratch_operands = 2 : i64, tpu.core_type = #tpu.core_type<tc>, window_params = [{transform_indices = @transform_0, window_bounds = array<i64: 1, 16, 16, 4>}, {pipeline_mode = #tpu.pipeline_mode<synchronous>, transform_indices = @transform_1, window_bounds = array<i64: 36, 8>}, {transform_indices = @transform_2, window_bounds = array<i64: 1, 16, 16, 8>}, {transform_indices = @transform_3, window_bounds = array<i64: 1, 2, 8>}]} {
    %cst = arith.constant 0.000000e+00 : f32
    %0 = vector.broadcast %cst : f32 to vector<18x18x4xf32>
    %c0 = arith.constant 0 : index
    %c0_0 = arith.constant 0 : index
    %c0_1 = arith.constant 0 : index
    %1 = vector.load %arg5[%c0, %c0_0, %c0_1] : memref<18x18x4xf32, #tpu.memory_space<vmem>>, vector<18x18x4xf32>
    tpu.vector_store %arg5[%c0, %c0_0, %c0_1], %0 {strides = array<i32>} : memref<18x18x4xf32, #tpu.memory_space<vmem>>, vector<18x18x4xf32>,
    %c0_2 = arith.constant 0 : index
    %c0_3 = arith.constant 0 : index
    %c0_4 = arith.constant 0 : index
    %c0_5 = arith.constant 0 : index
    %2 = vector.load %arg1[%c0_2, %c0_3, %c0_4, %c0_5] : memref<1x16x16x4xf32, #tpu.memory_space<vmem>>, vector<1x16x16x4xf32>
    %3 = vector.shape_cast %2 : vector<1x16x16x4xf32> to vector<16x16x4xf32>
    %c1 = arith.constant 1 : index
    %c1_6 = arith.constant 1 : index
    %c0_7 = arith.constant 0 : index
    %4 = vector.load %arg5[%c1, %c1_6, %c0_7] : memref<18x18x4xf32, #tpu.memory_space<vmem>>, vector<16x16x4xf32>
    tpu.vector_store %arg5[%c1, %c1_6, %c0_7], %3 {strides = array<i32>} : memref<18x18x4xf32, #tpu.memory_space<vmem>>, vector<16x16x4xf32>,
    %cst_8 = arith.constant 0.000000e+00 : f32
    %5 = vector.broadcast %cst_8 : f32 to vector<256x8xf32>
    %c0_9 = arith.constant 0 : index
    %c0_10 = arith.constant 0 : index
    %6 = vector.load %arg6[%c0_9, %c0_10] : memref<256x8xf32, #tpu.memory_space<vmem>>, vector<256x8xf32>
    tpu.vector_store %arg6[%c0_9, %c0_10], %5 {strides = array<i32>} : memref<256x8xf32, #tpu.memory_space<vmem>>, vector<256x8xf32>,
    %c0_11 = arith.constant 0 : index
    %c0_12 = arith.constant 0 : index
    %c0_13 = arith.constant 0 : index
    %7 = vector.load %arg5[%c0_11, %c0_12, %c0_13] : memref<18x18x4xf32, #tpu.memory_space<vmem>>, vector<16x16x4xf32>
    %8 = vector.shape_cast %7 : vector<16x16x4xf32> to vector<256x4xf32>
    %c0_14 = arith.constant 0 : index
    %c0_15 = arith.constant 0 : index
    %9 = vector.load %arg2[%c0_14, %c0_15] : memref<36x8xf32, #tpu.memory_space<vmem>>, vector<4x8xf32>
    %c0_16 = arith.constant 0 : index
    %c0_17 = arith.constant 0 : index
    %10 = vector.load %arg6[%c0_16, %c0_17] : memref<256x8xf32, #tpu.memory_space<vmem>>, vector<256x8xf32>
    %cst_18 = arith.constant dense<0.000000e+00> : vector<256x8xf32>
    %11 = tpu.matmul %8, %9, %cst_18 {dimension_numbers = #tpu.dot_dimension_numbers<[1], [0], [0], [1], [0, 0, 1, 1], [], []>} : vector<256x4xf32>, vector<4x8xf32>, vector<256x8xf32> -> vector<256x8xf32>
    %12 = arith.addf %10, %11 : vector<256x8xf32>
    %c0_19 = arith.constant 0 : index
    %c0_20 = arith.constant 0 : index
    %13 = vector.load %arg6[%c0_19, %c0_20] : memref<256x8xf32, #tpu.memory_space<vmem>>, vector<256x8xf32>
    tpu.vector_store %arg6[%c0_19, %c0_20], %12 {strides = array<i32>} : memref<256x8xf32, #tpu.memory_space<vmem>>, vector<256x8xf32>,
    %c0_21 = arith.constant 0 : index
    %c1_22 = arith.constant 1 : index
    %c0_23 = arith.constant 0 : index
    %14 = vector.load %arg5[%c0_21, %c1_22, %c0_23] : memref<18x18x4xf32, #tpu.memory_space<vmem>>, vector<16x16x4xf32>
    %15 = vector.shape_cast %14 : vector<16x16x4xf32> to vector<256x4xf32>
    %c4 = arith.constant 4 : index
    %c0_24 = arith.constant 0 : index
    %16 = vector.load %arg2[%c4, %c0_24] : memref<36x8xf32, #tpu.memory_space<vmem>>, vector<4x8xf32>
    %c0_25 = arith.constant 0 : index
    %c0_26 = arith.constant 0 : index
    %17 = vector.load %arg6[%c0_25, %c0_26] : memref<256x8xf32, #tpu.memory_space<vmem>>, vector<256x8xf32>
    %cst_27 = arith.constant dense<0.000000e+00> : vector<256x8xf32>
    %18 = tpu.matmul %15, %16, %cst_27 {dimension_numbers = #tpu.dot_dimension_numbers<[1], [0], [0], [1], [0, 0, 1, 1], [], []>} : vector<256x4xf32>, vector<4x8xf32>, vector<256x8xf32> -> vector<256x8xf32>
    %19 = arith.addf %17, %18 : vector<256x8xf32>
    %c0_28 = arith.constant 0 : index
    %c0_29 = arith.constant 0 : index
    %20 = vector.load %arg6[%c0_28, %c0_29] : memref<256x8xf32, #tpu.memory_space<vmem>>, vector<256x8xf32>
    tpu.vector_store %arg6[%c0_28, %c0_29], %19 {strides = array<i32>} : memref<256x8xf32, #tpu.memory_space<vmem>>, vector<256x8xf32>,
    %c0_30 = arith.constant 0 : index
    %c2 = arith.constant 2 : index
    %c0_31 = arith.constant 0 : index
    %21 = vector.load %arg5[%c0_30, %c2, %c0_31] : memref<18x18x4xf32, #tpu.memory_space<vmem>>, vector<16x16x4xf32>
    %22 = vector.shape_cast %21 : vector<16x16x4xf32> to vector<256x4xf32>
    %c8 = arith.constant 8 : index
    %c0_32 = arith.constant 0 : index
    %23 = vector.load %arg2[%c8, %c0_32] : memref<36x8xf32, #tpu.memory_space<vmem>>, vector<4x8xf32>
    %c0_33 = arith.constant 0 : index
    %c0_34 = arith.constant 0 : index
    %24 = vector.load %arg6[%c0_33, %c0_34] : memref<256x8xf32, #tpu.memory_space<vmem>>, vector<256x8xf32>
    %cst_35 = arith.constant dense<0.000000e+00> : vector<256x8xf32>
    %25 = tpu.matmul %22, %23, %cst_35 {dimension_numbers = #tpu.dot_dimension_numbers<[1], [0], [0], [1], [0, 0, 1, 1], [], []>} : vector<256x4xf32>, vector<4x8xf32>, vector<256x8xf32> -> vector<256x8xf32>
    %26 = arith.addf %24, %25 : vector<256x8xf32>
    %c0_36 = arith.constant 0 : index
    %c0_37 = arith.constant 0 : index
    %27 = vector.load %arg6[%c0_36, %c0_37] : memref<256x8xf32, #tpu.memory_space<vmem>>, vector<256x8xf32>
    tpu.vector_store %arg6[%c0_36, %c0_37], %26 {strides = array<i32>} : memref<256x8xf32, #tpu.memory_space<vmem>>, vector<256x8xf32>,
    %c1_38 = arith.constant 1 : index
    %c0_39 = arith.constant 0 : index
    %c0_40 = arith.constant 0 : index
    %28 = vector.load %arg5[%c1_38, %c0_39, %c0_40] : memref<18x18x4xf32, #tpu.memory_space<vmem>>, vector<16x16x4xf32>
    %29 = vector.shape_cast %28 : vector<16x16x4xf32> to vector<256x4xf32>
    %c12 = arith.constant 12 : index
    %c0_41 = arith.constant 0 : index
    %30 = vector.load %arg2[%c12, %c0_41] : memref<36x8xf32, #tpu.memory_space<vmem>>, vector<4x8xf32>
    %c0_42 = arith.constant 0 : index
    %c0_43 = arith.constant 0 : index
    %31 = vector.load %arg6[%c0_42, %c0_43] : memref<256x8xf32, #tpu.memory_space<vmem>>, vector<256x8xf32>
    %cst_44 = arith.constant dense<0.000000e+00> : vector<256x8xf32>
    %32 = tpu.matmul %29, %30, %cst_44 {dimension_numbers = #tpu.dot_dimension_numbers<[1], [0], [0], [1], [0, 0, 1, 1], [], []>} : vector<256x4xf32>, vector<4x8xf32>, vector<256x8xf32> -> vector<256x8xf32>
    %33 = arith.addf %31, %32 : vector<256x8xf32>
    %c0_45 = arith.constant 0 : index
    %c0_46 = arith.constant 0 : index
    %34 = vector.load %arg6[%c0_45, %c0_46] : memref<256x8xf32, #tpu.memory_space<vmem>>, vector<256x8xf32>
    tpu.vector_store %arg6[%c0_45, %c0_46], %33 {strides = array<i32>} : memref<256x8xf32, #tpu.memory_space<vmem>>, vector<256x8xf32>,
    %c1_47 = arith.constant 1 : index
    %c1_48 = arith.constant 1 : index
    %c0_49 = arith.constant 0 : index
    %35 = vector.load %arg5[%c1_47, %c1_48, %c0_49] : memref<18x18x4xf32, #tpu.memory_space<vmem>>, vector<16x16x4xf32>
    %36 = vector.shape_cast %35 : vector<16x16x4xf32> to vector<256x4xf32>
    %c16 = arith.constant 16 : index
    %c0_50 = arith.constant 0 : index
    %37 = vector.load %arg2[%c16, %c0_50] : memref<36x8xf32, #tpu.memory_space<vmem>>, vector<4x8xf32>
    %c0_51 = arith.constant 0 : index
    %c0_52 = arith.constant 0 : index
    %38 = vector.load %arg6[%c0_51, %c0_52] : memref<256x8xf32, #tpu.memory_space<vmem>>, vector<256x8xf32>
    %cst_53 = arith.constant dense<0.000000e+00> : vector<256x8xf32>
    %39 = tpu.matmul %36, %37, %cst_53 {dimension_numbers = #tpu.dot_dimension_numbers<[1], [0], [0], [1], [0, 0, 1, 1], [], []>} : vector<256x4xf32>, vector<4x8xf32>, vector<256x8xf32> -> vector<256x8xf32>
    %40 = arith.addf %38, %39 : vector<256x8xf32>
    %c0_54 = arith.constant 0 : index
    %c0_55 = arith.constant 0 : index
    %41 = vector.load %arg6[%c0_54, %c0_55] : memref<256x8xf32, #tpu.memory_space<vmem>>, vector<256x8xf32>
    tpu.vector_store %arg6[%c0_54, %c0_55], %40 {strides = array<i32>} : memref<256x8xf32, #tpu.memory_space<vmem>>, vector<256x8xf32>,
    %c1_56 = arith.constant 1 : index
    %c2_57 = arith.constant 2 : index
    %c0_58 = arith.constant 0 : index
    %42 = vector.load %arg5[%c1_56, %c2_57, %c0_58] : memref<18x18x4xf32, #tpu.memory_space<vmem>>, vector<16x16x4xf32>
    %43 = vector.shape_cast %42 : vector<16x16x4xf32> to vector<256x4xf32>
    %c20 = arith.constant 20 : index
    %c0_59 = arith.constant 0 : index
    %44 = vector.load %arg2[%c20, %c0_59] : memref<36x8xf32, #tpu.memory_space<vmem>>, vector<4x8xf32>
    %c0_60 = arith.constant 0 : index
    %c0_61 = arith.constant 0 : index
    %45 = vector.load %arg6[%c0_60, %c0_61] : memref<256x8xf32, #tpu.memory_space<vmem>>, vector<256x8xf32>
    %cst_62 = arith.constant dense<0.000000e+00> : vector<256x8xf32>
    %46 = tpu.matmul %43, %44, %cst_62 {dimension_numbers = #tpu.dot_dimension_numbers<[1], [0], [0], [1], [0, 0, 1, 1], [], []>} : vector<256x4xf32>, vector<4x8xf32>, vector<256x8xf32> -> vector<256x8xf32>
    %47 = arith.addf %45, %46 : vector<256x8xf32>
    %c0_63 = arith.constant 0 : index
    %c0_64 = arith.constant 0 : index
    %48 = vector.load %arg6[%c0_63, %c0_64] : memref<256x8xf32, #tpu.memory_space<vmem>>, vector<256x8xf32>
    tpu.vector_store %arg6[%c0_63, %c0_64], %47 {strides = array<i32>} : memref<256x8xf32, #tpu.memory_space<vmem>>, vector<256x8xf32>,
    %c2_65 = arith.constant 2 : index
    %c0_66 = arith.constant 0 : index
    %c0_67 = arith.constant 0 : index
    %49 = vector.load %arg5[%c2_65, %c0_66, %c0_67] : memref<18x18x4xf32, #tpu.memory_space<vmem>>, vector<16x16x4xf32>
    %50 = vector.shape_cast %49 : vector<16x16x4xf32> to vector<256x4xf32>
    %c24 = arith.constant 24 : index
    %c0_68 = arith.constant 0 : index
    %51 = vector.load %arg2[%c24, %c0_68] : memref<36x8xf32, #tpu.memory_space<vmem>>, vector<4x8xf32>
    %c0_69 = arith.constant 0 : index
    %c0_70 = arith.constant 0 : index
    %52 = vector.load %arg6[%c0_69, %c0_70] : memref<256x8xf32, #tpu.memory_space<vmem>>, vector<256x8xf32>
    %cst_71 = arith.constant dense<0.000000e+00> : vector<256x8xf32>
    %53 = tpu.matmul %50, %51, %cst_71 {dimension_numbers = #tpu.dot_dimension_numbers<[1], [0], [0], [1], [0, 0, 1, 1], [], []>} : vector<256x4xf32>, vector<4x8xf32>, vector<256x8xf32> -> vector<256x8xf32>
    %54 = arith.addf %52, %53 : vector<256x8xf32>
    %c0_72 = arith.constant 0 : index
    %c0_73 = arith.constant 0 : index
    %55 = vector.load %arg6[%c0_72, %c0_73] : memref<256x8xf32, #tpu.memory_space<vmem>>, vector<256x8xf32>
    tpu.vector_store %arg6[%c0_72, %c0_73], %54 {strides = array<i32>} : memref<256x8xf32, #tpu.memory_space<vmem>>, vector<256x8xf32>,
    %c2_74 = arith.constant 2 : index
    %c1_75 = arith.constant 1 : index
    %c0_76 = arith.constant 0 : index
    %56 = vector.load %arg5[%c2_74, %c1_75, %c0_76] : memref<18x18x4xf32, #tpu.memory_space<vmem>>, vector<16x16x4xf32>
    %57 = vector.shape_cast %56 : vector<16x16x4xf32> to vector<256x4xf32>
    %c28 = arith.constant 28 : index
    %c0_77 = arith.constant 0 : index
    %58 = vector.load %arg2[%c28, %c0_77] : memref<36x8xf32, #tpu.memory_space<vmem>>, vector<4x8xf32>
    %c0_78 = arith.constant 0 : index
    %c0_79 = arith.constant 0 : index
    %59 = vector.load %arg6[%c0_78, %c0_79] : memref<256x8xf32, #tpu.memory_space<vmem>>, vector<256x8xf32>
    %cst_80 = arith.constant dense<0.000000e+00> : vector<256x8xf32>
    %60 = tpu.matmul %57, %58, %cst_80 {dimension_numbers = #tpu.dot_dimension_numbers<[1], [0], [0], [1], [0, 0, 1, 1], [], []>} : vector<256x4xf32>, vector<4x8xf32>, vector<256x8xf32> -> vector<256x8xf32>
    %61 = arith.addf %59, %60 : vector<256x8xf32>
    %c0_81 = arith.constant 0 : index
    %c0_82 = arith.constant 0 : index
    %62 = vector.load %arg6[%c0_81, %c0_82] : memref<256x8xf32, #tpu.memory_space<vmem>>, vector<256x8xf32>
    tpu.vector_store %arg6[%c0_81, %c0_82], %61 {strides = array<i32>} : memref<256x8xf32, #tpu.memory_space<vmem>>, vector<256x8xf32>,
    %c2_83 = arith.constant 2 : index
    %c2_84 = arith.constant 2 : index
    %c0_85 = arith.constant 0 : index
    %63 = vector.load %arg5[%c2_83, %c2_84, %c0_85] : memref<18x18x4xf32, #tpu.memory_space<vmem>>, vector<16x16x4xf32>
    %64 = vector.shape_cast %63 : vector<16x16x4xf32> to vector<256x4xf32>
    %c32 = arith.constant 32 : index
    %c0_86 = arith.constant 0 : index
    %65 = vector.load %arg2[%c32, %c0_86] : memref<36x8xf32, #tpu.memory_space<vmem>>, vector<4x8xf32>
    %c0_87 = arith.constant 0 : index
    %c0_88 = arith.constant 0 : index
    %66 = vector.load %arg6[%c0_87, %c0_88] : memref<256x8xf32, #tpu.memory_space<vmem>>, vector<256x8xf32>
    %cst_89 = arith.constant dense<0.000000e+00> : vector<256x8xf32>
    %67 = tpu.matmul %64, %65, %cst_89 {dimension_numbers = #tpu.dot_dimension_numbers<[1], [0], [0], [1], [0, 0, 1, 1], [], []>} : vector<256x4xf32>, vector<4x8xf32>, vector<256x8xf32> -> vector<256x8xf32>
    %68 = arith.addf %66, %67 : vector<256x8xf32>
    %c0_90 = arith.constant 0 : index
    %c0_91 = arith.constant 0 : index
    %69 = vector.load %arg6[%c0_90, %c0_91] : memref<256x8xf32, #tpu.memory_space<vmem>>, vector<256x8xf32>
    tpu.vector_store %arg6[%c0_90, %c0_91], %68 {strides = array<i32>} : memref<256x8xf32, #tpu.memory_space<vmem>>, vector<256x8xf32>,
    %c0_92 = arith.constant 0 : index
    %c0_93 = arith.constant 0 : index
    %70 = vector.load %arg6[%c0_92, %c0_93] : memref<256x8xf32, #tpu.memory_space<vmem>>, vector<256x8xf32>
    %71 = vector.shape_cast %70 : vector<256x8xf32> to vector<16x16x8xf32>
    %c0_94 = arith.constant 0 : index
    %c0_95 = arith.constant 0 : index
    %c0_96 = arith.constant 0 : index
    %c0_97 = arith.constant 0 : index
    %72 = vector.load %arg3[%c0_94, %c0_95, %c0_96, %c0_97] : memref<1x16x16x8xf32, #tpu.memory_space<vmem>>, vector<1x16x16x8xf32>
    %73 = vector.shape_cast %72 : vector<1x16x16x8xf32> to vector<16x16x8xf32>
    %74 = vector.shape_cast %71 : vector<16x16x8xf32> to vector<1x16x16x8xf32>
    tpu.vector_store %arg3[%c0_94, %c0_95, %c0_96, %c0_97], %74 {strides = array<i32>} : memref<1x16x16x8xf32, #tpu.memory_space<vmem>>, vector<1x16x16x8xf32>,
    %cst_98 = arith.constant dense<0.000000e+00> : vector<8xf32>
    %75 = vector.multi_reduction <add>, %70, %cst_98 [0] : vector<256x8xf32> to vector<8xf32>
    %76 = vector.shape_cast %75 : vector<8xf32> to vector<1x8xf32>
    %77 = arith.mulf %70, %70 : vector<256x8xf32>
    %cst_99 = arith.constant dense<0.000000e+00> : vector<8xf32>
    %78 = vector.multi_reduction <add>, %77, %cst_99 [0] : vector<256x8xf32> to vector<8xf32>
    %79 = vector.shape_cast %78 : vector<8xf32> to vector<1x8xf32>
    %80 = tpu.concatenate %76, %79 in 0 : vector<1x8xf32>, vector<1x8xf32> -> vector<2x8xf32>
    %c0_100 = arith.constant 0 : index
    %c0_101 = arith.constant 0 : index
    %c0_102 = arith.constant 0 : index
    %81 = vector.load %arg4[%c0_100, %c0_101, %c0_102] : memref<1x2x8xf32, #tpu.memory_space<vmem>>, vector<1x2x8xf32>
    %82 = vector.shape_cast %81 : vector<1x2x8xf32> to vector<2x8xf32>
    %83 = vector.shape_cast %80 : vector<2x8xf32> to vector<1x2x8xf32>
    tpu.vector_store %arg4[%c0_100, %c0_101, %c0_102], %83 {strides = array<i32>} : memref<1x2x8xf32, #tpu.memory_space<vmem>>, vector<1x2x8xf32>,
    return
  }
  func.func @transform_0(%arg0: i32) -> (i32, i32, i32, i32) {
    %c0_i32 = arith.constant 0 : i32
    %c0_i32_0 = arith.constant 0 : i32
    %c0_i32_1 = arith.constant 0 : i32
    %c0_i32_2 = arith.constant 0 : i32
    return %arg0, %c0_i32, %c0_i32_0, %c0_i32_1 : i32, i32, i32, i32
  }
  func.func @transform_1(%arg0: i32) -> (i32, i32) {
    %c0_i32 = arith.constant 0 : i32
    %c0_i32_0 = arith.constant 0 : i32
    %c0_i32_1 = arith.constant 0 : i32
    return %c0_i32, %c0_i32_0 : i32, i32
  }
  func.func @transform_2(%arg0: i32) -> (i32, i32, i32, i32) {
    %c0_i32 = arith.constant 0 : i32
    %c0_i32_0 = arith.constant 0 : i32
    %c0_i32_1 = arith.constant 0 : i32
    %c0_i32_2 = arith.constant 0 : i32
    return %arg0, %c0_i32, %c0_i32_0, %c0_i32_1 : i32, i32, i32, i32
  }
  func.func @transform_3(%arg0: i32) -> (i32, i32, i32) {
    %c0_i32 = arith.constant 0 : i32
    %c0_i32_0 = arith.constant 0 : i32
    %c0_i32_1 = arith.constant 0 : i32
    return %arg0, %c0_i32, %c0_i32_0 : i32, i32, i32
  }
}

module attributes {stable_mosaic.version = 11 : i64} {
  func.func @_bn_relu_conv2_kernel(%arg0: i32, %arg1: memref<1x16x16x8xf32, #tpu.memory_space<vmem>>, %arg2: memref<1x8xf32, #tpu.memory_space<vmem>>, %arg3: memref<1x8xf32, #tpu.memory_space<vmem>>, %arg4: memref<72x8xf32, #tpu.memory_space<vmem>>, %arg5: memref<1x16x16x8xf32, #tpu.memory_space<vmem>>, %arg6: memref<1x2x8xf32, #tpu.memory_space<vmem>>, %arg7: memref<18x18x8xf32, #tpu.memory_space<vmem>>, %arg8: memref<256x8xf32, #tpu.memory_space<vmem>>) attributes {dimension_semantics = [#tpu.dimension_semantics<parallel>], iteration_bounds = array<i64: 2>, scalar_prefetch = 0 : i64, scratch_operands = 2 : i64, tpu.core_type = #tpu.core_type<tc>, window_params = [{transform_indices = @transform_0, window_bounds = array<i64: 1, 16, 16, 8>}, {pipeline_mode = #tpu.pipeline_mode<synchronous>, transform_indices = @transform_1, window_bounds = array<i64: 1, 8>}, {pipeline_mode = #tpu.pipeline_mode<synchronous>, transform_indices = @transform_2, window_bounds = array<i64: 1, 8>}, {pipeline_mode = #tpu.pipeline_mode<synchronous>, transform_indices = @transform_3, window_bounds = array<i64: 72, 8>}, {transform_indices = @transform_4, window_bounds = array<i64: 1, 16, 16, 8>}, {transform_indices = @transform_5, window_bounds = array<i64: 1, 2, 8>}]} {
    %c0 = arith.constant 0 : index
    %c0_0 = arith.constant 0 : index
    %c0_1 = arith.constant 0 : index
    %c0_2 = arith.constant 0 : index
    %0 = vector.load %arg1[%c0, %c0_0, %c0_1, %c0_2] : memref<1x16x16x8xf32, #tpu.memory_space<vmem>>, vector<1x16x16x8xf32>
    %1 = vector.shape_cast %0 : vector<1x16x16x8xf32> to vector<16x16x8xf32>
    %c0_3 = arith.constant 0 : index
    %c0_4 = arith.constant 0 : index
    %2 = vector.load %arg2[%c0_3, %c0_4] : memref<1x8xf32, #tpu.memory_space<vmem>>, vector<1x8xf32>
    %3 = vector.shape_cast %2 : vector<1x8xf32> to vector<1x1x8xf32>
    %4 = vector.broadcast %3 : vector<1x1x8xf32> to vector<16x16x8xf32>
    %5 = arith.mulf %1, %4 : vector<16x16x8xf32>
    %c0_5 = arith.constant 0 : index
    %c0_6 = arith.constant 0 : index
    %6 = vector.load %arg3[%c0_5, %c0_6] : memref<1x8xf32, #tpu.memory_space<vmem>>, vector<1x8xf32>
    %7 = vector.shape_cast %6 : vector<1x8xf32> to vector<1x1x8xf32>
    %8 = vector.broadcast %7 : vector<1x1x8xf32> to vector<16x16x8xf32>
    %9 = arith.addf %5, %8 : vector<16x16x8xf32>
    %cst = arith.constant 0.000000e+00 : f32
    %10 = vector.broadcast %cst : f32 to vector<16x16x8xf32>
    %11 = arith.maximumf %9, %10 : vector<16x16x8xf32>
    %cst_7 = arith.constant 0.000000e+00 : f32
    %12 = vector.broadcast %cst_7 : f32 to vector<18x18x8xf32>
    %c0_8 = arith.constant 0 : index
    %c0_9 = arith.constant 0 : index
    %c0_10 = arith.constant 0 : index
    %13 = vector.load %arg7[%c0_8, %c0_9, %c0_10] : memref<18x18x8xf32, #tpu.memory_space<vmem>>, vector<18x18x8xf32>
    tpu.vector_store %arg7[%c0_8, %c0_9, %c0_10], %12 {strides = array<i32>} : memref<18x18x8xf32, #tpu.memory_space<vmem>>, vector<18x18x8xf32>,
    %c1 = arith.constant 1 : index
    %c1_11 = arith.constant 1 : index
    %c0_12 = arith.constant 0 : index
    %14 = vector.load %arg7[%c1, %c1_11, %c0_12] : memref<18x18x8xf32, #tpu.memory_space<vmem>>, vector<16x16x8xf32>
    tpu.vector_store %arg7[%c1, %c1_11, %c0_12], %11 {strides = array<i32>} : memref<18x18x8xf32, #tpu.memory_space<vmem>>, vector<16x16x8xf32>,
    %cst_13 = arith.constant 0.000000e+00 : f32
    %15 = vector.broadcast %cst_13 : f32 to vector<256x8xf32>
    %c0_14 = arith.constant 0 : index
    %c0_15 = arith.constant 0 : index
    %16 = vector.load %arg8[%c0_14, %c0_15] : memref<256x8xf32, #tpu.memory_space<vmem>>, vector<256x8xf32>
    tpu.vector_store %arg8[%c0_14, %c0_15], %15 {strides = array<i32>} : memref<256x8xf32, #tpu.memory_space<vmem>>, vector<256x8xf32>,
    %c0_16 = arith.constant 0 : index
    %c0_17 = arith.constant 0 : index
    %c0_18 = arith.constant 0 : index
    %17 = vector.load %arg7[%c0_16, %c0_17, %c0_18] : memref<18x18x8xf32, #tpu.memory_space<vmem>>, vector<16x16x8xf32>
    %18 = vector.shape_cast %17 : vector<16x16x8xf32> to vector<256x8xf32>
    %c0_19 = arith.constant 0 : index
    %c0_20 = arith.constant 0 : index
    %19 = vector.load %arg4[%c0_19, %c0_20] : memref<72x8xf32, #tpu.memory_space<vmem>>, vector<8x8xf32>
    %c0_21 = arith.constant 0 : index
    %c0_22 = arith.constant 0 : index
    %20 = vector.load %arg8[%c0_21, %c0_22] : memref<256x8xf32, #tpu.memory_space<vmem>>, vector<256x8xf32>
    %cst_23 = arith.constant dense<0.000000e+00> : vector<256x8xf32>
    %21 = tpu.matmul %18, %19, %cst_23 {dimension_numbers = #tpu.dot_dimension_numbers<[1], [0], [0], [1], [0, 0, 1, 1], [], []>} : vector<256x8xf32>, vector<8x8xf32>, vector<256x8xf32> -> vector<256x8xf32>
    %22 = arith.addf %20, %21 : vector<256x8xf32>
    %c0_24 = arith.constant 0 : index
    %c0_25 = arith.constant 0 : index
    %23 = vector.load %arg8[%c0_24, %c0_25] : memref<256x8xf32, #tpu.memory_space<vmem>>, vector<256x8xf32>
    tpu.vector_store %arg8[%c0_24, %c0_25], %22 {strides = array<i32>} : memref<256x8xf32, #tpu.memory_space<vmem>>, vector<256x8xf32>,
    %c0_26 = arith.constant 0 : index
    %c1_27 = arith.constant 1 : index
    %c0_28 = arith.constant 0 : index
    %24 = vector.load %arg7[%c0_26, %c1_27, %c0_28] : memref<18x18x8xf32, #tpu.memory_space<vmem>>, vector<16x16x8xf32>
    %25 = vector.shape_cast %24 : vector<16x16x8xf32> to vector<256x8xf32>
    %c8 = arith.constant 8 : index
    %c0_29 = arith.constant 0 : index
    %26 = vector.load %arg4[%c8, %c0_29] : memref<72x8xf32, #tpu.memory_space<vmem>>, vector<8x8xf32>
    %c0_30 = arith.constant 0 : index
    %c0_31 = arith.constant 0 : index
    %27 = vector.load %arg8[%c0_30, %c0_31] : memref<256x8xf32, #tpu.memory_space<vmem>>, vector<256x8xf32>
    %cst_32 = arith.constant dense<0.000000e+00> : vector<256x8xf32>
    %28 = tpu.matmul %25, %26, %cst_32 {dimension_numbers = #tpu.dot_dimension_numbers<[1], [0], [0], [1], [0, 0, 1, 1], [], []>} : vector<256x8xf32>, vector<8x8xf32>, vector<256x8xf32> -> vector<256x8xf32>
    %29 = arith.addf %27, %28 : vector<256x8xf32>
    %c0_33 = arith.constant 0 : index
    %c0_34 = arith.constant 0 : index
    %30 = vector.load %arg8[%c0_33, %c0_34] : memref<256x8xf32, #tpu.memory_space<vmem>>, vector<256x8xf32>
    tpu.vector_store %arg8[%c0_33, %c0_34], %29 {strides = array<i32>} : memref<256x8xf32, #tpu.memory_space<vmem>>, vector<256x8xf32>,
    %c0_35 = arith.constant 0 : index
    %c2 = arith.constant 2 : index
    %c0_36 = arith.constant 0 : index
    %31 = vector.load %arg7[%c0_35, %c2, %c0_36] : memref<18x18x8xf32, #tpu.memory_space<vmem>>, vector<16x16x8xf32>
    %32 = vector.shape_cast %31 : vector<16x16x8xf32> to vector<256x8xf32>
    %c16 = arith.constant 16 : index
    %c0_37 = arith.constant 0 : index
    %33 = vector.load %arg4[%c16, %c0_37] : memref<72x8xf32, #tpu.memory_space<vmem>>, vector<8x8xf32>
    %c0_38 = arith.constant 0 : index
    %c0_39 = arith.constant 0 : index
    %34 = vector.load %arg8[%c0_38, %c0_39] : memref<256x8xf32, #tpu.memory_space<vmem>>, vector<256x8xf32>
    %cst_40 = arith.constant dense<0.000000e+00> : vector<256x8xf32>
    %35 = tpu.matmul %32, %33, %cst_40 {dimension_numbers = #tpu.dot_dimension_numbers<[1], [0], [0], [1], [0, 0, 1, 1], [], []>} : vector<256x8xf32>, vector<8x8xf32>, vector<256x8xf32> -> vector<256x8xf32>
    %36 = arith.addf %34, %35 : vector<256x8xf32>
    %c0_41 = arith.constant 0 : index
    %c0_42 = arith.constant 0 : index
    %37 = vector.load %arg8[%c0_41, %c0_42] : memref<256x8xf32, #tpu.memory_space<vmem>>, vector<256x8xf32>
    tpu.vector_store %arg8[%c0_41, %c0_42], %36 {strides = array<i32>} : memref<256x8xf32, #tpu.memory_space<vmem>>, vector<256x8xf32>,
    %c1_43 = arith.constant 1 : index
    %c0_44 = arith.constant 0 : index
    %c0_45 = arith.constant 0 : index
    %38 = vector.load %arg7[%c1_43, %c0_44, %c0_45] : memref<18x18x8xf32, #tpu.memory_space<vmem>>, vector<16x16x8xf32>
    %39 = vector.shape_cast %38 : vector<16x16x8xf32> to vector<256x8xf32>
    %c24 = arith.constant 24 : index
    %c0_46 = arith.constant 0 : index
    %40 = vector.load %arg4[%c24, %c0_46] : memref<72x8xf32, #tpu.memory_space<vmem>>, vector<8x8xf32>
    %c0_47 = arith.constant 0 : index
    %c0_48 = arith.constant 0 : index
    %41 = vector.load %arg8[%c0_47, %c0_48] : memref<256x8xf32, #tpu.memory_space<vmem>>, vector<256x8xf32>
    %cst_49 = arith.constant dense<0.000000e+00> : vector<256x8xf32>
    %42 = tpu.matmul %39, %40, %cst_49 {dimension_numbers = #tpu.dot_dimension_numbers<[1], [0], [0], [1], [0, 0, 1, 1], [], []>} : vector<256x8xf32>, vector<8x8xf32>, vector<256x8xf32> -> vector<256x8xf32>
    %43 = arith.addf %41, %42 : vector<256x8xf32>
    %c0_50 = arith.constant 0 : index
    %c0_51 = arith.constant 0 : index
    %44 = vector.load %arg8[%c0_50, %c0_51] : memref<256x8xf32, #tpu.memory_space<vmem>>, vector<256x8xf32>
    tpu.vector_store %arg8[%c0_50, %c0_51], %43 {strides = array<i32>} : memref<256x8xf32, #tpu.memory_space<vmem>>, vector<256x8xf32>,
    %c1_52 = arith.constant 1 : index
    %c1_53 = arith.constant 1 : index
    %c0_54 = arith.constant 0 : index
    %45 = vector.load %arg7[%c1_52, %c1_53, %c0_54] : memref<18x18x8xf32, #tpu.memory_space<vmem>>, vector<16x16x8xf32>
    %46 = vector.shape_cast %45 : vector<16x16x8xf32> to vector<256x8xf32>
    %c32 = arith.constant 32 : index
    %c0_55 = arith.constant 0 : index
    %47 = vector.load %arg4[%c32, %c0_55] : memref<72x8xf32, #tpu.memory_space<vmem>>, vector<8x8xf32>
    %c0_56 = arith.constant 0 : index
    %c0_57 = arith.constant 0 : index
    %48 = vector.load %arg8[%c0_56, %c0_57] : memref<256x8xf32, #tpu.memory_space<vmem>>, vector<256x8xf32>
    %cst_58 = arith.constant dense<0.000000e+00> : vector<256x8xf32>
    %49 = tpu.matmul %46, %47, %cst_58 {dimension_numbers = #tpu.dot_dimension_numbers<[1], [0], [0], [1], [0, 0, 1, 1], [], []>} : vector<256x8xf32>, vector<8x8xf32>, vector<256x8xf32> -> vector<256x8xf32>
    %50 = arith.addf %48, %49 : vector<256x8xf32>
    %c0_59 = arith.constant 0 : index
    %c0_60 = arith.constant 0 : index
    %51 = vector.load %arg8[%c0_59, %c0_60] : memref<256x8xf32, #tpu.memory_space<vmem>>, vector<256x8xf32>
    tpu.vector_store %arg8[%c0_59, %c0_60], %50 {strides = array<i32>} : memref<256x8xf32, #tpu.memory_space<vmem>>, vector<256x8xf32>,
    %c1_61 = arith.constant 1 : index
    %c2_62 = arith.constant 2 : index
    %c0_63 = arith.constant 0 : index
    %52 = vector.load %arg7[%c1_61, %c2_62, %c0_63] : memref<18x18x8xf32, #tpu.memory_space<vmem>>, vector<16x16x8xf32>
    %53 = vector.shape_cast %52 : vector<16x16x8xf32> to vector<256x8xf32>
    %c40 = arith.constant 40 : index
    %c0_64 = arith.constant 0 : index
    %54 = vector.load %arg4[%c40, %c0_64] : memref<72x8xf32, #tpu.memory_space<vmem>>, vector<8x8xf32>
    %c0_65 = arith.constant 0 : index
    %c0_66 = arith.constant 0 : index
    %55 = vector.load %arg8[%c0_65, %c0_66] : memref<256x8xf32, #tpu.memory_space<vmem>>, vector<256x8xf32>
    %cst_67 = arith.constant dense<0.000000e+00> : vector<256x8xf32>
    %56 = tpu.matmul %53, %54, %cst_67 {dimension_numbers = #tpu.dot_dimension_numbers<[1], [0], [0], [1], [0, 0, 1, 1], [], []>} : vector<256x8xf32>, vector<8x8xf32>, vector<256x8xf32> -> vector<256x8xf32>
    %57 = arith.addf %55, %56 : vector<256x8xf32>
    %c0_68 = arith.constant 0 : index
    %c0_69 = arith.constant 0 : index
    %58 = vector.load %arg8[%c0_68, %c0_69] : memref<256x8xf32, #tpu.memory_space<vmem>>, vector<256x8xf32>
    tpu.vector_store %arg8[%c0_68, %c0_69], %57 {strides = array<i32>} : memref<256x8xf32, #tpu.memory_space<vmem>>, vector<256x8xf32>,
    %c2_70 = arith.constant 2 : index
    %c0_71 = arith.constant 0 : index
    %c0_72 = arith.constant 0 : index
    %59 = vector.load %arg7[%c2_70, %c0_71, %c0_72] : memref<18x18x8xf32, #tpu.memory_space<vmem>>, vector<16x16x8xf32>
    %60 = vector.shape_cast %59 : vector<16x16x8xf32> to vector<256x8xf32>
    %c48 = arith.constant 48 : index
    %c0_73 = arith.constant 0 : index
    %61 = vector.load %arg4[%c48, %c0_73] : memref<72x8xf32, #tpu.memory_space<vmem>>, vector<8x8xf32>
    %c0_74 = arith.constant 0 : index
    %c0_75 = arith.constant 0 : index
    %62 = vector.load %arg8[%c0_74, %c0_75] : memref<256x8xf32, #tpu.memory_space<vmem>>, vector<256x8xf32>
    %cst_76 = arith.constant dense<0.000000e+00> : vector<256x8xf32>
    %63 = tpu.matmul %60, %61, %cst_76 {dimension_numbers = #tpu.dot_dimension_numbers<[1], [0], [0], [1], [0, 0, 1, 1], [], []>} : vector<256x8xf32>, vector<8x8xf32>, vector<256x8xf32> -> vector<256x8xf32>
    %64 = arith.addf %62, %63 : vector<256x8xf32>
    %c0_77 = arith.constant 0 : index
    %c0_78 = arith.constant 0 : index
    %65 = vector.load %arg8[%c0_77, %c0_78] : memref<256x8xf32, #tpu.memory_space<vmem>>, vector<256x8xf32>
    tpu.vector_store %arg8[%c0_77, %c0_78], %64 {strides = array<i32>} : memref<256x8xf32, #tpu.memory_space<vmem>>, vector<256x8xf32>,
    %c2_79 = arith.constant 2 : index
    %c1_80 = arith.constant 1 : index
    %c0_81 = arith.constant 0 : index
    %66 = vector.load %arg7[%c2_79, %c1_80, %c0_81] : memref<18x18x8xf32, #tpu.memory_space<vmem>>, vector<16x16x8xf32>
    %67 = vector.shape_cast %66 : vector<16x16x8xf32> to vector<256x8xf32>
    %c56 = arith.constant 56 : index
    %c0_82 = arith.constant 0 : index
    %68 = vector.load %arg4[%c56, %c0_82] : memref<72x8xf32, #tpu.memory_space<vmem>>, vector<8x8xf32>
    %c0_83 = arith.constant 0 : index
    %c0_84 = arith.constant 0 : index
    %69 = vector.load %arg8[%c0_83, %c0_84] : memref<256x8xf32, #tpu.memory_space<vmem>>, vector<256x8xf32>
    %cst_85 = arith.constant dense<0.000000e+00> : vector<256x8xf32>
    %70 = tpu.matmul %67, %68, %cst_85 {dimension_numbers = #tpu.dot_dimension_numbers<[1], [0], [0], [1], [0, 0, 1, 1], [], []>} : vector<256x8xf32>, vector<8x8xf32>, vector<256x8xf32> -> vector<256x8xf32>
    %71 = arith.addf %69, %70 : vector<256x8xf32>
    %c0_86 = arith.constant 0 : index
    %c0_87 = arith.constant 0 : index
    %72 = vector.load %arg8[%c0_86, %c0_87] : memref<256x8xf32, #tpu.memory_space<vmem>>, vector<256x8xf32>
    tpu.vector_store %arg8[%c0_86, %c0_87], %71 {strides = array<i32>} : memref<256x8xf32, #tpu.memory_space<vmem>>, vector<256x8xf32>,
    %c2_88 = arith.constant 2 : index
    %c2_89 = arith.constant 2 : index
    %c0_90 = arith.constant 0 : index
    %73 = vector.load %arg7[%c2_88, %c2_89, %c0_90] : memref<18x18x8xf32, #tpu.memory_space<vmem>>, vector<16x16x8xf32>
    %74 = vector.shape_cast %73 : vector<16x16x8xf32> to vector<256x8xf32>
    %c64 = arith.constant 64 : index
    %c0_91 = arith.constant 0 : index
    %75 = vector.load %arg4[%c64, %c0_91] : memref<72x8xf32, #tpu.memory_space<vmem>>, vector<8x8xf32>
    %c0_92 = arith.constant 0 : index
    %c0_93 = arith.constant 0 : index
    %76 = vector.load %arg8[%c0_92, %c0_93] : memref<256x8xf32, #tpu.memory_space<vmem>>, vector<256x8xf32>
    %cst_94 = arith.constant dense<0.000000e+00> : vector<256x8xf32>
    %77 = tpu.matmul %74, %75, %cst_94 {dimension_numbers = #tpu.dot_dimension_numbers<[1], [0], [0], [1], [0, 0, 1, 1], [], []>} : vector<256x8xf32>, vector<8x8xf32>, vector<256x8xf32> -> vector<256x8xf32>
    %78 = arith.addf %76, %77 : vector<256x8xf32>
    %c0_95 = arith.constant 0 : index
    %c0_96 = arith.constant 0 : index
    %79 = vector.load %arg8[%c0_95, %c0_96] : memref<256x8xf32, #tpu.memory_space<vmem>>, vector<256x8xf32>
    tpu.vector_store %arg8[%c0_95, %c0_96], %78 {strides = array<i32>} : memref<256x8xf32, #tpu.memory_space<vmem>>, vector<256x8xf32>,
    %c0_97 = arith.constant 0 : index
    %c0_98 = arith.constant 0 : index
    %80 = vector.load %arg8[%c0_97, %c0_98] : memref<256x8xf32, #tpu.memory_space<vmem>>, vector<256x8xf32>
    %81 = vector.shape_cast %80 : vector<256x8xf32> to vector<16x16x8xf32>
    %c0_99 = arith.constant 0 : index
    %c0_100 = arith.constant 0 : index
    %c0_101 = arith.constant 0 : index
    %c0_102 = arith.constant 0 : index
    %82 = vector.load %arg5[%c0_99, %c0_100, %c0_101, %c0_102] : memref<1x16x16x8xf32, #tpu.memory_space<vmem>>, vector<1x16x16x8xf32>
    %83 = vector.shape_cast %82 : vector<1x16x16x8xf32> to vector<16x16x8xf32>
    %84 = vector.shape_cast %81 : vector<16x16x8xf32> to vector<1x16x16x8xf32>
    tpu.vector_store %arg5[%c0_99, %c0_100, %c0_101, %c0_102], %84 {strides = array<i32>} : memref<1x16x16x8xf32, #tpu.memory_space<vmem>>, vector<1x16x16x8xf32>,
    %cst_103 = arith.constant dense<0.000000e+00> : vector<8xf32>
    %85 = vector.multi_reduction <add>, %80, %cst_103 [0] : vector<256x8xf32> to vector<8xf32>
    %86 = vector.shape_cast %85 : vector<8xf32> to vector<1x8xf32>
    %87 = arith.mulf %80, %80 : vector<256x8xf32>
    %cst_104 = arith.constant dense<0.000000e+00> : vector<8xf32>
    %88 = vector.multi_reduction <add>, %87, %cst_104 [0] : vector<256x8xf32> to vector<8xf32>
    %89 = vector.shape_cast %88 : vector<8xf32> to vector<1x8xf32>
    %90 = tpu.concatenate %86, %89 in 0 : vector<1x8xf32>, vector<1x8xf32> -> vector<2x8xf32>
    %c0_105 = arith.constant 0 : index
    %c0_106 = arith.constant 0 : index
    %c0_107 = arith.constant 0 : index
    %91 = vector.load %arg6[%c0_105, %c0_106, %c0_107] : memref<1x2x8xf32, #tpu.memory_space<vmem>>, vector<1x2x8xf32>
    %92 = vector.shape_cast %91 : vector<1x2x8xf32> to vector<2x8xf32>
    %93 = vector.shape_cast %90 : vector<2x8xf32> to vector<1x2x8xf32>
    tpu.vector_store %arg6[%c0_105, %c0_106, %c0_107], %93 {strides = array<i32>} : memref<1x2x8xf32, #tpu.memory_space<vmem>>, vector<1x2x8xf32>,
    return
  }
  func.func @transform_0(%arg0: i32) -> (i32, i32, i32, i32) {
    %c0_i32 = arith.constant 0 : i32
    %c0_i32_0 = arith.constant 0 : i32
    %c0_i32_1 = arith.constant 0 : i32
    %c0_i32_2 = arith.constant 0 : i32
    return %arg0, %c0_i32, %c0_i32_0, %c0_i32_1 : i32, i32, i32, i32
  }
  func.func @transform_1(%arg0: i32) -> (i32, i32) {
    %c0_i32 = arith.constant 0 : i32
    %c0_i32_0 = arith.constant 0 : i32
    %c0_i32_1 = arith.constant 0 : i32
    return %c0_i32, %c0_i32_0 : i32, i32
  }
  func.func @transform_2(%arg0: i32) -> (i32, i32) {
    %c0_i32 = arith.constant 0 : i32
    %c0_i32_0 = arith.constant 0 : i32
    %c0_i32_1 = arith.constant 0 : i32
    return %c0_i32, %c0_i32_0 : i32, i32
  }
  func.func @transform_3(%arg0: i32) -> (i32, i32) {
    %c0_i32 = arith.constant 0 : i32
    %c0_i32_0 = arith.constant 0 : i32
    %c0_i32_1 = arith.constant 0 : i32
    return %c0_i32, %c0_i32_0 : i32, i32
  }
  func.func @transform_4(%arg0: i32) -> (i32, i32, i32, i32) {
    %c0_i32 = arith.constant 0 : i32
    %c0_i32_0 = arith.constant 0 : i32
    %c0_i32_1 = arith.constant 0 : i32
    %c0_i32_2 = arith.constant 0 : i32
    return %arg0, %c0_i32, %c0_i32_0, %c0_i32_1 : i32, i32, i32, i32
  }
  func.func @transform_5(%arg0: i32) -> (i32, i32, i32) {
    %c0_i32 = arith.constant 0 : i32
    %c0_i32_0 = arith.constant 0 : i32
    %c0_i32_1 = arith.constant 0 : i32
    return %arg0, %c0_i32, %c0_i32_0 : i32, i32, i32
  }
}

module attributes {stable_mosaic.version = 11 : i64} {
  func.func @_bn_relu_kernel(%arg0: i32, %arg1: memref<1x16x128xf32, #tpu.memory_space<vmem>>, %arg2: memref<1x128xf32, #tpu.memory_space<vmem>>, %arg3: memref<1x128xf32, #tpu.memory_space<vmem>>, %arg4: memref<1x16x128xf32, #tpu.memory_space<vmem>>) attributes {dimension_semantics = [#tpu.dimension_semantics<parallel>], iteration_bounds = array<i64: 2>, scalar_prefetch = 0 : i64, scratch_operands = 0 : i64, tpu.core_type = #tpu.core_type<tc>, window_params = [{transform_indices = @transform_0, window_bounds = array<i64: 1, 16, 128>}, {pipeline_mode = #tpu.pipeline_mode<synchronous>, transform_indices = @transform_1, window_bounds = array<i64: 1, 128>}, {pipeline_mode = #tpu.pipeline_mode<synchronous>, transform_indices = @transform_2, window_bounds = array<i64: 1, 128>}, {transform_indices = @transform_3, window_bounds = array<i64: 1, 16, 128>}]} {
    %c0 = arith.constant 0 : index
    %c0_0 = arith.constant 0 : index
    %c0_1 = arith.constant 0 : index
    %0 = vector.load %arg1[%c0, %c0_0, %c0_1] : memref<1x16x128xf32, #tpu.memory_space<vmem>>, vector<1x16x128xf32>
    %c0_2 = arith.constant 0 : index
    %c0_3 = arith.constant 0 : index
    %1 = vector.load %arg2[%c0_2, %c0_3] : memref<1x128xf32, #tpu.memory_space<vmem>>, vector<1x128xf32>
    %2 = vector.shape_cast %1 : vector<1x128xf32> to vector<1x1x128xf32>
    %3 = vector.broadcast %2 : vector<1x1x128xf32> to vector<1x16x128xf32>
    %4 = arith.mulf %0, %3 : vector<1x16x128xf32>
    %c0_4 = arith.constant 0 : index
    %c0_5 = arith.constant 0 : index
    %5 = vector.load %arg3[%c0_4, %c0_5] : memref<1x128xf32, #tpu.memory_space<vmem>>, vector<1x128xf32>
    %6 = vector.shape_cast %5 : vector<1x128xf32> to vector<1x1x128xf32>
    %7 = vector.broadcast %6 : vector<1x1x128xf32> to vector<1x16x128xf32>
    %8 = arith.addf %4, %7 : vector<1x16x128xf32>
    %cst = arith.constant 0.000000e+00 : f32
    %9 = vector.broadcast %cst : f32 to vector<1x16x128xf32>
    %10 = arith.maximumf %8, %9 : vector<1x16x128xf32>
    %c0_6 = arith.constant 0 : index
    %c0_7 = arith.constant 0 : index
    %c0_8 = arith.constant 0 : index
    %11 = vector.load %arg4[%c0_6, %c0_7, %c0_8] : memref<1x16x128xf32, #tpu.memory_space<vmem>>, vector<1x16x128xf32>
    tpu.vector_store %arg4[%c0_6, %c0_7, %c0_8], %10 {strides = array<i32>} : memref<1x16x128xf32, #tpu.memory_space<vmem>>, vector<1x16x128xf32>,
    return
  }
  func.func @transform_0(%arg0: i32) -> (i32, i32, i32) {
    %c0_i32 = arith.constant 0 : i32
    %c0_i32_0 = arith.constant 0 : i32
    %c0_i32_1 = arith.constant 0 : i32
    return %arg0, %c0_i32, %c0_i32_0 : i32, i32, i32
  }
  func.func @transform_1(%arg0: i32) -> (i32, i32) {
    %c0_i32 = arith.constant 0 : i32
    %c0_i32_0 = arith.constant 0 : i32
    %c0_i32_1 = arith.constant 0 : i32
    return %c0_i32, %c0_i32_0 : i32, i32
  }
  func.func @transform_2(%arg0: i32) -> (i32, i32) {
    %c0_i32 = arith.constant 0 : i32
    %c0_i32_0 = arith.constant 0 : i32
    %c0_i32_1 = arith.constant 0 : i32
    return %c0_i32, %c0_i32_0 : i32, i32
  }
  func.func @transform_3(%arg0: i32) -> (i32, i32, i32) {
    %c0_i32 = arith.constant 0 : i32
    %c0_i32_0 = arith.constant 0 : i32
    %c0_i32_1 = arith.constant 0 : i32
    return %arg0, %c0_i32, %c0_i32_0 : i32, i32, i32
  }
}

</mosaic_0001>

<llo_original>
// kernel: tile.18
$region0: #{tile.18}
  #allocation0 [shape = 's32[1]{0}', space=sflag, size = 0x4, scoped, tag = 'scoped memory for tile.18']
  %s0 = inlined_call_operand.vmem [shape: f32[8], index: 0, kind: input, shape index: {}]
  %s1 = inlined_call_operand.vmem [shape: f32[16,8], index: 1, kind: output, shape index: {}]
  // Predicated region
  $region2: #{tile.18} parent=0 // pred_check
    _
  $region3: #{tile.18} parent=0 // pred_check_branch
    %3 = sbr.rel (0) target = $region5
  $region4: #{tile.18} parent=0 // pred_region
    _
  $region5: #{tile.18} parent=0 // pred_fallthru
    _
  %v4 = vld [vmem:[%s0] ss:$0 sm:$0xff]
  %5 = vst [vmem:[%s1] sm:$0xff] %v4
  %s6 = scalar_lea.vmem %s1, 8
  %7 = vst [vmem:[%s6] sm:$0xff] %v4

// kernel: tile.19
$region0: #{tile.19}
  %s0 = inlined_call_operand.vmem [shape: f32[16,8], index: 0, kind: input, shape index: {}]
  %s1 = inlined_call_operand.vmem [shape: f32[1,128], index: 1, kind: output, shape index: {}]
  $region1: #{tile.19} parent=0
    #allocation0 [shape = 'u8[4096]{0}', space=vmem, size = 0x1000, scoped, tag = 'scoped mem for output reshape']
    %v2 = vld [vmem:[%s0] sm:$0x1]
    %vm3 = vcmask 64512
    %4 = vst.msk [vmem:[#allocation0] sm:$0x1] %vm3, %v2
    %s5 = scalar_lea.vmem %s0, 15
    %v6 = vld [vmem:[%s5] sm:$0x1]
    %7 = vrot.lane.b32.xlu0 %v6, 120
    %v8 = vpop.permute.xlu0 %7
    %vm9 = vcmask 1048512
    %10 = vst.msk [vmem:[#allocation0] sm:$0x1] %vm9, %v8
    %s11 = scalar_lea.vmem %s0, 14
    %v12 = vld [vmem:[%s11] sm:$0x1]
    %13 = vrot.lane.b32.xlu0 %v12, 112
    %v14 = vpop.permute.xlu0 %13
    %vm15 = vcmask 982912
    %16 = vst.msk [vmem:[#allocation0] sm:$0x1] %vm15, %v14
    %s17 = scalar_lea.vmem %s0, 13
    %v18 = vld [vmem:[%s17] sm:$0x1]
    %19 = vrot.lane.b32.xlu0 %v18, 104
    %v20 = vpop.permute.xlu0 %19
    %vm21 = vcmask 917312
    %22 = vst.msk [vmem:[#allocation0] sm:$0x1] %vm21, %v20
    %s23 = scalar_lea.vmem %s0, 12
    %v24 = vld [vmem:[%s23] sm:$0x1]
    %25 = vrot.lane.b32.xlu0 %v24, 96
    %v26 = vpop.permute.xlu0 %25
    %vm27 = vcmask 851712
    %28 = vst.msk [vmem:[#allocation0] sm:$0x1] %vm27, %v26
    %s29 = scalar_lea.vmem %s0, 11
    %v30 = vld [vmem:[%s29] sm:$0x1]
    %31 = vrot.lane.b32.xlu0 %v30, 88
    %v32 = vpop.permute.xlu0 %31
    %vm33 = vcmask 786112
    %34 = vst.msk [vmem:[#allocation0] sm:$0x1] %vm33, %v32
    %s35 = scalar_lea.vmem %s0, 10
    %v36 = vld [vmem:[%s35] sm:$0x1]
    %37 = vrot.lane.b32.xlu0 %v36, 80
    %v38 = vpop.permute.xlu0 %37
    %vm39 = vcmask 720512
    %40 = vst.msk [vmem:[#allocation0] sm:$0x1] %vm39, %v38
    %s41 = scalar_lea.vmem %s0, 9
    %v42 = vld [vmem:[%s41] sm:$0x1]
    %43 = vrot.lane.b32.xlu0 %v42, 72
    %v44 = vpop.permute.xlu0 %43
    %vm45 = vcmask 654912
    %46 = vst.msk [vmem:[#allocation0] sm:$0x1] %vm45, %v44
    %s47 = scalar_lea.vmem %s0, 8
    %v48 = vld [vmem:[%s47] sm:$0x1]
    %49 = vrot.lane.b32.xlu0 %v48, 64
    %v50 = vpop.permute.xlu0 %49
    %vm51 = vcmask 589312
    %52 = vst.msk [vmem:[#allocation0] sm:$0x1] %vm51, %v50
    %s53 = scalar_lea.vmem %s0, 7
    %v54 = vld [vmem:[%s53] sm:$0x1]
    %55 = vrot.lane.b32.xlu0 %v54, 56
    %v56 = vpop.permute.xlu0 %55
    %vm57 = vcmask 523712
    %58 = vst.msk [vmem:[#allocation0] sm:$0x1] %vm57, %v56
    %s59 = scalar_lea.vmem %s0, 6
    %v60 = vld [vmem:[%s59] sm:$0x1]
    %61 = vrot.lane.b32.xlu0 %v60, 48
    %v62 = vpop.permute.xlu0 %61
    %vm63 = vcmask 458112
    %64 = vst.msk [vmem:[#allocation0] sm:$0x1] %vm63, %v62
    %s65 = scalar_lea.vmem %s0, 5
    %v66 = vld [vmem:[%s65] sm:$0x1]
    %67 = vrot.lane.b32.xlu0 %v66, 40
    %v68 = vpop.permute.xlu0 %67
    %vm69 = vcmask 392512
    %70 = vst.msk [vmem:[#allocation0] sm:$0x1] %vm69, %v68
    %s71 = scalar_lea.vmem %s0, 4
    %v72 = vld [vmem:[%s71] sm:$0x1]
    %73 = vrot.lane.b32.xlu0 %v72, 32
    %v74 = vpop.permute.xlu0 %73
    %vm75 = vcmask 326912
    %76 = vst.msk [vmem:[#allocation0] sm:$0x1] %vm75, %v74
    %s77 = scalar_lea.vmem %s0, 3
    %v78 = vld [vmem:[%s77] sm:$0x1]
    %79 = vrot.lane.b32.xlu0 %v78, 24
    %v80 = vpop.permute.xlu0 %79
    %vm81 = vcmask 261312
    %82 = vst.msk [vmem:[#allocation0] sm:$0x1] %vm81, %v80
    %s83 = scalar_lea.vmem %s0, 2
    %v84 = vld [vmem:[%s83] sm:$0x1]
    %85 = vrot.lane.b32.xlu0 %v84, 16
    %v86 = vpop.permute.xlu0 %85
    %vm87 = vcmask 195712
    %88 = vst.msk [vmem:[#allocation0] sm:$0x1] %vm87, %v86
    %s89 = scalar_lea.vmem %s0, 1
    %v90 = vld [vmem:[%s89] sm:$0x1]
    %91 = vrot.lane.b32.xlu0 %v90, 8
    %v92 = vpop.permute.xlu0 %91
    %vm93 = vcmask 130112
    %94 = vst.msk [vmem:[#allocation0] sm:$0x1] %vm93, %v92
    %s96 = sshllo.u32 0, 1
    %v98 = vld [vmem:[#allocation0] sm:%s96]
    %s99 = sshllo.u32 0, 1
    %100 = vst [vmem:[%s1] sm:%s99] %v98

// kernel: double_conv.5
$region0: #{double_conv.5}
  #allocation0 [shape = 'u32[]', space=smem, size = 0x4, offset = 0x4, fixed_abs, tag = 'smem constant byte address 0x4 - core index']
  #allocation1 [shape = 'u32[144,128]{1,0:T(1,128)}', space=vmem, size = 0x12000, scoped, tag = 'internal scratch']
  %s0 = inlined_call_operand.vmem [shape: f32[2,16,128], index: 0, kind: input, shape index: {}]
  %s1 = inlined_call_operand.vmem [shape: f32[1,128], index: 1, kind: input, shape index: {}]
  %s2 = inlined_call_operand.vmem [shape: f32[1,128], index: 2, kind: input, shape index: {}]
  %s3 = inlined_call_operand.vmem [shape: f32[2,16,128], index: 3, kind: output, shape index: {}]
  %s4 = sld [smem:[#allocation0]]
  $region45: #{double_conv.5} parent=0
    _
  %s6 = ssub.s32 1, %s4
  %s7 = scalar_select 0, %s6, %s4
  loop: start=0, step=1, limit=4
  $region2: #{double_conv.5} parent=0 // loop_pre_header
    _
  $region3: #{double_conv.5} parent=0 // loop_header
    %s9 = sphi 0, %s13
    %p10 = scmp.ge.s32.totalorder %s9, 4
    %s19 = sphi 0, %s21
    %s22 = sphi 0, %s19
    %s23 = sphi 0, %s22
    %s39 = sphi 0, %s23
    %s43 = sphi 0, %s43
    %s45 = sphi 0, %s43
    %s46 = sphi 0, %s45
    %s60 = sphi 0, %s46
    %s64 = sphi 0, %s64
    %s66 = sphi 0, %s64
    %s67 = sphi 0, %s66
    %s81 = sphi 0, %s67
    %s87 = sphi 0, %s89
    %s90 = sphi 0, %s87
    %s91 = sphi 0, %s90
    %s107 = sphi 0, %s91
  $region4: #{double_conv.5} parent=0 // loop_header_branch
    %12 = sbr.rel (%p10) target = $region8
  $region5: #{double_conv.5} parent=0 // loop_body
    %s14 = ssub.s32 %s9, 1
    %s15 = ssub.s32 %s9, 2
    %s16 = sadd.s32 %s9, 1
    %s17 = ssub.s32 %s9, %s16
    %p18 = scmp.eq.s32.totalorder %s17, 0
    %s20 = sadd.s32 %s19, 1
    %s21 = scalar_select %p18, %s19, %s20
    %p24 = pneg %p18
    %p25 = scmp.eq.s32.totalorder %s9, 1
    %p26 = por %p24, %p25
    %p27 = scmp.ne.s32.totalorder %s19, %s22
    %p28 = scmp.eq.s32.totalorder %s9, 0
    %p29 = por %p27, %p28
    %p30 = scmp.ne.s32.totalorder %s19, %s22
    %p31 = scmp.eq.s32.totalorder %s14, 1
    %p32 = por %p30, %p31
    %p33 = scmp.ne.s32.totalorder %s22, %s23
    %p34 = scmp.eq.s32.totalorder %s14, 0
    %p35 = por %p33, %p34
    %p36 = scmp.ne.s32.totalorder %s22, %s23
    %p37 = scmp.eq.s32.totalorder %s15, 1
    %p38 = por %p36, %p37
    %p40 = scmp.ne.s32.totalorder %s23, %s39
    %p41 = scmp.eq.s32.totalorder %s15, 0
    %p42 = por %p40, %p41
    %s44 = sadd.s32 %s43, 1
    %p47 = scmp.eq.s32.totalorder %s9, 1
    %p48 = scmp.ne.s32.totalorder %s43, %s45
    %p49 = scmp.eq.s32.totalorder %s9, 0
    %p50 = por %p48, %p49
    %p51 = scmp.ne.s32.totalorder %s43, %s45
    %p52 = scmp.eq.s32.totalorder %s14, 1
    %p53 = por %p51, %p52
    %p54 = scmp.ne.s32.totalorder %s45, %s46
    %p55 = scmp.eq.s32.totalorder %s14, 0
    %p56 = por %p54, %p55
    %p57 = scmp.ne.s32.totalorder %s45, %s46
    %p58 = scmp.eq.s32.totalorder %s15, 1
    %p59 = por %p57, %p58
    %p61 = scmp.ne.s32.totalorder %s46, %s60
    %p62 = scmp.eq.s32.totalorder %s15, 0
    %p63 = por %p61, %p62
    %s65 = sadd.s32 %s64, 1
    %p68 = scmp.eq.s32.totalorder %s9, 1
    %p69 = scmp.ne.s32.totalorder %s64, %s66
    %p70 = scmp.eq.s32.totalorder %s9, 0
    %p71 = por %p69, %p70
    %p72 = scmp.ne.s32.totalorder %s64, %s66
    %p73 = scmp.eq.s32.totalorder %s14, 1
    %p74 = por %p72, %p73
    %p75 = scmp.ne.s32.totalorder %s66, %s67
    %p76 = scmp.eq.s32.totalorder %s14, 0
    %p77 = por %p75, %p76
    %p78 = scmp.ne.s32.totalorder %s66, %s67
    %p79 = scmp.eq.s32.totalorder %s15, 1
    %p80 = por %p78, %p79
    %p82 = scmp.ne.s32.totalorder %s67, %s81
    %p83 = scmp.eq.s32.totalorder %s15, 0
    %p84 = por %p82, %p83
    %s85 = ssub.s32 %s9, %s16
    %p86 = scmp.eq.s32.totalorder %s85, 0
    %s88 = sadd.s32 %s87, 1
    %s89 = scalar_select %p86, %s87, %s88
    %p92 = pneg %p86
    %p93 = scmp.eq.s32.totalorder %s9, 1
    %p94 = por %p92, %p93
    %p95 = scmp.ne.s32.totalorder %s87, %s90
    %p96 = scmp.eq.s32.totalorder %s9, 0
    %p97 = por %p95, %p96
    %p98 = scmp.ne.s32.totalorder %s87, %s90
    %p99 = scmp.eq.s32.totalorder %s14, 1
    %p100 = por %p98, %p99
    %p101 = scmp.ne.s32.totalorder %s90, %s91
    %p102 = scmp.eq.s32.totalorder %s14, 0
    %p103 = por %p101, %p102
    %p104 = scmp.ne.s32.totalorder %s90, %s91
    %p105 = scmp.eq.s32.totalorder %s15, 1
    %p106 = por %p104, %p105
    %p108 = scmp.ne.s32.totalorder %s91, %s107
    %p109 = scmp.eq.s32.totalorder %s15, 0
    %p110 = por %p108, %p109
    %p111 = scmp.le.s32.totalorder 1, %s9
    %p112 = scmp.lt.s32.totalorder %s9, 3
    %p113 = pnand %p111, %p112
    %p114 = pneg %p113
    // Predicated region
    $region9: #{double_conv.5} parent=5 // pred_check
      _
    $region10: #{double_conv.5} parent=5 // pred_check_branch
      %116 = sbr.rel (%p113) target = $region12
    $region11: #{double_conv.5} parent=5 // pred_region
      %s117 = ssub.s32 %s9, 1
      // Predicated region
      $region13: #{double_conv.5} parent=11 // pred_check
        %p118 = pneg %p56
      $region14: #{double_conv.5} parent=11 // pred_check_branch
        %120 = sbr.rel (%p118) target = $region16
      $region15: #{double_conv.5} parent=11 // pred_region
        _
      $region16: #{double_conv.5} parent=11 // pred_fallthru
        _
      // Predicated region
      $region17: #{double_conv.5} parent=11 // pred_check
        %p121 = pneg %p77
      $region18: #{double_conv.5} parent=11 // pred_check_branch
        %123 = sbr.rel (%p121) target = $region20
      $region19: #{double_conv.5} parent=11 // pred_region
        _
      $region20: #{double_conv.5} parent=11 // pred_fallthru
        _
    $region12: #{double_conv.5} parent=5 // pred_fallthru
      _
    %p124 = scmp.lt.s32.totalorder %s9, 2
    // Predicated region
    $region21: #{double_conv.5} parent=5 // pred_check
      %p125 = pneg %p124
    $region22: #{double_conv.5} parent=5 // pred_check_branch
      %127 = sbr.rel (%p125) target = $region24
    $region23: #{double_conv.5} parent=5 // pred_region
      // Predicated region
      $region25: #{double_conv.5} parent=23 // pred_check
        %p128 = pneg %p29
      $region26: #{double_conv.5} parent=23 // pred_check_branch
        %130 = sbr.rel (%p128) target = $region28
      $region27: #{double_conv.5} parent=23 // pred_region
        %p131 = scmp.lt.s32.totalorder %s9, 1
        %s132 = scalar_select %p131, %s9, 1
        %s133 = smul.addr %s132, 2
        %s134 = smul.addr %s133, 8
        %s135 = scalar_lea.vmem %s0, %s134
      $region28: #{double_conv.5} parent=23 // pred_fallthru
        _
    $region24: #{double_conv.5} parent=5 // pred_fallthru
      _
    %p136 = scmp.le.s32.totalorder 1, %s9
    %p137 = scmp.lt.s32.totalorder %s9, 3
    %p138 = pnand %p136, %p137
    %p139 = pneg %p138
    // Predicated region
    $region29: #{double_conv.5} parent=5 // pred_check
      _
    $region30: #{double_conv.5} parent=5 // pred_check_branch
      %141 = sbr.rel (%p138) target = $region32
    $region31: #{double_conv.5} parent=5 // pred_region
      %s142 = ssub.s32 %s9, 1
      %p143 = scmp.lt.s32.totalorder %s14, 1
      %s144 = scalar_select %p143, %s14, 1
      %s145 = smul.addr %s144, 2
      %s146 = smul.addr %s145, 8
      %s147 = scalar_lea.vmem %s0, %s146
      %p148 = pneg %p35
      %p149 = pneg %p32
      %p150 = pneg %p56
      %p151 = pneg %p53
      %p152 = pneg %p77
      %p153 = pneg %p74
      %p154 = pneg %p103
      %p155 = pneg %p100
      %p156 = scmp.lt.s32.totalorder %s14, 1
      %s157 = scalar_select %p156, %s14, 1
      %s158 = smul.addr %s157, 2
      %s159 = smul.addr %s158, 8
      %s160 = scalar_lea.vmem %s3, %s159
      %p161 = scmp.lt.s32.totalorder %s14, 1
      %s162 = scalar_select %p161, %s14, 1
      %s163 = smul.addr %s162, 2
      %s164 = smul.addr %s163, 8
      %s165 = scalar_lea.vmem %s0, %s164
      %p166 = scmp.lt.s32.totalorder %s14, 1
      %s167 = scalar_select %p166, %s14, 1
      %s168 = smul.addr %s167, 2
      %s169 = smul.addr %s168, 8
      %s170 = scalar_lea.vmem %s3, %s169
      %v171 = vld [vmem:[%s165] sm:$0xff]
      %v172 = vld [vmem:[%s165 + $0x8] sm:$0xff]
      %v173 = vld [vmem:[%s1] sm:$0x1]
      %v175 = vlaneseq
      %v176 = vshrl.u32 %v175, 7
      %v177 = vsub.s32 0, %v176
      %v178 = vrot.slane %v173, %v177
      %v180 = vmul.f32 %v171, %v178
      %v181 = vmul.f32 %v172, %v178
      %v182 = vld [vmem:[%s2] sm:$0x1]
      %v184 = vlaneseq
      %v185 = vshrl.u32 %v184, 7
      %v186 = vsub.s32 0, %v185
      %v187 = vrot.slane %v182, %v186
      %v189 = vadd.f32 %v180, %v187
      %v190 = vadd.f32 %v181, %v187
      %v191 = vmax.f32 %v189, 0.0
      %v192 = vmax.f32 %v190, 0.0
      %193 = vst [vmem:[%s170] sm:$0xff] %v191
      %194 = vst [vmem:[%s170 + $0x8] sm:$0xff] %v192
      %p195 = scmp.lt.s32.totalorder %s14, 1
      %s196 = scalar_select %p195, %s14, 1
      %s197 = smul.addr %s196, 2
      %s198 = smul.addr %s197, 8
      %s199 = scalar_lea.vmem %s3, %s198
      // Predicated region
      $region33: #{double_conv.5} parent=31 // pred_check
        %p200 = pneg %p100
      $region34: #{double_conv.5} parent=31 // pred_check_branch
        %202 = sbr.rel (%p200) target = $region36
      $region35: #{double_conv.5} parent=31 // pred_region
        _
      $region36: #{double_conv.5} parent=31 // pred_fallthru
        _
    $region32: #{double_conv.5} parent=5 // pred_fallthru
      _
    %p203 = scmp.le.s32.totalorder 2, %s9
    // Predicated region
    $region37: #{double_conv.5} parent=5 // pred_check
      %p204 = pneg %p203
    $region38: #{double_conv.5} parent=5 // pred_check_branch
      %206 = sbr.rel (%p204) target = $region40
    $region39: #{double_conv.5} parent=5 // pred_region
      %s207 = ssub.s32 %s9, 2
      // Predicated region
      $region41: #{double_conv.5} parent=39 // pred_check
        %p208 = pneg %p106
      $region42: #{double_conv.5} parent=39 // pred_check_branch
        %210 = sbr.rel (%p208) target = $region44
      $region43: #{double_conv.5} parent=39 // pred_region
        %p211 = scmp.lt.s32.totalorder %s15, 1
        %s212 = scalar_select %p211, %s15, 1
        %s213 = smul.addr %s212, 2
        %s214 = smul.addr %s213, 8
        %s215 = scalar_lea.vmem %s3, %s214
      $region44: #{double_conv.5} parent=39 // pred_fallthru
        _
    $region40: #{double_conv.5} parent=5 // pred_fallthru
      _
  $region6: #{double_conv.5} parent=0 // loop_footer
    %s13 = sadd.s32 1, %s9
  $region7: #{double_conv.5} parent=0 // loop_footer_branch
    %8 = sbr.rel target = $region3
  $region8: #{double_conv.5} parent=0 // loop_exit
    _

// kernel: double_conv.3
$region0: #{double_conv.3}
  #allocation0 [shape = 'u32[]', space=smem, size = 0x4, offset = 0x4, fixed_abs, tag = 'smem constant byte address 0x4 - core index']
  #allocation1 [shape = 'u32[144,128]{1,0:T(1,128)}', space=vmem, size = 0x12000, scoped, tag = 'internal scratch']
  #allocation2 [shape = 'f32[18,18,4]{2,1,0:T(8,128)}', space=vmem, size = 0x36000, scoped, tag = 'scratch operand']
  #allocation3 [shape = 'f32[256,8]{1,0:T(8,128)}', space=vmem, size = 0x20000, scoped, tag = 'scratch operand']
  %s0 = inlined_call_operand.vmem [shape: f32[2,16,16,4], index: 0, kind: input, shape index: {}]
  %s1 = inlined_call_operand.vmem [shape: f32[36,8], index: 1, kind: input, shape index: {}]
  %s2 = inlined_call_operand.vmem [shape: f32[2,16,16,8], index: 2, kind: output, shape index: {0}]
  %s3 = inlined_call_operand.vmem [shape: f32[2,2,8], index: 3, kind: output, shape index: {1}]
  %4 = xla_tuple %s2, %s3
  %s5 = sld [smem:[#allocation0]]
  $region49: #{double_conv.3} parent=0
    _
  %s7 = ssub.s32 1, %s5
  %s8 = scalar_select 0, %s7, %s5
  loop: start=0, step=1, limit=4
  $region2: #{double_conv.3} parent=0 // loop_pre_header
    _
  $region3: #{double_conv.3} parent=0 // loop_header
    %s10 = sphi 0, %s14
    %p11 = scmp.ge.s32.totalorder %s10, 4
    %s20 = sphi 0, %s22
    %s23 = sphi 0, %s20
    %s24 = sphi 0, %s23
    %s40 = sphi 0, %s24
    %s44 = sphi 0, %s44
    %s46 = sphi 0, %s44
    %s47 = sphi 0, %s46
    %s61 = sphi 0, %s47
    %s67 = sphi 0, %s69
    %s70 = sphi 0, %s67
    %s71 = sphi 0, %s70
    %s87 = sphi 0, %s71
    %s93 = sphi 0, %s95
    %s96 = sphi 0, %s93
    %s97 = sphi 0, %s96
    %s113 = sphi 0, %s97
  $region4: #{double_conv.3} parent=0 // loop_header_branch
    %13 = sbr.rel (%p11) target = $region8
  $region5: #{double_conv.3} parent=0 // loop_body
    %s15 = ssub.s32 %s10, 1
    %s16 = ssub.s32 %s10, 2
    %s17 = sadd.s32 %s10, 1
    %s18 = ssub.s32 %s10, %s17
    %p19 = scmp.eq.s32.totalorder %s18, 0
    %s21 = sadd.s32 %s20, 1
    %s22 = scalar_select %p19, %s20, %s21
    %p25 = pneg %p19
    %p26 = scmp.eq.s32.totalorder %s10, 1
    %p27 = por %p25, %p26
    %p28 = scmp.ne.s32.totalorder %s20, %s23
    %p29 = scmp.eq.s32.totalorder %s10, 0
    %p30 = por %p28, %p29
    %p31 = scmp.ne.s32.totalorder %s20, %s23
    %p32 = scmp.eq.s32.totalorder %s15, 1
    %p33 = por %p31, %p32
    %p34 = scmp.ne.s32.totalorder %s23, %s24
    %p35 = scmp.eq.s32.totalorder %s15, 0
    %p36 = por %p34, %p35
    %p37 = scmp.ne.s32.totalorder %s23, %s24
    %p38 = scmp.eq.s32.totalorder %s16, 1
    %p39 = por %p37, %p38
    %p41 = scmp.ne.s32.totalorder %s24, %s40
    %p42 = scmp.eq.s32.totalorder %s16, 0
    %p43 = por %p41, %p42
    %s45 = sadd.s32 %s44, 1
    %p48 = scmp.eq.s32.totalorder %s10, 1
    %p49 = scmp.ne.s32.totalorder %s44, %s46
    %p50 = scmp.eq.s32.totalorder %s10, 0
    %p51 = por %p49, %p50
    %p52 = scmp.ne.s32.totalorder %s44, %s46
    %p53 = scmp.eq.s32.totalorder %s15, 1
    %p54 = por %p52, %p53
    %p55 = scmp.ne.s32.totalorder %s46, %s47
    %p56 = scmp.eq.s32.totalorder %s15, 0
    %p57 = por %p55, %p56
    %p58 = scmp.ne.s32.totalorder %s46, %s47
    %p59 = scmp.eq.s32.totalorder %s16, 1
    %p60 = por %p58, %p59
    %p62 = scmp.ne.s32.totalorder %s47, %s61
    %p63 = scmp.eq.s32.totalorder %s16, 0
    %p64 = por %p62, %p63
    %s65 = ssub.s32 %s10, %s17
    %p66 = scmp.eq.s32.totalorder %s65, 0
    %s68 = sadd.s32 %s67, 1
    %s69 = scalar_select %p66, %s67, %s68
    %p72 = pneg %p66
    %p73 = scmp.eq.s32.totalorder %s10, 1
    %p74 = por %p72, %p73
    %p75 = scmp.ne.s32.totalorder %s67, %s70
    %p76 = scmp.eq.s32.totalorder %s10, 0
    %p77 = por %p75, %p76
    %p78 = scmp.ne.s32.totalorder %s67, %s70
    %p79 = scmp.eq.s32.totalorder %s15, 1
    %p80 = por %p78, %p79
    %p81 = scmp.ne.s32.totalorder %s70, %s71
    %p82 = scmp.eq.s32.totalorder %s15, 0
    %p83 = por %p81, %p82
    %p84 = scmp.ne.s32.totalorder %s70, %s71
    %p85 = scmp.eq.s32.totalorder %s16, 1
    %p86 = por %p84, %p85
    %p88 = scmp.ne.s32.totalorder %s71, %s87
    %p89 = scmp.eq.s32.totalorder %s16, 0
    %p90 = por %p88, %p89
    %s91 = ssub.s32 %s10, %s17
    %p92 = scmp.eq.s32.totalorder %s91, 0
    %s94 = sadd.s32 %s93, 1
    %s95 = scalar_select %p92, %s93, %s94
    %p98 = pneg %p92
    %p99 = scmp.eq.s32.totalorder %s10, 1
    %p100 = por %p98, %p99
    %p101 = scmp.ne.s32.totalorder %s93, %s96
    %p102 = scmp.eq.s32.totalorder %s10, 0
    %p103 = por %p101, %p102
    %p104 = scmp.ne.s32.totalorder %s93, %s96
    %p105 = scmp.eq.s32.totalorder %s15, 1
    %p106 = por %p104, %p105
    %p107 = scmp.ne.s32.totalorder %s96, %s97
    %p108 = scmp.eq.s32.totalorder %s15, 0
    %p109 = por %p107, %p108
    %p110 = scmp.ne.s32.totalorder %s96, %s97
    %p111 = scmp.eq.s32.totalorder %s16, 1
    %p112 = por %p110, %p111
    %p114 = scmp.ne.s32.totalorder %s97, %s113
    %p115 = scmp.eq.s32.totalorder %s16, 0
    %p116 = por %p114, %p115
    %p117 = scmp.le.s32.totalorder 1, %s10
    %p118 = scmp.lt.s32.totalorder %s10, 3
    %p119 = pnand %p117, %p118
    %p120 = pneg %p119
    // Predicated region
    $region9: #{double_conv.3} parent=5 // pred_check
      _
    $region10: #{double_conv.3} parent=5 // pred_check_branch
      %122 = sbr.rel (%p119) target = $region12
    $region11: #{double_conv.3} parent=5 // pred_region
      %s123 = ssub.s32 %s10, 1
      // Predicated region
      $region13: #{double_conv.3} parent=11 // pred_check
        %p124 = pneg %p57
      $region14: #{double_conv.3} parent=11 // pred_check_branch
        %126 = sbr.rel (%p124) target = $region16
      $region15: #{double_conv.3} parent=11 // pred_region
        _
      $region16: #{double_conv.3} parent=11 // pred_fallthru
        _
    $region12: #{double_conv.3} parent=5 // pred_fallthru
      _
    %p127 = scmp.lt.s32.totalorder %s10, 2
    // Predicated region
    $region17: #{double_conv.3} parent=5 // pred_check
      %p128 = pneg %p127
    $region18: #{double_conv.3} parent=5 // pred_check_branch
      %130 = sbr.rel (%p128) target = $region20
    $region19: #{double_conv.3} parent=5 // pred_region
      // Predicated region
      $region21: #{double_conv.3} parent=19 // pred_check
        %p131 = pneg %p30
      $region22: #{double_conv.3} parent=19 // pred_check_branch
        %133 = sbr.rel (%p131) target = $region24
      $region23: #{double_conv.3} parent=19 // pred_region
        %p134 = scmp.lt.s32.totalorder %s10, 1
        %s135 = scalar_select %p134, %s10, 1
        %s136 = smul.addr %s135, 32
        %s137 = smul.addr %s136, 8
        %s138 = scalar_lea.vmem %s0, %s137
      $region24: #{double_conv.3} parent=19 // pred_fallthru
        _
    $region20: #{double_conv.3} parent=5 // pred_fallthru
      _
    %p139 = scmp.le.s32.totalorder 1, %s10
    %p140 = scmp.lt.s32.totalorder %s10, 3
    %p141 = pnand %p139, %p140
    %p142 = pneg %p141
    // Predicated region
    $region25: #{double_conv.3} parent=5 // pred_check
      _
    $region26: #{double_conv.3} parent=5 // pred_check_branch
      %144 = sbr.rel (%p141) target = $region28
    $region27: #{double_conv.3} parent=5 // pred_region
      %s145 = ssub.s32 %s10, 1
      %p146 = scmp.lt.s32.totalorder %s15, 1
      %s147 = scalar_select %p146, %s15, 1
      %s148 = smul.addr %s147, 32
      %s149 = smul.addr %s148, 8
      %s150 = scalar_lea.vmem %s0, %s149
      %p151 = pneg %p36
      %p152 = pneg %p33
      %p153 = pneg %p57
      %p154 = pneg %p54
      %p155 = pneg %p83
      %p156 = pneg %p80
      %p157 = scmp.lt.s32.totalorder %s15, 1
      %s158 = scalar_select %p157, %s15, 1
      %s159 = smul.addr %s158, 32
      %s160 = smul.addr %s159, 8
      %s161 = scalar_lea.vmem %s2, %s160
      %p162 = pneg %p109
      %p163 = pneg %p106
      %p164 = scmp.lt.s32.totalorder %s15, 1
      %s165 = scalar_select %p164, %s15, 1
      %s166 = smul.addr %s165, 2
      %s167 = scalar_lea.vmem %s3, %s166
      %p168 = scmp.lt.s32.totalorder %s15, 1
      %s169 = scalar_select %p168, %s15, 1
      %s170 = smul.addr %s169, 32
      %s171 = smul.addr %s170, 8
      %s172 = scalar_lea.vmem %s0, %s171
      %p173 = scmp.lt.s32.totalorder %s15, 1
      %s174 = scalar_select %p173, %s15, 1
      %s175 = smul.addr %s174, 32
      %s176 = smul.addr %s175, 8
      %s177 = scalar_lea.vmem %s2, %s176
      %p178 = scmp.lt.s32.totalorder %s15, 1
      %s179 = scalar_select %p178, %s15, 1
      %s180 = smul.addr %s179, 2
      %s181 = scalar_lea.vmem %s3, %s180
      %vm182 = vcmask 31744
      %183 = vst.msk [vmem:[#allocation2] sm:$0xff] %vm182, 0.0
      %184 = vst.msk [vmem:[#allocation2 + $0x8] sm:$0xff] %vm182, 0.0
      %vm185 = vcmask 25600
      %186 = vst.msk [vmem:[#allocation2 + $0x10] sm:$0x3] %vm185, 0.0
      %187 = vst.msk [vmem:[#allocation2 + $0x18] sm:$0xff] %vm182, 0.0
      %188 = vst.msk [vmem:[#allocation2 + $0x20] sm:$0xff] %vm182, 0.0
      %189 = vst.msk [vmem:[#allocation2 + $0x28] sm:$0x3] %vm185, 0.0
      %190 = vst.msk [vmem:[#allocation2 + $0x30] sm:$0xff] %vm182, 0.0
      %191 = vst.msk [vmem:[#allocation2 + $0x38] sm:$0xff] %vm182, 0.0
      %192 = vst.msk [vmem:[#allocation2 + $0x40] sm:$0x3] %vm185, 0.0
      %193 = vst.msk [vmem:[#allocation2 + $0x48] sm:$0xff] %vm182, 0.0
      %194 = vst.msk [vmem:[#allocation2 + $0x50] sm:$0xff] %vm182, 0.0
      %195 = vst.msk [vmem:[#allocation2 + $0x58] sm:$0x3] %vm185, 0.0
      %196 = vst.msk [vmem:[#allocation2 + $0x60] sm:$0xff] %vm182, 0.0
      %197 = vst.msk [vmem:[#allocation2 + $0x68] sm:$0xff] %vm182, 0.0
      %198 = vst.msk [vmem:[#allocation2 + $0x70] sm:$0x3] %vm185, 0.0
      %199 = vst.msk [vmem:[#allocation2 + $0x78] sm:$0xff] %vm182, 0.0
      %200 = vst.msk [vmem:[#allocation2 + $0x80] sm:$0xff] %vm182, 0.0
      %201 = vst.msk [vmem:[#allocation2 + $0x88] sm:$0x3] %vm185, 0.0
      %202 = vst.msk [vmem:[#allocation2 + $0x90] sm:$0xff] %vm182, 0.0
      %203 = vst.msk [vmem:[#allocation2 + $0x98] sm:$0xff] %vm182, 0.0
      %204 = vst.msk [vmem:[#allocation2 + $0xa0] sm:$0x3] %vm185, 0.0
      %205 = vst.msk [vmem:[#allocation2 + $0xa8] sm:$0xff] %vm182, 0.0
      %206 = vst.msk [vmem:[#allocation2 + $0xb0] sm:$0xff] %vm182, 0.0
      %207 = vst.msk [vmem:[#allocation2 + $0xb8] sm:$0x3] %vm185, 0.0
      %208 = vst.msk [vmem:[#allocation2 + $0xc0] sm:$0xff] %vm182, 0.0
      %209 = vst.msk [vmem:[#allocation2 + $0xc8] sm:$0xff] %vm182, 0.0
      %210 = vst.msk [vmem:[#allocation2 + $0xd0] sm:$0x3] %vm185, 0.0
      %211 = vst.msk [vmem:[#allocation2 + $0xd8] sm:$0xff] %vm182, 0.0
      %212 = vst.msk [vmem:[#allocation2 + $0xe0] sm:$0xff] %vm182, 0.0
      %213 = vst.msk [vmem:[#allocation2 + $0xe8] sm:$0x3] %vm185, 0.0
      %214 = vst.msk [vmem:[#allocation2 + $0xf0] sm:$0xff] %vm182, 0.0
      %215 = vst.msk [vmem:[#allocation2 + $0xf8] sm:$0xff] %vm182, 0.0
      %216 = vst.msk [vmem:[#allocation2 + $0x100] sm:$0x3] %vm185, 0.0
      %217 = vst.msk [vmem:[#allocation2 + $0x108] sm:$0xff] %vm182, 0.0
      %218 = vst.msk [vmem:[#allocation2 + $0x110] sm:$0xff] %vm182, 0.0
      %219 = vst.msk [vmem:[#allocation2 + $0x118] sm:$0x3] %vm185, 0.0
      %220 = vst.msk [vmem:[#allocation2 + $0x120] sm:$0xff] %vm182, 0.0
      %221 = vst.msk [vmem:[#allocation2 + $0x128] sm:$0xff] %vm182, 0.0
      %222 = vst.msk [vmem:[#allocation2 + $0x130] sm:$0x3] %vm185, 0.0
      %223 = vst.msk [vmem:[#allocation2 + $0x138] sm:$0xff] %vm182, 0.0
      %224 = vst.msk [vmem:[#allocation2 + $0x140] sm:$0xff] %vm182, 0.0
      %225 = vst.msk [vmem:[#allocation2 + $0x148] sm:$0x3] %vm185, 0.0
      %226 = vst.msk [vmem:[#allocation2 + $0x150] sm:$0xff] %vm182, 0.0
      %227 = vst.msk [vmem:[#allocation2 + $0x158] sm:$0xff] %vm182, 0.0
      %228 = vst.msk [vmem:[#allocation2 + $0x160] sm:$0x3] %vm185, 0.0
      %229 = vst.msk [vmem:[#allocation2 + $0x168] sm:$0xff] %vm182, 0.0
      %230 = vst.msk [vmem:[#allocation2 + $0x170] sm:$0xff] %vm182, 0.0
      %231 = vst.msk [vmem:[#allocation2 + $0x178] sm:$0x3] %vm185, 0.0
      %232 = vst.msk [vmem:[#allocation2 + $0x180] sm:$0xff] %vm182, 0.0
      %233 = vst.msk [vmem:[#allocation2 + $0x188] sm:$0xff] %vm182, 0.0
      %234 = vst.msk [vmem:[#allocation2 + $0x190] sm:$0x3] %vm185, 0.0
      %235 = vst.msk [vmem:[#allocation2 + $0x198] sm:$0xff] %vm182, 0.0
      %236 = vst.msk [vmem:[#allocation2 + $0x1a0] sm:$0xff] %vm182, 0.0
      %237 = vst.msk [vmem:[#allocation2 + $0x1a8] sm:$0x3] %vm185, 0.0
      %v238 = vld [vmem:[%s172] sm:$0xff]
      %v239 = vld [vmem:[%s172 + $0x8] sm:$0xff]
      %v240 = vld [vmem:[%s172 + $0x10] sm:$0xff]
      %v241 = vld [vmem:[%s172 + $0x18] sm:$0xff]
      %v242 = vld [vmem:[%s172 + $0x20] sm:$0xff]
      %v243 = vld [vmem:[%s172 + $0x28] sm:$0xff]
      %v244 = vld [vmem:[%s172 + $0x30] sm:$0xff]
      %v245 = vld [vmem:[%s172 + $0x38] sm:$0xff]
      %v246 = vld [vmem:[%s172 + $0x40] sm:$0xff]
      %v247 = vld [vmem:[%s172 + $0x48] sm:$0xff]
      %v248 = vld [vmem:[%s172 + $0x50] sm:$0xff]
      %v249 = vld [vmem:[%s172 + $0x58] sm:$0xff]
      %v250 = vld [vmem:[%s172 + $0x60] sm:$0xff]
      %v251 = vld [vmem:[%s172 + $0x68] sm:$0xff]
      %v252 = vld [vmem:[%s172 + $0x70] sm:$0xff]
      %v253 = vld [vmem:[%s172 + $0x78] sm:$0xff]
      %v254 = vld [vmem:[%s172 + $0x80] sm:$0xff]
      %v255 = vld [vmem:[%s172 + $0x88] sm:$0xff]
      %v256 = vld [vmem:[%s172 + $0x90] sm:$0xff]
      %v257 = vld [vmem:[%s172 + $0x98] sm:$0xff]
      %v258 = vld [vmem:[%s172 + $0xa0] sm:$0xff]
      %v259 = vld [vmem:[%s172 + $0xa8] sm:$0xff]
      %v260 = vld [vmem:[%s172 + $0xb0] sm:$0xff]
      %v261 = vld [vmem:[%s172 + $0xb8] sm:$0xff]
      %v262 = vld [vmem:[%s172 + $0xc0] sm:$0xff]
      %v263 = vld [vmem:[%s172 + $0xc8] sm:$0xff]
      %v264 = vld [vmem:[%s172 + $0xd0] sm:$0xff]
      %v265 = vld [vmem:[%s172 + $0xd8] sm:$0xff]
      %v266 = vld [vmem:[%s172 + $0xe0] sm:$0xff]
      %v267 = vld [vmem:[%s172 + $0xe8] sm:$0xff]
      %v268 = vld [vmem:[%s172 + $0xf0] sm:$0xff]
      %v269 = vld [vmem:[%s172 + $0xf8] sm:$0xff]
      %s270 = scalar_lea.vmem [#allocation2], 24
      %271 = vst.msk [vmem:[%s270 + $0x1] sm:$0xff] %vm182, %v238
      %272 = vst.msk [vmem:[%s270 + $0x9] sm:$0xff] %vm182, %v239
      %273 = vst.msk [vmem:[%s270 + $0x19] sm:$0xff] %vm182, %v240
      %274 = vst.msk [vmem:[%s270 + $0x21] sm:$0xff] %vm182, %v241
      %275 = vst.msk [vmem:[%s270 + $0x31] sm:$0xff] %vm182, %v242
      %276 = vst.msk [vmem:[%s270 + $0x39] sm:$0xff] %vm182, %v243
      %277 = vst.msk [vmem:[%s270 + $0x49] sm:$0xff] %vm182, %v244
      %278 = vst.msk [vmem:[%s270 + $0x51] sm:$0xff] %vm182, %v245
      %279 = vst.msk [vmem:[%s270 + $0x61] sm:$0xff] %vm182, %v246
      %280 = vst.msk [vmem:[%s270 + $0x69] sm:$0xff] %vm182, %v247
      %281 = vst.msk [vmem:[%s270 + $0x79] sm:$0xff] %vm182, %v248
      %282 = vst.msk [vmem:[%s270 + $0x81] sm:$0xff] %vm182, %v249
      %283 = vst.msk [vmem:[%s270 + $0x91] sm:$0xff] %vm182, %v250
      %284 = vst.msk [vmem:[%s270 + $0x99] sm:$0xff] %vm182, %v251
      %285 = vst.msk [vmem:[%s270 + $0xa9] sm:$0xff] %vm182, %v252
      %286 = vst.msk [vmem:[%s270 + $0xb1] sm:$0xff] %vm182, %v253
      %287 = vst.msk [vmem:[%s270 + $0xc1] sm:$0xff] %vm182, %v254
      %288 = vst.msk [vmem:[%s270 + $0xc9] sm:$0xff] %vm182, %v255
      %289 = vst.msk [vmem:[%s270 + $0xd9] sm:$0xff] %vm182, %v256
      %290 = vst.msk [vmem:[%s270 + $0xe1] sm:$0xff] %vm182, %v257
      %291 = vst.msk [vmem:[%s270 + $0xf1] sm:$0xff] %vm182, %v258
      %292 = vst.msk [vmem:[%s270 + $0xf9] sm:$0xff] %vm182, %v259
      %293 = vst.msk [vmem:[%s270 + $0x109] sm:$0xff] %vm182, %v260
      %294 = vst.msk [vmem:[%s270 + $0x111] sm:$0xff] %vm182, %v261
      %295 = vst.msk [vmem:[%s270 + $0x121] sm:$0xff] %vm182, %v262
      %296 = vst.msk [vmem:[%s270 + $0x129] sm:$0xff] %vm182, %v263
      %297 = vst.msk [vmem:[%s270 + $0x139] sm:$0xff] %vm182, %v264
      %298 = vst.msk [vmem:[%s270 + $0x141] sm:$0xff] %vm182, %v265
      %299 = vst.msk [vmem:[%s270 + $0x151] sm:$0xff] %vm182, %v266
      %300 = vst.msk [vmem:[%s270 + $0x159] sm:$0xff] %vm182, %v267
      %301 = vst.msk [vmem:[%s270 + $0x169] sm:$0xff] %vm182, %v268
      %302 = vst.msk [vmem:[%s270 + $0x171] sm:$0xff] %vm182, %v269
      %vm303 = vcmask 64512
      %304 = vst.msk [vmem:[#allocation3] sm:$0xff] %vm303, 0.0
      %305 = vst.msk [vmem:[#allocation3 + $0x8] sm:$0xff] %vm303, 0.0
      %306 = vst.msk [vmem:[#allocation3 + $0x10] sm:$0xff] %vm303, 0.0
      %307 = vst.msk [vmem:[#allocation3 + $0x18] sm:$0xff] %vm303, 0.0
      %308 = vst.msk [vmem:[#allocation3 + $0x20] sm:$0xff] %vm303, 0.0
      %309 = vst.msk [vmem:[#allocation3 + $0x28] sm:$0xff] %vm303, 0.0
      %310 = vst.msk [vmem:[#allocation3 + $0x30] sm:$0xff] %vm303, 0.0
      %311 = vst.msk [vmem:[#allocation3 + $0x38] sm:$0xff] %vm303, 0.0
      %312 = vst.msk [vmem:[#allocation3 + $0x40] sm:$0xff] %vm303, 0.0
      %313 = vst.msk [vmem:[#allocation3 + $0x48] sm:$0xff] %vm303, 0.0
      %314 = vst.msk [vmem:[#allocation3 + $0x50] sm:$0xff] %vm303, 0.0
      %315 = vst.msk [vmem:[#allocation3 + $0x58] sm:$0xff] %vm303, 0.0
      %316 = vst.msk [vmem:[#allocation3 + $0x60] sm:$0xff] %vm303, 0.0
      %317 = vst.msk [vmem:[#allocation3 + $0x68] sm:$0xff] %vm303, 0.0
      %318 = vst.msk [vmem:[#allocation3 + $0x70] sm:$0xff] %vm303, 0.0
      %319 = vst.msk [vmem:[#allocation3 + $0x78] sm:$0xff] %vm303, 0.0
      %320 = vst.msk [vmem:[#allocation3 + $0x80] sm:$0xff] %vm303, 0.0
      %321 = vst.msk [vmem:[#allocation3 + $0x88] sm:$0xff] %vm303, 0.0
      %322 = vst.msk [vmem:[#allocation3 + $0x90] sm:$0xff] %vm303, 0.0
      %323 = vst.msk [vmem:[#allocation3 + $0x98] sm:$0xff] %vm303, 0.0
      %324 = vst.msk [vmem:[#allocation3 + $0xa0] sm:$0xff] %vm303, 0.0
      %325 = vst.msk [vmem:[#allocation3 + $0xa8] sm:$0xff] %vm303, 0.0
      %326 = vst.msk [vmem:[#allocation3 + $0xb0] sm:$0xff] %vm303, 0.0
      %327 = vst.msk [vmem:[#allocation3 + $0xb8] sm:$0xff] %vm303, 0.0
      %328 = vst.msk [vmem:[#allocation3 + $0xc0] sm:$0xff] %vm303, 0.0
      %329 = vst.msk [vmem:[#allocation3 + $0xc8] sm:$0xff] %vm303, 0.0
      %330 = vst.msk [vmem:[#allocation3 + $0xd0] sm:$0xff] %vm303, 0.0
      %331 = vst.msk [vmem:[#allocation3 + $0xd8] sm:$0xff] %vm303, 0.0
      %332 = vst.msk [vmem:[#allocation3 + $0xe0] sm:$0xff] %vm303, 0.0
      %333 = vst.msk [vmem:[#allocation3 + $0xe8] sm:$0xff] %vm303, 0.0
      %334 = vst.msk [vmem:[#allocation3 + $0xf0] sm:$0xff] %vm303, 0.0
      %335 = vst.msk [vmem:[#allocation3 + $0xf8] sm:$0xff] %vm303, 0.0
      %v336 = vld [vmem:[#allocation2] sm:$0xff]
      %v337 = vld [vmem:[#allocation2 + $0x8] sm:$0xff]
      %v338 = vld [vmem:[#allocation2 + $0x18] sm:$0xff]
      %v339 = vld [vmem:[#allocation2 + $0x20] sm:$0xff]
      %v340 = vld [vmem:[#allocation2 + $0x30] sm:$0xff]
      %v341 = vld [vmem:[#allocation2 + $0x38] sm:$0xff]
      %v342 = vld [vmem:[#allocation2 + $0x48] sm:$0xff]
      %v343 = vld [vmem:[#allocation2 + $0x50] sm:$0xff]
      %v344 = vld [vmem:[#allocation2 + $0x60] sm:$0xff]
      %v345 = vld [vmem:[#allocation2 + $0x68] sm:$0xff]
      %v346 = vld [vmem:[#allocation2 + $0x78] sm:$0xff]
      %v347 = vld [vmem:[#allocation2 + $0x80] sm:$0xff]
      %v348 = vld [vmem:[#allocation2 + $0x90] sm:$0xff]
      %v349 = vld [vmem:[#allocation2 + $0x98] sm:$0xff]
      %v350 = vld [vmem:[#allocation2 + $0xa8] sm:$0xff]
      %v351 = vld [vmem:[#allocation2 + $0xb0] sm:$0xff]
      %v352 = vld [vmem:[#allocation2 + $0xc0] sm:$0xff]
      %v353 = vld [vmem:[#allocation2 + $0xc8] sm:$0xff]
      %v354 = vld [vmem:[#allocation2 + $0xd8] sm:$0xff]
      %v355 = vld [vmem:[#allocation2 + $0xe0] sm:$0xff]
      %v356 = vld [vmem:[#allocation2 + $0xf0] sm:$0xff]
      %v357 = vld [vmem:[#allocation2 + $0xf8] sm:$0xff]
      %v358 = vld [vmem:[#allocation2 + $0x108] sm:$0xff]
      %v359 = vld [vmem:[#allocation2 + $0x110] sm:$0xff]
      %v360 = vld [vmem:[#allocation2 + $0x120] sm:$0xff]
      %v361 = vld [vmem:[#allocation2 + $0x128] sm:$0xff]
      %v362 = vld [vmem:[#allocation2 + $0x138] sm:$0xff]
      %v363 = vld [vmem:[#allocation2 + $0x140] sm:$0xff]
      %v364 = vld [vmem:[#allocation2 + $0x150] sm:$0xff]
      %v365 = vld [vmem:[#allocation2 + $0x158] sm:$0xff]
      %v366 = vld [vmem:[#allocation2 + $0x168] sm:$0xff]
      %v367 = vld [vmem:[#allocation2 + $0x170] sm:$0xff]
      %v368 = vld [vmem:[%s1] sm:$0xf]
      %v369 = vld [vmem:[#allocation3] sm:$0xff]
      %v370 = vld [vmem:[#allocation3 + $0x8] sm:$0xff]
      %v371 = vld [vmem:[#allocation3 + $0x10] sm:$0xff]
      %v372 = vld [vmem:[#allocation3 + $0x18] sm:$0xff]
      %v373 = vld [vmem:[#allocation3 + $0x20] sm:$0xff]
      %v374 = vld [vmem:[#allocation3 + $0x28] sm:$0xff]
      %v375 = vld [vmem:[#allocation3 + $0x30] sm:$0xff]
      %v376 = vld [vmem:[#allocation3 + $0x38] sm:$0xff]
      %v377 = vld [vmem:[#allocation3 + $0x40] sm:$0xff]
      %v378 = vld [vmem:[#allocation3 + $0x48] sm:$0xff]
      %v379 = vld [vmem:[#allocation3 + $0x50] sm:$0xff]
      %v380 = vld [vmem:[#allocation3 + $0x58] sm:$0xff]
      %v381 = vld [vmem:[#allocation3 + $0x60] sm:$0xff]
      %v382 = vld [vmem:[#allocation3 + $0x68] sm:$0xff]
      %v383 = vld [vmem:[#allocation3 + $0x70] sm:$0xff]
      %v384 = vld [vmem:[#allocation3 + $0x78] sm:$0xff]
      %v385 = vld [vmem:[#allocation3 + $0x80] sm:$0xff]
      %v386 = vld [vmem:[#allocation3 + $0x88] sm:$0xff]
      %v387 = vld [vmem:[#allocation3 + $0x90] sm:$0xff]
      %v388 = vld [vmem:[#allocation3 + $0x98] sm:$0xff]
      %v389 = vld [vmem:[#allocation3 + $0xa0] sm:$0xff]
      %v390 = vld [vmem:[#allocation3 + $0xa8] sm:$0xff]
      %v391 = vld [vmem:[#allocation3 + $0xb0] sm:$0xff]
      %v392 = vld [vmem:[#allocation3 + $0xb8] sm:$0xff]
      %v393 = vld [vmem:[#allocation3 + $0xc0] sm:$0xff]
      %v394 = vld [vmem:[#allocation3 + $0xc8] sm:$0xff]
      %v395 = vld [vmem:[#allocation3 + $0xd0] sm:$0xff]
      %v396 = vld [vmem:[#allocation3 + $0xd8] sm:$0xff]
      %v397 = vld [vmem:[#allocation3 + $0xe0] sm:$0xff]
      %v398 = vld [vmem:[#allocation3 + $0xe8] sm:$0xff]
      %v399 = vld [vmem:[#allocation3 + $0xf0] sm:$0xff]
      %v400 = vld [vmem:[#allocation3 + $0xf8] sm:$0xff]
      %v402 = vsel %vm182, %v336, 0
      %v405 = vsel %vm182, %v337, 0
      %v408 = vsel %vm182, %v338, 0
      %v411 = vsel %vm182, %v339, 0
      %v414 = vsel %vm182, %v340, 0
      %v417 = vsel %vm182, %v341, 0
      %v420 = vsel %vm182, %v342, 0
      %v423 = vsel %vm182, %v343, 0
      %v426 = vsel %vm182, %v344, 0
      %v429 = vsel %vm182, %v345, 0
      %v432 = vsel %vm182, %v346, 0
      %v435 = vsel %vm182, %v347, 0
      %v438 = vsel %vm182, %v348, 0
      %v441 = vsel %vm182, %v349, 0
      %v444 = vsel %vm182, %v350, 0
      %v447 = vsel %vm182, %v351, 0
      %v450 = vsel %vm182, %v352, 0
      %v453 = vsel %vm182, %v353, 0
      %v456 = vsel %vm182, %v354, 0
      %v459 = vsel %vm182, %v355, 0
      %v462 = vsel %vm182, %v356, 0
      %v465 = vsel %vm182, %v357, 0
      %v468 = vsel %vm182, %v358, 0
      %v471 = vsel %vm182, %v359, 0
      %v474 = vsel %vm182, %v360, 0
      %v477 = vsel %vm182, %v361, 0
      %v480 = vsel %vm182, %v362, 0
      %v483 = vsel %vm182, %v363, 0
      %v486 = vsel %vm182, %v364, 0
      %v489 = vsel %vm182, %v365, 0
      %v492 = vsel %vm182, %v366, 0
      %v495 = vsel %vm182, %v367, 0
      %vm497 = vcmask 1043456
      %v499 = vsel %vm497, %v368, 0
      %501 = vmatprep.subr.mxu0 0.0
      %502 = vmatpush1.msra.mxu0 %v499
      %503 = vmatprep.subr.mxu0 0.0
      %504 = vmatpush1.msra.mxu0 0.0
      %505 = vmatprep.subr.mxu0 0.0
      %506 = vmatpush1.msra.mxu0 0.0
      %507 = vmatprep.subr.mxu0 0.0
      %508 = vmatpush1.msra.mxu0 0.0
      %509 = vmatprep.subr.mxu0 0.0
      %510 = vmatpush1.msra.mxu0 0.0
      %511 = vmatprep.subr.mxu0 0.0
      %512 = vmatpush1.msra.mxu0 0.0
      %513 = vmatprep.subr.mxu0 0.0
      %514 = vmatpush1.msra.mxu0 0.0
      %515 = vmatprep.subr.mxu0 0.0
      %516 = vmatpush1.msra.mxu0 0.0
      %517 = vmatprep.subr.mxu0 0.0
      %518 = vmatpush1.msra.mxu0 0.0
      %519 = vmatprep.subr.mxu0 0.0
      %520 = vmatpush1.msra.mxu0 0.0
      %521 = vmatprep.subr.mxu0 0.0
      %522 = vmatpush1.msra.mxu0 0.0
      %523 = vmatprep.subr.mxu0 0.0
      %524 = vmatpush1.msra.mxu0 0.0
      %525 = vmatprep.subr.mxu0 0.0
      %526 = vmatpush1.msra.mxu0 0.0
      %527 = vmatprep.subr.mxu0 0.0
      %528 = vmatpush1.msra.mxu0 0.0
      %529 = vmatprep.subr.mxu0 0.0
      %530 = vmatpush1.msra.mxu0 0.0
      %531 = vmatprep.subr.mxu0 0.0
      %532 = vmatpush1.msra.mxu0 0.0
      %533 = vmatprep.subr.mxu0 0.0
      %534 = vmatpush1.msra.mxu0 0.0
      %535 = vmatprep.subr.mxu0 0.0
      %536 = vmatpush1.msra.mxu0 0.0
      %537 = vmatprep.subr.mxu0 0.0
      %538 = vmatpush1.msra.mxu0 0.0
      %539 = vmatprep.subr.mxu0 0.0
      %540 = vmatpush1.msra.mxu0 0.0
      %541 = vmatprep.subr.mxu0 0.0
      %542 = vmatpush1.msra.mxu0 0.0
      %543 = vmatprep.subr.mxu0 0.0
      %544 = vmatpush1.msra.mxu0 0.0
      %545 = vmatprep.subr.mxu0 0.0
      %546 = vmatpush1.msra.mxu0 0.0
      %547 = vmatprep.subr.mxu0 0.0
      %548 = vmatpush1.msra.mxu0 0.0
      %549 = vmatprep.subr.mxu0 0.0
      %550 = vmatpush1.msra.mxu0 0.0
      %551 = vmatprep.subr.mxu0 0.0
      %552 = vmatpush1.msra.mxu0 0.0
      %553 = vmatprep.subr.mxu0 0.0
      %554 = vmatpush1.msra.mxu0 0.0
      %555 = vmatprep.subr.mxu0 0.0
      %556 = vmatpush1.msra.mxu0 0.0
      %557 = vmatprep.subr.mxu0 0.0
      %558 = vmatpush1.msra.mxu0 0.0
      %559 = vmatprep.subr.mxu0 0.0
      %560 = vmatpush1.msra.mxu0 0.0
      %561 = vmatprep.subr.mxu0 0.0
      %562 = vmatpush1.msra.mxu0 0.0
      %563 = vmatprep.subr.mxu0 0.0
      %564 = vmatpush1.msra.mxu0 0.0
      %565 = vmatprep.mubr.f32.mxu0 0.0
      %566 = vmatmul.mubr.f32.gmra.mrb[0].mxu0 %v402
      %v567 = vpop.f32.mrb[0].mxu0
      %v568 = vadd.f32 0.0, %v567
      %v569 = vpop.f32.mrb[0].mxu0
      %570 = vmatprep.mubr.f32.mxu0 0.0
      %571 = vmatmul.mubr.f32.gmra.mrb[0].mxu0 %v405
      %v572 = vpop.f32.mrb[0].mxu0
      %v573 = vadd.f32 0.0, %v572
      %v574 = vpop.f32.mrb[0].mxu0
      %575 = vmatprep.mubr.f32.mxu0 0.0
      %576 = vmatmul.mubr.f32.gmra.mrb[0].mxu0 %v408
      %v577 = vpop.f32.mrb[0].mxu0
      %v578 = vadd.f32 0.0, %v577
      %v579 = vpop.f32.mrb[0].mxu0
      %580 = vmatprep.mubr.f32.mxu0 0.0
      %581 = vmatmul.mubr.f32.gmra.mrb[0].mxu0 %v411
      %v582 = vpop.f32.mrb[0].mxu0
      %v583 = vadd.f32 0.0, %v582
      %v584 = vpop.f32.mrb[0].mxu0
      %585 = vmatprep.mubr.f32.mxu0 0.0
      %586 = vmatmul.mubr.f32.gmra.mrb[0].mxu0 %v414
      %v587 = vpop.f32.mrb[0].mxu0
      %v588 = vadd.f32 0.0, %v587
      %v589 = vpop.f32.mrb[0].mxu0
      %590 = vmatprep.mubr.f32.mxu0 0.0
      %591 = vmatmul.mubr.f32.gmra.mrb[0].mxu0 %v417
      %v592 = vpop.f32.mrb[0].mxu0
      %v593 = vadd.f32 0.0, %v592
      %v594 = vpop.f32.mrb[0].mxu0
      %595 = vmatprep.mubr.f32.mxu0 0.0
      %596 = vmatmul.mubr.f32.gmra.mrb[0].mxu0 %v420
      %v597 = vpop.f32.mrb[0].mxu0
      %v598 = vadd.f32 0.0, %v597
      %v599 = vpop.f32.mrb[0].mxu0
      %600 = vmatprep.mubr.f32.mxu0 0.0
      %601 = vmatmul.mubr.f32.gmra.mrb[0].mxu0 %v423
      %v602 = vpop.f32.mrb[0].mxu0
      %v603 = vadd.f32 0.0, %v602
      %v604 = vpop.f32.mrb[0].mxu0
      %605 = vmatprep.mubr.f32.mxu0 0.0
      %606 = vmatmul.mubr.f32.gmra.mrb[0].mxu0 %v426
      %v607 = vpop.f32.mrb[0].mxu0
      %v608 = vadd.f32 0.0, %v607
      %v609 = vpop.f32.mrb[0].mxu0
      %610 = vmatprep.mubr.f32.mxu0 0.0
      %611 = vmatmul.mubr.f32.gmra.mrb[0].mxu0 %v429
      %v612 = vpop.f32.mrb[0].mxu0
      %v613 = vadd.f32 0.0, %v612
      %v614 = vpop.f32.mrb[0].mxu0
      %615 = vmatprep.mubr.f32.mxu0 0.0
      %616 = vmatmul.mubr.f32.gmra.mrb[0].mxu0 %v432
      %v617 = vpop.f32.mrb[0].mxu0
      %v618 = vadd.f32 0.0, %v617
      %v619 = vpop.f32.mrb[0].mxu0
      %620 = vmatprep.mubr.f32.mxu0 0.0
      %621 = vmatmul.mubr.f32.gmra.mrb[0].mxu0 %v435
      %v622 = vpop.f32.mrb[0].mxu0
      %v623 = vadd.f32 0.0, %v622
      %v624 = vpop.f32.mrb[0].mxu0
      %625 = vmatprep.mubr.f32.mxu0 0.0
      %626 = vmatmul.mubr.f32.gmra.mrb[0].mxu0 %v438
      %v627 = vpop.f32.mrb[0].mxu0
      %v628 = vadd.f32 0.0, %v627
      %v629 = vpop.f32.mrb[0].mxu0
      %630 = vmatprep.mubr.f32.mxu0 0.0
      %631 = vmatmul.mubr.f32.gmra.mrb[0].mxu0 %v441
      %v632 = vpop.f32.mrb[0].mxu0
      %v633 = vadd.f32 0.0, %v632
      %v634 = vpop.f32.mrb[0].mxu0
      %635 = vmatprep.mubr.f32.mxu0 0.0
      %636 = vmatmul.mubr.f32.gmra.mrb[0].mxu0 %v444
      %v637 = vpop.f32.mrb[0].mxu0
      %v638 = vadd.f32 0.0, %v637
      %v639 = vpop.f32.mrb[0].mxu0
      %640 = vmatprep.mubr.f32.mxu0 0.0
      %641 = vmatmul.mubr.f32.gmra.mrb[0].mxu0 %v447
      %v642 = vpop.f32.mrb[0].mxu0
      %v643 = vadd.f32 0.0, %v642
      %v644 = vpop.f32.mrb[0].mxu0
      %645 = vmatprep.mubr.f32.mxu0 0.0
      %646 = vmatmul.mubr.f32.gmra.mrb[0].mxu0 %v450
      %v647 = vpop.f32.mrb[0].mxu0
      %v648 = vadd.f32 0.0, %v647
      %v649 = vpop.f32.mrb[0].mxu0
      %650 = vmatprep.mubr.f32.mxu0 0.0
      %651 = vmatmul.mubr.f32.gmra.mrb[0].mxu0 %v453
      %v652 = vpop.f32.mrb[0].mxu0
      %v653 = vadd.f32 0.0, %v652
      %v654 = vpop.f32.mrb[0].mxu0
      %655 = vmatprep.mubr.f32.mxu0 0.0
      %656 = vmatmul.mubr.f32.gmra.mrb[0].mxu0 %v456
      %v657 = vpop.f32.mrb[0].mxu0
      %v658 = vadd.f32 0.0, %v657
      %v659 = vpop.f32.mrb[0].mxu0
      %660 = vmatprep.mubr.f32.mxu0 0.0
      %661 = vmatmul.mubr.f32.gmra.mrb[0].mxu0 %v459
      %v662 = vpop.f32.mrb[0].mxu0
      %v663 = vadd.f32 0.0, %v662
      %v664 = vpop.f32.mrb[0].mxu0
      %665 = vmatprep.mubr.f32.mxu0 0.0
      %666 = vmatmul.mubr.f32.gmra.mrb[0].mxu0 %v462
      %v667 = vpop.f32.mrb[0].mxu0
      %v668 = vadd.f32 0.0, %v667
      %v669 = vpop.f32.mrb[0].mxu0
      %670 = vmatprep.mubr.f32.mxu0 0.0
      %671 = vmatmul.mubr.f32.gmra.mrb[0].mxu0 %v465
      %v672 = vpop.f32.mrb[0].mxu0
      %v673 = vadd.f32 0.0, %v672
      %v674 = vpop.f32.mrb[0].mxu0
      %675 = vmatprep.mubr.f32.mxu0 0.0
      %676 = vmatmul.mubr.f32.gmra.mrb[0].mxu0 %v468
      %v677 = vpop.f32.mrb[0].mxu0
      %v678 = vadd.f32 0.0, %v677
      %v679 = vpop.f32.mrb[0].mxu0
      %680 = vmatprep.mubr.f32.mxu0 0.0
      %681 = vmatmul.mubr.f32.gmra.mrb[0].mxu0 %v471
      %v682 = vpop.f32.mrb[0].mxu0
      %v683 = vadd.f32 0.0, %v682
      %v684 = vpop.f32.mrb[0].mxu0
      %685 = vmatprep.mubr.f32.mxu0 0.0
      %686 = vmatmul.mubr.f32.gmra.mrb[0].mxu0 %v474
      %v687 = vpop.f32.mrb[0].mxu0
      %v688 = vadd.f32 0.0, %v687
      %v689 = vpop.f32.mrb[0].mxu0
      %690 = vmatprep.mubr.f32.mxu0 0.0
      %691 = vmatmul.mubr.f32.gmra.mrb[0].mxu0 %v477
      %v692 = vpop.f32.mrb[0].mxu0
      %v693 = vadd.f32 0.0, %v692
      %v694 = vpop.f32.mrb[0].mxu0
      %695 = vmatprep.mubr.f32.mxu0 0.0
      %696 = vmatmul.mubr.f32.gmra.mrb[0].mxu0 %v480
      %v697 = vpop.f32.mrb[0].mxu0
      %v698 = vadd.f32 0.0, %v697
      %v699 = vpop.f32.mrb[0].mxu0
      %700 = vmatprep.mubr.f32.mxu0 0.0
      %701 = vmatmul.mubr.f32.gmra.mrb[0].mxu0 %v483
      %v702 = vpop.f32.mrb[0].mxu0
      %v703 = vadd.f32 0.0, %v702
      %v704 = vpop.f32.mrb[0].mxu0
      %705 = vmatprep.mubr.f32.mxu0 0.0
      %706 = vmatmul.mubr.f32.gmra.mrb[0].mxu0 %v486
      %v707 = vpop.f32.mrb[0].mxu0
      %v708 = vadd.f32 0.0, %v707
      %v709 = vpop.f32.mrb[0].mxu0
      %710 = vmatprep.mubr.f32.mxu0 0.0
      %711 = vmatmul.mubr.f32.gmra.mrb[0].mxu0 %v489
      %v712 = vpop.f32.mrb[0].mxu0
      %v713 = vadd.f32 0.0, %v712
      %v714 = vpop.f32.mrb[0].mxu0
      %715 = vmatprep.mubr.f32.mxu0 0.0
      %716 = vmatmul.mubr.f32.gmra.mrb[0].mxu0 %v492
      %v717 = vpop.f32.mrb[0].mxu0
      %v718 = vadd.f32 0.0, %v717
      %v719 = vpop.f32.mrb[0].mxu0
      %720 = vmatprep.mubr.f32.mxu0 0.0
      %721 = vmatmul.mubr.f32.gmra.mrb[0].mxu0 %v495
      %v722 = vpop.f32.mrb[0].mxu0
      %v723 = vadd.f32 0.0, %v722
      %v724 = vpop.f32.mrb[0].mxu0
      %725 = vdwg.mxu0
      %v726 = vadd.f32 %v369, %v568
      %v727 = vadd.f32 %v370, %v573
      %v728 = vadd.f32 %v371, %v578
      %v729 = vadd.f32 %v372, %v583
      %v730 = vadd.f32 %v373, %v588
      %v731 = vadd.f32 %v374, %v593
      %v732 = vadd.f32 %v375, %v598
      %v733 = vadd.f32 %v376, %v603
      %v734 = vadd.f32 %v377, %v608
      %v735 = vadd.f32 %v378, %v613
      %v736 = vadd.f32 %v379, %v618
      %v737 = vadd.f32 %v380, %v623
      %v738 = vadd.f32 %v381, %v628
      %v739 = vadd.f32 %v382, %v633
      %v740 = vadd.f32 %v383, %v638
      %v741 = vadd.f32 %v384, %v643
      %v742 = vadd.f32 %v385, %v648
      %v743 = vadd.f32 %v386, %v653
      %v744 = vadd.f32 %v387, %v658
      %v745 = vadd.f32 %v388, %v663
      %v746 = vadd.f32 %v389, %v668
      %v747 = vadd.f32 %v390, %v673
      %v748 = vadd.f32 %v391, %v678
      %v749 = vadd.f32 %v392, %v683
      %v750 = vadd.f32 %v393, %v688
      %v751 = vadd.f32 %v394, %v693
      %v752 = vadd.f32 %v395, %v698
      %v753 = vadd.f32 %v396, %v703
      %v754 = vadd.f32 %v397, %v708
      %v755 = vadd.f32 %v398, %v713
      %v756 = vadd.f32 %v399, %v718
      %v757 = vadd.f32 %v400, %v723
      %758 = vst.msk [vmem:[#allocation3] sm:$0xff] %vm303, %v726
      %759 = vst.msk [vmem:[#allocation3 + $0x8] sm:$0xff] %vm303, %v727
      %760 = vst.msk [vmem:[#allocation3 + $0x10] sm:$0xff] %vm303, %v728
      %761 = vst.msk [vmem:[#allocation3 + $0x18] sm:$0xff] %vm303, %v729
      %762 = vst.msk [vmem:[#allocation3 + $0x20] sm:$0xff] %vm303, %v730
      %763 = vst.msk [vmem:[#allocation3 + $0x28] sm:$0xff] %vm303, %v731
      %764 = vst.msk [vmem:[#allocation3 + $0x30] sm:$0xff] %vm303, %v732
      %765 = vst.msk [vmem:[#allocation3 + $0x38] sm:$0xff] %vm303, %v733
      %766 = vst.msk [vmem:[#allocation3 + $0x40] sm:$0xff] %vm303, %v734
      %767 = vst.msk [vmem:[#allocation3 + $0x48] sm:$0xff] %vm303, %v735
      %768 = vst.msk [vmem:[#allocation3 + $0x50] sm:$0xff] %vm303, %v736
      %769 = vst.msk [vmem:[#allocation3 + $0x58] sm:$0xff] %vm303, %v737
      %770 = vst.msk [vmem:[#allocation3 + $0x60] sm:$0xff] %vm303, %v738
      %771 = vst.msk [vmem:[#allocation3 + $0x68] sm:$0xff] %vm303, %v739
      %772 = vst.msk [vmem:[#allocation3 + $0x70] sm:$0xff] %vm303, %v740
      %773 = vst.msk [vmem:[#allocation3 + $0x78] sm:$0xff] %vm303, %v741
      %774 = vst.msk [vmem:[#allocation3 + $0x80] sm:$0xff] %vm303, %v742
      %775 = vst.msk [vmem:[#allocation3 + $0x88] sm:$0xff] %vm303, %v743
      %776 = vst.msk [vmem:[#allocation3 + $0x90] sm:$0xff] %vm303, %v744
      %777 = vst.msk [vmem:[#allocation3 + $0x98] sm:$0xff] %vm303, %v745
      %778 = vst.msk [vmem:[#allocation3 + $0xa0] sm:$0xff] %vm303, %v746
      %779 = vst.msk [vmem:[#allocation3 + $0xa8] sm:$0xff] %vm303, %v747
      %780 = vst.msk [vmem:[#allocation3 + $0xb0] sm:$0xff] %vm303, %v748
      %781 = vst.msk [vmem:[#allocation3 + $0xb8] sm:$0xff] %vm303, %v749
      %782 = vst.msk [vmem:[#allocation3 + $0xc0] sm:$0xff] %vm303, %v750
      %783 = vst.msk [vmem:[#allocation3 + $0xc8] sm:$0xff] %vm303, %v751
      %784 = vst.msk [vmem:[#allocation3 + $0xd0] sm:$0xff] %vm303, %v752
      %785 = vst.msk [vmem:[#allocation3 + $0xd8] sm:$0xff] %vm303, %v753
      %786 = vst.msk [vmem:[#allocation3 + $0xe0] sm:$0xff] %vm303, %v754
      %787 = vst.msk [vmem:[#allocation3 + $0xe8] sm:$0xff] %vm303, %v755
      %788 = vst.msk [vmem:[#allocation3 + $0xf0] sm:$0xff] %vm303, %v756
      %789 = vst.msk [vmem:[#allocation3 + $0xf8] sm:$0xff] %vm303, %v757
      %v790 = vld [vmem:[#allocation2 + $0x1] sm:$0xff]
      %v791 = vld [vmem:[#allocation2 + $0x9] sm:$0xff]
      %v792 = vld [vmem:[#allocation2 + $0x19] sm:$0xff]
      %v793 = vld [vmem:[#allocation2 + $0x21] sm:$0xff]
      %v794 = vld [vmem:[#allocation2 + $0x31] sm:$0xff]
      %v795 = vld [vmem:[#allocation2 + $0x39] sm:$0xff]
      %v796 = vld [vmem:[#allocation2 + $0x49] sm:$0xff]
      %v797 = vld [vmem:[#allocation2 + $0x51] sm:$0xff]
      %v798 = vld [vmem:[#allocation2 + $0x61] sm:$0xff]
      %v799 = vld [vmem:[#allocation2 + $0x69] sm:$0xff]
      %v800 = vld [vmem:[#allocation2 + $0x79] sm:$0xff]
      %v801 = vld [vmem:[#allocation2 + $0x81] sm:$0xff]
      %v802 = vld [vmem:[#allocation2 + $0x91] sm:$0xff]
      %v803 = vld [vmem:[#allocation2 + $0x99] sm:$0xff]
      %v804 = vld [vmem:[#allocation2 + $0xa9] sm:$0xff]
      %v805 = vld [vmem:[#allocation2 + $0xb1] sm:$0xff]
      %v806 = vld [vmem:[#allocation2 + $0xc1] sm:$0xff]
      %v807 = vld [vmem:[#allocation2 + $0xc9] sm:$0xff]
      %v808 = vld [vmem:[#allocation2 + $0xd9] sm:$0xff]
      %v809 = vld [vmem:[#allocation2 + $0xe1] sm:$0xff]
      %v810 = vld [vmem:[#allocation2 + $0xf1] sm:$0xff]
      %v811 = vld [vmem:[#allocation2 + $0xf9] sm:$0xff]
      %v812 = vld [vmem:[#allocation2 + $0x109] sm:$0xff]
      %v813 = vld [vmem:[#allocation2 + $0x111] sm:$0xff]
      %v814 = vld [vmem:[#allocation2 + $0x121] sm:$0xff]
      %v815 = vld [vmem:[#allocation2 + $0x129] sm:$0xff]
      %v816 = vld [vmem:[#allocation2 + $0x139] sm:$0xff]
      %v817 = vld [vmem:[#allocation2 + $0x141] sm:$0xff]
      %v818 = vld [vmem:[#allocation2 + $0x151] sm:$0xff]
      %v819 = vld [vmem:[#allocation2 + $0x159] sm:$0xff]
      %v820 = vld [vmem:[#allocation2 + $0x169] sm:$0xff]
      %v821 = vld [vmem:[#allocation2 + $0x171] sm:$0xff]
      %v822 = vld [vmem:[%s1 + $0x4] sm:$0xf]
      %v823 = vld [vmem:[#allocation3] sm:$0xff]
      %v824 = vld [vmem:[#allocation3 + $0x8] sm:$0xff]
      %v825 = vld [vmem:[#allocation3 + $0x10] sm:$0xff]
      %v826 = vld [vmem:[#allocation3 + $0x18] sm:$0xff]
      %v827 = vld [vmem:[#allocation3 + $0x20] sm:$0xff]
      %v828 = vld [vmem:[#allocation3 + $0x28] sm:$0xff]
      %v829 = vld [vmem:[#allocation3 + $0x30] sm:$0xff]
      %v830 = vld [vmem:[#allocation3 + $0x38] sm:$0xff]
      %v831 = vld [vmem:[#allocation3 + $0x40] sm:$0xff]
      %v832 = vld [vmem:[#allocation3 + $0x48] sm:$0xff]
      %v833 = vld [vmem:[#allocation3 + $0x50] sm:$0xff]
      %v834 = vld [vmem:[#allocation3 + $0x58] sm:$0xff]
      %v835 = vld [vmem:[#allocation3 + $0x60] sm:$0xff]
      %v836 = vld [vmem:[#allocation3 + $0x68] sm:$0xff]
      %v837 = vld [vmem:[#allocation3 + $0x70] sm:$0xff]
      %v838 = vld [vmem:[#allocation3 + $0x78] sm:$0xff]
      %v839 = vld [vmem:[#allocation3 + $0x80] sm:$0xff]
      %v840 = vld [vmem:[#allocation3 + $0x88] sm:$0xff]
      %v841 = vld [vmem:[#allocation3 + $0x90] sm:$0xff]
      %v842 = vld [vmem:[#allocation3 + $0x98] sm:$0xff]
      %v843 = vld [vmem:[#allocation3 + $0xa0] sm:$0xff]
      %v844 = vld [vmem:[#allocation3 + $0xa8] sm:$0xff]
      %v845 = vld [vmem:[#allocation3 + $0xb0] sm:$0xff]
      %v846 = vld [vmem:[#allocation3 + $0xb8] sm:$0xff]
      %v847 = vld [vmem:[#allocation3 + $0xc0] sm:$0xff]
      %v848 = vld [vmem:[#allocation3 + $0xc8] sm:$0xff]
      %v849 = vld [vmem:[#allocation3 + $0xd0] sm:$0xff]
      %v850 = vld [vmem:[#allocation3 + $0xd8] sm:$0xff]
      %v851 = vld [vmem:[#allocation3 + $0xe0] sm:$0xff]
      %v852 = vld [vmem:[#allocation3 + $0xe8] sm:$0xff]
      %v853 = vld [vmem:[#allocation3 + $0xf0] sm:$0xff]
      %v854 = vld [vmem:[#allocation3 + $0xf8] sm:$0xff]
      %v856 = vsel %vm182, %v790, 0
      %v859 = vsel %vm182, %v791, 0
      %v862 = vsel %vm182, %v792, 0
      %v865 = vsel %vm182, %v793, 0
      %v868 = vsel %vm182, %v794, 0
      %v871 = vsel %vm182, %v795, 0
      %v874 = vsel %vm182, %v796, 0
      %v877 = vsel %vm182, %v797, 0
      %v880 = vsel %vm182, %v798, 0
      %v883 = vsel %vm182, %v799, 0
      %v886 = vsel %vm182, %v800, 0
      %v889 = vsel %vm182, %v801, 0
      %v892 = vsel %vm182, %v802, 0
      %v895 = vsel %vm182, %v803, 0
      %v898 = vsel %vm182, %v804, 0
      %v901 = vsel %vm182, %v805, 0
      %v904 = vsel %vm182, %v806, 0
      %v907 = vsel %vm182, %v807, 0
      %v910 = vsel %vm182, %v808, 0
      %v913 = vsel %vm182, %v809, 0
      %v916 = vsel %vm182, %v810, 0
      %v919 = vsel %vm182, %v811, 0
      %v922 = vsel %vm182, %v812, 0
      %v925 = vsel %vm182, %v813, 0
      %v928 = vsel %vm182, %v814, 0
      %v931 = vsel %vm182, %v815, 0
      %v934 = vsel %vm182, %v816, 0
      %v937 = vsel %vm182, %v817, 0
      %v940 = vsel %vm182, %v818, 0
      %v943 = vsel %vm182, %v819, 0
      %v946 = vsel %vm182, %v820, 0
      %v949 = vsel %vm182, %v821, 0
      %v952 = vsel %vm497, %v822, 0
      %954 = vmatprep.subr.mxu0 0.0
      %955 = vmatpush1.msra.mxu0 %v952
      %956 = vmatprep.subr.mxu0 0.0
      %957 = vmatpush1.msra.mxu0 0.0
      %958 = vmatprep.subr.mxu0 0.0
      %959 = vmatpush1.msra.mxu0 0.0
      %960 = vmatprep.subr.mxu0 0.0
      %961 = vmatpush1.msra.mxu0 0.0
      %962 = vmatprep.subr.mxu0 0.0
      %963 = vmatpush1.msra.mxu0 0.0
      %964 = vmatprep.subr.mxu0 0.0
      %965 = vmatpush1.msra.mxu0 0.0
      %966 = vmatprep.subr.mxu0 0.0
      %967 = vmatpush1.msra.mxu0 0.0
      %968 = vmatprep.subr.mxu0 0.0
      %969 = vmatpush1.msra.mxu0 0.0
      %970 = vmatprep.subr.mxu0 0.0
      %971 = vmatpush1.msra.mxu0 0.0
      %972 = vmatprep.subr.mxu0 0.0
      %973 = vmatpush1.msra.mxu0 0.0
      %974 = vmatprep.subr.mxu0 0.0
      %975 = vmatpush1.msra.mxu0 0.0
      %976 = vmatprep.subr.mxu0 0.0
      %977 = vmatpush1.msra.mxu0 0.0
      %978 = vmatprep.subr.mxu0 0.0
      %979 = vmatpush1.msra.mxu0 0.0
      %980 = vmatprep.subr.mxu0 0.0
      %981 = vmatpush1.msra.mxu0 0.0
      %982 = vmatprep.subr.mxu0 0.0
      %983 = vmatpush1.msra.mxu0 0.0
      %984 = vmatprep.subr.mxu0 0.0
      %985 = vmatpush1.msra.mxu0 0.0
      %986 = vmatprep.subr.mxu0 0.0
      %987 = vmatpush1.msra.mxu0 0.0
      %988 = vmatprep.subr.mxu0 0.0
      %989 = vmatpush1.msra.mxu0 0.0
      %990 = vmatprep.subr.mxu0 0.0
      %991 = vmatpush1.msra.mxu0 0.0
      %992 = vmatprep.subr.mxu0 0.0
      %993 = vmatpush1.msra.mxu0 0.0
      %994 = vmatprep.subr.mxu0 0.0
      %995 = vmatpush1.msra.mxu0 0.0
      %996 = vmatprep.subr.mxu0 0.0
      %997 = vmatpush1.msra.mxu0 0.0
      %998 = vmatprep.subr.mxu0 0.0
      %999 = vmatpush1.msra.mxu0 0.0
      %1000 = vmatprep.subr.mxu0 0.0
      %1001 = vmatpush1.msra.mxu0 0.0
      %1002 = vmatprep.subr.mxu0 0.0
      %1003 = vmatpush1.msra.mxu0 0.0
      %1004 = vmatprep.subr.mxu0 0.0
      %1005 = vmatpush1.msra.mxu0 0.0
      %1006 = vmatprep.subr.mxu0 0.0
      %1007 = vmatpush1.msra.mxu0 0.0
      %1008 = vmatprep.subr.mxu0 0.0
      %1009 = vmatpush1.msra.mxu0 0.0
      %1010 = vmatprep.subr.mxu0 0.0
      %1011 = vmatpush1.msra.mxu0 0.0
      %1012 = vmatprep.subr.mxu0 0.0
      %1013 = vmatpush1.msra.mxu0 0.0
      %1014 = vmatprep.subr.mxu0 0.0
      %1015 = vmatpush1.msra.mxu0 0.0
      %1016 = vmatprep.subr.mxu0 0.0
      %1017 = vmatpush1.msra.mxu0 0.0
      %1018 = vmatprep.mubr.f32.mxu0 0.0
      %1019 = vmatmul.mubr.f32.gmra.mrb[0].mxu0 %v856
      %v1020 = vpop.f32.mrb[0].mxu0
      %v1021 = vadd.f32 0.0, %v1020
      %v1022 = vpop.f32.mrb[0].mxu0
      %1023 = vmatprep.mubr.f32.mxu0 0.0
      %1024 = vmatmul.mubr.f32.gmra.mrb[0].mxu0 %v859
      %v1025 = vpop.f32.mrb[0].mxu0
      %v1026 = vadd.f32 0.0, %v1025
      %v1027 = vpop.f32.mrb[0].mxu0
      %1028 = vmatprep.mubr.f32.mxu0 0.0
      %1029 = vmatmul.mubr.f32.gmra.mrb[0].mxu0 %v862
      %v1030 = vpop.f32.mrb[0].mxu0
      %v1031 = vadd.f32 0.0, %v1030
      %v1032 = vpop.f32.mrb[0].mxu0
      %1033 = vmatprep.mubr.f32.mxu0 0.0
      %1034 = vmatmul.mubr.f32.gmra.mrb[0].mxu0 %v865
      %v1035 = vpop.f32.mrb[0].mxu0
      %v1036 = vadd.f32 0.0, %v1035
      %v1037 = vpop.f32.mrb[0].mxu0
      %1038 = vmatprep.mubr.f32.mxu0 0.0
      %1039 = vmatmul.mubr.f32.gmra.mrb[0].mxu0 %v868
      %v1040 = vpop.f32.mrb[0].mxu0
      %v1041 = vadd.f32 0.0, %v1040
      %v1042 = vpop.f32.mrb[0].mxu0
      %1043 = vmatprep.mubr.f32.mxu0 0.0
      %1044 = vmatmul.mubr.f32.gmra.mrb[0].mxu0 %v871
      %v1045 = vpop.f32.mrb[0].mxu0
      %v1046 = vadd.f32 0.0, %v1045
      %v1047 = vpop.f32.mrb[0].mxu0
      %1048 = vmatprep.mubr.f32.mxu0 0.0
      %1049 = vmatmul.mubr.f32.gmra.mrb[0].mxu0 %v874
      %v1050 = vpop.f32.mrb[0].mxu0
      %v1051 = vadd.f32 0.0, %v1050
      %v1052 = vpop.f32.mrb[0].mxu0
      %1053 = vmatprep.mubr.f32.mxu0 0.0
      %1054 = vmatmul.mubr.f32.gmra.mrb[0].mxu0 %v877
      %v1055 = vpop.f32.mrb[0].mxu0
      %v1056 = vadd.f32 0.0, %v1055
      %v1057 = vpop.f32.mrb[0].mxu0
      %1058 = vmatprep.mubr.f32.mxu0 0.0
      %1059 = vmatmul.mubr.f32.gmra.mrb[0].mxu0 %v880
      %v1060 = vpop.f32.mrb[0].mxu0
      %v1061 = vadd.f32 0.0, %v1060
      %v1062 = vpop.f32.mrb[0].mxu0
      %1063 = vmatprep.mubr.f32.mxu0 0.0
      %1064 = vmatmul.mubr.f32.gmra.mrb[0].mxu0 %v883
      %v1065 = vpop.f32.mrb[0].mxu0
      %v1066 = vadd.f32 0.0, %v1065
      %v1067 = vpop.f32.mrb[0].mxu0
      %1068 = vmatprep.mubr.f32.mxu0 0.0
      %1069 = vmatmul.mubr.f32.gmra.mrb[0].mxu0 %v886
      %v1070 = vpop.f32.mrb[0].mxu0
      %v1071 = vadd.f32 0.0, %v1070
      %v1072 = vpop.f32.mrb[0].mxu0
      %1073 = vmatprep.mubr.f32.mxu0 0.0
      %1074 = vmatmul.mubr.f32.gmra.mrb[0].mxu0 %v889
      %v1075 = vpop.f32.mrb[0].mxu0
      %v1076 = vadd.f32 0.0, %v1075
      %v1077 = vpop.f32.mrb[0].mxu0
      %1078 = vmatprep.mubr.f32.mxu0 0.0
      %1079 = vmatmul.mubr.f32.gmra.mrb[0].mxu0 %v892
      %v1080 = vpop.f32.mrb[0].mxu0
      %v1081 = vadd.f32 0.0, %v1080
      %v1082 = vpop.f32.mrb[0].mxu0
      %1083 = vmatprep.mubr.f32.mxu0 0.0
      %1084 = vmatmul.mubr.f32.gmra.mrb[0].mxu0 %v895
      %v1085 = vpop.f32.mrb[0].mxu0
      %v1086 = vadd.f32 0.0, %v1085
      %v1087 = vpop.f32.mrb[0].mxu0
      %1088 = vmatprep.mubr.f32.mxu0 0.0
      %1089 = vmatmul.mubr.f32.gmra.mrb[0].mxu0 %v898
      %v1090 = vpop.f32.mrb[0].mxu0
      %v1091 = vadd.f32 0.0, %v1090
      %v1092 = vpop.f32.mrb[0].mxu0
      %1093 = vmatprep.mubr.f32.mxu0 0.0
      %1094 = vmatmul.mubr.f32.gmra.mrb[0].mxu0 %v901
      %v1095 = vpop.f32.mrb[0].mxu0
      %v1096 = vadd.f32 0.0, %v1095
      %v1097 = vpop.f32.mrb[0].mxu0
      %1098 = vmatprep.mubr.f32.mxu0 0.0
      %1099 = vmatmul.mubr.f32.gmra.mrb[0].mxu0 %v904
      %v1100 = vpop.f32.mrb[0].mxu0
      %v1101 = vadd.f32 0.0, %v1100
      %v1102 = vpop.f32.mrb[0].mxu0
      %1103 = vmatprep.mubr.f32.mxu0 0.0
      %1104 = vmatmul.mubr.f32.gmra.mrb[0].mxu0 %v907
      %v1105 = vpop.f32.mrb[0].mxu0
      %v1106 = vadd.f32 0.0, %v1105
      %v1107 = vpop.f32.mrb[0].mxu0
      %1108 = vmatprep.mubr.f32.mxu0 0.0
      %1109 = vmatmul.mubr.f32.gmra.mrb[0].mxu0 %v910
      %v1110 = vpop.f32.mrb[0].mxu0
      %v1111 = vadd.f32 0.0, %v1110
      %v1112 = vpop.f32.mrb[0].mxu0
      %1113 = vmatprep.mubr.f32.mxu0 0.0
      %1114 = vmatmul.mubr.f32.gmra.mrb[0].mxu0 %v913
      %v1115 = vpop.f32.mrb[0].mxu0
      %v1116 = vadd.f32 0.0, %v1115
      %v1117 = vpop.f32.mrb[0].mxu0
      %1118 = vmatprep.mubr.f32.mxu0 0.0
      %1119 = vmatmul.mubr.f32.gmra.mrb[0].mxu0 %v916
      %v1120 = vpop.f32.mrb[0].mxu0
      %v1121 = vadd.f32 0.0, %v1120
      %v1122 = vpop.f32.mrb[0].mxu0
      %1123 = vmatprep.mubr.f32.mxu0 0.0
      %1124 = vmatmul.mubr.f32.gmra.mrb[0].mxu0 %v919
      %v1125 = vpop.f32.mrb[0].mxu0
      %v1126 = vadd.f32 0.0, %v1125
      %v1127 = vpop.f32.mrb[0].mxu0
      %1128 = vmatprep.mubr.f32.mxu0 0.0
      %1129 = vmatmul.mubr.f32.gmra.mrb[0].mxu0 %v922
      %v1130 = vpop.f32.mrb[0].mxu0
      %v1131 = vadd.f32 0.0, %v1130
      %v1132 = vpop.f32.mrb[0].mxu0
      %1133 = vmatprep.mubr.f32.mxu0 0.0
      %1134 = vmatmul.mubr.f32.gmra.mrb[0].mxu0 %v925
      %v1135 = vpop.f32.mrb[0].mxu0
      %v1136 = vadd.f32 0.0, %v1135
      %v1137 = vpop.f32.mrb[0].mxu0
      %1138 = vmatprep.mubr.f32.mxu0 0.0
      %1139 = vmatmul.mubr.f32.gmra.mrb[0].mxu0 %v928
      %v1140 = vpop.f32.mrb[0].mxu0
      %v1141 = vadd.f32 0.0, %v1140
      %v1142 = vpop.f32.mrb[0].mxu0
      %1143 = vmatprep.mubr.f32.mxu0 0.0
      %1144 = vmatmul.mubr.f32.gmra.mrb[0].mxu0 %v931
      %v1145 = vpop.f32.mrb[0].mxu0
      %v1146 = vadd.f32 0.0, %v1145
      %v1147 = vpop.f32.mrb[0].mxu0
      %1148 = vmatprep.mubr.f32.mxu0 0.0
      %1149 = vmatmul.mubr.f32.gmra.mrb[0].mxu0 %v934
      %v1150 = vpop.f32.mrb[0].mxu0
      %v1151 = vadd.f32 0.0, %v1150
      %v1152 = vpop.f32.mrb[0].mxu0
      %1153 = vmatprep.mubr.f32.mxu0 0.0
      %1154 = vmatmul.mubr.f32.gmra.mrb[0].mxu0 %v937
      %v1155 = vpop.f32.mrb[0].mxu0
      %v1156 = vadd.f32 0.0, %v1155
      %v1157 = vpop.f32.mrb[0].mxu0
      %1158 = vmatprep.mubr.f32.mxu0 0.0
      %1159 = vmatmul.mubr.f32.gmra.mrb[0].mxu0 %v940
      %v1160 = vpop.f32.mrb[0].mxu0
      %v1161 = vadd.f32 0.0, %v1160
      %v1162 = vpop.f32.mrb[0].mxu0
      %1163 = vmatprep.mubr.f32.mxu0 0.0
      %1164 = vmatmul.mubr.f32.gmra.mrb[0].mxu0 %v943
      %v1165 = vpop.f32.mrb[0].mxu0
      %v1166 = vadd.f32 0.0, %v1165
      %v1167 = vpop.f32.mrb[0].mxu0
      %1168 = vmatprep.mubr.f32.mxu0 0.0
      %1169 = vmatmul.mubr.f32.gmra.mrb[0].mxu0 %v946
      %v1170 = vpop.f32.mrb[0].mxu0
      %v1171 = vadd.f32 0.0, %v1170
      %v1172 = vpop.f32.mrb[0].mxu0
      %1173 = vmatprep.mubr.f32.mxu0 0.0
      %1174 = vmatmul.mubr.f32.gmra.mrb[0].mxu0 %v949
      %v1175 = vpop.f32.mrb[0].mxu0
      %v1176 = vadd.f32 0.0, %v1175
      %v1177 = vpop.f32.mrb[0].mxu0
      %1178 = vdwg.mxu0
      %v1179 = vadd.f32 %v823, %v1021
      %v1180 = vadd.f32 %v824, %v1026
      %v1181 = vadd.f32 %v825, %v1031
      %v1182 = vadd.f32 %v826, %v1036
      %v1183 = vadd.f32 %v827, %v1041
      %v1184 = vadd.f32 %v828, %v1046
      %v1185 = vadd.f32 %v829, %v1051
      %v1186 = vadd.f32 %v830, %v1056
      %v1187 = vadd.f32 %v831, %v1061
      %v1188 = vadd.f32 %v832, %v1066
      %v1189 = vadd.f32 %v833, %v1071
      %v1190 = vadd.f32 %v834, %v1076
      %v1191 = vadd.f32 %v835, %v1081
      %v1192 = vadd.f32 %v836, %v1086
      %v1193 = vadd.f32 %v837, %v1091
      %v1194 = vadd.f32 %v838, %v1096
      %v1195 = vadd.f32 %v839, %v1101
      %v1196 = vadd.f32 %v840, %v1106
      %v1197 = vadd.f32 %v841, %v1111
      %v1198 = vadd.f32 %v842, %v1116
      %v1199 = vadd.f32 %v843, %v1121
      %v1200 = vadd.f32 %v844, %v1126
      %v1201 = vadd.f32 %v845, %v1131
      %v1202 = vadd.f32 %v846, %v1136
      %v1203 = vadd.f32 %v847, %v1141
      %v1204 = vadd.f32 %v848, %v1146
      %v1205 = vadd.f32 %v849, %v1151
      %v1206 = vadd.f32 %v850, %v1156
      %v1207 = vadd.f32 %v851, %v1161
      %v1208 = vadd.f32 %v852, %v1166
      %v1209 = vadd.f32 %v853, %v1171
      %v1210 = vadd.f32 %v854, %v1176
      %1211 = vst.msk [vmem:[#allocation3] sm:$0xff] %vm303, %v1179
      %1212 = vst.msk [vmem:[#allocation3 + $0x8] sm:$0xff] %vm303, %v1180
      %1213 = vst.msk [vmem:[#allocation3 + $0x10] sm:$0xff] %vm303, %v1181
      %1214 = vst.msk [vmem:[#allocation3 + $0x18] sm:$0xff] %vm303, %v1182
      %1215 = vst.msk [vmem:[#allocation3 + $0x20] sm:$0xff] %vm303, %v1183
      %1216 = vst.msk [vmem:[#allocation3 + $0x28] sm:$0xff] %vm303, %v1184
      %1217 = vst.msk [vmem:[#allocation3 + $0x30] sm:$0xff] %vm303, %v1185
      %1218 = vst.msk [vmem:[#allocation3 + $0x38] sm:$0xff] %vm303, %v1186
      %1219 = vst.msk [vmem:[#allocation3 + $0x40] sm:$0xff] %vm303, %v1187
      %1220 = vst.msk [vmem:[#allocation3 + $0x48] sm:$0xff] %vm303, %v1188
      %1221 = vst.msk [vmem:[#allocation3 + $0x50] sm:$0xff] %vm303, %v1189
      %1222 = vst.msk [vmem:[#allocation3 + $0x58] sm:$0xff] %vm303, %v1190
      %1223 = vst.msk [vmem:[#allocation3 + $0x60] sm:$0xff] %vm303, %v1191
      %1224 = vst.msk [vmem:[#allocation3 + $0x68] sm:$0xff] %vm303, %v1192
      %1225 = vst.msk [vmem:[#allocation3 + $0x70] sm:$0xff] %vm303, %v1193
      %1226 = vst.msk [vmem:[#allocation3 + $0x78] sm:$0xff] %vm303, %v1194
      %1227 = vst.msk [vmem:[#allocation3 + $0x80] sm:$0xff] %vm303, %v1195
      %1228 = vst.msk [vmem:[#allocation3 + $0x88] sm:$0xff] %vm303, %v1196
      %1229 = vst.msk [vmem:[#allocation3 + $0x90] sm:$0xff] %vm303, %v1197
      %1230 = vst.msk [vmem:[#allocation3 + $0x98] sm:$0xff] %vm303, %v1198
      %1231 = vst.msk [vmem:[#allocation3 + $0xa0] sm:$0xff] %vm303, %v1199
      %1232 = vst.msk [vmem:[#allocation3 + $0xa8] sm:$0xff] %vm303, %v1200
      %1233 = vst.msk [vmem:[#allocation3 + $0xb0] sm:$0xff] %vm303, %v1201
      %1234 = vst.msk [vmem:[#allocation3 + $0xb8] sm:$0xff] %vm303, %v1202
      %1235 = vst.msk [vmem:[#allocation3 + $0xc0] sm:$0xff] %vm303, %v1203
      %1236 = vst.msk [vmem:[#allocation3 + $0xc8] sm:$0xff] %vm303, %v1204
      %1237 = vst.msk [vmem:[#allocation3 + $0xd0] sm:$0xff] %vm303, %v1205
      %1238 = vst.msk [vmem:[#allocation3 + $0xd8] sm:$0xff] %vm303, %v1206
      %1239 = vst.msk [vmem:[#allocation3 + $0xe0] sm:$0xff] %vm303, %v1207
      %1240 = vst.msk [vmem:[#allocation3 + $0xe8] sm:$0xff] %vm303, %v1208
      %1241 = vst.msk [vmem:[#allocation3 + $0xf0] sm:$0xff] %vm303, %v1209
      %1242 = vst.msk [vmem:[#allocation3 + $0xf8] sm:$0xff] %vm303, %v1210
      %v1243 = vld [vmem:[#allocation2 + $0x2] sm:$0xff]
      %v1244 = vld [vmem:[#allocation2 + $0xa] sm:$0xff]
      %v1245 = vld [vmem:[#allocation2 + $0x1a] sm:$0xff]
      %v1246 = vld [vmem:[#allocation2 + $0x22] sm:$0xff]
      %v1247 = vld [vmem:[#allocation2 + $0x32] sm:$0xff]
      %v1248 = vld [vmem:[#allocation2 + $0x3a] sm:$0xff]
      %v1249 = vld [vmem:[#allocation2 + $0x4a] sm:$0xff]
      %v1250 = vld [vmem:[#allocation2 + $0x52] sm:$0xff]
      %v1251 = vld [vmem:[#allocation2 + $0x62] sm:$0xff]
      %v1252 = vld [vmem:[#allocation2 + $0x6a] sm:$0xff]
      %v1253 = vld [vmem:[#allocation2 + $0x7a] sm:$0xff]
      %v1254 = vld [vmem:[#allocation2 + $0x82] sm:$0xff]
      %v1255 = vld [vmem:[#allocation2 + $0x92] sm:$0xff]
      %v1256 = vld [vmem:[#allocation2 + $0x9a] sm:$0xff]
      %v1257 = vld [vmem:[#allocation2 + $0xaa] sm:$0xff]
      %v1258 = vld [vmem:[#allocation2 + $0xb2] sm:$0xff]
      %v1259 = vld [vmem:[#allocation2 + $0xc2] sm:$0xff]
      %v1260 = vld [vmem:[#allocation2 + $0xca] sm:$0xff]
      %v1261 = vld [vmem:[#allocation2 + $0xda] sm:$0xff]
      %v1262 = vld [vmem:[#allocation2 + $0xe2] sm:$0xff]
      %v1263 = vld [vmem:[#allocation2 + $0xf2] sm:$0xff]
      %v1264 = vld [vmem:[#allocation2 + $0xfa] sm:$0xff]
      %v1265 = vld [vmem:[#allocation2 + $0x10a] sm:$0xff]
      %v1266 = vld [vmem:[#allocation2 + $0x112] sm:$0xff]
      %v1267 = vld [vmem:[#allocation2 + $0x122] sm:$0xff]
      %v1268 = vld [vmem:[#allocation2 + $0x12a] sm:$0xff]
      %v1269 = vld [vmem:[#allocation2 + $0x13a] sm:$0xff]
      %v1270 = vld [vmem:[#allocation2 + $0x142] sm:$0xff]
      %v1271 = vld [vmem:[#allocation2 + $0x152] sm:$0xff]
      %v1272 = vld [vmem:[#allocation2 + $0x15a] sm:$0xff]
      %v1273 = vld [vmem:[#allocation2 + $0x16a] sm:$0xff]
      %v1274 = vld [vmem:[#allocation2 + $0x172] sm:$0xff]
      %v1275 = vld [vmem:[%s1 + $0x8] sm:$0xf]
      %v1276 = vld [vmem:[#allocation3] sm:$0xff]
      %v1277 = vld [vmem:[#allocation3 + $0x8] sm:$0xff]
      %v1278 = vld [vmem:[#allocation3 + $0x10] sm:$0xff]
      %v1279 = vld [vmem:[#allocation3 + $0x18] sm:$0xff]
      %v1280 = vld [vmem:[#allocation3 + $0x20] sm:$0xff]
      %v1281 = vld [vmem:[#allocation3 + $0x28] sm:$0xff]
      %v1282 = vld [vmem:[#allocation3 + $0x30] sm:$0xff]
      %v1283 = vld [vmem:[#allocation3 + $0x38] sm:$0xff]
      %v1284 = vld [vmem:[#allocation3 + $0x40] sm:$0xff]
      %v1285 = vld [vmem:[#allocation3 + $0x48] sm:$0xff]
      %v1286 = vld [vmem:[#allocation3 + $0x50] sm:$0xff]
      %v1287 = vld [vmem:[#allocation3 + $0x58] sm:$0xff]
      %v1288 = vld [vmem:[#allocation3 + $0x60] sm:$0xff]
      %v1289 = vld [vmem:[#allocation3 + $0x68] sm:$0xff]
      %v1290 = vld [vmem:[#allocation3 + $0x70] sm:$0xff]
      %v1291 = vld [vmem:[#allocation3 + $0x78] sm:$0xff]
      %v1292 = vld [vmem:[#allocation3 + $0x80] sm:$0xff]
      %v1293 = vld [vmem:[#allocation3 + $0x88] sm:$0xff]
      %v1294 = vld [vmem:[#allocation3 + $0x90] sm:$0xff]
      %v1295 = vld [vmem:[#allocation3 + $0x98] sm:$0xff]
      %v1296 = vld [vmem:[#allocation3 + $0xa0] sm:$0xff]
      %v1297 = vld [vmem:[#allocation3 + $0xa8] sm:$0xff]
      %v1298 = vld [vmem:[#allocation3 + $0xb0] sm:$0xff]
      %v1299 = vld [vmem:[#allocation3 + $0xb8] sm:$0xff]
      %v1300 = vld [vmem:[#allocation3 + $0xc0] sm:$0xff]
      %v1301 = vld [vmem:[#allocation3 + $0xc8] sm:$0xff]
      %v1302 = vld [vmem:[#allocation3 + $0xd0] sm:$0xff]
      %v1303 = vld [vmem:[#allocation3 + $0xd8] sm:$0xff]
      %v1304 = vld [vmem:[#allocation3 + $0xe0] sm:$0xff]
      %v1305 = vld [vmem:[#allocation3 + $0xe8] sm:$0xff]
      %v1306 = vld [vmem:[#allocation3 + $0xf0] sm:$0xff]
      %v1307 = vld [vmem:[#allocation3 + $0xf8] sm:$0xff]
      %v1309 = vsel %vm182, %v1243, 0
      %v1312 = vsel %vm182, %v1244, 0
      %v1315 = vsel %vm182, %v1245, 0
      %v1318 = vsel %vm182, %v1246, 0
      %v1321 = vsel %vm182, %v1247, 0
      %v1324 = vsel %vm182, %v1248, 0
      %v1327 = vsel %vm182, %v1249, 0
      %v1330 = vsel %vm182, %v1250, 0
      %v1333 = vsel %vm182, %v1251, 0
      %v1336 = vsel %vm182, %v1252, 0
      %v1339 = vsel %vm182, %v1253, 0
      %v1342 = vsel %vm182, %v1254, 0
      %v1345 = vsel %vm182, %v1255, 0
      %v1348 = vsel %vm182, %v1256, 0
      %v1351 = vsel %vm182, %v1257, 0
      %v1354 = vsel %vm182, %v1258, 0
      %v1357 = vsel %vm182, %v1259, 0
      %v1360 = vsel %vm182, %v1260, 0
      %v1363 = vsel %vm182, %v1261, 0
      %v1366 = vsel %vm182, %v1262, 0
      %v1369 = vsel %vm182, %v1263, 0
      %v1372 = vsel %vm182, %v1264, 0
      %v1375 = vsel %vm182, %v1265, 0
      %v1378 = vsel %vm182, %v1266, 0
      %v1381 = vsel %vm182, %v1267, 0
      %v1384 = vsel %vm182, %v1268, 0
      %v1387 = vsel %vm182, %v1269, 0
      %v1390 = vsel %vm182, %v1270, 0
      %v1393 = vsel %vm182, %v1271, 0
      %v1396 = vsel %vm182, %v1272, 0
      %v1399 = vsel %vm182, %v1273, 0
      %v1402 = vsel %vm182, %v1274, 0
      %v1405 = vsel %vm497, %v1275, 0
      %1407 = vmatprep.subr.mxu0 0.0
      %1408 = vmatpush1.msra.mxu0 %v1405
      %1409 = vmatprep.subr.mxu0 0.0
      %1410 = vmatpush1.msra.mxu0 0.0
      %1411 = vmatprep.subr.mxu0 0.0
      %1412 = vmatpush1.msra.mxu0 0.0
      %1413 = vmatprep.subr.mxu0 0.0
      %1414 = vmatpush1.msra.mxu0 0.0
      %1415 = vmatprep.subr.mxu0 0.0
      %1416 = vmatpush1.msra.mxu0 0.0
      %1417 = vmatprep.subr.mxu0 0.0
      %1418 = vmatpush1.msra.mxu0 0.0
      %1419 = vmatprep.subr.mxu0 0.0
      %1420 = vmatpush1.msra.mxu0 0.0
      %1421 = vmatprep.subr.mxu0 0.0
      %1422 = vmatpush1.msra.mxu0 0.0
      %1423 = vmatprep.subr.mxu0 0.0
      %1424 = vmatpush1.msra.mxu0 0.0
      %1425 = vmatprep.subr.mxu0 0.0
      %1426 = vmatpush1.msra.mxu0 0.0
      %1427 = vmatprep.subr.mxu0 0.0
      %1428 = vmatpush1.msra.mxu0 0.0
      %1429 = vmatprep.subr.mxu0 0.0
      %1430 = vmatpush1.msra.mxu0 0.0
      %1431 = vmatprep.subr.mxu0 0.0
      %1432 = vmatpush1.msra.mxu0 0.0
      %1433 = vmatprep.subr.mxu0 0.0
      %1434 = vmatpush1.msra.mxu0 0.0
      %1435 = vmatprep.subr.mxu0 0.0
      %1436 = vmatpush1.msra.mxu0 0.0
      %1437 = vmatprep.subr.mxu0 0.0
      %1438 = vmatpush1.msra.mxu0 0.0
      %1439 = vmatprep.subr.mxu0 0.0
      %1440 = vmatpush1.msra.mxu0 0.0
      %1441 = vmatprep.subr.mxu0 0.0
      %1442 = vmatpush1.msra.mxu0 0.0
      %1443 = vmatprep.subr.mxu0 0.0
      %1444 = vmatpush1.msra.mxu0 0.0
      %1445 = vmatprep.subr.mxu0 0.0
      %1446 = vmatpush1.msra.mxu0 0.0
      %1447 = vmatprep.subr.mxu0 0.0
      %1448 = vmatpush1.msra.mxu0 0.0
      %1449 = vmatprep.subr.mxu0 0.0
      %1450 = vmatpush1.msra.mxu0 0.0
      %1451 = vmatprep.subr.mxu0 0.0
      %1452 = vmatpush1.msra.mxu0 0.0
      %1453 = vmatprep.subr.mxu0 0.0
      %1454 = vmatpush1.msra.mxu0 0.0
      %1455 = vmatprep.subr.mxu0 0.0
      %1456 = vmatpush1.msra.mxu0 0.0
      %1457 = vmatprep.subr.mxu0 0.0
      %1458 = vmatpush1.msra.mxu0 0.0
      %1459 = vmatprep.subr.mxu0 0.0
      %1460 = vmatpush1.msra.mxu0 0.0
      %1461 = vmatprep.subr.mxu0 0.0
      %1462 = vmatpush1.msra.mxu0 0.0
      %1463 = vmatprep.subr.mxu0 0.0
      %1464 = vmatpush1.msra.mxu0 0.0
      %1465 = vmatprep.subr.mxu0 0.0
      %1466 = vmatpush1.msra.mxu0 0.0
      %1467 = vmatprep.subr.mxu0 0.0
      %1468 = vmatpush1.msra.mxu0 0.0
      %1469 = vmatprep.subr.mxu0 0.0
      %1470 = vmatpush1.msra.mxu0 0.0
      %1471 = vmatprep.mubr.f32.mxu0 0.0
      %1472 = vmatmul.mubr.f32.gmra.mrb[0].mxu0 %v1309
      %v1473 = vpop.f32.mrb[0].mxu0
      %v1474 = vadd.f32 0.0, %v1473
      %v1475 = vpop.f32.mrb[0].mxu0
      %1476 = vmatprep.mubr.f32.mxu0 0.0
      %1477 = vmatmul.mubr.f32.gmra.mrb[0].mxu0 %v1312
      %v1478 = vpop.f32.mrb[0].mxu0
      %v1479 = vadd.f32 0.0, %v1478
      %v1480 = vpop.f32.mrb[0].mxu0
      %1481 = vmatprep.mubr.f32.mxu0 0.0
      %1482 = vmatmul.mubr.f32.gmra.mrb[0].mxu0 %v1315
      %v1483 = vpop.f32.mrb[0].mxu0
      %v1484 = vadd.f32 0.0, %v1483
      %v1485 = vpop.f32.mrb[0].mxu0
      %1486 = vmatprep.mubr.f32.mxu0 0.0
      %1487 = vmatmul.mubr.f32.gmra.mrb[0].mxu0 %v1318
      %v1488 = vpop.f32.mrb[0].mxu0
      %v1489 = vadd.f32 0.0, %v1488
      %v1490 = vpop.f32.mrb[0].mxu0
      %1491 = vmatprep.mubr.f32.mxu0 0.0
      %1492 = vmatmul.mubr.f32.gmra.mrb[0].mxu0 %v1321
      %v1493 = vpop.f32.mrb[0].mxu0
      %v1494 = vadd.f32 0.0, %v1493
      %v1495 = vpop.f32.mrb[0].mxu0
      %1496 = vmatprep.mubr.f32.mxu0 0.0
      %1497 = vmatmul.mubr.f32.gmra.mrb[0].mxu0 %v1324
      %v1498 = vpop.f32.mrb[0].mxu0
      %v1499 = vadd.f32 0.0, %v1498
      %v1500 = vpop.f32.mrb[0].mxu0
      %1501 = vmatprep.mubr.f32.mxu0 0.0
      %1502 = vmatmul.mubr.f32.gmra.mrb[0].mxu0 %v1327
      %v1503 = vpop.f32.mrb[0].mxu0
      %v1504 = vadd.f32 0.0, %v1503
      %v1505 = vpop.f32.mrb[0].mxu0
      %1506 = vmatprep.mubr.f32.mxu0 0.0
      %1507 = vmatmul.mubr.f32.gmra.mrb[0].mxu0 %v1330
      %v1508 = vpop.f32.mrb[0].mxu0
      %v1509 = vadd.f32 0.0, %v1508
      %v1510 = vpop.f32.mrb[0].mxu0
      %1511 = vmatprep.mubr.f32.mxu0 0.0
      %1512 = vmatmul.mubr.f32.gmra.mrb[0].mxu0 %v1333
      %v1513 = vpop.f32.mrb[0].mxu0
      %v1514 = vadd.f32 0.0, %v1513
      %v1515 = vpop.f32.mrb[0].mxu0
      %1516 = vmatprep.mubr.f32.mxu0 0.0
      %1517 = vmatmul.mubr.f32.gmra.mrb[0].mxu0 %v1336
      %v1518 = vpop.f32.mrb[0].mxu0
      %v1519 = vadd.f32 0.0, %v1518
      %v1520 = vpop.f32.mrb[0].mxu0
      %1521 = vmatprep.mubr.f32.mxu0 0.0
      %1522 = vmatmul.mubr.f32.gmra.mrb[0].mxu0 %v1339
      %v1523 = vpop.f32.mrb[0].mxu0
      %v1524 = vadd.f32 0.0, %v1523
      %v1525 = vpop.f32.mrb[0].mxu0
      %1526 = vmatprep.mubr.f32.mxu0 0.0
      %1527 = vmatmul.mubr.f32.gmra.mrb[0].mxu0 %v1342
      %v1528 = vpop.f32.mrb[0].mxu0
      %v1529 = vadd.f32 0.0, %v1528
      %v1530 = vpop.f32.mrb[0].mxu0
      %1531 = vmatprep.mubr.f32.mxu0 0.0
      %1532 = vmatmul.mubr.f32.gmra.mrb[0].mxu0 %v1345
      %v1533 = vpop.f32.mrb[0].mxu0
      %v1534 = vadd.f32 0.0, %v1533
      %v1535 = vpop.f32.mrb[0].mxu0
      %1536 = vmatprep.mubr.f32.mxu0 0.0
      %1537 = vmatmul.mubr.f32.gmra.mrb[0].mxu0 %v1348
      %v1538 = vpop.f32.mrb[0].mxu0
      %v1539 = vadd.f32 0.0, %v1538
      %v1540 = vpop.f32.mrb[0].mxu0
      %1541 = vmatprep.mubr.f32.mxu0 0.0
      %1542 = vmatmul.mubr.f32.gmra.mrb[0].mxu0 %v1351
      %v1543 = vpop.f32.mrb[0].mxu0
      %v1544 = vadd.f32 0.0, %v1543
      %v1545 = vpop.f32.mrb[0].mxu0
      %1546 = vmatprep.mubr.f32.mxu0 0.0
      %1547 = vmatmul.mubr.f32.gmra.mrb[0].mxu0 %v1354
      %v1548 = vpop.f32.mrb[0].mxu0
      %v1549 = vadd.f32 0.0, %v1548
      %v1550 = vpop.f32.mrb[0].mxu0
      %1551 = vmatprep.mubr.f32.mxu0 0.0
      %1552 = vmatmul.mubr.f32.gmra.mrb[0].mxu0 %v1357
      %v1553 = vpop.f32.mrb[0].mxu0
      %v1554 = vadd.f32 0.0, %v1553
      %v1555 = vpop.f32.mrb[0].mxu0
      %1556 = vmatprep.mubr.f32.mxu0 0.0
      %1557 = vmatmul.mubr.f32.gmra.mrb[0].mxu0 %v1360
      %v1558 = vpop.f32.mrb[0].mxu0
      %v1559 = vadd.f32 0.0, %v1558
      %v1560 = vpop.f32.mrb[0].mxu0
      %1561 = vmatprep.mubr.f32.mxu0 0.0
      %1562 = vmatmul.mubr.f32.gmra.mrb[0].mxu0 %v1363
      %v1563 = vpop.f32.mrb[0].mxu0
      %v1564 = vadd.f32 0.0, %v1563
      %v1565 = vpop.f32.mrb[0].mxu0
      %1566 = vmatprep.mubr.f32.mxu0 0.0
      %1567 = vmatmul.mubr.f32.gmra.mrb[0].mxu0 %v1366
      %v1568 = vpop.f32.mrb[0].mxu0
      %v1569 = vadd.f32 0.0, %v1568
      %v1570 = vpop.f32.mrb[0].mxu0
      %1571 = vmatprep.mubr.f32.mxu0 0.0
      %1572 = vmatmul.mubr.f32.gmra.mrb[0].mxu0 %v1369
      %v1573 = vpop.f32.mrb[0].mxu0
      %v1574 = vadd.f32 0.0, %v1573
      %v1575 = vpop.f32.mrb[0].mxu0
      %1576 = vmatprep.mubr.f32.mxu0 0.0
      %1577 = vmatmul.mubr.f32.gmra.mrb[0].mxu0 %v1372
      %v1578 = vpop.f32.mrb[0].mxu0
      %v1579 = vadd.f32 0.0, %v1578
      %v1580 = vpop.f32.mrb[0].mxu0
      %1581 = vmatprep.mubr.f32.mxu0 0.0
      %1582 = vmatmul.mubr.f32.gmra.mrb[0].mxu0 %v1375
      %v1583 = vpop.f32.mrb[0].mxu0
      %v1584 = vadd.f32 0.0, %v1583
      %v1585 = vpop.f32.mrb[0].mxu0
      %1586 = vmatprep.mubr.f32.mxu0 0.0
      %1587 = vmatmul.mubr.f32.gmra.mrb[0].mxu0 %v1378
      %v1588 = vpop.f32.mrb[0].mxu0
      %v1589 = vadd.f32 0.0, %v1588
      %v1590 = vpop.f32.mrb[0].mxu0
      %1591 = vmatprep.mubr.f32.mxu0 0.0
      %1592 = vmatmul.mubr.f32.gmra.mrb[0].mxu0 %v1381
      %v1593 = vpop.f32.mrb[0].mxu0
      %v1594 = vadd.f32 0.0, %v1593
      %v1595 = vpop.f32.mrb[0].mxu0
      %1596 = vmatprep.mubr.f32.mxu0 0.0
      %1597 = vmatmul.mubr.f32.gmra.mrb[0].mxu0 %v1384
      %v1598 = vpop.f32.mrb[0].mxu0
      %v1599 = vadd.f32 0.0, %v1598
      %v1600 = vpop.f32.mrb[0].mxu0
      %1601 = vmatprep.mubr.f32.mxu0 0.0
      %1602 = vmatmul.mubr.f32.gmra.mrb[0].mxu0 %v1387
      %v1603 = vpop.f32.mrb[0].mxu0
      %v1604 = vadd.f32 0.0, %v1603
      %v1605 = vpop.f32.mrb[0].mxu0
      %1606 = vmatprep.mubr.f32.mxu0 0.0
      %1607 = vmatmul.mubr.f32.gmra.mrb[0].mxu0 %v1390
      %v1608 = vpop.f32.mrb[0].mxu0
      %v1609 = vadd.f32 0.0, %v1608
      %v1610 = vpop.f32.mrb[0].mxu0
      %1611 = vmatprep.mubr.f32.mxu0 0.0
      %1612 = vmatmul.mubr.f32.gmra.mrb[0].mxu0 %v1393
      %v1613 = vpop.f32.mrb[0].mxu0
      %v1614 = vadd.f32 0.0, %v1613
      %v1615 = vpop.f32.mrb[0].mxu0
      %1616 = vmatprep.mubr.f32.mxu0 0.0
      %1617 = vmatmul.mubr.f32.gmra.mrb[0].mxu0 %v1396
      %v1618 = vpop.f32.mrb[0].mxu0
      %v1619 = vadd.f32 0.0, %v1618
      %v1620 = vpop.f32.mrb[0].mxu0
      %1621 = vmatprep.mubr.f32.mxu0 0.0
      %1622 = vmatmul.mubr.f32.gmra.mrb[0].mxu0 %v1399
      %v1623 = vpop.f32.mrb[0].mxu0
      %v1624 = vadd.f32 0.0, %v1623
      %v1625 = vpop.f32.mrb[0].mxu0
      %1626 = vmatprep.mubr.f32.mxu0 0.0
      %1627 = vmatmul.mubr.f32.gmra.mrb[0].mxu0 %v1402
      %v1628 = vpop.f32.mrb[0].mxu0
      %v1629 = vadd.f32 0.0, %v1628
      %v1630 = vpop.f32.mrb[0].mxu0
      %1631 = vdwg.mxu0
      %v1632 = vadd.f32 %v1276, %v1474
      %v1633 = vadd.f32 %v1277, %v1479
      %v1634 = vadd.f32 %v1278, %v1484
      %v1635 = vadd.f32 %v1279, %v1489
      %v1636 = vadd.f32 %v1280, %v1494
      %v1637 = vadd.f32 %v1281, %v1499
      %v1638 = vadd.f32 %v1282, %v1504
      %v1639 = vadd.f32 %v1283, %v1509
      %v1640 = vadd.f32 %v1284, %v1514
      %v1641 = vadd.f32 %v1285, %v1519
      %v1642 = vadd.f32 %v1286, %v1524
      %v1643 = vadd.f32 %v1287, %v1529
      %v1644 = vadd.f32 %v1288, %v1534
      %v1645 = vadd.f32 %v1289, %v1539
      %v1646 = vadd.f32 %v1290, %v1544
      %v1647 = vadd.f32 %v1291, %v1549
      %v1648 = vadd.f32 %v1292, %v1554
      %v1649 = vadd.f32 %v1293, %v1559
      %v1650 = vadd.f32 %v1294, %v1564
      %v1651 = vadd.f32 %v1295, %v1569
      %v1652 = vadd.f32 %v1296, %v1574
      %v1653 = vadd.f32 %v1297, %v1579
      %v1654 = vadd.f32 %v1298, %v1584
      %v1655 = vadd.f32 %v1299, %v1589
      %v1656 = vadd.f32 %v1300, %v1594
      %v1657 = vadd.f32 %v1301, %v1599
      %v1658 = vadd.f32 %v1302, %v1604
      %v1659 = vadd.f32 %v1303, %v1609
      %v1660 = vadd.f32 %v1304, %v1614
      %v1661 = vadd.f32 %v1305, %v1619
      %v1662 = vadd.f32 %v1306, %v1624
      %v1663 = vadd.f32 %v1307, %v1629
      %1664 = vst.msk [vmem:[#allocation3] sm:$0xff] %vm303, %v1632
      %1665 = vst.msk [vmem:[#allocation3 + $0x8] sm:$0xff] %vm303, %v1633
      %1666 = vst.msk [vmem:[#allocation3 + $0x10] sm:$0xff] %vm303, %v1634
      %1667 = vst.msk [vmem:[#allocation3 + $0x18] sm:$0xff] %vm303, %v1635
      %1668 = vst.msk [vmem:[#allocation3 + $0x20] sm:$0xff] %vm303, %v1636
      %1669 = vst.msk [vmem:[#allocation3 + $0x28] sm:$0xff] %vm303, %v1637
      %1670 = vst.msk [vmem:[#allocation3 + $0x30] sm:$0xff] %vm303, %v1638
      %1671 = vst.msk [vmem:[#allocation3 + $0x38] sm:$0xff] %vm303, %v1639
      %1672 = vst.msk [vmem:[#allocation3 + $0x40] sm:$0xff] %vm303, %v1640
      %1673 = vst.msk [vmem:[#allocation3 + $0x48] sm:$0xff] %vm303, %v1641
      %1674 = vst.msk [vmem:[#allocation3 + $0x50] sm:$0xff] %vm303, %v1642
      %1675 = vst.msk [vmem:[#allocation3 + $0x58] sm:$0xff] %vm303, %v1643
      %1676 = vst.msk [vmem:[#allocation3 + $0x60] sm:$0xff] %vm303, %v1644
      %1677 = vst.msk [vmem:[#allocation3 + $0x68] sm:$0xff] %vm303, %v1645
      %1678 = vst.msk [vmem:[#allocation3 + $0x70] sm:$0xff] %vm303, %v1646
      %1679 = vst.msk [vmem:[#allocation3 + $0x78] sm:$0xff] %vm303, %v1647
      %1680 = vst.msk [vmem:[#allocation3 + $0x80] sm:$0xff] %vm303, %v1648
      %1681 = vst.msk [vmem:[#allocation3 + $0x88] sm:$0xff] %vm303, %v1649
      %1682 = vst.msk [vmem:[#allocation3 + $0x90] sm:$0xff] %vm303, %v1650
      %1683 = vst.msk [vmem:[#allocation3 + $0x98] sm:$0xff] %vm303, %v1651
      %1684 = vst.msk [vmem:[#allocation3 + $0xa0] sm:$0xff] %vm303, %v1652
      %1685 = vst.msk [vmem:[#allocation3 + $0xa8] sm:$0xff] %vm303, %v1653
      %1686 = vst.msk [vmem:[#allocation3 + $0xb0] sm:$0xff] %vm303, %v1654
      %1687 = vst.msk [vmem:[#allocation3 + $0xb8] sm:$0xff] %vm303, %v1655
      %1688 = vst.msk [vmem:[#allocation3 + $0xc0] sm:$0xff] %vm303, %v1656
      %1689 = vst.msk [vmem:[#allocation3 + $0xc8] sm:$0xff] %vm303, %v1657
      %1690 = vst.msk [vmem:[#allocation3 + $0xd0] sm:$0xff] %vm303, %v1658
      %1691 = vst.msk [vmem:[#allocation3 + $0xd8] sm:$0xff] %vm303, %v1659
      %1692 = vst.msk [vmem:[#allocation3 + $0xe0] sm:$0xff] %vm303, %v1660
      %1693 = vst.msk [vmem:[#allocation3 + $0xe8] sm:$0xff] %vm303, %v1661
      %1694 = vst.msk [vmem:[#allocation3 + $0xf0] sm:$0xff] %vm303, %v1662
      %1695 = vst.msk [vmem:[#allocation3 + $0xf8] sm:$0xff] %vm303, %v1663
      %v1696 = vld [vmem:[%s270] sm:$0xff]
      %v1697 = vld [vmem:[%s270 + $0x8] sm:$0xff]
      %v1698 = vld [vmem:[%s270 + $0x18] sm:$0xff]
      %v1699 = vld [vmem:[%s270 + $0x20] sm:$0xff]
      %v1700 = vld [vmem:[%s270 + $0x30] sm:$0xff]
      %v1701 = vld [vmem:[%s270 + $0x38] sm:$0xff]
      %v1702 = vld [vmem:[%s270 + $0x48] sm:$0xff]
      %v1703 = vld [vmem:[%s270 + $0x50] sm:$0xff]
      %v1704 = vld [vmem:[%s270 + $0x60] sm:$0xff]
      %v1705 = vld [vmem:[%s270 + $0x68] sm:$0xff]
      %v1706 = vld [vmem:[%s270 + $0x78] sm:$0xff]
      %v1707 = vld [vmem:[%s270 + $0x80] sm:$0xff]
      %v1708 = vld [vmem:[%s270 + $0x90] sm:$0xff]
      %v1709 = vld [vmem:[%s270 + $0x98] sm:$0xff]
      %v1710 = vld [vmem:[%s270 + $0xa8] sm:$0xff]
      %v1711 = vld [vmem:[%s270 + $0xb0] sm:$0xff]
      %v1712 = vld [vmem:[%s270 + $0xc0] sm:$0xff]
      %v1713 = vld [vmem:[%s270 + $0xc8] sm:$0xff]
      %v1714 = vld [vmem:[%s270 + $0xd8] sm:$0xff]
      %v1715 = vld [vmem:[%s270 + $0xe0] sm:$0xff]
      %v1716 = vld [vmem:[%s270 + $0xf0] sm:$0xff]
      %v1717 = vld [vmem:[%s270 + $0xf8] sm:$0xff]
      %v1718 = vld [vmem:[%s270 + $0x108] sm:$0xff]
      %v1719 = vld [vmem:[%s270 + $0x110] sm:$0xff]
      %v1720 = vld [vmem:[%s270 + $0x120] sm:$0xff]
      %v1721 = vld [vmem:[%s270 + $0x128] sm:$0xff]
      %v1722 = vld [vmem:[%s270 + $0x138] sm:$0xff]
      %v1723 = vld [vmem:[%s270 + $0x140] sm:$0xff]
      %v1724 = vld [vmem:[%s270 + $0x150] sm:$0xff]
      %v1725 = vld [vmem:[%s270 + $0x158] sm:$0xff]
      %v1726 = vld [vmem:[%s270 + $0x168] sm:$0xff]
      %v1727 = vld [vmem:[%s270 + $0x170] sm:$0xff]
      %v1728 = vld [vmem:[%s1 + $0xc] sm:$0xf]
      %v1729 = vld [vmem:[#allocation3] sm:$0xff]
      %v1730 = vld [vmem:[#allocation3 + $0x8] sm:$0xff]
      %v1731 = vld [vmem:[#allocation3 + $0x10] sm:$0xff]
      %v1732 = vld [vmem:[#allocation3 + $0x18] sm:$0xff]
      %v1733 = vld [vmem:[#allocation3 + $0x20] sm:$0xff]
      %v1734 = vld [vmem:[#allocation3 + $0x28] sm:$0xff]
      %v1735 = vld [vmem:[#allocation3 + $0x30] sm:$0xff]
      %v1736 = vld [vmem:[#allocation3 + $0x38] sm:$0xff]
      %v1737 = vld [vmem:[#allocation3 + $0x40] sm:$0xff]
      %v1738 = vld [vmem:[#allocation3 + $0x48] sm:$0xff]
      %v1739 = vld [vmem:[#allocation3 + $0x50] sm:$0xff]
      %v1740 = vld [vmem:[#allocation3 + $0x58] sm:$0xff]
      %v1741 = vld [vmem:[#allocation3 + $0x60] sm:$0xff]
      %v1742 = vld [vmem:[#allocation3 + $0x68] sm:$0xff]
      %v1743 = vld [vmem:[#allocation3 + $0x70] sm:$0xff]
      %v1744 = vld [vmem:[#allocation3 + $0x78] sm:$0xff]
      %v1745 = vld [vmem:[#allocation3 + $0x80] sm:$0xff]
      %v1746 = vld [vmem:[#allocation3 + $0x88] sm:$0xff]
      %v1747 = vld [vmem:[#allocation3 + $0x90] sm:$0xff]
      %v1748 = vld [vmem:[#allocation3 + $0x98] sm:$0xff]
      %v1749 = vld [vmem:[#allocation3 + $0xa0] sm:$0xff]
      %v1750 = vld [vmem:[#allocation3 + $0xa8] sm:$0xff]
      %v1751 = vld [vmem:[#allocation3 + $0xb0] sm:$0xff]
      %v1752 = vld [vmem:[#allocation3 + $0xb8] sm:$0xff]
      %v1753 = vld [vmem:[#allocation3 + $0xc0] sm:$0xff]
      %v1754 = vld [vmem:[#allocation3 + $0xc8] sm:$0xff]
      %v1755 = vld [vmem:[#allocation3 + $0xd0] sm:$0xff]
      %v1756 = vld [vmem:[#allocation3 + $0xd8] sm:$0xff]
      %v1757 = vld [vmem:[#allocation3 + $0xe0] sm:$0xff]
      %v1758 = vld [vmem:[#allocation3 + $0xe8] sm:$0xff]
      %v1759 = vld [vmem:[#allocation3 + $0xf0] sm:$0xff]
      %v1760 = vld [vmem:[#allocation3 + $0xf8] sm:$0xff]
      %v1762 = vsel %vm182, %v1696, 0
      %v1765 = vsel %vm182, %v1697, 0
      %v1768 = vsel %vm182, %v1698, 0
      %v1771 = vsel %vm182, %v1699, 0
      %v1774 = vsel %vm182, %v1700, 0
      %v1777 = vsel %vm182, %v1701, 0
      %v1780 = vsel %vm182, %v1702, 0
      %v1783 = vsel %vm182, %v1703, 0
      %v1786 = vsel %vm182, %v1704, 0
      %v1789 = vsel %vm182, %v1705, 0
      %v1792 = vsel %vm182, %v1706, 0
      %v1795 = vsel %vm182, %v1707, 0
      %v1798 = vsel %vm182, %v1708, 0
      %v1801 = vsel %vm182, %v1709, 0
      %v1804 = vsel %vm182, %v1710, 0
      %v1807 = vsel %vm182, %v1711, 0
      %v1810 = vsel %vm182, %v1712, 0
      %v1813 = vsel %vm182, %v1713, 0
      %v1816 = vsel %vm182, %v1714, 0
      %v1819 = vsel %vm182, %v1715, 0
      %v1822 = vsel %vm182, %v1716, 0
      %v1825 = vsel %vm182, %v1717, 0
      %v1828 = vsel %vm182, %v1718, 0
      %v1831 = vsel %vm182, %v1719, 0
      %v1834 = vsel %vm182, %v1720, 0
      %v1837 = vsel %vm182, %v1721, 0
      %v1840 = vsel %vm182, %v1722, 0
      %v1843 = vsel %vm182, %v1723, 0
      %v1846 = vsel %vm182, %v1724, 0
      %v1849 = vsel %vm182, %v1725, 0
      %v1852 = vsel %vm182, %v1726, 0
      %v1855 = vsel %vm182, %v1727, 0
      %v1858 = vsel %vm497, %v1728, 0
      %1860 = vmatprep.subr.mxu0 0.0
      %1861 = vmatpush1.msra.mxu0 %v1858
      %1862 = vmatprep.subr.mxu0 0.0
      %1863 = vmatpush1.msra.mxu0 0.0
      %1864 = vmatprep.subr.mxu0 0.0
      %1865 = vmatpush1.msra.mxu0 0.0
      %1866 = vmatprep.subr.mxu0 0.0
      %1867 = vmatpush1.msra.mxu0 0.0
      %1868 = vmatprep.subr.mxu0 0.0
      %1869 = vmatpush1.msra.mxu0 0.0
      %1870 = vmatprep.subr.mxu0 0.0
      %1871 = vmatpush1.msra.mxu0 0.0
      %1872 = vmatprep.subr.mxu0 0.0
      %1873 = vmatpush1.msra.mxu0 0.0
      %1874 = vmatprep.subr.mxu0 0.0
      %1875 = vmatpush1.msra.mxu0 0.0
      %1876 = vmatprep.subr.mxu0 0.0
      %1877 = vmatpush1.msra.mxu0 0.0
      %1878 = vmatprep.subr.mxu0 0.0
      %1879 = vmatpush1.msra.mxu0 0.0
      %1880 = vmatprep.subr.mxu0 0.0
      %1881 = vmatpush1.msra.mxu0 0.0
      %1882 = vmatprep.subr.mxu0 0.0
      %1883 = vmatpush1.msra.mxu0 0.0
      %1884 = vmatprep.subr.mxu0 0.0
      %1885 = vmatpush1.msra.mxu0 0.0
      %1886 = vmatprep.subr.mxu0 0.0
      %1887 = vmatpush1.msra.mxu0 0.0
      %1888 = vmatprep.subr.mxu0 0.0
      %1889 = vmatpush1.msra.mxu0 0.0
      %1890 = vmatprep.subr.mxu0 0.0
      %1891 = vmatpush1.msra.mxu0 0.0
      %1892 = vmatprep.subr.mxu0 0.0
      %1893 = vmatpush1.msra.mxu0 0.0
      %1894 = vmatprep.subr.mxu0 0.0
      %1895 = vmatpush1.msra.mxu0 0.0
      %1896 = vmatprep.subr.mxu0 0.0
      %1897 = vmatpush1.msra.mxu0 0.0
      %1898 = vmatprep.subr.mxu0 0.0
      %1899 = vmatpush1.msra.mxu0 0.0
      %1900 = vmatprep.subr.mxu0 0.0
      %1901 = vmatpush1.msra.mxu0 0.0
      %1902 = vmatprep.subr.mxu0 0.0
      %1903 = vmatpush1.msra.mxu0 0.0
      %1904 = vmatprep.subr.mxu0 0.0
      %1905 = vmatpush1.msra.mxu0 0.0
      %1906 = vmatprep.subr.mxu0 0.0
      %1907 = vmatpush1.msra.mxu0 0.0
      %1908 = vmatprep.subr.mxu0 0.0
      %1909 = vmatpush1.msra.mxu0 0.0
      %1910 = vmatprep.subr.mxu0 0.0
      %1911 = vmatpush1.msra.mxu0 0.0
      %1912 = vmatprep.subr.mxu0 0.0
      %1913 = vmatpush1.msra.mxu0 0.0
      %1914 = vmatprep.subr.mxu0 0.0
      %1915 = vmatpush1.msra.mxu0 0.0
      %1916 = vmatprep.subr.mxu0 0.0
      %1917 = vmatpush1.msra.mxu0 0.0
      %1918 = vmatprep.subr.mxu0 0.0
      %1919 = vmatpush1.msra.mxu0 0.0
      %1920 = vmatprep.subr.mxu0 0.0
      %1921 = vmatpush1.msra.mxu0 0.0
      %1922 = vmatprep.subr.mxu0 0.0
      %1923 = vmatpush1.msra.mxu0 0.0
      %1924 = vmatprep.mubr.f32.mxu0 0.0
      %1925 = vmatmul.mubr.f32.gmra.mrb[0].mxu0 %v1762
      %v1926 = vpop.f32.mrb[0].mxu0
      %v1927 = vadd.f32 0.0, %v1926
      %v1928 = vpop.f32.mrb[0].mxu0
      %1929 = vmatprep.mubr.f32.mxu0 0.0
      %1930 = vmatmul.mubr.f32.gmra.mrb[0].mxu0 %v1765
      %v1931 = vpop.f32.mrb[0].mxu0
      %v1932 = vadd.f32 0.0, %v1931
      %v1933 = vpop.f32.mrb[0].mxu0
      %1934 = vmatprep.mubr.f32.mxu0 0.0
      %1935 = vmatmul.mubr.f32.gmra.mrb[0].mxu0 %v1768
      %v1936 = vpop.f32.mrb[0].mxu0
      %v1937 = vadd.f32 0.0, %v1936
      %v1938 = vpop.f32.mrb[0].mxu0
      %1939 = vmatprep.mubr.f32.mxu0 0.0
      %1940 = vmatmul.mubr.f32.gmra.mrb[0].mxu0 %v1771
      %v1941 = vpop.f32.mrb[0].mxu0
      %v1942 = vadd.f32 0.0, %v1941
      %v1943 = vpop.f32.mrb[0].mxu0
      %1944 = vmatprep.mubr.f32.mxu0 0.0
      %1945 = vmatmul.mubr.f32.gmra.mrb[0].mxu0 %v1774
      %v1946 = vpop.f32.mrb[0].mxu0
      %v1947 = vadd.f32 0.0, %v1946
      %v1948 = vpop.f32.mrb[0].mxu0
      %1949 = vmatprep.mubr.f32.mxu0 0.0
      %1950 = vmatmul.mubr.f32.gmra.mrb[0].mxu0 %v1777
      %v1951 = vpop.f32.mrb[0].mxu0
      %v1952 = vadd.f32 0.0, %v1951
      %v1953 = vpop.f32.mrb[0].mxu0
      %1954 = vmatprep.mubr.f32.mxu0 0.0
      %1955 = vmatmul.mubr.f32.gmra.mrb[0].mxu0 %v1780
      %v1956 = vpop.f32.mrb[0].mxu0
      %v1957 = vadd.f32 0.0, %v1956
      %v1958 = vpop.f32.mrb[0].mxu0
      %1959 = vmatprep.mubr.f32.mxu0 0.0
      %1960 = vmatmul.mubr.f32.gmra.mrb[0].mxu0 %v1783
      %v1961 = vpop.f32.mrb[0].mxu0
      %v1962 = vadd.f32 0.0, %v1961
      %v1963 = vpop.f32.mrb[0].mxu0
      %1964 = vmatprep.mubr.f32.mxu0 0.0
      %1965 = vmatmul.mubr.f32.gmra.mrb[0].mxu0 %v1786
      %v1966 = vpop.f32.mrb[0].mxu0
      %v1967 = vadd.f32 0.0, %v1966
      %v1968 = vpop.f32.mrb[0].mxu0
      %1969 = vmatprep.mubr.f32.mxu0 0.0
      %1970 = vmatmul.mubr.f32.gmra.mrb[0].mxu0 %v1789
      %v1971 = vpop.f32.mrb[0].mxu0
      %v1972 = vadd.f32 0.0, %v1971
      %v1973 = vpop.f32.mrb[0].mxu0
      %1974 = vmatprep.mubr.f32.mxu0 0.0
      %1975 = vmatmul.mubr.f32.gmra.mrb[0].mxu0 %v1792
      %v1976 = vpop.f32.mrb[0].mxu0
      %v1977 = vadd.f32 0.0, %v1976
      %v1978 = vpop.f32.mrb[0].mxu0
      %1979 = vmatprep.mubr.f32.mxu0 0.0
      %1980 = vmatmul.mubr.f32.gmra.mrb[0].mxu0 %v1795
      %v1981 = vpop.f32.mrb[0].mxu0
      %v1982 = vadd.f32 0.0, %v1981
      %v1983 = vpop.f32.mrb[0].mxu0
      %1984 = vmatprep.mubr.f32.mxu0 0.0
      %1985 = vmatmul.mubr.f32.gmra.mrb[0].mxu0 %v1798
      %v1986 = vpop.f32.mrb[0].mxu0
      %v1987 = vadd.f32 0.0, %v1986
      %v1988 = vpop.f32.mrb[0].mxu0
      %1989 = vmatprep.mubr.f32.mxu0 0.0
      %1990 = vmatmul.mubr.f32.gmra.mrb[0].mxu0 %v1801
      %v1991 = vpop.f32.mrb[0].mxu0
      %v1992 = vadd.f32 0.0, %v1991
      %v1993 = vpop.f32.mrb[0].mxu0
      %1994 = vmatprep.mubr.f32.mxu0 0.0
      %1995 = vmatmul.mubr.f32.gmra.mrb[0].mxu0 %v1804
      %v1996 = vpop.f32.mrb[0].mxu0
      %v1997 = vadd.f32 0.0, %v1996
      %v1998 = vpop.f32.mrb[0].mxu0
      %1999 = vmatprep.mubr.f32.mxu0 0.0
      %2000 = vmatmul.mubr.f32.gmra.mrb[0].mxu0 %v1807
      %v2001 = vpop.f32.mrb[0].mxu0
      %v2002 = vadd.f32 0.0, %v2001
      %v2003 = vpop.f32.mrb[0].mxu0
      %2004 = vmatprep.mubr.f32.mxu0 0.0
      %2005 = vmatmul.mubr.f32.gmra.mrb[0].mxu0 %v1810
      %v2006 = vpop.f32.mrb[0].mxu0
      %v2007 = vadd.f32 0.0, %v2006
      %v2008 = vpop.f32.mrb[0].mxu0
      %2009 = vmatprep.mubr.f32.mxu0 0.0
      %2010 = vmatmul.mubr.f32.gmra.mrb[0].mxu0 %v1813
      %v2011 = vpop.f32.mrb[0].mxu0
      %v2012 = vadd.f32 0.0, %v2011
      %v2013 = vpop.f32.mrb[0].mxu0
      %2014 = vmatprep.mubr.f32.mxu0 0.0
      %2015 = vmatmul.mubr.f32.gmra.mrb[0].mxu0 %v1816
      %v2016 = vpop.f32.mrb[0].mxu0
      %v2017 = vadd.f32 0.0, %v2016
      %v2018 = vpop.f32.mrb[0].mxu0
      %2019 = vmatprep.mubr.f32.mxu0 0.0
      %2020 = vmatmul.mubr.f32.gmra.mrb[0].mxu0 %v1819
      %v2021 = vpop.f32.mrb[0].mxu0
      %v2022 = vadd.f32 0.0, %v2021
      %v2023 = vpop.f32.mrb[0].mxu0
      %2024 = vmatprep.mubr.f32.mxu0 0.0
      %2025 = vmatmul.mubr.f32.gmra.mrb[0].mxu0 %v1822
      %v2026 = vpop.f32.mrb[0].mxu0
      %v2027 = vadd.f32 0.0, %v2026
      %v2028 = vpop.f32.mrb[0].mxu0
      %2029 = vmatprep.mubr.f32.mxu0 0.0
      %2030 = vmatmul.mubr.f32.gmra.mrb[0].mxu0 %v1825
      %v2031 = vpop.f32.mrb[0].mxu0
      %v2032 = vadd.f32 0.0, %v2031
      %v2033 = vpop.f32.mrb[0].mxu0
      %2034 = vmatprep.mubr.f32.mxu0 0.0
      %2035 = vmatmul.mubr.f32.gmra.mrb[0].mxu0 %v1828
      %v2036 = vpop.f32.mrb[0].mxu0
      %v2037 = vadd.f32 0.0, %v2036
      %v2038 = vpop.f32.mrb[0].mxu0
      %2039 = vmatprep.mubr.f32.mxu0 0.0
      %2040 = vmatmul.mubr.f32.gmra.mrb[0].mxu0 %v1831
      %v2041 = vpop.f32.mrb[0].mxu0
      %v2042 = vadd.f32 0.0, %v2041
      %v2043 = vpop.f32.mrb[0].mxu0
      %2044 = vmatprep.mubr.f32.mxu0 0.0
      %2045 = vmatmul.mubr.f32.gmra.mrb[0].mxu0 %v1834
      %v2046 = vpop.f32.mrb[0].mxu0
      %v2047 = vadd.f32 0.0, %v2046
      %v2048 = vpop.f32.mrb[0].mxu0
      %2049 = vmatprep.mubr.f32.mxu0 0.0
      %2050 = vmatmul.mubr.f32.gmra.mrb[0].mxu0 %v1837
      %v2051 = vpop.f32.mrb[0].mxu0
      %v2052 = vadd.f32 0.0, %v2051
      %v2053 = vpop.f32.mrb[0].mxu0
      %2054 = vmatprep.mubr.f32.mxu0 0.0
      %2055 = vmatmul.mubr.f32.gmra.mrb[0].mxu0 %v1840
      %v2056 = vpop.f32.mrb[0].mxu0
      %v2057 = vadd.f32 0.0, %v2056
      %v2058 = vpop.f32.mrb[0].mxu0
      %2059 = vmatprep.mubr.f32.mxu0 0.0
      %2060 = vmatmul.mubr.f32.gmra.mrb[0].mxu0 %v1843
      %v2061 = vpop.f32.mrb[0].mxu0
      %v2062 = vadd.f32 0.0, %v2061
      %v2063 = vpop.f32.mrb[0].mxu0
      %2064 = vmatprep.mubr.f32.mxu0 0.0
      %2065 = vmatmul.mubr.f32.gmra.mrb[0].mxu0 %v1846
      %v2066 = vpop.f32.mrb[0].mxu0
      %v2067 = vadd.f32 0.0, %v2066
      %v2068 = vpop.f32.mrb[0].mxu0
      %2069 = vmatprep.mubr.f32.mxu0 0.0
      %2070 = vmatmul.mubr.f32.gmra.mrb[0].mxu0 %v1849
      %v2071 = vpop.f32.mrb[0].mxu0
      %v2072 = vadd.f32 0.0, %v2071
      %v2073 = vpop.f32.mrb[0].mxu0
      %2074 = vmatprep.mubr.f32.mxu0 0.0
      %2075 = vmatmul.mubr.f32.gmra.mrb[0].mxu0 %v1852
      %v2076 = vpop.f32.mrb[0].mxu0
      %v2077 = vadd.f32 0.0, %v2076
      %v2078 = vpop.f32.mrb[0].mxu0
      %2079 = vmatprep.mubr.f32.mxu0 0.0
      %2080 = vmatmul.mubr.f32.gmra.mrb[0].mxu0 %v1855
      %v2081 = vpop.f32.mrb[0].mxu0
      %v2082 = vadd.f32 0.0, %v2081
      %v2083 = vpop.f32.mrb[0].mxu0
      %2084 = vdwg.mxu0
      %v2085 = vadd.f32 %v1729, %v1927
      %v2086 = vadd.f32 %v1730, %v1932
      %v2087 = vadd.f32 %v1731, %v1937
      %v2088 = vadd.f32 %v1732, %v1942
      %v2089 = vadd.f32 %v1733, %v1947
      %v2090 = vadd.f32 %v1734, %v1952
      %v2091 = vadd.f32 %v1735, %v1957
      %v2092 = vadd.f32 %v1736, %v1962
      %v2093 = vadd.f32 %v1737, %v1967
      %v2094 = vadd.f32 %v1738, %v1972
      %v2095 = vadd.f32 %v1739, %v1977
      %v2096 = vadd.f32 %v1740, %v1982
      %v2097 = vadd.f32 %v1741, %v1987
      %v2098 = vadd.f32 %v1742, %v1992
      %v2099 = vadd.f32 %v1743, %v1997
      %v2100 = vadd.f32 %v1744, %v2002
      %v2101 = vadd.f32 %v1745, %v2007
      %v2102 = vadd.f32 %v1746, %v2012
      %v2103 = vadd.f32 %v1747, %v2017
      %v2104 = vadd.f32 %v1748, %v2022
      %v2105 = vadd.f32 %v1749, %v2027
      %v2106 = vadd.f32 %v1750, %v2032
      %v2107 = vadd.f32 %v1751, %v2037
      %v2108 = vadd.f32 %v1752, %v2042
      %v2109 = vadd.f32 %v1753, %v2047
      %v2110 = vadd.f32 %v1754, %v2052
      %v2111 = vadd.f32 %v1755, %v2057
      %v2112 = vadd.f32 %v1756, %v2062
      %v2113 = vadd.f32 %v1757, %v2067
      %v2114 = vadd.f32 %v1758, %v2072
      %v2115 = vadd.f32 %v1759, %v2077
      %v2116 = vadd.f32 %v1760, %v2082
      %2117 = vst.msk [vmem:[#allocation3] sm:$0xff] %vm303, %v2085
      %2118 = vst.msk [vmem:[#allocation3 + $0x8] sm:$0xff] %vm303, %v2086
      %2119 = vst.msk [vmem:[#allocation3 + $0x10] sm:$0xff] %vm303, %v2087
      %2120 = vst.msk [vmem:[#allocation3 + $0x18] sm:$0xff] %vm303, %v2088
      %2121 = vst.msk [vmem:[#allocation3 + $0x20] sm:$0xff] %vm303, %v2089
      %2122 = vst.msk [vmem:[#allocation3 + $0x28] sm:$0xff] %vm303, %v2090
      %2123 = vst.msk [vmem:[#allocation3 + $0x30] sm:$0xff] %vm303, %v2091
      %2124 = vst.msk [vmem:[#allocation3 + $0x38] sm:$0xff] %vm303, %v2092
      %2125 = vst.msk [vmem:[#allocation3 + $0x40] sm:$0xff] %vm303, %v2093
      %2126 = vst.msk [vmem:[#allocation3 + $0x48] sm:$0xff] %vm303, %v2094
      %2127 = vst.msk [vmem:[#allocation3 + $0x50] sm:$0xff] %vm303, %v2095
      %2128 = vst.msk [vmem:[#allocation3 + $0x58] sm:$0xff] %vm303, %v2096
      %2129 = vst.msk [vmem:[#allocation3 + $0x60] sm:$0xff] %vm303, %v2097
      %2130 = vst.msk [vmem:[#allocation3 + $0x68] sm:$0xff] %vm303, %v2098
      %2131 = vst.msk [vmem:[#allocation3 + $0x70] sm:$0xff] %vm303, %v2099
      %2132 = vst.msk [vmem:[#allocation3 + $0x78] sm:$0xff] %vm303, %v2100
      %2133 = vst.msk [vmem:[#allocation3 + $0x80] sm:$0xff] %vm303, %v2101
      %2134 = vst.msk [vmem:[#allocation3 + $0x88] sm:$0xff] %vm303, %v2102
      %2135 = vst.msk [vmem:[#allocation3 + $0x90] sm:$0xff] %vm303, %v2103
      %2136 = vst.msk [vmem:[#allocation3 + $0x98] sm:$0xff] %vm303, %v2104
      %2137 = vst.msk [vmem:[#allocation3 + $0xa0] sm:$0xff] %vm303, %v2105
      %2138 = vst.msk [vmem:[#allocation3 + $0xa8] sm:$0xff] %vm303, %v2106
      %2139 = vst.msk [vmem:[#allocation3 + $0xb0] sm:$0xff] %vm303, %v2107
      %2140 = vst.msk [vmem:[#allocation3 + $0xb8] sm:$0xff] %vm303, %v2108
      %2141 = vst.msk [vmem:[#allocation3 + $0xc0] sm:$0xff] %vm303, %v2109
      %2142 = vst.msk [vmem:[#allocation3 + $0xc8] sm:$0xff] %vm303, %v2110
      %2143 = vst.msk [vmem:[#allocation3 + $0xd0] sm:$0xff] %vm303, %v2111
      %2144 = vst.msk [vmem:[#allocation3 + $0xd8] sm:$0xff] %vm303, %v2112
      %2145 = vst.msk [vmem:[#allocation3 + $0xe0] sm:$0xff] %vm303, %v2113
      %2146 = vst.msk [vmem:[#allocation3 + $0xe8] sm:$0xff] %vm303, %v2114
      %2147 = vst.msk [vmem:[#allocation3 + $0xf0] sm:$0xff] %vm303, %v2115
      %2148 = vst.msk [vmem:[#allocation3 + $0xf8] sm:$0xff] %vm303, %v2116
      %v2149 = vld [vmem:[%s270 + $0x1] sm:$0xff]
      %v2150 = vld [vmem:[%s270 + $0x9] sm:$0xff]
      %v2151 = vld [vmem:[%s270 + $0x19] sm:$0xff]
      %v2152 = vld [vmem:[%s270 + $0x21] sm:$0xff]
      %v2153 = vld [vmem:[%s270 + $0x31] sm:$0xff]
      %v2154 = vld [vmem:[%s270 + $0x39] sm:$0xff]
      %v2155 = vld [vmem:[%s270 + $0x49] sm:$0xff]
      %v2156 = vld [vmem:[%s270 + $0x51] sm:$0xff]
      %v2157 = vld [vmem:[%s270 + $0x61] sm:$0xff]
      %v2158 = vld [vmem:[%s270 + $0x69] sm:$0xff]
      %v2159 = vld [vmem:[%s270 + $0x79] sm:$0xff]
      %v2160 = vld [vmem:[%s270 + $0x81] sm:$0xff]
      %v2161 = vld [vmem:[%s270 + $0x91] sm:$0xff]
      %v2162 = vld [vmem:[%s270 + $0x99] sm:$0xff]
      %v2163 = vld [vmem:[%s270 + $0xa9] sm:$0xff]
      %v2164 = vld [vmem:[%s270 + $0xb1] sm:$0xff]
      %v2165 = vld [vmem:[%s270 + $0xc1] sm:$0xff]
      %v2166 = vld [vmem:[%s270 + $0xc9] sm:$0xff]
      %v2167 = vld [vmem:[%s270 + $0xd9] sm:$0xff]
      %v2168 = vld [vmem:[%s270 + $0xe1] sm:$0xff]
      %v2169 = vld [vmem:[%s270 + $0xf1] sm:$0xff]
      %v2170 = vld [vmem:[%s270 + $0xf9] sm:$0xff]
      %v2171 = vld [vmem:[%s270 + $0x109] sm:$0xff]
      %v2172 = vld [vmem:[%s270 + $0x111] sm:$0xff]
      %v2173 = vld [vmem:[%s270 + $0x121] sm:$0xff]
      %v2174 = vld [vmem:[%s270 + $0x129] sm:$0xff]
      %v2175 = vld [vmem:[%s270 + $0x139] sm:$0xff]
      %v2176 = vld [vmem:[%s270 + $0x141] sm:$0xff]
      %v2177 = vld [vmem:[%s270 + $0x151] sm:$0xff]
      %v2178 = vld [vmem:[%s270 + $0x159] sm:$0xff]
      %v2179 = vld [vmem:[%s270 + $0x169] sm:$0xff]
      %v2180 = vld [vmem:[%s270 + $0x171] sm:$0xff]
      %v2181 = vld [vmem:[%s1 + $0x10] sm:$0xf]
      %v2182 = vld [vmem:[#allocation3] sm:$0xff]
      %v2183 = vld [vmem:[#allocation3 + $0x8] sm:$0xff]
      %v2184 = vld [vmem:[#allocation3 + $0x10] sm:$0xff]
      %v2185 = vld [vmem:[#allocation3 + $0x18] sm:$0xff]
      %v2186 = vld [vmem:[#allocation3 + $0x20] sm:$0xff]
      %v2187 = vld [vmem:[#allocation3 + $0x28] sm:$0xff]
      %v2188 = vld [vmem:[#allocation3 + $0x30] sm:$0xff]
      %v2189 = vld [vmem:[#allocation3 + $0x38] sm:$0xff]
      %v2190 = vld [vmem:[#allocation3 + $0x40] sm:$0xff]
      %v2191 = vld [vmem:[#allocation3 + $0x48] sm:$0xff]
      %v2192 = vld [vmem:[#allocation3 + $0x50] sm:$0xff]
      %v2193 = vld [vmem:[#allocation3 + $0x58] sm:$0xff]
      %v2194 = vld [vmem:[#allocation3 + $0x60] sm:$0xff]
      %v2195 = vld [vmem:[#allocation3 + $0x68] sm:$0xff]
      %v2196 = vld [vmem:[#allocation3 + $0x70] sm:$0xff]
      %v2197 = vld [vmem:[#allocation3 + $0x78] sm:$0xff]
      %v2198 = vld [vmem:[#allocation3 + $0x80] sm:$0xff]
      %v2199 = vld [vmem:[#allocation3 + $0x88] sm:$0xff]
      %v2200 = vld [vmem:[#allocation3 + $0x90] sm:$0xff]
      %v2201 = vld [vmem:[#allocation3 + $0x98] sm:$0xff]
      %v2202 = vld [vmem:[#allocation3 + $0xa0] sm:$0xff]
      %v2203 = vld [vmem:[#allocation3 + $0xa8] sm:$0xff]
      %v2204 = vld [vmem:[#allocation3 + $0xb0] sm:$0xff]
      %v2205 = vld [vmem:[#allocation3 + $0xb8] sm:$0xff]
      %v2206 = vld [vmem:[#allocation3 + $0xc0] sm:$0xff]
      %v2207 = vld [vmem:[#allocation3 + $0xc8] sm:$0xff]
      %v2208 = vld [vmem:[#allocation3 + $0xd0] sm:$0xff]
      %v2209 = vld [vmem:[#allocation3 + $0xd8] sm:$0xff]
      %v2210 = vld [vmem:[#allocation3 + $0xe0] sm:$0xff]
      %v2211 = vld [vmem:[#allocation3 + $0xe8] sm:$0xff]
      %v2212 = vld [vmem:[#allocation3 + $0xf0] sm:$0xff]
      %v2213 = vld [vmem:[#allocation3 + $0xf8] sm:$0xff]
      %v2215 = vsel %vm182, %v2149, 0
      %v2218 = vsel %vm182, %v2150, 0
      %v2221 = vsel %vm182, %v2151, 0
      %v2224 = vsel %vm182, %v2152, 0
      %v2227 = vsel %vm182, %v2153, 0
      %v2230 = vsel %vm182, %v2154, 0
      %v2233 = vsel %vm182, %v2155, 0
      %v2236 = vsel %vm182, %v2156, 0
      %v2239 = vsel %vm182, %v2157, 0
      %v2242 = vsel %vm182, %v2158, 0
      %v2245 = vsel %vm182, %v2159, 0
      %v2248 = vsel %vm182, %v2160, 0
      %v2251 = vsel %vm182, %v2161, 0
      %v2254 = vsel %vm182, %v2162, 0
      %v2257 = vsel %vm182, %v2163, 0
      %v2260 = vsel %vm182, %v2164, 0
      %v2263 = vsel %vm182, %v2165, 0
      %v2266 = vsel %vm182, %v2166, 0
      %v2269 = vsel %vm182, %v2167, 0
      %v2272 = vsel %vm182, %v2168, 0
      %v2275 = vsel %vm182, %v2169, 0
      %v2278 = vsel %vm182, %v2170, 0
      %v2281 = vsel %vm182, %v2171, 0
      %v2284 = vsel %vm182, %v2172, 0
      %v2287 = vsel %vm182, %v2173, 0
      %v2290 = vsel %vm182, %v2174, 0
      %v2293 = vsel %vm182, %v2175, 0
      %v2296 = vsel %vm182, %v2176, 0
      %v2299 = vsel %vm182, %v2177, 0
      %v2302 = vsel %vm182, %v2178, 0
      %v2305 = vsel %vm182, %v2179, 0
      %v2308 = vsel %vm182, %v2180, 0
      %v2311 = vsel %vm497, %v2181, 0
      %2313 = vmatprep.subr.mxu0 0.0
      %2314 = vmatpush1.msra.mxu0 %v2311
      %2315 = vmatprep.subr.mxu0 0.0
      %2316 = vmatpush1.msra.mxu0 0.0
      %2317 = vmatprep.subr.mxu0 0.0
      %2318 = vmatpush1.msra.mxu0 0.0
      %2319 = vmatprep.subr.mxu0 0.0
      %2320 = vmatpush1.msra.mxu0 0.0
      %2321 = vmatprep.subr.mxu0 0.0
      %2322 = vmatpush1.msra.mxu0 0.0
      %2323 = vmatprep.subr.mxu0 0.0
      %2324 = vmatpush1.msra.mxu0 0.0
      %2325 = vmatprep.subr.mxu0 0.0
      %2326 = vmatpush1.msra.mxu0 0.0
      %2327 = vmatprep.subr.mxu0 0.0
      %2328 = vmatpush1.msra.mxu0 0.0
      %2329 = vmatprep.subr.mxu0 0.0
      %2330 = vmatpush1.msra.mxu0 0.0
      %2331 = vmatprep.subr.mxu0 0.0
      %2332 = vmatpush1.msra.mxu0 0.0
      %2333 = vmatprep.subr.mxu0 0.0
      %2334 = vmatpush1.msra.mxu0 0.0
      %2335 = vmatprep.subr.mxu0 0.0
      %2336 = vmatpush1.msra.mxu0 0.0
      %2337 = vmatprep.subr.mxu0 0.0
      %2338 = vmatpush1.msra.mxu0 0.0
      %2339 = vmatprep.subr.mxu0 0.0
      %2340 = vmatpush1.msra.mxu0 0.0
      %2341 = vmatprep.subr.mxu0 0.0
      %2342 = vmatpush1.msra.mxu0 0.0
      %2343 = vmatprep.subr.mxu0 0.0
      %2344 = vmatpush1.msra.mxu0 0.0
      %2345 = vmatprep.subr.mxu0 0.0
      %2346 = vmatpush1.msra.mxu0 0.0
      %2347 = vmatprep.subr.mxu0 0.0
      %2348 = vmatpush1.msra.mxu0 0.0
      %2349 = vmatprep.subr.mxu0 0.0
      %2350 = vmatpush1.msra.mxu0 0.0
      %2351 = vmatprep.subr.mxu0 0.0
      %2352 = vmatpush1.msra.mxu0 0.0
      %2353 = vmatprep.subr.mxu0 0.0
      %2354 = vmatpush1.msra.mxu0 0.0
      %2355 = vmatprep.subr.mxu0 0.0
      %2356 = vmatpush1.msra.mxu0 0.0
      %2357 = vmatprep.subr.mxu0 0.0
      %2358 = vmatpush1.msra.mxu0 0.0
      %2359 = vmatprep.subr.mxu0 0.0
      %2360 = vmatpush1.msra.mxu0 0.0
      %2361 = vmatprep.subr.mxu0 0.0
      %2362 = vmatpush1.msra.mxu0 0.0
      %2363 = vmatprep.subr.mxu0 0.0
      %2364 = vmatpush1.msra.mxu0 0.0
      %2365 = vmatprep.subr.mxu0 0.0
      %2366 = vmatpush1.msra.mxu0 0.0
      %2367 = vmatprep.subr.mxu0 0.0
      %2368 = vmatpush1.msra.mxu0 0.0
      %2369 = vmatprep.subr.mxu0 0.0
      %2370 = vmatpush1.msra.mxu0 0.0
      %2371 = vmatprep.subr.mxu0 0.0
      %2372 = vmatpush1.msra.mxu0 0.0
      %2373 = vmatprep.subr.mxu0 0.0
      %2374 = vmatpush1.msra.mxu0 0.0
      %2375 = vmatprep.subr.mxu0 0.0
      %2376 = vmatpush1.msra.mxu0 0.0
      %2377 = vmatprep.mubr.f32.mxu0 0.0
      %2378 = vmatmul.mubr.f32.gmra.mrb[0].mxu0 %v2215
      %v2379 = vpop.f32.mrb[0].mxu0
      %v2380 = vadd.f32 0.0, %v2379
      %v2381 = vpop.f32.mrb[0].mxu0
      %2382 = vmatprep.mubr.f32.mxu0 0.0
      %2383 = vmatmul.mubr.f32.gmra.mrb[0].mxu0 %v2218
      %v2384 = vpop.f32.mrb[0].mxu0
      %v2385 = vadd.f32 0.0, %v2384
      %v2386 = vpop.f32.mrb[0].mxu0
      %2387 = vmatprep.mubr.f32.mxu0 0.0
      %2388 = vmatmul.mubr.f32.gmra.mrb[0].mxu0 %v2221
      %v2389 = vpop.f32.mrb[0].mxu0
      %v2390 = vadd.f32 0.0, %v2389
      %v2391 = vpop.f32.mrb[0].mxu0
      %2392 = vmatprep.mubr.f32.mxu0 0.0
      %2393 = vmatmul.mubr.f32.gmra.mrb[0].mxu0 %v2224
      %v2394 = vpop.f32.mrb[0].mxu0
      %v2395 = vadd.f32 0.0, %v2394
      %v2396 = vpop.f32.mrb[0].mxu0
      %2397 = vmatprep.mubr.f32.mxu0 0.0
      %2398 = vmatmul.mubr.f32.gmra.mrb[0].mxu0 %v2227
      %v2399 = vpop.f32.mrb[0].mxu0
      %v2400 = vadd.f32 0.0, %v2399
      %v2401 = vpop.f32.mrb[0].mxu0
      %2402 = vmatprep.mubr.f32.mxu0 0.0
      %2403 = vmatmul.mubr.f32.gmra.mrb[0].mxu0 %v2230
      %v2404 = vpop.f32.mrb[0].mxu0
      %v2405 = vadd.f32 0.0, %v2404
      %v2406 = vpop.f32.mrb[0].mxu0
      %2407 = vmatprep.mubr.f32.mxu0 0.0
      %2408 = vmatmul.mubr.f32.gmra.mrb[0].mxu0 %v2233
      %v2409 = vpop.f32.mrb[0].mxu0
      %v2410 = vadd.f32 0.0, %v2409
      %v2411 = vpop.f32.mrb[0].mxu0
      %2412 = vmatprep.mubr.f32.mxu0 0.0
      %2413 = vmatmul.mubr.f32.gmra.mrb[0].mxu0 %v2236
      %v2414 = vpop.f32.mrb[0].mxu0
      %v2415 = vadd.f32 0.0, %v2414
      %v2416 = vpop.f32.mrb[0].mxu0
      %2417 = vmatprep.mubr.f32.mxu0 0.0
      %2418 = vmatmul.mubr.f32.gmra.mrb[0].mxu0 %v2239
      %v2419 = vpop.f32.mrb[0].mxu0
      %v2420 = vadd.f32 0.0, %v2419
      %v2421 = vpop.f32.mrb[0].mxu0
      %2422 = vmatprep.mubr.f32.mxu0 0.0
      %2423 = vmatmul.mubr.f32.gmra.mrb[0].mxu0 %v2242
      %v2424 = vpop.f32.mrb[0].mxu0
      %v2425 = vadd.f32 0.0, %v2424
      %v2426 = vpop.f32.mrb[0].mxu0
      %2427 = vmatprep.mubr.f32.mxu0 0.0
      %2428 = vmatmul.mubr.f32.gmra.mrb[0].mxu0 %v2245
      %v2429 = vpop.f32.mrb[0].mxu0
      %v2430 = vadd.f32 0.0, %v2429
      %v2431 = vpop.f32.mrb[0].mxu0
      %2432 = vmatprep.mubr.f32.mxu0 0.0
      %2433 = vmatmul.mubr.f32.gmra.mrb[0].mxu0 %v2248
      %v2434 = vpop.f32.mrb[0].mxu0
      %v2435 = vadd.f32 0.0, %v2434
      %v2436 = vpop.f32.mrb[0].mxu0
      %2437 = vmatprep.mubr.f32.mxu0 0.0
      %2438 = vmatmul.mubr.f32.gmra.mrb[0].mxu0 %v2251
      %v2439 = vpop.f32.mrb[0].mxu0
      %v2440 = vadd.f32 0.0, %v2439
      %v2441 = vpop.f32.mrb[0].mxu0
      %2442 = vmatprep.mubr.f32.mxu0 0.0
      %2443 = vmatmul.mubr.f32.gmra.mrb[0].mxu0 %v2254
      %v2444 = vpop.f32.mrb[0].mxu0
      %v2445 = vadd.f32 0.0, %v2444
      %v2446 = vpop.f32.mrb[0].mxu0
      %2447 = vmatprep.mubr.f32.mxu0 0.0
      %2448 = vmatmul.mubr.f32.gmra.mrb[0].mxu0 %v2257
      %v2449 = vpop.f32.mrb[0].mxu0
      %v2450 = vadd.f32 0.0, %v2449
      %v2451 = vpop.f32.mrb[0].mxu0
      %2452 = vmatprep.mubr.f32.mxu0 0.0
      %2453 = vmatmul.mubr.f32.gmra.mrb[0].mxu0 %v2260
      %v2454 = vpop.f32.mrb[0].mxu0
      %v2455 = vadd.f32 0.0, %v2454
      %v2456 = vpop.f32.mrb[0].mxu0
      %2457 = vmatprep.mubr.f32.mxu0 0.0
      %2458 = vmatmul.mubr.f32.gmra.mrb[0].mxu0 %v2263
      %v2459 = vpop.f32.mrb[0].mxu0
      %v2460 = vadd.f32 0.0, %v2459
      %v2461 = vpop.f32.mrb[0].mxu0
      %2462 = vmatprep.mubr.f32.mxu0 0.0
      %2463 = vmatmul.mubr.f32.gmra.mrb[0].mxu0 %v2266
      %v2464 = vpop.f32.mrb[0].mxu0
      %v2465 = vadd.f32 0.0, %v2464
      %v2466 = vpop.f32.mrb[0].mxu0
      %2467 = vmatprep.mubr.f32.mxu0 0.0
      %2468 = vmatmul.mubr.f32.gmra.mrb[0].mxu0 %v2269
      %v2469 = vpop.f32.mrb[0].mxu0
      %v2470 = vadd.f32 0.0, %v2469
      %v2471 = vpop.f32.mrb[0].mxu0
      %2472 = vmatprep.mubr.f32.mxu0 0.0
      %2473 = vmatmul.mubr.f32.gmra.mrb[0].mxu0 %v2272
      %v2474 = vpop.f32.mrb[0].mxu0
      %v2475 = vadd.f32 0.0, %v2474
      %v2476 = vpop.f32.mrb[0].mxu0
      %2477 = vmatprep.mubr.f32.mxu0 0.0
      %2478 = vmatmul.mubr.f32.gmra.mrb[0].mxu0 %v2275
      %v2479 = vpop.f32.mrb[0].mxu0
      %v2480 = vadd.f32 0.0, %v2479
      %v2481 = vpop.f32.mrb[0].mxu0
      %2482 = vmatprep.mubr.f32.mxu0 0.0
      %2483 = vmatmul.mubr.f32.gmra.mrb[0].mxu0 %v2278
      %v2484 = vpop.f32.mrb[0].mxu0
      %v2485 = vadd.f32 0.0, %v2484
      %v2486 = vpop.f32.mrb[0].mxu0
      %2487 = vmatprep.mubr.f32.mxu0 0.0
      %2488 = vmatmul.mubr.f32.gmra.mrb[0].mxu0 %v2281
      %v2489 = vpop.f32.mrb[0].mxu0
      %v2490 = vadd.f32 0.0, %v2489
      %v2491 = vpop.f32.mrb[0].mxu0
      %2492 = vmatprep.mubr.f32.mxu0 0.0
      %2493 = vmatmul.mubr.f32.gmra.mrb[0].mxu0 %v2284
      %v2494 = vpop.f32.mrb[0].mxu0
      %v2495 = vadd.f32 0.0, %v2494
      %v2496 = vpop.f32.mrb[0].mxu0
      %2497 = vmatprep.mubr.f32.mxu0 0.0
      %2498 = vmatmul.mubr.f32.gmra.mrb[0].mxu0 %v2287
      %v2499 = vpop.f32.mrb[0].mxu0
      %v2500 = vadd.f32 0.0, %v2499
      %v2501 = vpop.f32.mrb[0].mxu0
      %2502 = vmatprep.mubr.f32.mxu0 0.0
      %2503 = vmatmul.mubr.f32.gmra.mrb[0].mxu0 %v2290
      %v2504 = vpop.f32.mrb[0].mxu0
      %v2505 = vadd.f32 0.0, %v2504
      %v2506 = vpop.f32.mrb[0].mxu0
      %2507 = vmatprep.mubr.f32.mxu0 0.0
      %2508 = vmatmul.mubr.f32.gmra.mrb[0].mxu0 %v2293
      %v2509 = vpop.f32.mrb[0].mxu0
      %v2510 = vadd.f32 0.0, %v2509
      %v2511 = vpop.f32.mrb[0].mxu0
      %2512 = vmatprep.mubr.f32.mxu0 0.0
      %2513 = vmatmul.mubr.f32.gmra.mrb[0].mxu0 %v2296
      %v2514 = vpop.f32.mrb[0].mxu0
      %v2515 = vadd.f32 0.0, %v2514
      %v2516 = vpop.f32.mrb[0].mxu0
      %2517 = vmatprep.mubr.f32.mxu0 0.0
      %2518 = vmatmul.mubr.f32.gmra.mrb[0].mxu0 %v2299
      %v2519 = vpop.f32.mrb[0].mxu0
      %v2520 = vadd.f32 0.0, %v2519
      %v2521 = vpop.f32.mrb[0].mxu0
      %2522 = vmatprep.mubr.f32.mxu0 0.0
      %2523 = vmatmul.mubr.f32.gmra.mrb[0].mxu0 %v2302
      %v2524 = vpop.f32.mrb[0].mxu0
      %v2525 = vadd.f32 0.0, %v2524
      %v2526 = vpop.f32.mrb[0].mxu0
      %2527 = vmatprep.mubr.f32.mxu0 0.0
      %2528 = vmatmul.mubr.f32.gmra.mrb[0].mxu0 %v2305
      %v2529 = vpop.f32.mrb[0].mxu0
      %v2530 = vadd.f32 0.0, %v2529
      %v2531 = vpop.f32.mrb[0].mxu0
      %2532 = vmatprep.mubr.f32.mxu0 0.0
      %2533 = vmatmul.mubr.f32.gmra.mrb[0].mxu0 %v2308
      %v2534 = vpop.f32.mrb[0].mxu0
      %v2535 = vadd.f32 0.0, %v2534
      %v2536 = vpop.f32.mrb[0].mxu0
      %2537 = vdwg.mxu0
      %v2538 = vadd.f32 %v2182, %v2380
      %v2539 = vadd.f32 %v2183, %v2385
      %v2540 = vadd.f32 %v2184, %v2390
      %v2541 = vadd.f32 %v2185, %v2395
      %v2542 = vadd.f32 %v2186, %v2400
      %v2543 = vadd.f32 %v2187, %v2405
      %v2544 = vadd.f32 %v2188, %v2410
      %v2545 = vadd.f32 %v2189, %v2415
      %v2546 = vadd.f32 %v2190, %v2420
      %v2547 = vadd.f32 %v2191, %v2425
      %v2548 = vadd.f32 %v2192, %v2430
      %v2549 = vadd.f32 %v2193, %v2435
      %v2550 = vadd.f32 %v2194, %v2440
      %v2551 = vadd.f32 %v2195, %v2445
      %v2552 = vadd.f32 %v2196, %v2450
      %v2553 = vadd.f32 %v2197, %v2455
      %v2554 = vadd.f32 %v2198, %v2460
      %v2555 = vadd.f32 %v2199, %v2465
      %v2556 = vadd.f32 %v2200, %v2470
      %v2557 = vadd.f32 %v2201, %v2475
      %v2558 = vadd.f32 %v2202, %v2480
      %v2559 = vadd.f32 %v2203, %v2485
      %v2560 = vadd.f32 %v2204, %v2490
      %v2561 = vadd.f32 %v2205, %v2495
      %v2562 = vadd.f32 %v2206, %v2500
      %v2563 = vadd.f32 %v2207, %v2505
      %v2564 = vadd.f32 %v2208, %v2510
      %v2565 = vadd.f32 %v2209, %v2515
      %v2566 = vadd.f32 %v2210, %v2520
      %v2567 = vadd.f32 %v2211, %v2525
      %v2568 = vadd.f32 %v2212, %v2530
      %v2569 = vadd.f32 %v2213, %v2535
      %2570 = vst.msk [vmem:[#allocation3] sm:$0xff] %vm303, %v2538
      %2571 = vst.msk [vmem:[#allocation3 + $0x8] sm:$0xff] %vm303, %v2539
      %2572 = vst.msk [vmem:[#allocation3 + $0x10] sm:$0xff] %vm303, %v2540
      %2573 = vst.msk [vmem:[#allocation3 + $0x18] sm:$0xff] %vm303, %v2541
      %2574 = vst.msk [vmem:[#allocation3 + $0x20] sm:$0xff] %vm303, %v2542
      %2575 = vst.msk [vmem:[#allocation3 + $0x28] sm:$0xff] %vm303, %v2543
      %2576 = vst.msk [vmem:[#allocation3 + $0x30] sm:$0xff] %vm303, %v2544
      %2577 = vst.msk [vmem:[#allocation3 + $0x38] sm:$0xff] %vm303, %v2545
      %2578 = vst.msk [vmem:[#allocation3 + $0x40] sm:$0xff] %vm303, %v2546
      %2579 = vst.msk [vmem:[#allocation3 + $0x48] sm:$0xff] %vm303, %v2547
      %2580 = vst.msk [vmem:[#allocation3 + $0x50] sm:$0xff] %vm303, %v2548
      %2581 = vst.msk [vmem:[#allocation3 + $0x58] sm:$0xff] %vm303, %v2549
      %2582 = vst.msk [vmem:[#allocation3 + $0x60] sm:$0xff] %vm303, %v2550
      %2583 = vst.msk [vmem:[#allocation3 + $0x68] sm:$0xff] %vm303, %v2551
      %2584 = vst.msk [vmem:[#allocation3 + $0x70] sm:$0xff] %vm303, %v2552
      %2585 = vst.msk [vmem:[#allocation3 + $0x78] sm:$0xff] %vm303, %v2553
      %2586 = vst.msk [vmem:[#allocation3 + $0x80] sm:$0xff] %vm303, %v2554
      %2587 = vst.msk [vmem:[#allocation3 + $0x88] sm:$0xff] %vm303, %v2555
      %2588 = vst.msk [vmem:[#allocation3 + $0x90] sm:$0xff] %vm303, %v2556
      %2589 = vst.msk [vmem:[#allocation3 + $0x98] sm:$0xff] %vm303, %v2557
      %2590 = vst.msk [vmem:[#allocation3 + $0xa0] sm:$0xff] %vm303, %v2558
      %2591 = vst.msk [vmem:[#allocation3 + $0xa8] sm:$0xff] %vm303, %v2559
      %2592 = vst.msk [vmem:[#allocation3 + $0xb0] sm:$0xff] %vm303, %v2560
      %2593 = vst.msk [vmem:[#allocation3 + $0xb8] sm:$0xff] %vm303, %v2561
      %2594 = vst.msk [vmem:[#allocation3 + $0xc0] sm:$0xff] %vm303, %v2562
      %2595 = vst.msk [vmem:[#allocation3 + $0xc8] sm:$0xff] %vm303, %v2563
      %2596 = vst.msk [vmem:[#allocation3 + $0xd0] sm:$0xff] %vm303, %v2564
      %2597 = vst.msk [vmem:[#allocation3 + $0xd8] sm:$0xff] %vm303, %v2565
      %2598 = vst.msk [vmem:[#allocation3 + $0xe0] sm:$0xff] %vm303, %v2566
      %2599 = vst.msk [vmem:[#allocation3 + $0xe8] sm:$0xff] %vm303, %v2567
      %2600 = vst.msk [vmem:[#allocation3 + $0xf0] sm:$0xff] %vm303, %v2568
      %2601 = vst.msk [vmem:[#allocation3 + $0xf8] sm:$0xff] %vm303, %v2569
      %v2602 = vld [vmem:[%s270 + $0x2] sm:$0xff]
      %v2603 = vld [vmem:[%s270 + $0xa] sm:$0xff]
      %v2604 = vld [vmem:[%s270 + $0x1a] sm:$0xff]
      %v2605 = vld [vmem:[%s270 + $0x22] sm:$0xff]
      %v2606 = vld [vmem:[%s270 + $0x32] sm:$0xff]
      %v2607 = vld [vmem:[%s270 + $0x3a] sm:$0xff]
      %v2608 = vld [vmem:[%s270 + $0x4a] sm:$0xff]
      %v2609 = vld [vmem:[%s270 + $0x52] sm:$0xff]
      %v2610 = vld [vmem:[%s270 + $0x62] sm:$0xff]
      %v2611 = vld [vmem:[%s270 + $0x6a] sm:$0xff]
      %v2612 = vld [vmem:[%s270 + $0x7a] sm:$0xff]
      %v2613 = vld [vmem:[%s270 + $0x82] sm:$0xff]
      %v2614 = vld [vmem:[%s270 + $0x92] sm:$0xff]
      %v2615 = vld [vmem:[%s270 + $0x9a] sm:$0xff]
      %v2616 = vld [vmem:[%s270 + $0xaa] sm:$0xff]
      %v2617 = vld [vmem:[%s270 + $0xb2] sm:$0xff]
      %v2618 = vld [vmem:[%s270 + $0xc2] sm:$0xff]
      %v2619 = vld [vmem:[%s270 + $0xca] sm:$0xff]
      %v2620 = vld [vmem:[%s270 + $0xda] sm:$0xff]
      %v2621 = vld [vmem:[%s270 + $0xe2] sm:$0xff]
      %v2622 = vld [vmem:[%s270 + $0xf2] sm:$0xff]
      %v2623 = vld [vmem:[%s270 + $0xfa] sm:$0xff]
      %v2624 = vld [vmem:[%s270 + $0x10a] sm:$0xff]
      %v2625 = vld [vmem:[%s270 + $0x112] sm:$0xff]
      %v2626 = vld [vmem:[%s270 + $0x122] sm:$0xff]
      %v2627 = vld [vmem:[%s270 + $0x12a] sm:$0xff]
      %v2628 = vld [vmem:[%s270 + $0x13a] sm:$0xff]
      %v2629 = vld [vmem:[%s270 + $0x142] sm:$0xff]
      %v2630 = vld [vmem:[%s270 + $0x152] sm:$0xff]
      %v2631 = vld [vmem:[%s270 + $0x15a] sm:$0xff]
      %v2632 = vld [vmem:[%s270 + $0x16a] sm:$0xff]
      %v2633 = vld [vmem:[%s270 + $0x172] sm:$0xff]
      %v2634 = vld [vmem:[%s1 + $0x14] sm:$0xf]
      %v2635 = vld [vmem:[#allocation3] sm:$0xff]
      %v2636 = vld [vmem:[#allocation3 + $0x8] sm:$0xff]
      %v2637 = vld [vmem:[#allocation3 + $0x10] sm:$0xff]
      %v2638 = vld [vmem:[#allocation3 + $0x18] sm:$0xff]
      %v2639 = vld [vmem:[#allocation3 + $0x20] sm:$0xff]
      %v2640 = vld [vmem:[#allocation3 + $0x28] sm:$0xff]
      %v2641 = vld [vmem:[#allocation3 + $0x30] sm:$0xff]
      %v2642 = vld [vmem:[#allocation3 + $0x38] sm:$0xff]
      %v2643 = vld [vmem:[#allocation3 + $0x40] sm:$0xff]
      %v2644 = vld [vmem:[#allocation3 + $0x48] sm:$0xff]
      %v2645 = vld [vmem:[#allocation3 + $0x50] sm:$0xff]
      %v2646 = vld [vmem:[#allocation3 + $0x58] sm:$0xff]
      %v2647 = vld [vmem:[#allocation3 + $0x60] sm:$0xff]
      %v2648 = vld [vmem:[#allocation3 + $0x68] sm:$0xff]
      %v2649 = vld [vmem:[#allocation3 + $0x70] sm:$0xff]
      %v2650 = vld [vmem:[#allocation3 + $0x78] sm:$0xff]
      %v2651 = vld [vmem:[#allocation3 + $0x80] sm:$0xff]
      %v2652 = vld [vmem:[#allocation3 + $0x88] sm:$0xff]
      %v2653 = vld [vmem:[#allocation3 + $0x90] sm:$0xff]
      %v2654 = vld [vmem:[#allocation3 + $0x98] sm:$0xff]
      %v2655 = vld [vmem:[#allocation3 + $0xa0] sm:$0xff]
      %v2656 = vld [vmem:[#allocation3 + $0xa8] sm:$0xff]
      %v2657 = vld [vmem:[#allocation3 + $0xb0] sm:$0xff]
      %v2658 = vld [vmem:[#allocation3 + $0xb8] sm:$0xff]
      %v2659 = vld [vmem:[#allocation3 + $0xc0] sm:$0xff]
      %v2660 = vld [vmem:[#allocation3 + $0xc8] sm:$0xff]
      %v2661 = vld [vmem:[#allocation3 + $0xd0] sm:$0xff]
      %v2662 = vld [vmem:[#allocation3 + $0xd8] sm:$0xff]
      %v2663 = vld [vmem:[#allocation3 + $0xe0] sm:$0xff]
      %v2664 = vld [vmem:[#allocation3 + $0xe8] sm:$0xff]
      %v2665 = vld [vmem:[#allocation3 + $0xf0] sm:$0xff]
      %v2666 = vld [vmem:[#allocation3 + $0xf8] sm:$0xff]
      %v2668 = vsel %vm182, %v2602, 0
      %v2671 = vsel %vm182, %v2603, 0
      %v2674 = vsel %vm182, %v2604, 0
      %v2677 = vsel %vm182, %v2605, 0
      %v2680 = vsel %vm182, %v2606, 0
      %v2683 = vsel %vm182, %v2607, 0
      %v2686 = vsel %vm182, %v2608, 0
      %v2689 = vsel %vm182, %v2609, 0
      %v2692 = vsel %vm182, %v2610, 0
      %v2695 = vsel %vm182, %v2611, 0
      %v2698 = vsel %vm182, %v2612, 0
      %v2701 = vsel %vm182, %v2613, 0
      %v2704 = vsel %vm182, %v2614, 0
      %v2707 = vsel %vm182, %v2615, 0
      %v2710 = vsel %vm182, %v2616, 0
      %v2713 = vsel %vm182, %v2617, 0
      %v2716 = vsel %vm182, %v2618, 0
      %v2719 = vsel %vm182, %v2619, 0
      %v2722 = vsel %vm182, %v2620, 0
      %v2725 = vsel %vm182, %v2621, 0
      %v2728 = vsel %vm182, %v2622, 0
      %v2731 = vsel %vm182, %v2623, 0
      %v2734 = vsel %vm182, %v2624, 0
      %v2737 = vsel %vm182, %v2625, 0
      %v2740 = vsel %vm182, %v2626, 0
      %v2743 = vsel %vm182, %v2627, 0
      %v2746 = vsel %vm182, %v2628, 0
      %v2749 = vsel %vm182, %v2629, 0
      %v2752 = vsel %vm182, %v2630, 0
      %v2755 = vsel %vm182, %v2631, 0
      %v2758 = vsel %vm182, %v2632, 0
      %v2761 = vsel %vm182, %v2633, 0
      %v2764 = vsel %vm497, %v2634, 0
      %2766 = vmatprep.subr.mxu0 0.0
      %2767 = vmatpush1.msra.mxu0 %v2764
      %2768 = vmatprep.subr.mxu0 0.0
      %2769 = vmatpush1.msra.mxu0 0.0
      %2770 = vmatprep.subr.mxu0 0.0
      %2771 = vmatpush1.msra.mxu0 0.0
      %2772 = vmatprep.subr.mxu0 0.0
      %2773 = vmatpush1.msra.mxu0 0.0
      %2774 = vmatprep.subr.mxu0 0.0
      %2775 = vmatpush1.msra.mxu0 0.0
      %2776 = vmatprep.subr.mxu0 0.0
      %2777 = vmatpush1.msra.mxu0 0.0
      %2778 = vmatprep.subr.mxu0 0.0
      %2779 = vmatpush1.msra.mxu0 0.0
      %2780 = vmatprep.subr.mxu0 0.0
      %2781 = vmatpush1.msra.mxu0 0.0
      %2782 = vmatprep.subr.mxu0 0.0
      %2783 = vmatpush1.msra.mxu0 0.0
      %2784 = vmatprep.subr.mxu0 0.0
      %2785 = vmatpush1.msra.mxu0 0.0
      %2786 = vmatprep.subr.mxu0 0.0
      %2787 = vmatpush1.msra.mxu0 0.0
      %2788 = vmatprep.subr.mxu0 0.0
      %2789 = vmatpush1.msra.mxu0 0.0
      %2790 = vmatprep.subr.mxu0 0.0
      %2791 = vmatpush1.msra.mxu0 0.0
      %2792 = vmatprep.subr.mxu0 0.0
      %2793 = vmatpush1.msra.mxu0 0.0
      %2794 = vmatprep.subr.mxu0 0.0
      %2795 = vmatpush1.msra.mxu0 0.0
      %2796 = vmatprep.subr.mxu0 0.0
      %2797 = vmatpush1.msra.mxu0 0.0
      %2798 = vmatprep.subr.mxu0 0.0
      %2799 = vmatpush1.msra.mxu0 0.0
      %2800 = vmatprep.subr.mxu0 0.0
      %2801 = vmatpush1.msra.mxu0 0.0
      %2802 = vmatprep.subr.mxu0 0.0
      %2803 = vmatpush1.msra.mxu0 0.0
      %2804 = vmatprep.subr.mxu0 0.0
      %2805 = vmatpush1.msra.mxu0 0.0
      %2806 = vmatprep.subr.mxu0 0.0
      %2807 = vmatpush1.msra.mxu0 0.0
      %2808 = vmatprep.subr.mxu0 0.0
      %2809 = vmatpush1.msra.mxu0 0.0
      %2810 = vmatprep.subr.mxu0 0.0
      %2811 = vmatpush1.msra.mxu0 0.0
      %2812 = vmatprep.subr.mxu0 0.0
      %2813 = vmatpush1.msra.mxu0 0.0
      %2814 = vmatprep.subr.mxu0 0.0
      %2815 = vmatpush1.msra.mxu0 0.0
      %2816 = vmatprep.subr.mxu0 0.0
      %2817 = vmatpush1.msra.mxu0 0.0
      %2818 = vmatprep.subr.mxu0 0.0
      %2819 = vmatpush1.msra.mxu0 0.0
      %2820 = vmatprep.subr.mxu0 0.0
      %2821 = vmatpush1.msra.mxu0 0.0
      %2822 = vmatprep.subr.mxu0 0.0
      %2823 = vmatpush1.msra.mxu0 0.0
      %2824 = vmatprep.subr.mxu0 0.0
      %2825 = vmatpush1.msra.mxu0 0.0
      %2826 = vmatprep.subr.mxu0 0.0
      %2827 = vmatpush1.msra.mxu0 0.0
      %2828 = vmatprep.subr.mxu0 0.0
      %2829 = vmatpush1.msra.mxu0 0.0
      %2830 = vmatprep.mubr.f32.mxu0 0.0
      %2831 = vmatmul.mubr.f32.gmra.mrb[0].mxu0 %v2668
      %v2832 = vpop.f32.mrb[0].mxu0
      %v2833 = vadd.f32 0.0, %v2832
      %v2834 = vpop.f32.mrb[0].mxu0
      %2835 = vmatprep.mubr.f32.mxu0 0.0
      %2836 = vmatmul.mubr.f32.gmra.mrb[0].mxu0 %v2671
      %v2837 = vpop.f32.mrb[0].mxu0
      %v2838 = vadd.f32 0.0, %v2837
      %v2839 = vpop.f32.mrb[0].mxu0
      %2840 = vmatprep.mubr.f32.mxu0 0.0
      %2841 = vmatmul.mubr.f32.gmra.mrb[0].mxu0 %v2674
      %v2842 = vpop.f32.mrb[0].mxu0
      %v2843 = vadd.f32 0.0, %v2842
      %v2844 = vpop.f32.mrb[0].mxu0
      %2845 = vmatprep.mubr.f32.mxu0 0.0
      %2846 = vmatmul.mubr.f32.gmra.mrb[0].mxu0 %v2677
      %v2847 = vpop.f32.mrb[0].mxu0
      %v2848 = vadd.f32 0.0, %v2847
      %v2849 = vpop.f32.mrb[0].mxu0
      %2850 = vmatprep.mubr.f32.mxu0 0.0
      %2851 = vmatmul.mubr.f32.gmra.mrb[0].mxu0 %v2680
      %v2852 = vpop.f32.mrb[0].mxu0
      %v2853 = vadd.f32 0.0, %v2852
      %v2854 = vpop.f32.mrb[0].mxu0
      %2855 = vmatprep.mubr.f32.mxu0 0.0
      %2856 = vmatmul.mubr.f32.gmra.mrb[0].mxu0 %v2683
      %v2857 = vpop.f32.mrb[0].mxu0
      %v2858 = vadd.f32 0.0, %v2857
      %v2859 = vpop.f32.mrb[0].mxu0
      %2860 = vmatprep.mubr.f32.mxu0 0.0
      %2861 = vmatmul.mubr.f32.gmra.mrb[0].mxu0 %v2686
      %v2862 = vpop.f32.mrb[0].mxu0
      %v2863 = vadd.f32 0.0, %v2862
      %v2864 = vpop.f32.mrb[0].mxu0
      %2865 = vmatprep.mubr.f32.mxu0 0.0
      %2866 = vmatmul.mubr.f32.gmra.mrb[0].mxu0 %v2689
      %v2867 = vpop.f32.mrb[0].mxu0
      %v2868 = vadd.f32 0.0, %v2867
      %v2869 = vpop.f32.mrb[0].mxu0
      %2870 = vmatprep.mubr.f32.mxu0 0.0
      %2871 = vmatmul.mubr.f32.gmra.mrb[0].mxu0 %v2692
      %v2872 = vpop.f32.mrb[0].mxu0
      %v2873 = vadd.f32 0.0, %v2872
      %v2874 = vpop.f32.mrb[0].mxu0
      %2875 = vmatprep.mubr.f32.mxu0 0.0
      %2876 = vmatmul.mubr.f32.gmra.mrb[0].mxu0 %v2695
      %v2877 = vpop.f32.mrb[0].mxu0
      %v2878 = vadd.f32 0.0, %v2877
      %v2879 = vpop.f32.mrb[0].mxu0
      %2880 = vmatprep.mubr.f32.mxu0 0.0
      %2881 = vmatmul.mubr.f32.gmra.mrb[0].mxu0 %v2698
      %v2882 = vpop.f32.mrb[0].mxu0
      %v2883 = vadd.f32 0.0, %v2882
      %v2884 = vpop.f32.mrb[0].mxu0
      %2885 = vmatprep.mubr.f32.mxu0 0.0
      %2886 = vmatmul.mubr.f32.gmra.mrb[0].mxu0 %v2701
      %v2887 = vpop.f32.mrb[0].mxu0
      %v2888 = vadd.f32 0.0, %v2887
      %v2889 = vpop.f32.mrb[0].mxu0
      %2890 = vmatprep.mubr.f32.mxu0 0.0
      %2891 = vmatmul.mubr.f32.gmra.mrb[0].mxu0 %v2704
      %v2892 = vpop.f32.mrb[0].mxu0
      %v2893 = vadd.f32 0.0, %v2892
      %v2894 = vpop.f32.mrb[0].mxu0
      %2895 = vmatprep.mubr.f32.mxu0 0.0
      %2896 = vmatmul.mubr.f32.gmra.mrb[0].mxu0 %v2707
      %v2897 = vpop.f32.mrb[0].mxu0
      %v2898 = vadd.f32 0.0, %v2897
      %v2899 = vpop.f32.mrb[0].mxu0
      %2900 = vmatprep.mubr.f32.mxu0 0.0
      %2901 = vmatmul.mubr.f32.gmra.mrb[0].mxu0 %v2710
      %v2902 = vpop.f32.mrb[0].mxu0
      %v2903 = vadd.f32 0.0, %v2902
      %v2904 = vpop.f32.mrb[0].mxu0
      %2905 = vmatprep.mubr.f32.mxu0 0.0
      %2906 = vmatmul.mubr.f32.gmra.mrb[0].mxu0 %v2713
      %v2907 = vpop.f32.mrb[0].mxu0
      %v2908 = vadd.f32 0.0, %v2907
      %v2909 = vpop.f32.mrb[0].mxu0
      %2910 = vmatprep.mubr.f32.mxu0 0.0
      %2911 = vmatmul.mubr.f32.gmra.mrb[0].mxu0 %v2716
      %v2912 = vpop.f32.mrb[0].mxu0
      %v2913 = vadd.f32 0.0, %v2912
      %v2914 = vpop.f32.mrb[0].mxu0
      %2915 = vmatprep.mubr.f32.mxu0 0.0
      %2916 = vmatmul.mubr.f32.gmra.mrb[0].mxu0 %v2719
      %v2917 = vpop.f32.mrb[0].mxu0
      %v2918 = vadd.f32 0.0, %v2917
      %v2919 = vpop.f32.mrb[0].mxu0
      %2920 = vmatprep.mubr.f32.mxu0 0.0
      %2921 = vmatmul.mubr.f32.gmra.mrb[0].mxu0 %v2722
      %v2922 = vpop.f32.mrb[0].mxu0
      %v2923 = vadd.f32 0.0, %v2922
      %v2924 = vpop.f32.mrb[0].mxu0
      %2925 = vmatprep.mubr.f32.mxu0 0.0
      %2926 = vmatmul.mubr.f32.gmra.mrb[0].mxu0 %v2725
      %v2927 = vpop.f32.mrb[0].mxu0
      %v2928 = vadd.f32 0.0, %v2927
      %v2929 = vpop.f32.mrb[0].mxu0
      %2930 = vmatprep.mubr.f32.mxu0 0.0
      %2931 = vmatmul.mubr.f32.gmra.mrb[0].mxu0 %v2728
      %v2932 = vpop.f32.mrb[0].mxu0
      %v2933 = vadd.f32 0.0, %v2932
      %v2934 = vpop.f32.mrb[0].mxu0
      %2935 = vmatprep.mubr.f32.mxu0 0.0
      %2936 = vmatmul.mubr.f32.gmra.mrb[0].mxu0 %v2731
      %v2937 = vpop.f32.mrb[0].mxu0
      %v2938 = vadd.f32 0.0, %v2937
      %v2939 = vpop.f32.mrb[0].mxu0
      %2940 = vmatprep.mubr.f32.mxu0 0.0
      %2941 = vmatmul.mubr.f32.gmra.mrb[0].mxu0 %v2734
      %v2942 = vpop.f32.mrb[0].mxu0
      %v2943 = vadd.f32 0.0, %v2942
      %v2944 = vpop.f32.mrb[0].mxu0
      %2945 = vmatprep.mubr.f32.mxu0 0.0
      %2946 = vmatmul.mubr.f32.gmra.mrb[0].mxu0 %v2737
      %v2947 = vpop.f32.mrb[0].mxu0
      %v2948 = vadd.f32 0.0, %v2947
      %v2949 = vpop.f32.mrb[0].mxu0
      %2950 = vmatprep.mubr.f32.mxu0 0.0
      %2951 = vmatmul.mubr.f32.gmra.mrb[0].mxu0 %v2740
      %v2952 = vpop.f32.mrb[0].mxu0
      %v2953 = vadd.f32 0.0, %v2952
      %v2954 = vpop.f32.mrb[0].mxu0
      %2955 = vmatprep.mubr.f32.mxu0 0.0
      %2956 = vmatmul.mubr.f32.gmra.mrb[0].mxu0 %v2743
      %v2957 = vpop.f32.mrb[0].mxu0
      %v2958 = vadd.f32 0.0, %v2957
      %v2959 = vpop.f32.mrb[0].mxu0
      %2960 = vmatprep.mubr.f32.mxu0 0.0
      %2961 = vmatmul.mubr.f32.gmra.mrb[0].mxu0 %v2746
      %v2962 = vpop.f32.mrb[0].mxu0
      %v2963 = vadd.f32 0.0, %v2962
      %v2964 = vpop.f32.mrb[0].mxu0
      %2965 = vmatprep.mubr.f32.mxu0 0.0
      %2966 = vmatmul.mubr.f32.gmra.mrb[0].mxu0 %v2749
      %v2967 = vpop.f32.mrb[0].mxu0
      %v2968 = vadd.f32 0.0, %v2967
      %v2969 = vpop.f32.mrb[0].mxu0
      %2970 = vmatprep.mubr.f32.mxu0 0.0
      %2971 = vmatmul.mubr.f32.gmra.mrb[0].mxu0 %v2752
      %v2972 = vpop.f32.mrb[0].mxu0
      %v2973 = vadd.f32 0.0, %v2972
      %v2974 = vpop.f32.mrb[0].mxu0
      %2975 = vmatprep.mubr.f32.mxu0 0.0
      %2976 = vmatmul.mubr.f32.gmra.mrb[0].mxu0 %v2755
      %v2977 = vpop.f32.mrb[0].mxu0
      %v2978 = vadd.f32 0.0, %v2977
      %v2979 = vpop.f32.mrb[0].mxu0
      %2980 = vmatprep.mubr.f32.mxu0 0.0
      %2981 = vmatmul.mubr.f32.gmra.mrb[0].mxu0 %v2758
      %v2982 = vpop.f32.mrb[0].mxu0
      %v2983 = vadd.f32 0.0, %v2982
      %v2984 = vpop.f32.mrb[0].mxu0
      %2985 = vmatprep.mubr.f32.mxu0 0.0
      %2986 = vmatmul.mubr.f32.gmra.mrb[0].mxu0 %v2761
      %v2987 = vpop.f32.mrb[0].mxu0
      %v2988 = vadd.f32 0.0, %v2987
      %v2989 = vpop.f32.mrb[0].mxu0
      %2990 = vdwg.mxu0
      %v2991 = vadd.f32 %v2635, %v2833
      %v2992 = vadd.f32 %v2636, %v2838
      %v2993 = vadd.f32 %v2637, %v2843
      %v2994 = vadd.f32 %v2638, %v2848
      %v2995 = vadd.f32 %v2639, %v2853
      %v2996 = vadd.f32 %v2640, %v2858
      %v2997 = vadd.f32 %v2641, %v2863
      %v2998 = vadd.f32 %v2642, %v2868
      %v2999 = vadd.f32 %v2643, %v2873
      %v3000 = vadd.f32 %v2644, %v2878
      %v3001 = vadd.f32 %v2645, %v2883
      %v3002 = vadd.f32 %v2646, %v2888
      %v3003 = vadd.f32 %v2647, %v2893
      %v3004 = vadd.f32 %v2648, %v2898
      %v3005 = vadd.f32 %v2649, %v2903
      %v3006 = vadd.f32 %v2650, %v2908
      %v3007 = vadd.f32 %v2651, %v2913
      %v3008 = vadd.f32 %v2652, %v2918
      %v3009 = vadd.f32 %v2653, %v2923
      %v3010 = vadd.f32 %v2654, %v2928
      %v3011 = vadd.f32 %v2655, %v2933
      %v3012 = vadd.f32 %v2656, %v2938
      %v3013 = vadd.f32 %v2657, %v2943
      %v3014 = vadd.f32 %v2658, %v2948
      %v3015 = vadd.f32 %v2659, %v2953
      %v3016 = vadd.f32 %v2660, %v2958
      %v3017 = vadd.f32 %v2661, %v2963
      %v3018 = vadd.f32 %v2662, %v2968
      %v3019 = vadd.f32 %v2663, %v2973
      %v3020 = vadd.f32 %v2664, %v2978
      %v3021 = vadd.f32 %v2665, %v2983
      %v3022 = vadd.f32 %v2666, %v2988
      %3023 = vst.msk [vmem:[#allocation3] sm:$0xff] %vm303, %v2991
      %3024 = vst.msk [vmem:[#allocation3 + $0x8] sm:$0xff] %vm303, %v2992
      %3025 = vst.msk [vmem:[#allocation3 + $0x10] sm:$0xff] %vm303, %v2993
      %3026 = vst.msk [vmem:[#allocation3 + $0x18] sm:$0xff] %vm303, %v2994
      %3027 = vst.msk [vmem:[#allocation3 + $0x20] sm:$0xff] %vm303, %v2995
      %3028 = vst.msk [vmem:[#allocation3 + $0x28] sm:$0xff] %vm303, %v2996
      %3029 = vst.msk [vmem:[#allocation3 + $0x30] sm:$0xff] %vm303, %v2997
      %3030 = vst.msk [vmem:[#allocation3 + $0x38] sm:$0xff] %vm303, %v2998
      %3031 = vst.msk [vmem:[#allocation3 + $0x40] sm:$0xff] %vm303, %v2999
      %3032 = vst.msk [vmem:[#allocation3 + $0x48] sm:$0xff] %vm303, %v3000
      %3033 = vst.msk [vmem:[#allocation3 + $0x50] sm:$0xff] %vm303, %v3001
      %3034 = vst.msk [vmem:[#allocation3 + $0x58] sm:$0xff] %vm303, %v3002
      %3035 = vst.msk [vmem:[#allocation3 + $0x60] sm:$0xff] %vm303, %v3003
      %3036 = vst.msk [vmem:[#allocation3 + $0x68] sm:$0xff] %vm303, %v3004
      %3037 = vst.msk [vmem:[#allocation3 + $0x70] sm:$0xff] %vm303, %v3005
      %3038 = vst.msk [vmem:[#allocation3 + $0x78] sm:$0xff] %vm303, %v3006
      %3039 = vst.msk [vmem:[#allocation3 + $0x80] sm:$0xff] %vm303, %v3007
      %3040 = vst.msk [vmem:[#allocation3 + $0x88] sm:$0xff] %vm303, %v3008
      %3041 = vst.msk [vmem:[#allocation3 + $0x90] sm:$0xff] %vm303, %v3009
      %3042 = vst.msk [vmem:[#allocation3 + $0x98] sm:$0xff] %vm303, %v3010
      %3043 = vst.msk [vmem:[#allocation3 + $0xa0] sm:$0xff] %vm303, %v3011
      %3044 = vst.msk [vmem:[#allocation3 + $0xa8] sm:$0xff] %vm303, %v3012
      %3045 = vst.msk [vmem:[#allocation3 + $0xb0] sm:$0xff] %vm303, %v3013
      %3046 = vst.msk [vmem:[#allocation3 + $0xb8] sm:$0xff] %vm303, %v3014
      %3047 = vst.msk [vmem:[#allocation3 + $0xc0] sm:$0xff] %vm303, %v3015
      %3048 = vst.msk [vmem:[#allocation3 + $0xc8] sm:$0xff] %vm303, %v3016
      %3049 = vst.msk [vmem:[#allocation3 + $0xd0] sm:$0xff] %vm303, %v3017
      %3050 = vst.msk [vmem:[#allocation3 + $0xd8] sm:$0xff] %vm303, %v3018
      %3051 = vst.msk [vmem:[#allocation3 + $0xe0] sm:$0xff] %vm303, %v3019
      %3052 = vst.msk [vmem:[#allocation3 + $0xe8] sm:$0xff] %vm303, %v3020
      %3053 = vst.msk [vmem:[#allocation3 + $0xf0] sm:$0xff] %vm303, %v3021
      %3054 = vst.msk [vmem:[#allocation3 + $0xf8] sm:$0xff] %vm303, %v3022
      %s3055 = scalar_lea.vmem [#allocation2], 48
      %v3056 = vld [vmem:[%s3055] sm:$0xff]
      %v3057 = vld [vmem:[%s3055 + $0x8] sm:$0xff]
      %v3058 = vld [vmem:[%s3055 + $0x18] sm:$0xff]
      %v3059 = vld [vmem:[%s3055 + $0x20] sm:$0xff]
      %v3060 = vld [vmem:[%s3055 + $0x30] sm:$0xff]
      %v3061 = vld [vmem:[%s3055 + $0x38] sm:$0xff]
      %v3062 = vld [vmem:[%s3055 + $0x48] sm:$0xff]
      %v3063 = vld [vmem:[%s3055 + $0x50] sm:$0xff]
      %v3064 = vld [vmem:[%s3055 + $0x60] sm:$0xff]
      %v3065 = vld [vmem:[%s3055 + $0x68] sm:$0xff]
      %v3066 = vld [vmem:[%s3055 + $0x78] sm:$0xff]
      %v3067 = vld [vmem:[%s3055 + $0x80] sm:$0xff]
      %v3068 = vld [vmem:[%s3055 + $0x90] sm:$0xff]
      %v3069 = vld [vmem:[%s3055 + $0x98] sm:$0xff]
      %v3070 = vld [vmem:[%s3055 + $0xa8] sm:$0xff]
      %v3071 = vld [vmem:[%s3055 + $0xb0] sm:$0xff]
      %v3072 = vld [vmem:[%s3055 + $0xc0] sm:$0xff]
      %v3073 = vld [vmem:[%s3055 + $0xc8] sm:$0xff]
      %v3074 = vld [vmem:[%s3055 + $0xd8] sm:$0xff]
      %v3075 = vld [vmem:[%s3055 + $0xe0] sm:$0xff]
      %v3076 = vld [vmem:[%s3055 + $0xf0] sm:$0xff]
      %v3077 = vld [vmem:[%s3055 + $0xf8] sm:$0xff]
      %v3078 = vld [vmem:[%s3055 + $0x108] sm:$0xff]
      %v3079 = vld [vmem:[%s3055 + $0x110] sm:$0xff]
      %v3080 = vld [vmem:[%s3055 + $0x120] sm:$0xff]
      %v3081 = vld [vmem:[%s3055 + $0x128] sm:$0xff]
      %v3082 = vld [vmem:[%s3055 + $0x138] sm:$0xff]
      %v3083 = vld [vmem:[%s3055 + $0x140] sm:$0xff]
      %v3084 = vld [vmem:[%s3055 + $0x150] sm:$0xff]
      %v3085 = vld [vmem:[%s3055 + $0x158] sm:$0xff]
      %v3086 = vld [vmem:[%s3055 + $0x168] sm:$0xff]
      %v3087 = vld [vmem:[%s3055 + $0x170] sm:$0xff]
      %v3088 = vld [vmem:[%s1 + $0x18] sm:$0xf]
      %v3089 = vld [vmem:[#allocation3] sm:$0xff]
      %v3090 = vld [vmem:[#allocation3 + $0x8] sm:$0xff]
      %v3091 = vld [vmem:[#allocation3 + $0x10] sm:$0xff]
      %v3092 = vld [vmem:[#allocation3 + $0x18] sm:$0xff]
      %v3093 = vld [vmem:[#allocation3 + $0x20] sm:$0xff]
      %v3094 = vld [vmem:[#allocation3 + $0x28] sm:$0xff]
      %v3095 = vld [vmem:[#allocation3 + $0x30] sm:$0xff]
      %v3096 = vld [vmem:[#allocation3 + $0x38] sm:$0xff]
      %v3097 = vld [vmem:[#allocation3 + $0x40] sm:$0xff]
      %v3098 = vld [vmem:[#allocation3 + $0x48] sm:$0xff]
      %v3099 = vld [vmem:[#allocation3 + $0x50] sm:$0xff]
      %v3100 = vld [vmem:[#allocation3 + $0x58] sm:$0xff]
      %v3101 = vld [vmem:[#allocation3 + $0x60] sm:$0xff]
      %v3102 = vld [vmem:[#allocation3 + $0x68] sm:$0xff]
      %v3103 = vld [vmem:[#allocation3 + $0x70] sm:$0xff]
      %v3104 = vld [vmem:[#allocation3 + $0x78] sm:$0xff]
      %v3105 = vld [vmem:[#allocation3 + $0x80] sm:$0xff]
      %v3106 = vld [vmem:[#allocation3 + $0x88] sm:$0xff]
      %v3107 = vld [vmem:[#allocation3 + $0x90] sm:$0xff]
      %v3108 = vld [vmem:[#allocation3 + $0x98] sm:$0xff]
      %v3109 = vld [vmem:[#allocation3 + $0xa0] sm:$0xff]
      %v3110 = vld [vmem:[#allocation3 + $0xa8] sm:$0xff]
      %v3111 = vld [vmem:[#allocation3 + $0xb0] sm:$0xff]
      %v3112 = vld [vmem:[#allocation3 + $0xb8] sm:$0xff]
      %v3113 = vld [vmem:[#allocation3 + $0xc0] sm:$0xff]
      %v3114 = vld [vmem:[#allocation3 + $0xc8] sm:$0xff]
      %v3115 = vld [vmem:[#allocation3 + $0xd0] sm:$0xff]
      %v3116 = vld [vmem:[#allocation3 + $0xd8] sm:$0xff]
      %v3117 = vld [vmem:[#allocation3 + $0xe0] sm:$0xff]
      %v3118 = vld [vmem:[#allocation3 + $0xe8] sm:$0xff]
      %v3119 = vld [vmem:[#allocation3 + $0xf0] sm:$0xff]
      %v3120 = vld [vmem:[#allocation3 + $0xf8] sm:$0xff]
      %v3122 = vsel %vm182, %v3056, 0
      %v3125 = vsel %vm182, %v3057, 0
      %v3128 = vsel %vm182, %v3058, 0
      %v3131 = vsel %vm182, %v3059, 0
      %v3134 = vsel %vm182, %v3060, 0
      %v3137 = vsel %vm182, %v3061, 0
      %v3140 = vsel %vm182, %v3062, 0
      %v3143 = vsel %vm182, %v3063, 0
      %v3146 = vsel %vm182, %v3064, 0
      %v3149 = vsel %vm182, %v3065, 0
      %v3152 = vsel %vm182, %v3066, 0
      %v3155 = vsel %vm182, %v3067, 0
      %v3158 = vsel %vm182, %v3068, 0
      %v3161 = vsel %vm182, %v3069, 0
      %v3164 = vsel %vm182, %v3070, 0
      %v3167 = vsel %vm182, %v3071, 0
      %v3170 = vsel %vm182, %v3072, 0
      %v3173 = vsel %vm182, %v3073, 0
      %v3176 = vsel %vm182, %v3074, 0
      %v3179 = vsel %vm182, %v3075, 0
      %v3182 = vsel %vm182, %v3076, 0
      %v3185 = vsel %vm182, %v3077, 0
      %v3188 = vsel %vm182, %v3078, 0
      %v3191 = vsel %vm182, %v3079, 0
      %v3194 = vsel %vm182, %v3080, 0
      %v3197 = vsel %vm182, %v3081, 0
      %v3200 = vsel %vm182, %v3082, 0
      %v3203 = vsel %vm182, %v3083, 0
      %v3206 = vsel %vm182, %v3084, 0
      %v3209 = vsel %vm182, %v3085, 0
      %v3212 = vsel %vm182, %v3086, 0
      %v3215 = vsel %vm182, %v3087, 0
      %v3218 = vsel %vm497, %v3088, 0
      %3220 = vmatprep.subr.mxu0 0.0
      %3221 = vmatpush1.msra.mxu0 %v3218
      %3222 = vmatprep.subr.mxu0 0.0
      %3223 = vmatpush1.msra.mxu0 0.0
      %3224 = vmatprep.subr.mxu0 0.0
      %3225 = vmatpush1.msra.mxu0 0.0
      %3226 = vmatprep.subr.mxu0 0.0
      %3227 = vmatpush1.msra.mxu0 0.0
      %3228 = vmatprep.subr.mxu0 0.0
      %3229 = vmatpush1.msra.mxu0 0.0
      %3230 = vmatprep.subr.mxu0 0.0
      %3231 = vmatpush1.msra.mxu0 0.0
      %3232 = vmatprep.subr.mxu0 0.0
      %3233 = vmatpush1.msra.mxu0 0.0
      %3234 = vmatprep.subr.mxu0 0.0
      %3235 = vmatpush1.msra.mxu0 0.0
      %3236 = vmatprep.subr.mxu0 0.0
      %3237 = vmatpush1.msra.mxu0 0.0
      %3238 = vmatprep.subr.mxu0 0.0
      %3239 = vmatpush1.msra.mxu0 0.0
      %3240 = vmatprep.subr.mxu0 0.0
      %3241 = vmatpush1.msra.mxu0 0.0
      %3242 = vmatprep.subr.mxu0 0.0
      %3243 = vmatpush1.msra.mxu0 0.0
      %3244 = vmatprep.subr.mxu0 0.0
      %3245 = vmatpush1.msra.mxu0 0.0
      %3246 = vmatprep.subr.mxu0 0.0
      %3247 = vmatpush1.msra.mxu0 0.0
      %3248 = vmatprep.subr.mxu0 0.0
      %3249 = vmatpush1.msra.mxu0 0.0
      %3250 = vmatprep.subr.mxu0 0.0
      %3251 = vmatpush1.msra.mxu0 0.0
      %3252 = vmatprep.subr.mxu0 0.0
      %3253 = vmatpush1.msra.mxu0 0.0
      %3254 = vmatprep.subr.mxu0 0.0
      %3255 = vmatpush1.msra.mxu0 0.0
      %3256 = vmatprep.subr.mxu0 0.0
      %3257 = vmatpush1.msra.mxu0 0.0
      %3258 = vmatprep.subr.mxu0 0.0
      %3259 = vmatpush1.msra.mxu0 0.0
      %3260 = vmatprep.subr.mxu0 0.0
      %3261 = vmatpush1.msra.mxu0 0.0
      %3262 = vmatprep.subr.mxu0 0.0
      %3263 = vmatpush1.msra.mxu0 0.0
      %3264 = vmatprep.subr.mxu0 0.0
      %3265 = vmatpush1.msra.mxu0 0.0
      %3266 = vmatprep.subr.mxu0 0.0
      %3267 = vmatpush1.msra.mxu0 0.0
      %3268 = vmatprep.subr.mxu0 0.0
      %3269 = vmatpush1.msra.mxu0 0.0
      %3270 = vmatprep.subr.mxu0 0.0
      %3271 = vmatpush1.msra.mxu0 0.0
      %3272 = vmatprep.subr.mxu0 0.0
      %3273 = vmatpush1.msra.mxu0 0.0
      %3274 = vmatprep.subr.mxu0 0.0
      %3275 = vmatpush1.msra.mxu0 0.0
      %3276 = vmatprep.subr.mxu0 0.0
      %3277 = vmatpush1.msra.mxu0 0.0
      %3278 = vmatprep.subr.mxu0 0.0
      %3279 = vmatpush1.msra.mxu0 0.0
      %3280 = vmatprep.subr.mxu0 0.0
      %3281 = vmatpush1.msra.mxu0 0.0
      %3282 = vmatprep.subr.mxu0 0.0
      %3283 = vmatpush1.msra.mxu0 0.0
      %3284 = vmatprep.mubr.f32.mxu0 0.0
      %3285 = vmatmul.mubr.f32.gmra.mrb[0].mxu0 %v3122
      %v3286 = vpop.f32.mrb[0].mxu0
      %v3287 = vadd.f32 0.0, %v3286
      %v3288 = vpop.f32.mrb[0].mxu0
      %3289 = vmatprep.mubr.f32.mxu0 0.0
      %3290 = vmatmul.mubr.f32.gmra.mrb[0].mxu0 %v3125
      %v3291 = vpop.f32.mrb[0].mxu0
      %v3292 = vadd.f32 0.0, %v3291
      %v3293 = vpop.f32.mrb[0].mxu0
      %3294 = vmatprep.mubr.f32.mxu0 0.0
      %3295 = vmatmul.mubr.f32.gmra.mrb[0].mxu0 %v3128
      %v3296 = vpop.f32.mrb[0].mxu0
      %v3297 = vadd.f32 0.0, %v3296
      %v3298 = vpop.f32.mrb[0].mxu0
      %3299 = vmatprep.mubr.f32.mxu0 0.0
      %3300 = vmatmul.mubr.f32.gmra.mrb[0].mxu0 %v3131
      %v3301 = vpop.f32.mrb[0].mxu0
      %v3302 = vadd.f32 0.0, %v3301
      %v3303 = vpop.f32.mrb[0].mxu0
      %3304 = vmatprep.mubr.f32.mxu0 0.0
      %3305 = vmatmul.mubr.f32.gmra.mrb[0].mxu0 %v3134
      %v3306 = vpop.f32.mrb[0].mxu0
      %v3307 = vadd.f32 0.0, %v3306
      %v3308 = vpop.f32.mrb[0].mxu0
      %3309 = vmatprep.mubr.f32.mxu0 0.0
      %3310 = vmatmul.mubr.f32.gmra.mrb[0].mxu0 %v3137
      %v3311 = vpop.f32.mrb[0].mxu0
      %v3312 = vadd.f32 0.0, %v3311
      %v3313 = vpop.f32.mrb[0].mxu0
      %3314 = vmatprep.mubr.f32.mxu0 0.0
      %3315 = vmatmul.mubr.f32.gmra.mrb[0].mxu0 %v3140
      %v3316 = vpop.f32.mrb[0].mxu0
      %v3317 = vadd.f32 0.0, %v3316
      %v3318 = vpop.f32.mrb[0].mxu0
      %3319 = vmatprep.mubr.f32.mxu0 0.0
      %3320 = vmatmul.mubr.f32.gmra.mrb[0].mxu0 %v3143
      %v3321 = vpop.f32.mrb[0].mxu0
      %v3322 = vadd.f32 0.0, %v3321
      %v3323 = vpop.f32.mrb[0].mxu0
      %3324 = vmatprep.mubr.f32.mxu0 0.0
      %3325 = vmatmul.mubr.f32.gmra.mrb[0].mxu0 %v3146
      %v3326 = vpop.f32.mrb[0].mxu0
      %v3327 = vadd.f32 0.0, %v3326
      %v3328 = vpop.f32.mrb[0].mxu0
      %3329 = vmatprep.mubr.f32.mxu0 0.0
      %3330 = vmatmul.mubr.f32.gmra.mrb[0].mxu0 %v3149
      %v3331 = vpop.f32.mrb[0].mxu0
      %v3332 = vadd.f32 0.0, %v3331
      %v3333 = vpop.f32.mrb[0].mxu0
      %3334 = vmatprep.mubr.f32.mxu0 0.0
      %3335 = vmatmul.mubr.f32.gmra.mrb[0].mxu0 %v3152
      %v3336 = vpop.f32.mrb[0].mxu0
      %v3337 = vadd.f32 0.0, %v3336
      %v3338 = vpop.f32.mrb[0].mxu0
      %3339 = vmatprep.mubr.f32.mxu0 0.0
      %3340 = vmatmul.mubr.f32.gmra.mrb[0].mxu0 %v3155
      %v3341 = vpop.f32.mrb[0].mxu0
      %v3342 = vadd.f32 0.0, %v3341
      %v3343 = vpop.f32.mrb[0].mxu0
      %3344 = vmatprep.mubr.f32.mxu0 0.0
      %3345 = vmatmul.mubr.f32.gmra.mrb[0].mxu0 %v3158
      %v3346 = vpop.f32.mrb[0].mxu0
      %v3347 = vadd.f32 0.0, %v3346
      %v3348 = vpop.f32.mrb[0].mxu0
      %3349 = vmatprep.mubr.f32.mxu0 0.0
      %3350 = vmatmul.mubr.f32.gmra.mrb[0].mxu0 %v3161
      %v3351 = vpop.f32.mrb[0].mxu0
      %v3352 = vadd.f32 0.0, %v3351
      %v3353 = vpop.f32.mrb[0].mxu0
      %3354 = vmatprep.mubr.f32.mxu0 0.0
      %3355 = vmatmul.mubr.f32.gmra.mrb[0].mxu0 %v3164
      %v3356 = vpop.f32.mrb[0].mxu0
      %v3357 = vadd.f32 0.0, %v3356
      %v3358 = vpop.f32.mrb[0].mxu0
      %3359 = vmatprep.mubr.f32.mxu0 0.0
      %3360 = vmatmul.mubr.f32.gmra.mrb[0].mxu0 %v3167
      %v3361 = vpop.f32.mrb[0].mxu0
      %v3362 = vadd.f32 0.0, %v3361
      %v3363 = vpop.f32.mrb[0].mxu0
      %3364 = vmatprep.mubr.f32.mxu0 0.0
      %3365 = vmatmul.mubr.f32.gmra.mrb[0].mxu0 %v3170
      %v3366 = vpop.f32.mrb[0].mxu0
      %v3367 = vadd.f32 0.0, %v3366
      %v3368 = vpop.f32.mrb[0].mxu0
      %3369 = vmatprep.mubr.f32.mxu0 0.0
      %3370 = vmatmul.mubr.f32.gmra.mrb[0].mxu0 %v3173
      %v3371 = vpop.f32.mrb[0].mxu0
      %v3372 = vadd.f32 0.0, %v3371
      %v3373 = vpop.f32.mrb[0].mxu0
      %3374 = vmatprep.mubr.f32.mxu0 0.0
      %3375 = vmatmul.mubr.f32.gmra.mrb[0].mxu0 %v3176
      %v3376 = vpop.f32.mrb[0].mxu0
      %v3377 = vadd.f32 0.0, %v3376
      %v3378 = vpop.f32.mrb[0].mxu0
      %3379 = vmatprep.mubr.f32.mxu0 0.0
      %3380 = vmatmul.mubr.f32.gmra.mrb[0].mxu0 %v3179
      %v3381 = vpop.f32.mrb[0].mxu0
      %v3382 = vadd.f32 0.0, %v3381
      %v3383 = vpop.f32.mrb[0].mxu0
      %3384 = vmatprep.mubr.f32.mxu0 0.0
      %3385 = vmatmul.mubr.f32.gmra.mrb[0].mxu0 %v3182
      %v3386 = vpop.f32.mrb[0].mxu0
      %v3387 = vadd.f32 0.0, %v3386
      %v3388 = vpop.f32.mrb[0].mxu0
      %3389 = vmatprep.mubr.f32.mxu0 0.0
      %3390 = vmatmul.mubr.f32.gmra.mrb[0].mxu0 %v3185
      %v3391 = vpop.f32.mrb[0].mxu0
      %v3392 = vadd.f32 0.0, %v3391
      %v3393 = vpop.f32.mrb[0].mxu0
      %3394 = vmatprep.mubr.f32.mxu0 0.0
      %3395 = vmatmul.mubr.f32.gmra.mrb[0].mxu0 %v3188
      %v3396 = vpop.f32.mrb[0].mxu0
      %v3397 = vadd.f32 0.0, %v3396
      %v3398 = vpop.f32.mrb[0].mxu0
      %3399 = vmatprep.mubr.f32.mxu0 0.0
      %3400 = vmatmul.mubr.f32.gmra.mrb[0].mxu0 %v3191
      %v3401 = vpop.f32.mrb[0].mxu0
      %v3402 = vadd.f32 0.0, %v3401
      %v3403 = vpop.f32.mrb[0].mxu0
      %3404 = vmatprep.mubr.f32.mxu0 0.0
      %3405 = vmatmul.mubr.f32.gmra.mrb[0].mxu0 %v3194
      %v3406 = vpop.f32.mrb[0].mxu0
      %v3407 = vadd.f32 0.0, %v3406
      %v3408 = vpop.f32.mrb[0].mxu0
      %3409 = vmatprep.mubr.f32.mxu0 0.0
      %3410 = vmatmul.mubr.f32.gmra.mrb[0].mxu0 %v3197
      %v3411 = vpop.f32.mrb[0].mxu0
      %v3412 = vadd.f32 0.0, %v3411
      %v3413 = vpop.f32.mrb[0].mxu0
      %3414 = vmatprep.mubr.f32.mxu0 0.0
      %3415 = vmatmul.mubr.f32.gmra.mrb[0].mxu0 %v3200
      %v3416 = vpop.f32.mrb[0].mxu0
      %v3417 = vadd.f32 0.0, %v3416
      %v3418 = vpop.f32.mrb[0].mxu0
      %3419 = vmatprep.mubr.f32.mxu0 0.0
      %3420 = vmatmul.mubr.f32.gmra.mrb[0].mxu0 %v3203
      %v3421 = vpop.f32.mrb[0].mxu0
      %v3422 = vadd.f32 0.0, %v3421
      %v3423 = vpop.f32.mrb[0].mxu0
      %3424 = vmatprep.mubr.f32.mxu0 0.0
      %3425 = vmatmul.mubr.f32.gmra.mrb[0].mxu0 %v3206
      %v3426 = vpop.f32.mrb[0].mxu0
      %v3427 = vadd.f32 0.0, %v3426
      %v3428 = vpop.f32.mrb[0].mxu0
      %3429 = vmatprep.mubr.f32.mxu0 0.0
      %3430 = vmatmul.mubr.f32.gmra.mrb[0].mxu0 %v3209
      %v3431 = vpop.f32.mrb[0].mxu0
      %v3432 = vadd.f32 0.0, %v3431
      %v3433 = vpop.f32.mrb[0].mxu0
      %3434 = vmatprep.mubr.f32.mxu0 0.0
      %3435 = vmatmul.mubr.f32.gmra.mrb[0].mxu0 %v3212
      %v3436 = vpop.f32.mrb[0].mxu0
      %v3437 = vadd.f32 0.0, %v3436
      %v3438 = vpop.f32.mrb[0].mxu0
      %3439 = vmatprep.mubr.f32.mxu0 0.0
      %3440 = vmatmul.mubr.f32.gmra.mrb[0].mxu0 %v3215
      %v3441 = vpop.f32.mrb[0].mxu0
      %v3442 = vadd.f32 0.0, %v3441
      %v3443 = vpop.f32.mrb[0].mxu0
      %3444 = vdwg.mxu0
      %v3445 = vadd.f32 %v3089, %v3287
      %v3446 = vadd.f32 %v3090, %v3292
      %v3447 = vadd.f32 %v3091, %v3297
      %v3448 = vadd.f32 %v3092, %v3302
      %v3449 = vadd.f32 %v3093, %v3307
      %v3450 = vadd.f32 %v3094, %v3312
      %v3451 = vadd.f32 %v3095, %v3317
      %v3452 = vadd.f32 %v3096, %v3322
      %v3453 = vadd.f32 %v3097, %v3327
      %v3454 = vadd.f32 %v3098, %v3332
      %v3455 = vadd.f32 %v3099, %v3337
      %v3456 = vadd.f32 %v3100, %v3342
      %v3457 = vadd.f32 %v3101, %v3347
      %v3458 = vadd.f32 %v3102, %v3352
      %v3459 = vadd.f32 %v3103, %v3357
      %v3460 = vadd.f32 %v3104, %v3362
      %v3461 = vadd.f32 %v3105, %v3367
      %v3462 = vadd.f32 %v3106, %v3372
      %v3463 = vadd.f32 %v3107, %v3377
      %v3464 = vadd.f32 %v3108, %v3382
      %v3465 = vadd.f32 %v3109, %v3387
      %v3466 = vadd.f32 %v3110, %v3392
      %v3467 = vadd.f32 %v3111, %v3397
      %v3468 = vadd.f32 %v3112, %v3402
      %v3469 = vadd.f32 %v3113, %v3407
      %v3470 = vadd.f32 %v3114, %v3412
      %v3471 = vadd.f32 %v3115, %v3417
      %v3472 = vadd.f32 %v3116, %v3422
      %v3473 = vadd.f32 %v3117, %v3427
      %v3474 = vadd.f32 %v3118, %v3432
      %v3475 = vadd.f32 %v3119, %v3437
      %v3476 = vadd.f32 %v3120, %v3442
      %3477 = vst.msk [vmem:[#allocation3] sm:$0xff] %vm303, %v3445
      %3478 = vst.msk [vmem:[#allocation3 + $0x8] sm:$0xff] %vm303, %v3446
      %3479 = vst.msk [vmem:[#allocation3 + $0x10] sm:$0xff] %vm303, %v3447
      %3480 = vst.msk [vmem:[#allocation3 + $0x18] sm:$0xff] %vm303, %v3448
      %3481 = vst.msk [vmem:[#allocation3 + $0x20] sm:$0xff] %vm303, %v3449
      %3482 = vst.msk [vmem:[#allocation3 + $0x28] sm:$0xff] %vm303, %v3450
      %3483 = vst.msk [vmem:[#allocation3 + $0x30] sm:$0xff] %vm303, %v3451
      %3484 = vst.msk [vmem:[#allocation3 + $0x38] sm:$0xff] %vm303, %v3452
      %3485 = vst.msk [vmem:[#allocation3 + $0x40] sm:$0xff] %vm303, %v3453
      %3486 = vst.msk [vmem:[#allocation3 + $0x48] sm:$0xff] %vm303, %v3454
      %3487 = vst.msk [vmem:[#allocation3 + $0x50] sm:$0xff] %vm303, %v3455
      %3488 = vst.msk [vmem:[#allocation3 + $0x58] sm:$0xff] %vm303, %v3456
      %3489 = vst.msk [vmem:[#allocation3 + $0x60] sm:$0xff] %vm303, %v3457
      %3490 = vst.msk [vmem:[#allocation3 + $0x68] sm:$0xff] %vm303, %v3458
      %3491 = vst.msk [vmem:[#allocation3 + $0x70] sm:$0xff] %vm303, %v3459
      %3492 = vst.msk [vmem:[#allocation3 + $0x78] sm:$0xff] %vm303, %v3460
      %3493 = vst.msk [vmem:[#allocation3 + $0x80] sm:$0xff] %vm303, %v3461
      %3494 = vst.msk [vmem:[#allocation3 + $0x88] sm:$0xff] %vm303, %v3462
      %3495 = vst.msk [vmem:[#allocation3 + $0x90] sm:$0xff] %vm303, %v3463
      %3496 = vst.msk [vmem:[#allocation3 + $0x98] sm:$0xff] %vm303, %v3464
      %3497 = vst.msk [vmem:[#allocation3 + $0xa0] sm:$0xff] %vm303, %v3465
      %3498 = vst.msk [vmem:[#allocation3 + $0xa8] sm:$0xff] %vm303, %v3466
      %3499 = vst.msk [vmem:[#allocation3 + $0xb0] sm:$0xff] %vm303, %v3467
      %3500 = vst.msk [vmem:[#allocation3 + $0xb8] sm:$0xff] %vm303, %v3468
      %3501 = vst.msk [vmem:[#allocation3 + $0xc0] sm:$0xff] %vm303, %v3469
      %3502 = vst.msk [vmem:[#allocation3 + $0xc8] sm:$0xff] %vm303, %v3470
      %3503 = vst.msk [vmem:[#allocation3 + $0xd0] sm:$0xff] %vm303, %v3471
      %3504 = vst.msk [vmem:[#allocation3 + $0xd8] sm:$0xff] %vm303, %v3472
      %3505 = vst.msk [vmem:[#allocation3 + $0xe0] sm:$0xff] %vm303, %v3473
      %3506 = vst.msk [vmem:[#allocation3 + $0xe8] sm:$0xff] %vm303, %v3474
      %3507 = vst.msk [vmem:[#allocation3 + $0xf0] sm:$0xff] %vm303, %v3475
      %3508 = vst.msk [vmem:[#allocation3 + $0xf8] sm:$0xff] %vm303, %v3476
      %v3509 = vld [vmem:[%s3055 + $0x1] sm:$0xff]
      %v3510 = vld [vmem:[%s3055 + $0x9] sm:$0xff]
      %v3511 = vld [vmem:[%s3055 + $0x19] sm:$0xff]
      %v3512 = vld [vmem:[%s3055 + $0x21] sm:$0xff]
      %v3513 = vld [vmem:[%s3055 + $0x31] sm:$0xff]
      %v3514 = vld [vmem:[%s3055 + $0x39] sm:$0xff]
      %v3515 = vld [vmem:[%s3055 + $0x49] sm:$0xff]
      %v3516 = vld [vmem:[%s3055 + $0x51] sm:$0xff]
      %v3517 = vld [vmem:[%s3055 + $0x61] sm:$0xff]
      %v3518 = vld [vmem:[%s3055 + $0x69] sm:$0xff]
      %v3519 = vld [vmem:[%s3055 + $0x79] sm:$0xff]
      %v3520 = vld [vmem:[%s3055 + $0x81] sm:$0xff]
      %v3521 = vld [vmem:[%s3055 + $0x91] sm:$0xff]
      %v3522 = vld [vmem:[%s3055 + $0x99] sm:$0xff]
      %v3523 = vld [vmem:[%s3055 + $0xa9] sm:$0xff]
      %v3524 = vld [vmem:[%s3055 + $0xb1] sm:$0xff]
      %v3525 = vld [vmem:[%s3055 + $0xc1] sm:$0xff]
      %v3526 = vld [vmem:[%s3055 + $0xc9] sm:$0xff]
      %v3527 = vld [vmem:[%s3055 + $0xd9] sm:$0xff]
      %v3528 = vld [vmem:[%s3055 + $0xe1] sm:$0xff]
      %v3529 = vld [vmem:[%s3055 + $0xf1] sm:$0xff]
      %v3530 = vld [vmem:[%s3055 + $0xf9] sm:$0xff]
      %v3531 = vld [vmem:[%s3055 + $0x109] sm:$0xff]
      %v3532 = vld [vmem:[%s3055 + $0x111] sm:$0xff]
      %v3533 = vld [vmem:[%s3055 + $0x121] sm:$0xff]
      %v3534 = vld [vmem:[%s3055 + $0x129] sm:$0xff]
      %v3535 = vld [vmem:[%s3055 + $0x139] sm:$0xff]
      %v3536 = vld [vmem:[%s3055 + $0x141] sm:$0xff]
      %v3537 = vld [vmem:[%s3055 + $0x151] sm:$0xff]
      %v3538 = vld [vmem:[%s3055 + $0x159] sm:$0xff]
      %v3539 = vld [vmem:[%s3055 + $0x169] sm:$0xff]
      %v3540 = vld [vmem:[%s3055 + $0x171] sm:$0xff]
      %v3541 = vld [vmem:[%s1 + $0x1c] sm:$0xf]
      %v3542 = vld [vmem:[#allocation3] sm:$0xff]
      %v3543 = vld [vmem:[#allocation3 + $0x8] sm:$0xff]
      %v3544 = vld [vmem:[#allocation3 + $0x10] sm:$0xff]
      %v3545 = vld [vmem:[#allocation3 + $0x18] sm:$0xff]
      %v3546 = vld [vmem:[#allocation3 + $0x20] sm:$0xff]
      %v3547 = vld [vmem:[#allocation3 + $0x28] sm:$0xff]
      %v3548 = vld [vmem:[#allocation3 + $0x30] sm:$0xff]
      %v3549 = vld [vmem:[#allocation3 + $0x38] sm:$0xff]
      %v3550 = vld [vmem:[#allocation3 + $0x40] sm:$0xff]
      %v3551 = vld [vmem:[#allocation3 + $0x48] sm:$0xff]
      %v3552 = vld [vmem:[#allocation3 + $0x50] sm:$0xff]
      %v3553 = vld [vmem:[#allocation3 + $0x58] sm:$0xff]
      %v3554 = vld [vmem:[#allocation3 + $0x60] sm:$0xff]
      %v3555 = vld [vmem:[#allocation3 + $0x68] sm:$0xff]
      %v3556 = vld [vmem:[#allocation3 + $0x70] sm:$0xff]
      %v3557 = vld [vmem:[#allocation3 + $0x78] sm:$0xff]
      %v3558 = vld [vmem:[#allocation3 + $0x80] sm:$0xff]
      %v3559 = vld [vmem:[#allocation3 + $0x88] sm:$0xff]
      %v3560 = vld [vmem:[#allocation3 + $0x90] sm:$0xff]
      %v3561 = vld [vmem:[#allocation3 + $0x98] sm:$0xff]
      %v3562 = vld [vmem:[#allocation3 + $0xa0] sm:$0xff]
      %v3563 = vld [vmem:[#allocation3 + $0xa8] sm:$0xff]
      %v3564 = vld [vmem:[#allocation3 + $0xb0] sm:$0xff]
      %v3565 = vld [vmem:[#allocation3 + $0xb8] sm:$0xff]
      %v3566 = vld [vmem:[#allocation3 + $0xc0] sm:$0xff]
      %v3567 = vld [vmem:[#allocation3 + $0xc8] sm:$0xff]
      %v3568 = vld [vmem:[#allocation3 + $0xd0] sm:$0xff]
      %v3569 = vld [vmem:[#allocation3 + $0xd8] sm:$0xff]
      %v3570 = vld [vmem:[#allocation3 + $0xe0] sm:$0xff]
      %v3571 = vld [vmem:[#allocation3 + $0xe8] sm:$0xff]
      %v3572 = vld [vmem:[#allocation3 + $0xf0] sm:$0xff]
      %v3573 = vld [vmem:[#allocation3 + $0xf8] sm:$0xff]
      %v3575 = vsel %vm182, %v3509, 0
      %v3578 = vsel %vm182, %v3510, 0
      %v3581 = vsel %vm182, %v3511, 0
      %v3584 = vsel %vm182, %v3512, 0
      %v3587 = vsel %vm182, %v3513, 0
      %v3590 = vsel %vm182, %v3514, 0
      %v3593 = vsel %vm182, %v3515, 0
      %v3596 = vsel %vm182, %v3516, 0
      %v3599 = vsel %vm182, %v3517, 0
      %v3602 = vsel %vm182, %v3518, 0
      %v3605 = vsel %vm182, %v3519, 0
      %v3608 = vsel %vm182, %v3520, 0
      %v3611 = vsel %vm182, %v3521, 0
      %v3614 = vsel %vm182, %v3522, 0
      %v3617 = vsel %vm182, %v3523, 0
      %v3620 = vsel %vm182, %v3524, 0
      %v3623 = vsel %vm182, %v3525, 0
      %v3626 = vsel %vm182, %v3526, 0
      %v3629 = vsel %vm182, %v3527, 0
      %v3632 = vsel %vm182, %v3528, 0
      %v3635 = vsel %vm182, %v3529, 0
      %v3638 = vsel %vm182, %v3530, 0
      %v3641 = vsel %vm182, %v3531, 0
      %v3644 = vsel %vm182, %v3532, 0
      %v3647 = vsel %vm182, %v3533, 0
      %v3650 = vsel %vm182, %v3534, 0
      %v3653 = vsel %vm182, %v3535, 0
      %v3656 = vsel %vm182, %v3536, 0
      %v3659 = vsel %vm182, %v3537, 0
      %v3662 = vsel %vm182, %v3538, 0
      %v3665 = vsel %vm182, %v3539, 0
      %v3668 = vsel %vm182, %v3540, 0
      %v3671 = vsel %vm497, %v3541, 0
      %3673 = vmatprep.subr.mxu0 0.0
      %3674 = vmatpush1.msra.mxu0 %v3671
      %3675 = vmatprep.subr.mxu0 0.0
      %3676 = vmatpush1.msra.mxu0 0.0
      %3677 = vmatprep.subr.mxu0 0.0
      %3678 = vmatpush1.msra.mxu0 0.0
      %3679 = vmatprep.subr.mxu0 0.0
      %3680 = vmatpush1.msra.mxu0 0.0
      %3681 = vmatprep.subr.mxu0 0.0
      %3682 = vmatpush1.msra.mxu0 0.0
      %3683 = vmatprep.subr.mxu0 0.0
      %3684 = vmatpush1.msra.mxu0 0.0
      %3685 = vmatprep.subr.mxu0 0.0
      %3686 = vmatpush1.msra.mxu0 0.0
      %3687 = vmatprep.subr.mxu0 0.0
      %3688 = vmatpush1.msra.mxu0 0.0
      %3689 = vmatprep.subr.mxu0 0.0
      %3690 = vmatpush1.msra.mxu0 0.0
      %3691 = vmatprep.subr.mxu0 0.0
      %3692 = vmatpush1.msra.mxu0 0.0
      %3693 = vmatprep.subr.mxu0 0.0
      %3694 = vmatpush1.msra.mxu0 0.0
      %3695 = vmatprep.subr.mxu0 0.0
      %3696 = vmatpush1.msra.mxu0 0.0
      %3697 = vmatprep.subr.mxu0 0.0
      %3698 = vmatpush1.msra.mxu0 0.0
      %3699 = vmatprep.subr.mxu0 0.0
      %3700 = vmatpush1.msra.mxu0 0.0
      %3701 = vmatprep.subr.mxu0 0.0
      %3702 = vmatpush1.msra.mxu0 0.0
      %3703 = vmatprep.subr.mxu0 0.0
      %3704 = vmatpush1.msra.mxu0 0.0
      %3705 = vmatprep.subr.mxu0 0.0
      %3706 = vmatpush1.msra.mxu0 0.0
      %3707 = vmatprep.subr.mxu0 0.0
      %3708 = vmatpush1.msra.mxu0 0.0
      %3709 = vmatprep.subr.mxu0 0.0
      %3710 = vmatpush1.msra.mxu0 0.0
      %3711 = vmatprep.subr.mxu0 0.0
      %3712 = vmatpush1.msra.mxu0 0.0
      %3713 = vmatprep.subr.mxu0 0.0
      %3714 = vmatpush1.msra.mxu0 0.0
      %3715 = vmatprep.subr.mxu0 0.0
      %3716 = vmatpush1.msra.mxu0 0.0
      %3717 = vmatprep.subr.mxu0 0.0
      %3718 = vmatpush1.msra.mxu0 0.0
      %3719 = vmatprep.subr.mxu0 0.0
      %3720 = vmatpush1.msra.mxu0 0.0
      %3721 = vmatprep.subr.mxu0 0.0
      %3722 = vmatpush1.msra.mxu0 0.0
      %3723 = vmatprep.subr.mxu0 0.0
      %3724 = vmatpush1.msra.mxu0 0.0
      %3725 = vmatprep.subr.mxu0 0.0
      %3726 = vmatpush1.msra.mxu0 0.0
      %3727 = vmatprep.subr.mxu0 0.0
      %3728 = vmatpush1.msra.mxu0 0.0
      %3729 = vmatprep.subr.mxu0 0.0
      %3730 = vmatpush1.msra.mxu0 0.0
      %3731 = vmatprep.subr.mxu0 0.0
      %3732 = vmatpush1.msra.mxu0 0.0
      %3733 = vmatprep.subr.mxu0 0.0
      %3734 = vmatpush1.msra.mxu0 0.0
      %3735 = vmatprep.subr.mxu0 0.0
      %3736 = vmatpush1.msra.mxu0 0.0
      %3737 = vmatprep.mubr.f32.mxu0 0.0
      %3738 = vmatmul.mubr.f32.gmra.mrb[0].mxu0 %v3575
      %v3739 = vpop.f32.mrb[0].mxu0
      %v3740 = vadd.f32 0.0, %v3739
      %v3741 = vpop.f32.mrb[0].mxu0
      %3742 = vmatprep.mubr.f32.mxu0 0.0
      %3743 = vmatmul.mubr.f32.gmra.mrb[0].mxu0 %v3578
      %v3744 = vpop.f32.mrb[0].mxu0
      %v3745 = vadd.f32 0.0, %v3744
      %v3746 = vpop.f32.mrb[0].mxu0
      %3747 = vmatprep.mubr.f32.mxu0 0.0
      %3748 = vmatmul.mubr.f32.gmra.mrb[0].mxu0 %v3581
      %v3749 = vpop.f32.mrb[0].mxu0
      %v3750 = vadd.f32 0.0, %v3749
      %v3751 = vpop.f32.mrb[0].mxu0
      %3752 = vmatprep.mubr.f32.mxu0 0.0
      %3753 = vmatmul.mubr.f32.gmra.mrb[0].mxu0 %v3584
      %v3754 = vpop.f32.mrb[0].mxu0
      %v3755 = vadd.f32 0.0, %v3754
      %v3756 = vpop.f32.mrb[0].mxu0
      %3757 = vmatprep.mubr.f32.mxu0 0.0
      %3758 = vmatmul.mubr.f32.gmra.mrb[0].mxu0 %v3587
      %v3759 = vpop.f32.mrb[0].mxu0
      %v3760 = vadd.f32 0.0, %v3759
      %v3761 = vpop.f32.mrb[0].mxu0
      %3762 = vmatprep.mubr.f32.mxu0 0.0
      %3763 = vmatmul.mubr.f32.gmra.mrb[0].mxu0 %v3590
      %v3764 = vpop.f32.mrb[0].mxu0
      %v3765 = vadd.f32 0.0, %v3764
      %v3766 = vpop.f32.mrb[0].mxu0
      %3767 = vmatprep.mubr.f32.mxu0 0.0
      %3768 = vmatmul.mubr.f32.gmra.mrb[0].mxu0 %v3593
      %v3769 = vpop.f32.mrb[0].mxu0
      %v3770 = vadd.f32 0.0, %v3769
      %v3771 = vpop.f32.mrb[0].mxu0
      %3772 = vmatprep.mubr.f32.mxu0 0.0
      %3773 = vmatmul.mubr.f32.gmra.mrb[0].mxu0 %v3596
      %v3774 = vpop.f32.mrb[0].mxu0
      %v3775 = vadd.f32 0.0, %v3774
      %v3776 = vpop.f32.mrb[0].mxu0
      %3777 = vmatprep.mubr.f32.mxu0 0.0
      %3778 = vmatmul.mubr.f32.gmra.mrb[0].mxu0 %v3599
      %v3779 = vpop.f32.mrb[0].mxu0
      %v3780 = vadd.f32 0.0, %v3779
      %v3781 = vpop.f32.mrb[0].mxu0
      %3782 = vmatprep.mubr.f32.mxu0 0.0
      %3783 = vmatmul.mubr.f32.gmra.mrb[0].mxu0 %v3602
      %v3784 = vpop.f32.mrb[0].mxu0
      %v3785 = vadd.f32 0.0, %v3784
      %v3786 = vpop.f32.mrb[0].mxu0
      %3787 = vmatprep.mubr.f32.mxu0 0.0
      %3788 = vmatmul.mubr.f32.gmra.mrb[0].mxu0 %v3605
      %v3789 = vpop.f32.mrb[0].mxu0
      %v3790 = vadd.f32 0.0, %v3789
      %v3791 = vpop.f32.mrb[0].mxu0
      %3792 = vmatprep.mubr.f32.mxu0 0.0
      %3793 = vmatmul.mubr.f32.gmra.mrb[0].mxu0 %v3608
      %v3794 = vpop.f32.mrb[0].mxu0
      %v3795 = vadd.f32 0.0, %v3794
      %v3796 = vpop.f32.mrb[0].mxu0
      %3797 = vmatprep.mubr.f32.mxu0 0.0
      %3798 = vmatmul.mubr.f32.gmra.mrb[0].mxu0 %v3611
      %v3799 = vpop.f32.mrb[0].mxu0
      %v3800 = vadd.f32 0.0, %v3799
      %v3801 = vpop.f32.mrb[0].mxu0
      %3802 = vmatprep.mubr.f32.mxu0 0.0
      %3803 = vmatmul.mubr.f32.gmra.mrb[0].mxu0 %v3614
      %v3804 = vpop.f32.mrb[0].mxu0
      %v3805 = vadd.f32 0.0, %v3804
      %v3806 = vpop.f32.mrb[0].mxu0
      %3807 = vmatprep.mubr.f32.mxu0 0.0
      %3808 = vmatmul.mubr.f32.gmra.mrb[0].mxu0 %v3617
      %v3809 = vpop.f32.mrb[0].mxu0
      %v3810 = vadd.f32 0.0, %v3809
      %v3811 = vpop.f32.mrb[0].mxu0
      %3812 = vmatprep.mubr.f32.mxu0 0.0
      %3813 = vmatmul.mubr.f32.gmra.mrb[0].mxu0 %v3620
      %v3814 = vpop.f32.mrb[0].mxu0
      %v3815 = vadd.f32 0.0, %v3814
      %v3816 = vpop.f32.mrb[0].mxu0
      %3817 = vmatprep.mubr.f32.mxu0 0.0
      %3818 = vmatmul.mubr.f32.gmra.mrb[0].mxu0 %v3623
      %v3819 = vpop.f32.mrb[0].mxu0
      %v3820 = vadd.f32 0.0, %v3819
      %v3821 = vpop.f32.mrb[0].mxu0
      %3822 = vmatprep.mubr.f32.mxu0 0.0
      %3823 = vmatmul.mubr.f32.gmra.mrb[0].mxu0 %v3626
      %v3824 = vpop.f32.mrb[0].mxu0
      %v3825 = vadd.f32 0.0, %v3824
      %v3826 = vpop.f32.mrb[0].mxu0
      %3827 = vmatprep.mubr.f32.mxu0 0.0
      %3828 = vmatmul.mubr.f32.gmra.mrb[0].mxu0 %v3629
      %v3829 = vpop.f32.mrb[0].mxu0
      %v3830 = vadd.f32 0.0, %v3829
      %v3831 = vpop.f32.mrb[0].mxu0
      %3832 = vmatprep.mubr.f32.mxu0 0.0
      %3833 = vmatmul.mubr.f32.gmra.mrb[0].mxu0 %v3632
      %v3834 = vpop.f32.mrb[0].mxu0
      %v3835 = vadd.f32 0.0, %v3834
      %v3836 = vpop.f32.mrb[0].mxu0
      %3837 = vmatprep.mubr.f32.mxu0 0.0
      %3838 = vmatmul.mubr.f32.gmra.mrb[0].mxu0 %v3635
      %v3839 = vpop.f32.mrb[0].mxu0
      %v3840 = vadd.f32 0.0, %v3839
      %v3841 = vpop.f32.mrb[0].mxu0
      %3842 = vmatprep.mubr.f32.mxu0 0.0
      %3843 = vmatmul.mubr.f32.gmra.mrb[0].mxu0 %v3638
      %v3844 = vpop.f32.mrb[0].mxu0
      %v3845 = vadd.f32 0.0, %v3844
      %v3846 = vpop.f32.mrb[0].mxu0
      %3847 = vmatprep.mubr.f32.mxu0 0.0
      %3848 = vmatmul.mubr.f32.gmra.mrb[0].mxu0 %v3641
      %v3849 = vpop.f32.mrb[0].mxu0
      %v3850 = vadd.f32 0.0, %v3849
      %v3851 = vpop.f32.mrb[0].mxu0
      %3852 = vmatprep.mubr.f32.mxu0 0.0
      %3853 = vmatmul.mubr.f32.gmra.mrb[0].mxu0 %v3644
      %v3854 = vpop.f32.mrb[0].mxu0
      %v3855 = vadd.f32 0.0, %v3854
      %v3856 = vpop.f32.mrb[0].mxu0
      %3857 = vmatprep.mubr.f32.mxu0 0.0
      %3858 = vmatmul.mubr.f32.gmra.mrb[0].mxu0 %v3647
      %v3859 = vpop.f32.mrb[0].mxu0
      %v3860 = vadd.f32 0.0, %v3859
      %v3861 = vpop.f32.mrb[0].mxu0
      %3862 = vmatprep.mubr.f32.mxu0 0.0
      %3863 = vmatmul.mubr.f32.gmra.mrb[0].mxu0 %v3650
      %v3864 = vpop.f32.mrb[0].mxu0
      %v3865 = vadd.f32 0.0, %v3864
      %v3866 = vpop.f32.mrb[0].mxu0
      %3867 = vmatprep.mubr.f32.mxu0 0.0
      %3868 = vmatmul.mubr.f32.gmra.mrb[0].mxu0 %v3653
      %v3869 = vpop.f32.mrb[0].mxu0
      %v3870 = vadd.f32 0.0, %v3869
      %v3871 = vpop.f32.mrb[0].mxu0
      %3872 = vmatprep.mubr.f32.mxu0 0.0
      %3873 = vmatmul.mubr.f32.gmra.mrb[0].mxu0 %v3656
      %v3874 = vpop.f32.mrb[0].mxu0
      %v3875 = vadd.f32 0.0, %v3874
      %v3876 = vpop.f32.mrb[0].mxu0
      %3877 = vmatprep.mubr.f32.mxu0 0.0
      %3878 = vmatmul.mubr.f32.gmra.mrb[0].mxu0 %v3659
      %v3879 = vpop.f32.mrb[0].mxu0
      %v3880 = vadd.f32 0.0, %v3879
      %v3881 = vpop.f32.mrb[0].mxu0
      %3882 = vmatprep.mubr.f32.mxu0 0.0
      %3883 = vmatmul.mubr.f32.gmra.mrb[0].mxu0 %v3662
      %v3884 = vpop.f32.mrb[0].mxu0
      %v3885 = vadd.f32 0.0, %v3884
      %v3886 = vpop.f32.mrb[0].mxu0
      %3887 = vmatprep.mubr.f32.mxu0 0.0
      %3888 = vmatmul.mubr.f32.gmra.mrb[0].mxu0 %v3665
      %v3889 = vpop.f32.mrb[0].mxu0
      %v3890 = vadd.f32 0.0, %v3889
      %v3891 = vpop.f32.mrb[0].mxu0
      %3892 = vmatprep.mubr.f32.mxu0 0.0
      %3893 = vmatmul.mubr.f32.gmra.mrb[0].mxu0 %v3668
      %v3894 = vpop.f32.mrb[0].mxu0
      %v3895 = vadd.f32 0.0, %v3894
      %v3896 = vpop.f32.mrb[0].mxu0
      %3897 = vdwg.mxu0
      %v3898 = vadd.f32 %v3542, %v3740
      %v3899 = vadd.f32 %v3543, %v3745
      %v3900 = vadd.f32 %v3544, %v3750
      %v3901 = vadd.f32 %v3545, %v3755
      %v3902 = vadd.f32 %v3546, %v3760
      %v3903 = vadd.f32 %v3547, %v3765
      %v3904 = vadd.f32 %v3548, %v3770
      %v3905 = vadd.f32 %v3549, %v3775
      %v3906 = vadd.f32 %v3550, %v3780
      %v3907 = vadd.f32 %v3551, %v3785
      %v3908 = vadd.f32 %v3552, %v3790
      %v3909 = vadd.f32 %v3553, %v3795
      %v3910 = vadd.f32 %v3554, %v3800
      %v3911 = vadd.f32 %v3555, %v3805
      %v3912 = vadd.f32 %v3556, %v3810
      %v3913 = vadd.f32 %v3557, %v3815
      %v3914 = vadd.f32 %v3558, %v3820
      %v3915 = vadd.f32 %v3559, %v3825
      %v3916 = vadd.f32 %v3560, %v3830
      %v3917 = vadd.f32 %v3561, %v3835
      %v3918 = vadd.f32 %v3562, %v3840
      %v3919 = vadd.f32 %v3563, %v3845
      %v3920 = vadd.f32 %v3564, %v3850
      %v3921 = vadd.f32 %v3565, %v3855
      %v3922 = vadd.f32 %v3566, %v3860
      %v3923 = vadd.f32 %v3567, %v3865
      %v3924 = vadd.f32 %v3568, %v3870
      %v3925 = vadd.f32 %v3569, %v3875
      %v3926 = vadd.f32 %v3570, %v3880
      %v3927 = vadd.f32 %v3571, %v3885
      %v3928 = vadd.f32 %v3572, %v3890
      %v3929 = vadd.f32 %v3573, %v3895
      %3930 = vst.msk [vmem:[#allocation3] sm:$0xff] %vm303, %v3898
      %3931 = vst.msk [vmem:[#allocation3 + $0x8] sm:$0xff] %vm303, %v3899
      %3932 = vst.msk [vmem:[#allocation3 + $0x10] sm:$0xff] %vm303, %v3900
      %3933 = vst.msk [vmem:[#allocation3 + $0x18] sm:$0xff] %vm303, %v3901
      %3934 = vst.msk [vmem:[#allocation3 + $0x20] sm:$0xff] %vm303, %v3902
      %3935 = vst.msk [vmem:[#allocation3 + $0x28] sm:$0xff] %vm303, %v3903
      %3936 = vst.msk [vmem:[#allocation3 + $0x30] sm:$0xff] %vm303, %v3904
      %3937 = vst.msk [vmem:[#allocation3 + $0x38] sm:$0xff] %vm303, %v3905
      %3938 = vst.msk [vmem:[#allocation3 + $0x40] sm:$0xff] %vm303, %v3906
      %3939 = vst.msk [vmem:[#allocation3 + $0x48] sm:$0xff] %vm303, %v3907
      %3940 = vst.msk [vmem:[#allocation3 + $0x50] sm:$0xff] %vm303, %v3908
      %3941 = vst.msk [vmem:[#allocation3 + $0x58] sm:$0xff] %vm303, %v3909
      %3942 = vst.msk [vmem:[#allocation3 + $0x60] sm:$0xff] %vm303, %v3910
      %3943 = vst.msk [vmem:[#allocation3 + $0x68] sm:$0xff] %vm303, %v3911
      %3944 = vst.msk [vmem:[#allocation3 + $0x70] sm:$0xff] %vm303, %v3912
      %3945 = vst.msk [vmem:[#allocation3 + $0x78] sm:$0xff] %vm303, %v3913
      %3946 = vst.msk [vmem:[#allocation3 + $0x80] sm:$0xff] %vm303, %v3914
      %3947 = vst.msk [vmem:[#allocation3 + $0x88] sm:$0xff] %vm303, %v3915
      %3948 = vst.msk [vmem:[#allocation3 + $0x90] sm:$0xff] %vm303, %v3916
      %3949 = vst.msk [vmem:[#allocation3 + $0x98] sm:$0xff] %vm303, %v3917
      %3950 = vst.msk [vmem:[#allocation3 + $0xa0] sm:$0xff] %vm303, %v3918
      %3951 = vst.msk [vmem:[#allocation3 + $0xa8] sm:$0xff] %vm303, %v3919
      %3952 = vst.msk [vmem:[#allocation3 + $0xb0] sm:$0xff] %vm303, %v3920
      %3953 = vst.msk [vmem:[#allocation3 + $0xb8] sm:$0xff] %vm303, %v3921
      %3954 = vst.msk [vmem:[#allocation3 + $0xc0] sm:$0xff] %vm303, %v3922
      %3955 = vst.msk [vmem:[#allocation3 + $0xc8] sm:$0xff] %vm303, %v3923
      %3956 = vst.msk [vmem:[#allocation3 + $0xd0] sm:$0xff] %vm303, %v3924
      %3957 = vst.msk [vmem:[#allocation3 + $0xd8] sm:$0xff] %vm303, %v3925
      %3958 = vst.msk [vmem:[#allocation3 + $0xe0] sm:$0xff] %vm303, %v3926
      %3959 = vst.msk [vmem:[#allocation3 + $0xe8] sm:$0xff] %vm303, %v3927
      %3960 = vst.msk [vmem:[#allocation3 + $0xf0] sm:$0xff] %vm303, %v3928
      %3961 = vst.msk [vmem:[#allocation3 + $0xf8] sm:$0xff] %vm303, %v3929
      %v3962 = vld [vmem:[%s3055 + $0x2] sm:$0xff]
      %v3963 = vld [vmem:[%s3055 + $0xa] sm:$0xff]
      %v3964 = vld [vmem:[%s3055 + $0x1a] sm:$0xff]
      %v3965 = vld [vmem:[%s3055 + $0x22] sm:$0xff]
      %v3966 = vld [vmem:[%s3055 + $0x32] sm:$0xff]
      %v3967 = vld [vmem:[%s3055 + $0x3a] sm:$0xff]
      %v3968 = vld [vmem:[%s3055 + $0x4a] sm:$0xff]
      %v3969 = vld [vmem:[%s3055 + $0x52] sm:$0xff]
      %v3970 = vld [vmem:[%s3055 + $0x62] sm:$0xff]
      %v3971 = vld [vmem:[%s3055 + $0x6a] sm:$0xff]
      %v3972 = vld [vmem:[%s3055 + $0x7a] sm:$0xff]
      %v3973 = vld [vmem:[%s3055 + $0x82] sm:$0xff]
      %v3974 = vld [vmem:[%s3055 + $0x92] sm:$0xff]
      %v3975 = vld [vmem:[%s3055 + $0x9a] sm:$0xff]
      %v3976 = vld [vmem:[%s3055 + $0xaa] sm:$0xff]
      %v3977 = vld [vmem:[%s3055 + $0xb2] sm:$0xff]
      %v3978 = vld [vmem:[%s3055 + $0xc2] sm:$0xff]
      %v3979 = vld [vmem:[%s3055 + $0xca] sm:$0xff]
      %v3980 = vld [vmem:[%s3055 + $0xda] sm:$0xff]
      %v3981 = vld [vmem:[%s3055 + $0xe2] sm:$0xff]
      %v3982 = vld [vmem:[%s3055 + $0xf2] sm:$0xff]
      %v3983 = vld [vmem:[%s3055 + $0xfa] sm:$0xff]
      %v3984 = vld [vmem:[%s3055 + $0x10a] sm:$0xff]
      %v3985 = vld [vmem:[%s3055 + $0x112] sm:$0xff]
      %v3986 = vld [vmem:[%s3055 + $0x122] sm:$0xff]
      %v3987 = vld [vmem:[%s3055 + $0x12a] sm:$0xff]
      %v3988 = vld [vmem:[%s3055 + $0x13a] sm:$0xff]
      %v3989 = vld [vmem:[%s3055 + $0x142] sm:$0xff]
      %v3990 = vld [vmem:[%s3055 + $0x152] sm:$0xff]
      %v3991 = vld [vmem:[%s3055 + $0x15a] sm:$0xff]
      %v3992 = vld [vmem:[%s3055 + $0x16a] sm:$0xff]
      %v3993 = vld [vmem:[%s3055 + $0x172] sm:$0xff]
      %v3994 = vld [vmem:[%s1 + $0x20] sm:$0xf]
      %v3995 = vld [vmem:[#allocation3] sm:$0xff]
      %v3996 = vld [vmem:[#allocation3 + $0x8] sm:$0xff]
      %v3997 = vld [vmem:[#allocation3 + $0x10] sm:$0xff]
      %v3998 = vld [vmem:[#allocation3 + $0x18] sm:$0xff]
      %v3999 = vld [vmem:[#allocation3 + $0x20] sm:$0xff]
      %v4000 = vld [vmem:[#allocation3 + $0x28] sm:$0xff]
      %v4001 = vld [vmem:[#allocation3 + $0x30] sm:$0xff]
      %v4002 = vld [vmem:[#allocation3 + $0x38] sm:$0xff]
      %v4003 = vld [vmem:[#allocation3 + $0x40] sm:$0xff]
      %v4004 = vld [vmem:[#allocation3 + $0x48] sm:$0xff]
      %v4005 = vld [vmem:[#allocation3 + $0x50] sm:$0xff]
      %v4006 = vld [vmem:[#allocation3 + $0x58] sm:$0xff]
      %v4007 = vld [vmem:[#allocation3 + $0x60] sm:$0xff]
      %v4008 = vld [vmem:[#allocation3 + $0x68] sm:$0xff]
      %v4009 = vld [vmem:[#allocation3 + $0x70] sm:$0xff]
      %v4010 = vld [vmem:[#allocation3 + $0x78] sm:$0xff]
      %v4011 = vld [vmem:[#allocation3 + $0x80] sm:$0xff]
      %v4012 = vld [vmem:[#allocation3 + $0x88] sm:$0xff]
      %v4013 = vld [vmem:[#allocation3 + $0x90] sm:$0xff]
      %v4014 = vld [vmem:[#allocation3 + $0x98] sm:$0xff]
      %v4015 = vld [vmem:[#allocation3 + $0xa0] sm:$0xff]
      %v4016 = vld [vmem:[#allocation3 + $0xa8] sm:$0xff]
      %v4017 = vld [vmem:[#allocation3 + $0xb0] sm:$0xff]
      %v4018 = vld [vmem:[#allocation3 + $0xb8] sm:$0xff]
      %v4019 = vld [vmem:[#allocation3 + $0xc0] sm:$0xff]
      %v4020 = vld [vmem:[#allocation3 + $0xc8] sm:$0xff]
      %v4021 = vld [vmem:[#allocation3 + $0xd0] sm:$0xff]
      %v4022 = vld [vmem:[#allocation3 + $0xd8] sm:$0xff]
      %v4023 = vld [vmem:[#allocation3 + $0xe0] sm:$0xff]
      %v4024 = vld [vmem:[#allocation3 + $0xe8] sm:$0xff]
      %v4025 = vld [vmem:[#allocation3 + $0xf0] sm:$0xff]
      %v4026 = vld [vmem:[#allocation3 + $0xf8] sm:$0xff]
      %v4028 = vsel %vm182, %v3962, 0
      %v4031 = vsel %vm182, %v3963, 0
      %v4034 = vsel %vm182, %v3964, 0
      %v4037 = vsel %vm182, %v3965, 0
      %v4040 = vsel %vm182, %v3966, 0
      %v4043 = vsel %vm182, %v3967, 0
      %v4046 = vsel %vm182, %v3968, 0
      %v4049 = vsel %vm182, %v3969, 0
      %v4052 = vsel %vm182, %v3970, 0
      %v4055 = vsel %vm182, %v3971, 0
      %v4058 = vsel %vm182, %v3972, 0
      %v4061 = vsel %vm182, %v3973, 0
      %v4064 = vsel %vm182, %v3974, 0
      %v4067 = vsel %vm182, %v3975, 0
      %v4070 = vsel %vm182, %v3976, 0
      %v4073 = vsel %vm182, %v3977, 0
      %v4076 = vsel %vm182, %v3978, 0
      %v4079 = vsel %vm182, %v3979, 0
      %v4082 = vsel %vm182, %v3980, 0
      %v4085 = vsel %vm182, %v3981, 0
      %v4088 = vsel %vm182, %v3982, 0
      %v4091 = vsel %vm182, %v3983, 0
      %v4094 = vsel %vm182, %v3984, 0
      %v4097 = vsel %vm182, %v3985, 0
      %v4100 = vsel %vm182, %v3986, 0
      %v4103 = vsel %vm182, %v3987, 0
      %v4106 = vsel %vm182, %v3988, 0
      %v4109 = vsel %vm182, %v3989, 0
      %v4112 = vsel %vm182, %v3990, 0
      %v4115 = vsel %vm182, %v3991, 0
      %v4118 = vsel %vm182, %v3992, 0
      %v4121 = vsel %vm182, %v3993, 0
      %v4124 = vsel %vm497, %v3994, 0
      %4126 = vmatprep.subr.mxu0 0.0
      %4127 = vmatpush1.msra.mxu0 %v4124
      %4128 = vmatprep.subr.mxu0 0.0
      %4129 = vmatpush1.msra.mxu0 0.0
      %4130 = vmatprep.subr.mxu0 0.0
      %4131 = vmatpush1.msra.mxu0 0.0
      %4132 = vmatprep.subr.mxu0 0.0
      %4133 = vmatpush1.msra.mxu0 0.0
      %4134 = vmatprep.subr.mxu0 0.0
      %4135 = vmatpush1.msra.mxu0 0.0
      %4136 = vmatprep.subr.mxu0 0.0
      %4137 = vmatpush1.msra.mxu0 0.0
      %4138 = vmatprep.subr.mxu0 0.0
      %4139 = vmatpush1.msra.mxu0 0.0
      %4140 = vmatprep.subr.mxu0 0.0
      %4141 = vmatpush1.msra.mxu0 0.0
      %4142 = vmatprep.subr.mxu0 0.0
      %4143 = vmatpush1.msra.mxu0 0.0
      %4144 = vmatprep.subr.mxu0 0.0
      %4145 = vmatpush1.msra.mxu0 0.0
      %4146 = vmatprep.subr.mxu0 0.0
      %4147 = vmatpush1.msra.mxu0 0.0
      %4148 = vmatprep.subr.mxu0 0.0
      %4149 = vmatpush1.msra.mxu0 0.0
      %4150 = vmatprep.subr.mxu0 0.0
      %4151 = vmatpush1.msra.mxu0 0.0
      %4152 = vmatprep.subr.mxu0 0.0
      %4153 = vmatpush1.msra.mxu0 0.0
      %4154 = vmatprep.subr.mxu0 0.0
      %4155 = vmatpush1.msra.mxu0 0.0
      %4156 = vmatprep.subr.mxu0 0.0
      %4157 = vmatpush1.msra.mxu0 0.0
      %4158 = vmatprep.subr.mxu0 0.0
      %4159 = vmatpush1.msra.mxu0 0.0
      %4160 = vmatprep.subr.mxu0 0.0
      %4161 = vmatpush1.msra.mxu0 0.0
      %4162 = vmatprep.subr.mxu0 0.0
      %4163 = vmatpush1.msra.mxu0 0.0
      %4164 = vmatprep.subr.mxu0 0.0
      %4165 = vmatpush1.msra.mxu0 0.0
      %4166 = vmatprep.subr.mxu0 0.0
      %4167 = vmatpush1.msra.mxu0 0.0
      %4168 = vmatprep.subr.mxu0 0.0
      %4169 = vmatpush1.msra.mxu0 0.0
      %4170 = vmatprep.subr.mxu0 0.0
      %4171 = vmatpush1.msra.mxu0 0.0
      %4172 = vmatprep.subr.mxu0 0.0
      %4173 = vmatpush1.msra.mxu0 0.0
      %4174 = vmatprep.subr.mxu0 0.0
      %4175 = vmatpush1.msra.mxu0 0.0
      %4176 = vmatprep.subr.mxu0 0.0
      %4177 = vmatpush1.msra.mxu0 0.0
      %4178 = vmatprep.subr.mxu0 0.0
      %4179 = vmatpush1.msra.mxu0 0.0
      %4180 = vmatprep.subr.mxu0 0.0
      %4181 = vmatpush1.msra.mxu0 0.0
      %4182 = vmatprep.subr.mxu0 0.0
      %4183 = vmatpush1.msra.mxu0 0.0
      %4184 = vmatprep.subr.mxu0 0.0
      %4185 = vmatpush1.msra.mxu0 0.0
      %4186 = vmatprep.subr.mxu0 0.0
      %4187 = vmatpush1.msra.mxu0 0.0
      %4188 = vmatprep.subr.mxu0 0.0
      %4189 = vmatpush1.msra.mxu0 0.0
      %4190 = vmatprep.mubr.f32.mxu0 0.0
      %4191 = vmatmul.mubr.f32.gmra.mrb[0].mxu0 %v4028
      %v4192 = vpop.f32.mrb[0].mxu0
      %v4193 = vadd.f32 0.0, %v4192
      %v4194 = vpop.f32.mrb[0].mxu0
      %4195 = vmatprep.mubr.f32.mxu0 0.0
      %4196 = vmatmul.mubr.f32.gmra.mrb[0].mxu0 %v4031
      %v4197 = vpop.f32.mrb[0].mxu0
      %v4198 = vadd.f32 0.0, %v4197
      %v4199 = vpop.f32.mrb[0].mxu0
      %4200 = vmatprep.mubr.f32.mxu0 0.0
      %4201 = vmatmul.mubr.f32.gmra.mrb[0].mxu0 %v4034
      %v4202 = vpop.f32.mrb[0].mxu0
      %v4203 = vadd.f32 0.0, %v4202
      %v4204 = vpop.f32.mrb[0].mxu0
      %4205 = vmatprep.mubr.f32.mxu0 0.0
      %4206 = vmatmul.mubr.f32.gmra.mrb[0].mxu0 %v4037
      %v4207 = vpop.f32.mrb[0].mxu0
      %v4208 = vadd.f32 0.0, %v4207
      %v4209 = vpop.f32.mrb[0].mxu0
      %4210 = vmatprep.mubr.f32.mxu0 0.0
      %4211 = vmatmul.mubr.f32.gmra.mrb[0].mxu0 %v4040
      %v4212 = vpop.f32.mrb[0].mxu0
      %v4213 = vadd.f32 0.0, %v4212
      %v4214 = vpop.f32.mrb[0].mxu0
      %4215 = vmatprep.mubr.f32.mxu0 0.0
      %4216 = vmatmul.mubr.f32.gmra.mrb[0].mxu0 %v4043
      %v4217 = vpop.f32.mrb[0].mxu0
      %v4218 = vadd.f32 0.0, %v4217
      %v4219 = vpop.f32.mrb[0].mxu0
      %4220 = vmatprep.mubr.f32.mxu0 0.0
      %4221 = vmatmul.mubr.f32.gmra.mrb[0].mxu0 %v4046
      %v4222 = vpop.f32.mrb[0].mxu0
      %v4223 = vadd.f32 0.0, %v4222
      %v4224 = vpop.f32.mrb[0].mxu0
      %4225 = vmatprep.mubr.f32.mxu0 0.0
      %4226 = vmatmul.mubr.f32.gmra.mrb[0].mxu0 %v4049
      %v4227 = vpop.f32.mrb[0].mxu0
      %v4228 = vadd.f32 0.0, %v4227
      %v4229 = vpop.f32.mrb[0].mxu0
      %4230 = vmatprep.mubr.f32.mxu0 0.0
      %4231 = vmatmul.mubr.f32.gmra.mrb[0].mxu0 %v4052
      %v4232 = vpop.f32.mrb[0].mxu0
      %v4233 = vadd.f32 0.0, %v4232
      %v4234 = vpop.f32.mrb[0].mxu0
      %4235 = vmatprep.mubr.f32.mxu0 0.0
      %4236 = vmatmul.mubr.f32.gmra.mrb[0].mxu0 %v4055
      %v4237 = vpop.f32.mrb[0].mxu0
      %v4238 = vadd.f32 0.0, %v4237
      %v4239 = vpop.f32.mrb[0].mxu0
      %4240 = vmatprep.mubr.f32.mxu0 0.0
      %4241 = vmatmul.mubr.f32.gmra.mrb[0].mxu0 %v4058
      %v4242 = vpop.f32.mrb[0].mxu0
      %v4243 = vadd.f32 0.0, %v4242
      %v4244 = vpop.f32.mrb[0].mxu0
      %4245 = vmatprep.mubr.f32.mxu0 0.0
      %4246 = vmatmul.mubr.f32.gmra.mrb[0].mxu0 %v4061
      %v4247 = vpop.f32.mrb[0].mxu0
      %v4248 = vadd.f32 0.0, %v4247
      %v4249 = vpop.f32.mrb[0].mxu0
      %4250 = vmatprep.mubr.f32.mxu0 0.0
      %4251 = vmatmul.mubr.f32.gmra.mrb[0].mxu0 %v4064
      %v4252 = vpop.f32.mrb[0].mxu0
      %v4253 = vadd.f32 0.0, %v4252
      %v4254 = vpop.f32.mrb[0].mxu0
      %4255 = vmatprep.mubr.f32.mxu0 0.0
      %4256 = vmatmul.mubr.f32.gmra.mrb[0].mxu0 %v4067
      %v4257 = vpop.f32.mrb[0].mxu0
      %v4258 = vadd.f32 0.0, %v4257
      %v4259 = vpop.f32.mrb[0].mxu0
      %4260 = vmatprep.mubr.f32.mxu0 0.0
      %4261 = vmatmul.mubr.f32.gmra.mrb[0].mxu0 %v4070
      %v4262 = vpop.f32.mrb[0].mxu0
      %v4263 = vadd.f32 0.0, %v4262
      %v4264 = vpop.f32.mrb[0].mxu0
      %4265 = vmatprep.mubr.f32.mxu0 0.0
      %4266 = vmatmul.mubr.f32.gmra.mrb[0].mxu0 %v4073
      %v4267 = vpop.f32.mrb[0].mxu0
      %v4268 = vadd.f32 0.0, %v4267
      %v4269 = vpop.f32.mrb[0].mxu0
      %4270 = vmatprep.mubr.f32.mxu0 0.0
      %4271 = vmatmul.mubr.f32.gmra.mrb[0].mxu0 %v4076
      %v4272 = vpop.f32.mrb[0].mxu0
      %v4273 = vadd.f32 0.0, %v4272
      %v4274 = vpop.f32.mrb[0].mxu0
      %4275 = vmatprep.mubr.f32.mxu0 0.0
      %4276 = vmatmul.mubr.f32.gmra.mrb[0].mxu0 %v4079
      %v4277 = vpop.f32.mrb[0].mxu0
      %v4278 = vadd.f32 0.0, %v4277
      %v4279 = vpop.f32.mrb[0].mxu0
      %4280 = vmatprep.mubr.f32.mxu0 0.0
      %4281 = vmatmul.mubr.f32.gmra.mrb[0].mxu0 %v4082
      %v4282 = vpop.f32.mrb[0].mxu0
      %v4283 = vadd.f32 0.0, %v4282
      %v4284 = vpop.f32.mrb[0].mxu0
      %4285 = vmatprep.mubr.f32.mxu0 0.0
      %4286 = vmatmul.mubr.f32.gmra.mrb[0].mxu0 %v4085
      %v4287 = vpop.f32.mrb[0].mxu0
      %v4288 = vadd.f32 0.0, %v4287
      %v4289 = vpop.f32.mrb[0].mxu0
      %4290 = vmatprep.mubr.f32.mxu0 0.0
      %4291 = vmatmul.mubr.f32.gmra.mrb[0].mxu0 %v4088
      %v4292 = vpop.f32.mrb[0].mxu0
      %v4293 = vadd.f32 0.0, %v4292
      %v4294 = vpop.f32.mrb[0].mxu0
      %4295 = vmatprep.mubr.f32.mxu0 0.0
      %4296 = vmatmul.mubr.f32.gmra.mrb[0].mxu0 %v4091
      %v4297 = vpop.f32.mrb[0].mxu0
      %v4298 = vadd.f32 0.0, %v4297
      %v4299 = vpop.f32.mrb[0].mxu0
      %4300 = vmatprep.mubr.f32.mxu0 0.0
      %4301 = vmatmul.mubr.f32.gmra.mrb[0].mxu0 %v4094
      %v4302 = vpop.f32.mrb[0].mxu0
      %v4303 = vadd.f32 0.0, %v4302
      %v4304 = vpop.f32.mrb[0].mxu0
      %4305 = vmatprep.mubr.f32.mxu0 0.0
      %4306 = vmatmul.mubr.f32.gmra.mrb[0].mxu0 %v4097
      %v4307 = vpop.f32.mrb[0].mxu0
      %v4308 = vadd.f32 0.0, %v4307
      %v4309 = vpop.f32.mrb[0].mxu0
      %4310 = vmatprep.mubr.f32.mxu0 0.0
      %4311 = vmatmul.mubr.f32.gmra.mrb[0].mxu0 %v4100
      %v4312 = vpop.f32.mrb[0].mxu0
      %v4313 = vadd.f32 0.0, %v4312
      %v4314 = vpop.f32.mrb[0].mxu0
      %4315 = vmatprep.mubr.f32.mxu0 0.0
      %4316 = vmatmul.mubr.f32.gmra.mrb[0].mxu0 %v4103
      %v4317 = vpop.f32.mrb[0].mxu0
      %v4318 = vadd.f32 0.0, %v4317
      %v4319 = vpop.f32.mrb[0].mxu0
      %4320 = vmatprep.mubr.f32.mxu0 0.0
      %4321 = vmatmul.mubr.f32.gmra.mrb[0].mxu0 %v4106
      %v4322 = vpop.f32.mrb[0].mxu0
      %v4323 = vadd.f32 0.0, %v4322
      %v4324 = vpop.f32.mrb[0].mxu0
      %4325 = vmatprep.mubr.f32.mxu0 0.0
      %4326 = vmatmul.mubr.f32.gmra.mrb[0].mxu0 %v4109
      %v4327 = vpop.f32.mrb[0].mxu0
      %v4328 = vadd.f32 0.0, %v4327
      %v4329 = vpop.f32.mrb[0].mxu0
      %4330 = vmatprep.mubr.f32.mxu0 0.0
      %4331 = vmatmul.mubr.f32.gmra.mrb[0].mxu0 %v4112
      %v4332 = vpop.f32.mrb[0].mxu0
      %v4333 = vadd.f32 0.0, %v4332
      %v4334 = vpop.f32.mrb[0].mxu0
      %4335 = vmatprep.mubr.f32.mxu0 0.0
      %4336 = vmatmul.mubr.f32.gmra.mrb[0].mxu0 %v4115
      %v4337 = vpop.f32.mrb[0].mxu0
      %v4338 = vadd.f32 0.0, %v4337
      %v4339 = vpop.f32.mrb[0].mxu0
      %4340 = vmatprep.mubr.f32.mxu0 0.0
      %4341 = vmatmul.mubr.f32.gmra.mrb[0].mxu0 %v4118
      %v4342 = vpop.f32.mrb[0].mxu0
      %v4343 = vadd.f32 0.0, %v4342
      %v4344 = vpop.f32.mrb[0].mxu0
      %4345 = vmatprep.mubr.f32.mxu0 0.0
      %4346 = vmatmul.mubr.f32.gmra.mrb[0].mxu0 %v4121
      %v4347 = vpop.f32.mrb[0].mxu0
      %v4348 = vadd.f32 0.0, %v4347
      %v4349 = vpop.f32.mrb[0].mxu0
      %4350 = vdwg.mxu0
      %v4351 = vadd.f32 %v3995, %v4193
      %v4352 = vadd.f32 %v3996, %v4198
      %v4353 = vadd.f32 %v3997, %v4203
      %v4354 = vadd.f32 %v3998, %v4208
      %v4355 = vadd.f32 %v3999, %v4213
      %v4356 = vadd.f32 %v4000, %v4218
      %v4357 = vadd.f32 %v4001, %v4223
      %v4358 = vadd.f32 %v4002, %v4228
      %v4359 = vadd.f32 %v4003, %v4233
      %v4360 = vadd.f32 %v4004, %v4238
      %v4361 = vadd.f32 %v4005, %v4243
      %v4362 = vadd.f32 %v4006, %v4248
      %v4363 = vadd.f32 %v4007, %v4253
      %v4364 = vadd.f32 %v4008, %v4258
      %v4365 = vadd.f32 %v4009, %v4263
      %v4366 = vadd.f32 %v4010, %v4268
      %v4367 = vadd.f32 %v4011, %v4273
      %v4368 = vadd.f32 %v4012, %v4278
      %v4369 = vadd.f32 %v4013, %v4283
      %v4370 = vadd.f32 %v4014, %v4288
      %v4371 = vadd.f32 %v4015, %v4293
      %v4372 = vadd.f32 %v4016, %v4298
      %v4373 = vadd.f32 %v4017, %v4303
      %v4374 = vadd.f32 %v4018, %v4308
      %v4375 = vadd.f32 %v4019, %v4313
      %v4376 = vadd.f32 %v4020, %v4318
      %v4377 = vadd.f32 %v4021, %v4323
      %v4378 = vadd.f32 %v4022, %v4328
      %v4379 = vadd.f32 %v4023, %v4333
      %v4380 = vadd.f32 %v4024, %v4338
      %v4381 = vadd.f32 %v4025, %v4343
      %v4382 = vadd.f32 %v4026, %v4348
      %4383 = vst.msk [vmem:[#allocation3] sm:$0xff] %vm303, %v4351
      %4384 = vst.msk [vmem:[#allocation3 + $0x8] sm:$0xff] %vm303, %v4352
      %4385 = vst.msk [vmem:[#allocation3 + $0x10] sm:$0xff] %vm303, %v4353
      %4386 = vst.msk [vmem:[#allocation3 + $0x18] sm:$0xff] %vm303, %v4354
      %4387 = vst.msk [vmem:[#allocation3 + $0x20] sm:$0xff] %vm303, %v4355
      %4388 = vst.msk [vmem:[#allocation3 + $0x28] sm:$0xff] %vm303, %v4356
      %4389 = vst.msk [vmem:[#allocation3 + $0x30] sm:$0xff] %vm303, %v4357
      %4390 = vst.msk [vmem:[#allocation3 + $0x38] sm:$0xff] %vm303, %v4358
      %4391 = vst.msk [vmem:[#allocation3 + $0x40] sm:$0xff] %vm303, %v4359
      %4392 = vst.msk [vmem:[#allocation3 + $0x48] sm:$0xff] %vm303, %v4360
      %4393 = vst.msk [vmem:[#allocation3 + $0x50] sm:$0xff] %vm303, %v4361
      %4394 = vst.msk [vmem:[#allocation3 + $0x58] sm:$0xff] %vm303, %v4362
      %4395 = vst.msk [vmem:[#allocation3 + $0x60] sm:$0xff] %vm303, %v4363
      %4396 = vst.msk [vmem:[#allocation3 + $0x68] sm:$0xff] %vm303, %v4364
      %4397 = vst.msk [vmem:[#allocation3 + $0x70] sm:$0xff] %vm303, %v4365
      %4398 = vst.msk [vmem:[#allocation3 + $0x78] sm:$0xff] %vm303, %v4366
      %4399 = vst.msk [vmem:[#allocation3 + $0x80] sm:$0xff] %vm303, %v4367
      %4400 = vst.msk [vmem:[#allocation3 + $0x88] sm:$0xff] %vm303, %v4368
      %4401 = vst.msk [vmem:[#allocation3 + $0x90] sm:$0xff] %vm303, %v4369
      %4402 = vst.msk [vmem:[#allocation3 + $0x98] sm:$0xff] %vm303, %v4370
      %4403 = vst.msk [vmem:[#allocation3 + $0xa0] sm:$0xff] %vm303, %v4371
      %4404 = vst.msk [vmem:[#allocation3 + $0xa8] sm:$0xff] %vm303, %v4372
      %4405 = vst.msk [vmem:[#allocation3 + $0xb0] sm:$0xff] %vm303, %v4373
      %4406 = vst.msk [vmem:[#allocation3 + $0xb8] sm:$0xff] %vm303, %v4374
      %4407 = vst.msk [vmem:[#allocation3 + $0xc0] sm:$0xff] %vm303, %v4375
      %4408 = vst.msk [vmem:[#allocation3 + $0xc8] sm:$0xff] %vm303, %v4376
      %4409 = vst.msk [vmem:[#allocation3 + $0xd0] sm:$0xff] %vm303, %v4377
      %4410 = vst.msk [vmem:[#allocation3 + $0xd8] sm:$0xff] %vm303, %v4378
      %4411 = vst.msk [vmem:[#allocation3 + $0xe0] sm:$0xff] %vm303, %v4379
      %4412 = vst.msk [vmem:[#allocation3 + $0xe8] sm:$0xff] %vm303, %v4380
      %4413 = vst.msk [vmem:[#allocation3 + $0xf0] sm:$0xff] %vm303, %v4381
      %4414 = vst.msk [vmem:[#allocation3 + $0xf8] sm:$0xff] %vm303, %v4382
      %v4415 = vld [vmem:[#allocation3] sm:$0xff]
      %v4416 = vld [vmem:[#allocation3 + $0x8] sm:$0xff]
      %v4417 = vld [vmem:[#allocation3 + $0x10] sm:$0xff]
      %v4418 = vld [vmem:[#allocation3 + $0x18] sm:$0xff]
      %v4419 = vld [vmem:[#allocation3 + $0x20] sm:$0xff]
      %v4420 = vld [vmem:[#allocation3 + $0x28] sm:$0xff]
      %v4421 = vld [vmem:[#allocation3 + $0x30] sm:$0xff]
      %v4422 = vld [vmem:[#allocation3 + $0x38] sm:$0xff]
      %v4423 = vld [vmem:[#allocation3 + $0x40] sm:$0xff]
      %v4424 = vld [vmem:[#allocation3 + $0x48] sm:$0xff]
      %v4425 = vld [vmem:[#allocation3 + $0x50] sm:$0xff]
      %v4426 = vld [vmem:[#allocation3 + $0x58] sm:$0xff]
      %v4427 = vld [vmem:[#allocation3 + $0x60] sm:$0xff]
      %v4428 = vld [vmem:[#allocation3 + $0x68] sm:$0xff]
      %v4429 = vld [vmem:[#allocation3 + $0x70] sm:$0xff]
      %v4430 = vld [vmem:[#allocation3 + $0x78] sm:$0xff]
      %v4431 = vld [vmem:[#allocation3 + $0x80] sm:$0xff]
      %v4432 = vld [vmem:[#allocation3 + $0x88] sm:$0xff]
      %v4433 = vld [vmem:[#allocation3 + $0x90] sm:$0xff]
      %v4434 = vld [vmem:[#allocation3 + $0x98] sm:$0xff]
      %v4435 = vld [vmem:[#allocation3 + $0xa0] sm:$0xff]
      %v4436 = vld [vmem:[#allocation3 + $0xa8] sm:$0xff]
      %v4437 = vld [vmem:[#allocation3 + $0xb0] sm:$0xff]
      %v4438 = vld [vmem:[#allocation3 + $0xb8] sm:$0xff]
      %v4439 = vld [vmem:[#allocation3 + $0xc0] sm:$0xff]
      %v4440 = vld [vmem:[#allocation3 + $0xc8] sm:$0xff]
      %v4441 = vld [vmem:[#allocation3 + $0xd0] sm:$0xff]
      %v4442 = vld [vmem:[#allocation3 + $0xd8] sm:$0xff]
      %v4443 = vld [vmem:[#allocation3 + $0xe0] sm:$0xff]
      %v4444 = vld [vmem:[#allocation3 + $0xe8] sm:$0xff]
      %v4445 = vld [vmem:[#allocation3 + $0xf0] sm:$0xff]
      %v4446 = vld [vmem:[#allocation3 + $0xf8] sm:$0xff]
      %4447 = vst.msk [vmem:[%s177] sm:$0xff] %vm303, %v4415
      %4448 = vst.msk [vmem:[%s177 + $0x8] sm:$0xff] %vm303, %v4416
      %4449 = vst.msk [vmem:[%s177 + $0x10] sm:$0xff] %vm303, %v4417
      %4450 = vst.msk [vmem:[%s177 + $0x18] sm:$0xff] %vm303, %v4418
      %4451 = vst.msk [vmem:[%s177 + $0x20] sm:$0xff] %vm303, %v4419
      %4452 = vst.msk [vmem:[%s177 + $0x28] sm:$0xff] %vm303, %v4420
      %4453 = vst.msk [vmem:[%s177 + $0x30] sm:$0xff] %vm303, %v4421
      %4454 = vst.msk [vmem:[%s177 + $0x38] sm:$0xff] %vm303, %v4422
      %4455 = vst.msk [vmem:[%s177 + $0x40] sm:$0xff] %vm303, %v4423
      %4456 = vst.msk [vmem:[%s177 + $0x48] sm:$0xff] %vm303, %v4424
      %4457 = vst.msk [vmem:[%s177 + $0x50] sm:$0xff] %vm303, %v4425
      %4458 = vst.msk [vmem:[%s177 + $0x58] sm:$0xff] %vm303, %v4426
      %4459 = vst.msk [vmem:[%s177 + $0x60] sm:$0xff] %vm303, %v4427
      %4460 = vst.msk [vmem:[%s177 + $0x68] sm:$0xff] %vm303, %v4428
      %4461 = vst.msk [vmem:[%s177 + $0x70] sm:$0xff] %vm303, %v4429
      %4462 = vst.msk [vmem:[%s177 + $0x78] sm:$0xff] %vm303, %v4430
      %4463 = vst.msk [vmem:[%s177 + $0x80] sm:$0xff] %vm303, %v4431
      %4464 = vst.msk [vmem:[%s177 + $0x88] sm:$0xff] %vm303, %v4432
      %4465 = vst.msk [vmem:[%s177 + $0x90] sm:$0xff] %vm303, %v4433
      %4466 = vst.msk [vmem:[%s177 + $0x98] sm:$0xff] %vm303, %v4434
      %4467 = vst.msk [vmem:[%s177 + $0xa0] sm:$0xff] %vm303, %v4435
      %4468 = vst.msk [vmem:[%s177 + $0xa8] sm:$0xff] %vm303, %v4436
      %4469 = vst.msk [vmem:[%s177 + $0xb0] sm:$0xff] %vm303, %v4437
      %4470 = vst.msk [vmem:[%s177 + $0xb8] sm:$0xff] %vm303, %v4438
      %4471 = vst.msk [vmem:[%s177 + $0xc0] sm:$0xff] %vm303, %v4439
      %4472 = vst.msk [vmem:[%s177 + $0xc8] sm:$0xff] %vm303, %v4440
      %4473 = vst.msk [vmem:[%s177 + $0xd0] sm:$0xff] %vm303, %v4441
      %4474 = vst.msk [vmem:[%s177 + $0xd8] sm:$0xff] %vm303, %v4442
      %4475 = vst.msk [vmem:[%s177 + $0xe0] sm:$0xff] %vm303, %v4443
      %4476 = vst.msk [vmem:[%s177 + $0xe8] sm:$0xff] %vm303, %v4444
      %4477 = vst.msk [vmem:[%s177 + $0xf0] sm:$0xff] %vm303, %v4445
      %4478 = vst.msk [vmem:[%s177 + $0xf8] sm:$0xff] %vm303, %v4446
      %v4479 = vsel %vm303, %v4415, 0.0
      %v4480 = vsel %vm303, %v4416, 0.0
      %v4481 = vadd.f32 %v4479, %v4480
      %v4482 = vsel %vm303, %v4417, 0.0
      %v4483 = vadd.f32 %v4481, %v4482
      %v4484 = vsel %vm303, %v4418, 0.0
      %v4485 = vadd.f32 %v4483, %v4484
      %v4486 = vsel %vm303, %v4419, 0.0
      %v4487 = vadd.f32 %v4485, %v4486
      %v4488 = vsel %vm303, %v4420, 0.0
      %v4489 = vadd.f32 %v4487, %v4488
      %v4490 = vsel %vm303, %v4421, 0.0
      %v4491 = vadd.f32 %v4489, %v4490
      %v4492 = vsel %vm303, %v4422, 0.0
      %v4493 = vadd.f32 %v4491, %v4492
      %v4494 = vsel %vm303, %v4423, 0.0
      %v4495 = vadd.f32 %v4493, %v4494
      %v4496 = vsel %vm303, %v4424, 0.0
      %v4497 = vadd.f32 %v4495, %v4496
      %v4498 = vsel %vm303, %v4425, 0.0
      %v4499 = vadd.f32 %v4497, %v4498
      %v4500 = vsel %vm303, %v4426, 0.0
      %v4501 = vadd.f32 %v4499, %v4500
      %v4502 = vsel %vm303, %v4427, 0.0
      %v4503 = vadd.f32 %v4501, %v4502
      %v4504 = vsel %vm303, %v4428, 0.0
      %v4505 = vadd.f32 %v4503, %v4504
      %v4506 = vsel %vm303, %v4429, 0.0
      %v4507 = vadd.f32 %v4505, %v4506
      %v4508 = vsel %vm303, %v4430, 0.0
      %v4509 = vadd.f32 %v4507, %v4508
      %v4510 = vsel %vm303, %v4431, 0.0
      %v4511 = vadd.f32 %v4509, %v4510
      %v4512 = vsel %vm303, %v4432, 0.0
      %v4513 = vadd.f32 %v4511, %v4512
      %v4514 = vsel %vm303, %v4433, 0.0
      %v4515 = vadd.f32 %v4513, %v4514
      %v4516 = vsel %vm303, %v4434, 0.0
      %v4517 = vadd.f32 %v4515, %v4516
      %v4518 = vsel %vm303, %v4435, 0.0
      %v4519 = vadd.f32 %v4517, %v4518
      %v4520 = vsel %vm303, %v4436, 0.0
      %v4521 = vadd.f32 %v4519, %v4520
      %v4522 = vsel %vm303, %v4437, 0.0
      %v4523 = vadd.f32 %v4521, %v4522
      %v4524 = vsel %vm303, %v4438, 0.0
      %v4525 = vadd.f32 %v4523, %v4524
      %v4526 = vsel %vm303, %v4439, 0.0
      %v4527 = vadd.f32 %v4525, %v4526
      %v4528 = vsel %vm303, %v4440, 0.0
      %v4529 = vadd.f32 %v4527, %v4528
      %v4530 = vsel %vm303, %v4441, 0.0
      %v4531 = vadd.f32 %v4529, %v4530
      %v4532 = vsel %vm303, %v4442, 0.0
      %v4533 = vadd.f32 %v4531, %v4532
      %v4534 = vsel %vm303, %v4443, 0.0
      %v4535 = vadd.f32 %v4533, %v4534
      %v4536 = vsel %vm303, %v4444, 0.0
      %v4537 = vadd.f32 %v4535, %v4536
      %v4538 = vsel %vm303, %v4445, 0.0
      %v4539 = vadd.f32 %v4537, %v4538
      %v4540 = vsel %vm303, %v4446, 0.0
      %v4541 = vadd.f32 %v4539, %v4540
      %v4542 = vrot.slane %v4541, 4
      %v4543 = vadd.f32 %v4541, %v4542
      %v4544 = vrot.slane %v4543, 2
      %v4545 = vadd.f32 %v4543, %v4544
      %v4546 = vrot.slane %v4545, 1
      %v4547 = vadd.f32 %v4545, %v4546
      %v4548 = vmul.f32 %v4415, %v4415
      %v4549 = vmul.f32 %v4416, %v4416
      %v4550 = vmul.f32 %v4417, %v4417
      %v4551 = vmul.f32 %v4418, %v4418
      %v4552 = vmul.f32 %v4419, %v4419
      %v4553 = vmul.f32 %v4420, %v4420
      %v4554 = vmul.f32 %v4421, %v4421
      %v4555 = vmul.f32 %v4422, %v4422
      %v4556 = vmul.f32 %v4423, %v4423
      %v4557 = vmul.f32 %v4424, %v4424
      %v4558 = vmul.f32 %v4425, %v4425
      %v4559 = vmul.f32 %v4426, %v4426
      %v4560 = vmul.f32 %v4427, %v4427
      %v4561 = vmul.f32 %v4428, %v4428
      %v4562 = vmul.f32 %v4429, %v4429
      %v4563 = vmul.f32 %v4430, %v4430
      %v4564 = vmul.f32 %v4431, %v4431
      %v4565 = vmul.f32 %v4432, %v4432
      %v4566 = vmul.f32 %v4433, %v4433
      %v4567 = vmul.f32 %v4434, %v4434
      %v4568 = vmul.f32 %v4435, %v4435
      %v4569 = vmul.f32 %v4436, %v4436
      %v4570 = vmul.f32 %v4437, %v4437
      %v4571 = vmul.f32 %v4438, %v4438
      %v4572 = vmul.f32 %v4439, %v4439
      %v4573 = vmul.f32 %v4440, %v4440
      %v4574 = vmul.f32 %v4441, %v4441
      %v4575 = vmul.f32 %v4442, %v4442
      %v4576 = vmul.f32 %v4443, %v4443
      %v4577 = vmul.f32 %v4444, %v4444
      %v4578 = vmul.f32 %v4445, %v4445
      %v4579 = vmul.f32 %v4446, %v4446
      %v4580 = vsel %vm303, %v4548, 0.0
      %v4581 = vsel %vm303, %v4549, 0.0
      %v4582 = vadd.f32 %v4580, %v4581
      %v4583 = vsel %vm303, %v4550, 0.0
      %v4584 = vadd.f32 %v4582, %v4583
      %v4585 = vsel %vm303, %v4551, 0.0
      %v4586 = vadd.f32 %v4584, %v4585
      %v4587 = vsel %vm303, %v4552, 0.0
      %v4588 = vadd.f32 %v4586, %v4587
      %v4589 = vsel %vm303, %v4553, 0.0
      %v4590 = vadd.f32 %v4588, %v4589
      %v4591 = vsel %vm303, %v4554, 0.0
      %v4592 = vadd.f32 %v4590, %v4591
      %v4593 = vsel %vm303, %v4555, 0.0
      %v4594 = vadd.f32 %v4592, %v4593
      %v4595 = vsel %vm303, %v4556, 0.0
      %v4596 = vadd.f32 %v4594, %v4595
      %v4597 = vsel %vm303, %v4557, 0.0
      %v4598 = vadd.f32 %v4596, %v4597
      %v4599 = vsel %vm303, %v4558, 0.0
      %v4600 = vadd.f32 %v4598, %v4599
      %v4601 = vsel %vm303, %v4559, 0.0
      %v4602 = vadd.f32 %v4600, %v4601
      %v4603 = vsel %vm303, %v4560, 0.0
      %v4604 = vadd.f32 %v4602, %v4603
      %v4605 = vsel %vm303, %v4561, 0.0
      %v4606 = vadd.f32 %v4604, %v4605
      %v4607 = vsel %vm303, %v4562, 0.0
      %v4608 = vadd.f32 %v4606, %v4607
      %v4609 = vsel %vm303, %v4563, 0.0
      %v4610 = vadd.f32 %v4608, %v4609
      %v4611 = vsel %vm303, %v4564, 0.0
      %v4612 = vadd.f32 %v4610, %v4611
      %v4613 = vsel %vm303, %v4565, 0.0
      %v4614 = vadd.f32 %v4612, %v4613
      %v4615 = vsel %vm303, %v4566, 0.0
      %v4616 = vadd.f32 %v4614, %v4615
      %v4617 = vsel %vm303, %v4567, 0.0
      %v4618 = vadd.f32 %v4616, %v4617
      %v4619 = vsel %vm303, %v4568, 0.0
      %v4620 = vadd.f32 %v4618, %v4619
      %v4621 = vsel %vm303, %v4569, 0.0
      %v4622 = vadd.f32 %v4620, %v4621
      %v4623 = vsel %vm303, %v4570, 0.0
      %v4624 = vadd.f32 %v4622, %v4623
      %v4625 = vsel %vm303, %v4571, 0.0
      %v4626 = vadd.f32 %v4624, %v4625
      %v4627 = vsel %vm303, %v4572, 0.0
      %v4628 = vadd.f32 %v4626, %v4627
      %v4629 = vsel %vm303, %v4573, 0.0
      %v4630 = vadd.f32 %v4628, %v4629
      %v4631 = vsel %vm303, %v4574, 0.0
      %v4632 = vadd.f32 %v4630, %v4631
      %v4633 = vsel %vm303, %v4575, 0.0
      %v4634 = vadd.f32 %v4632, %v4633
      %v4635 = vsel %vm303, %v4576, 0.0
      %v4636 = vadd.f32 %v4634, %v4635
      %v4637 = vsel %vm303, %v4577, 0.0
      %v4638 = vadd.f32 %v4636, %v4637
      %v4639 = vsel %vm303, %v4578, 0.0
      %v4640 = vadd.f32 %v4638, %v4639
      %v4641 = vsel %vm303, %v4579, 0.0
      %v4642 = vadd.f32 %v4640, %v4641
      %v4643 = vrot.slane %v4642, 4
      %v4644 = vadd.f32 %v4642, %v4643
      %v4645 = vrot.slane %v4644, 2
      %v4646 = vadd.f32 %v4644, %v4645
      %v4647 = vrot.slane %v4646, 1
      %v4648 = vadd.f32 %v4646, %v4647
      %vm4649 = vcmask 1040384
      %v4650 = vsel %vm4649, %v4547, %v4648
      %vm4651 = vcmask 58368
      %4652 = vst.msk [vmem:[%s181] sm:$0x3] %vm4651, %v4650
      %p4653 = scmp.lt.s32.totalorder %s15, 1
      %s4654 = scalar_select %p4653, %s15, 1
      %s4655 = smul.addr %s4654, 32
      %s4656 = smul.addr %s4655, 8
      %s4657 = scalar_lea.vmem %s2, %s4656
      %p4658 = scmp.lt.s32.totalorder %s15, 1
      %s4659 = scalar_select %p4658, %s15, 1
      %s4660 = smul.addr %s4659, 2
      %s4661 = scalar_lea.vmem %s3, %s4660
      // Predicated region
      $region29: #{double_conv.3} parent=27 // pred_check
        %p4662 = pneg %p80
      $region30: #{double_conv.3} parent=27 // pred_check_branch
        %4664 = sbr.rel (%p4662) target = $region32
      $region31: #{double_conv.3} parent=27 // pred_region
        _
      $region32: #{double_conv.3} parent=27 // pred_fallthru
        _
      // Predicated region
      $region33: #{double_conv.3} parent=27 // pred_check
        %p4665 = pneg %p106
      $region34: #{double_conv.3} parent=27 // pred_check_branch
        %4667 = sbr.rel (%p4665) target = $region36
      $region35: #{double_conv.3} parent=27 // pred_region
        _
      $region36: #{double_conv.3} parent=27 // pred_fallthru
        _
    $region28: #{double_conv.3} parent=5 // pred_fallthru
      _
    %p4668 = scmp.le.s32.totalorder 2, %s10
    // Predicated region
    $region37: #{double_conv.3} parent=5 // pred_check
      %p4669 = pneg %p4668
    $region38: #{double_conv.3} parent=5 // pred_check_branch
      %4671 = sbr.rel (%p4669) target = $region40
    $region39: #{double_conv.3} parent=5 // pred_region
      %s4672 = ssub.s32 %s10, 2
      // Predicated region
      $region41: #{double_conv.3} parent=39 // pred_check
        %p4673 = pneg %p86
      $region42: #{double_conv.3} parent=39 // pred_check_branch
        %4675 = sbr.rel (%p4673) target = $region44
      $region43: #{double_conv.3} parent=39 // pred_region
        %p4676 = scmp.lt.s32.totalorder %s16, 1
        %s4677 = scalar_select %p4676, %s16, 1
        %s4678 = smul.addr %s4677, 32
        %s4679 = smul.addr %s4678, 8
        %s4680 = scalar_lea.vmem %s2, %s4679
      $region44: #{double_conv.3} parent=39 // pred_fallthru
        _
      // Predicated region
      $region45: #{double_conv.3} parent=39 // pred_check
        %p4681 = pneg %p112
      $region46: #{double_conv.3} parent=39 // pred_check_branch
        %4683 = sbr.rel (%p4681) target = $region48
      $region47: #{double_conv.3} parent=39 // pred_region
        %p4684 = scmp.lt.s32.totalorder %s16, 1
        %s4685 = scalar_select %p4684, %s16, 1
        %s4686 = smul.addr %s4685, 2
        %s4687 = scalar_lea.vmem %s3, %s4686
      $region48: #{double_conv.3} parent=39 // pred_fallthru
        _
    $region40: #{double_conv.3} parent=5 // pred_fallthru
      _
  $region6: #{double_conv.3} parent=0 // loop_footer
    %s14 = sadd.s32 1, %s10
  $region7: #{double_conv.3} parent=0 // loop_footer_branch
    %9 = sbr.rel target = $region3
  $region8: #{double_conv.3} parent=0 // loop_exit
    _

// kernel: double_conv.4
$region0: #{double_conv.4}
  #allocation0 [shape = 'u32[]', space=smem, size = 0x4, offset = 0x4, fixed_abs, tag = 'smem constant byte address 0x4 - core index']
  #allocation1 [shape = 'u32[144,128]{1,0:T(1,128)}', space=vmem, size = 0x12000, scoped, tag = 'internal scratch']
  #allocation2 [shape = 'f32[18,18,8]{2,1,0:T(8,128)}', space=vmem, size = 0x36000, scoped, tag = 'scratch operand']
  #allocation3 [shape = 'f32[256,8]{1,0:T(8,128)}', space=vmem, size = 0x20000, scoped, tag = 'scratch operand']
  %s0 = inlined_call_operand.vmem [shape: f32[2,16,16,8], index: 0, kind: input, shape index: {}]
  %s1 = inlined_call_operand.vmem [shape: f32[1,8], index: 1, kind: input, shape index: {}]
  %s2 = inlined_call_operand.vmem [shape: f32[1,8], index: 2, kind: input, shape index: {}]
  %s3 = inlined_call_operand.vmem [shape: f32[72,8], index: 3, kind: input, shape index: {}]
  %s4 = inlined_call_operand.vmem [shape: f32[2,16,16,8], index: 4, kind: output, shape index: {0}]
  %s5 = inlined_call_operand.vmem [shape: f32[2,2,8], index: 5, kind: output, shape index: {1}]
  %6 = xla_tuple %s4, %s5
  %s7 = sld [smem:[#allocation0]]
  $region57: #{double_conv.4} parent=0
    _
  %s9 = ssub.s32 1, %s7
  %s10 = scalar_select 0, %s9, %s7
  loop: start=0, step=1, limit=4
  $region2: #{double_conv.4} parent=0 // loop_pre_header
    _
  $region3: #{double_conv.4} parent=0 // loop_header
    %s12 = sphi 0, %s16
    %p13 = scmp.ge.s32.totalorder %s12, 4
    %s22 = sphi 0, %s24
    %s25 = sphi 0, %s22
    %s26 = sphi 0, %s25
    %s42 = sphi 0, %s26
    %s46 = sphi 0, %s46
    %s48 = sphi 0, %s46
    %s49 = sphi 0, %s48
    %s63 = sphi 0, %s49
    %s67 = sphi 0, %s67
    %s69 = sphi 0, %s67
    %s70 = sphi 0, %s69
    %s84 = sphi 0, %s70
    %s88 = sphi 0, %s88
    %s90 = sphi 0, %s88
    %s91 = sphi 0, %s90
    %s105 = sphi 0, %s91
    %s111 = sphi 0, %s113
    %s114 = sphi 0, %s111
    %s115 = sphi 0, %s114
    %s131 = sphi 0, %s115
    %s137 = sphi 0, %s139
    %s140 = sphi 0, %s137
    %s141 = sphi 0, %s140
    %s157 = sphi 0, %s141
  $region4: #{double_conv.4} parent=0 // loop_header_branch
    %15 = sbr.rel (%p13) target = $region8
  $region5: #{double_conv.4} parent=0 // loop_body
    %s17 = ssub.s32 %s12, 1
    %s18 = ssub.s32 %s12, 2
    %s19 = sadd.s32 %s12, 1
    %s20 = ssub.s32 %s12, %s19
    %p21 = scmp.eq.s32.totalorder %s20, 0
    %s23 = sadd.s32 %s22, 1
    %s24 = scalar_select %p21, %s22, %s23
    %p27 = pneg %p21
    %p28 = scmp.eq.s32.totalorder %s12, 1
    %p29 = por %p27, %p28
    %p30 = scmp.ne.s32.totalorder %s22, %s25
    %p31 = scmp.eq.s32.totalorder %s12, 0
    %p32 = por %p30, %p31
    %p33 = scmp.ne.s32.totalorder %s22, %s25
    %p34 = scmp.eq.s32.totalorder %s17, 1
    %p35 = por %p33, %p34
    %p36 = scmp.ne.s32.totalorder %s25, %s26
    %p37 = scmp.eq.s32.totalorder %s17, 0
    %p38 = por %p36, %p37
    %p39 = scmp.ne.s32.totalorder %s25, %s26
    %p40 = scmp.eq.s32.totalorder %s18, 1
    %p41 = por %p39, %p40
    %p43 = scmp.ne.s32.totalorder %s26, %s42
    %p44 = scmp.eq.s32.totalorder %s18, 0
    %p45 = por %p43, %p44
    %s47 = sadd.s32 %s46, 1
    %p50 = scmp.eq.s32.totalorder %s12, 1
    %p51 = scmp.ne.s32.totalorder %s46, %s48
    %p52 = scmp.eq.s32.totalorder %s12, 0
    %p53 = por %p51, %p52
    %p54 = scmp.ne.s32.totalorder %s46, %s48
    %p55 = scmp.eq.s32.totalorder %s17, 1
    %p56 = por %p54, %p55
    %p57 = scmp.ne.s32.totalorder %s48, %s49
    %p58 = scmp.eq.s32.totalorder %s17, 0
    %p59 = por %p57, %p58
    %p60 = scmp.ne.s32.totalorder %s48, %s49
    %p61 = scmp.eq.s32.totalorder %s18, 1
    %p62 = por %p60, %p61
    %p64 = scmp.ne.s32.totalorder %s49, %s63
    %p65 = scmp.eq.s32.totalorder %s18, 0
    %p66 = por %p64, %p65
    %s68 = sadd.s32 %s67, 1
    %p71 = scmp.eq.s32.totalorder %s12, 1
    %p72 = scmp.ne.s32.totalorder %s67, %s69
    %p73 = scmp.eq.s32.totalorder %s12, 0
    %p74 = por %p72, %p73
    %p75 = scmp.ne.s32.totalorder %s67, %s69
    %p76 = scmp.eq.s32.totalorder %s17, 1
    %p77 = por %p75, %p76
    %p78 = scmp.ne.s32.totalorder %s69, %s70
    %p79 = scmp.eq.s32.totalorder %s17, 0
    %p80 = por %p78, %p79
    %p81 = scmp.ne.s32.totalorder %s69, %s70
    %p82 = scmp.eq.s32.totalorder %s18, 1
    %p83 = por %p81, %p82
    %p85 = scmp.ne.s32.totalorder %s70, %s84
    %p86 = scmp.eq.s32.totalorder %s18, 0
    %p87 = por %p85, %p86
    %s89 = sadd.s32 %s88, 1
    %p92 = scmp.eq.s32.totalorder %s12, 1
    %p93 = scmp.ne.s32.totalorder %s88, %s90
    %p94 = scmp.eq.s32.totalorder %s12, 0
    %p95 = por %p93, %p94
    %p96 = scmp.ne.s32.totalorder %s88, %s90
    %p97 = scmp.eq.s32.totalorder %s17, 1
    %p98 = por %p96, %p97
    %p99 = scmp.ne.s32.totalorder %s90, %s91
    %p100 = scmp.eq.s32.totalorder %s17, 0
    %p101 = por %p99, %p100
    %p102 = scmp.ne.s32.totalorder %s90, %s91
    %p103 = scmp.eq.s32.totalorder %s18, 1
    %p104 = por %p102, %p103
    %p106 = scmp.ne.s32.totalorder %s91, %s105
    %p107 = scmp.eq.s32.totalorder %s18, 0
    %p108 = por %p106, %p107
    %s109 = ssub.s32 %s12, %s19
    %p110 = scmp.eq.s32.totalorder %s109, 0
    %s112 = sadd.s32 %s111, 1
    %s113 = scalar_select %p110, %s111, %s112
    %p116 = pneg %p110
    %p117 = scmp.eq.s32.totalorder %s12, 1
    %p118 = por %p116, %p117
    %p119 = scmp.ne.s32.totalorder %s111, %s114
    %p120 = scmp.eq.s32.totalorder %s12, 0
    %p121 = por %p119, %p120
    %p122 = scmp.ne.s32.totalorder %s111, %s114
    %p123 = scmp.eq.s32.totalorder %s17, 1
    %p124 = por %p122, %p123
    %p125 = scmp.ne.s32.totalorder %s114, %s115
    %p126 = scmp.eq.s32.totalorder %s17, 0
    %p127 = por %p125, %p126
    %p128 = scmp.ne.s32.totalorder %s114, %s115
    %p129 = scmp.eq.s32.totalorder %s18, 1
    %p130 = por %p128, %p129
    %p132 = scmp.ne.s32.totalorder %s115, %s131
    %p133 = scmp.eq.s32.totalorder %s18, 0
    %p134 = por %p132, %p133
    %s135 = ssub.s32 %s12, %s19
    %p136 = scmp.eq.s32.totalorder %s135, 0
    %s138 = sadd.s32 %s137, 1
    %s139 = scalar_select %p136, %s137, %s138
    %p142 = pneg %p136
    %p143 = scmp.eq.s32.totalorder %s12, 1
    %p144 = por %p142, %p143
    %p145 = scmp.ne.s32.totalorder %s137, %s140
    %p146 = scmp.eq.s32.totalorder %s12, 0
    %p147 = por %p145, %p146
    %p148 = scmp.ne.s32.totalorder %s137, %s140
    %p149 = scmp.eq.s32.totalorder %s17, 1
    %p150 = por %p148, %p149
    %p151 = scmp.ne.s32.totalorder %s140, %s141
    %p152 = scmp.eq.s32.totalorder %s17, 0
    %p153 = por %p151, %p152
    %p154 = scmp.ne.s32.totalorder %s140, %s141
    %p155 = scmp.eq.s32.totalorder %s18, 1
    %p156 = por %p154, %p155
    %p158 = scmp.ne.s32.totalorder %s141, %s157
    %p159 = scmp.eq.s32.totalorder %s18, 0
    %p160 = por %p158, %p159
    %p161 = scmp.le.s32.totalorder 1, %s12
    %p162 = scmp.lt.s32.totalorder %s12, 3
    %p163 = pnand %p161, %p162
    %p164 = pneg %p163
    // Predicated region
    $region9: #{double_conv.4} parent=5 // pred_check
      _
    $region10: #{double_conv.4} parent=5 // pred_check_branch
      %166 = sbr.rel (%p163) target = $region12
    $region11: #{double_conv.4} parent=5 // pred_region
      %s167 = ssub.s32 %s12, 1
      // Predicated region
      $region13: #{double_conv.4} parent=11 // pred_check
        %p168 = pneg %p59
      $region14: #{double_conv.4} parent=11 // pred_check_branch
        %170 = sbr.rel (%p168) target = $region16
      $region15: #{double_conv.4} parent=11 // pred_region
        _
      $region16: #{double_conv.4} parent=11 // pred_fallthru
        _
      // Predicated region
      $region17: #{double_conv.4} parent=11 // pred_check
        %p171 = pneg %p80
      $region18: #{double_conv.4} parent=11 // pred_check_branch
        %173 = sbr.rel (%p171) target = $region20
      $region19: #{double_conv.4} parent=11 // pred_region
        _
      $region20: #{double_conv.4} parent=11 // pred_fallthru
        _
      // Predicated region
      $region21: #{double_conv.4} parent=11 // pred_check
        %p174 = pneg %p101
      $region22: #{double_conv.4} parent=11 // pred_check_branch
        %176 = sbr.rel (%p174) target = $region24
      $region23: #{double_conv.4} parent=11 // pred_region
        _
      $region24: #{double_conv.4} parent=11 // pred_fallthru
        _
    $region12: #{double_conv.4} parent=5 // pred_fallthru
      _
    %p177 = scmp.lt.s32.totalorder %s12, 2
    // Predicated region
    $region25: #{double_conv.4} parent=5 // pred_check
      %p178 = pneg %p177
    $region26: #{double_conv.4} parent=5 // pred_check_branch
      %180 = sbr.rel (%p178) target = $region28
    $region27: #{double_conv.4} parent=5 // pred_region
      // Predicated region
      $region29: #{double_conv.4} parent=27 // pred_check
        %p181 = pneg %p32
      $region30: #{double_conv.4} parent=27 // pred_check_branch
        %183 = sbr.rel (%p181) target = $region32
      $region31: #{double_conv.4} parent=27 // pred_region
        %p184 = scmp.lt.s32.totalorder %s12, 1
        %s185 = scalar_select %p184, %s12, 1
        %s186 = smul.addr %s185, 32
        %s187 = smul.addr %s186, 8
        %s188 = scalar_lea.vmem %s0, %s187
      $region32: #{double_conv.4} parent=27 // pred_fallthru
        _
    $region28: #{double_conv.4} parent=5 // pred_fallthru
      _
    %p189 = scmp.le.s32.totalorder 1, %s12
    %p190 = scmp.lt.s32.totalorder %s12, 3
    %p191 = pnand %p189, %p190
    %p192 = pneg %p191
    // Predicated region
    $region33: #{double_conv.4} parent=5 // pred_check
      _
    $region34: #{double_conv.4} parent=5 // pred_check_branch
      %194 = sbr.rel (%p191) target = $region36
    $region35: #{double_conv.4} parent=5 // pred_region
      %s195 = ssub.s32 %s12, 1
      %p196 = scmp.lt.s32.totalorder %s17, 1
      %s197 = scalar_select %p196, %s17, 1
      %s198 = smul.addr %s197, 32
      %s199 = smul.addr %s198, 8
      %s200 = scalar_lea.vmem %s0, %s199
      %p201 = pneg %p38
      %p202 = pneg %p35
      %p203 = pneg %p59
      %p204 = pneg %p56
      %p205 = pneg %p80
      %p206 = pneg %p77
      %p207 = pneg %p101
      %p208 = pneg %p98
      %p209 = pneg %p127
      %p210 = pneg %p124
      %p211 = scmp.lt.s32.totalorder %s17, 1
      %s212 = scalar_select %p211, %s17, 1
      %s213 = smul.addr %s212, 32
      %s214 = smul.addr %s213, 8
      %s215 = scalar_lea.vmem %s4, %s214
      %p216 = pneg %p153
      %p217 = pneg %p150
      %p218 = scmp.lt.s32.totalorder %s17, 1
      %s219 = scalar_select %p218, %s17, 1
      %s220 = smul.addr %s219, 2
      %s221 = scalar_lea.vmem %s5, %s220
      %p222 = scmp.lt.s32.totalorder %s17, 1
      %s223 = scalar_select %p222, %s17, 1
      %s224 = smul.addr %s223, 32
      %s225 = smul.addr %s224, 8
      %s226 = scalar_lea.vmem %s0, %s225
      %p227 = scmp.lt.s32.totalorder %s17, 1
      %s228 = scalar_select %p227, %s17, 1
      %s229 = smul.addr %s228, 32
      %s230 = smul.addr %s229, 8
      %s231 = scalar_lea.vmem %s4, %s230
      %p232 = scmp.lt.s32.totalorder %s17, 1
      %s233 = scalar_select %p232, %s17, 1
      %s234 = smul.addr %s233, 2
      %s235 = scalar_lea.vmem %s5, %s234
      %v236 = vld [vmem:[%s226] sm:$0xff]
      %v237 = vld [vmem:[%s226 + $0x8] sm:$0xff]
      %v238 = vld [vmem:[%s226 + $0x10] sm:$0xff]
      %v239 = vld [vmem:[%s226 + $0x18] sm:$0xff]
      %v240 = vld [vmem:[%s226 + $0x20] sm:$0xff]
      %v241 = vld [vmem:[%s226 + $0x28] sm:$0xff]
      %v242 = vld [vmem:[%s226 + $0x30] sm:$0xff]
      %v243 = vld [vmem:[%s226 + $0x38] sm:$0xff]
      %v244 = vld [vmem:[%s226 + $0x40] sm:$0xff]
      %v245 = vld [vmem:[%s226 + $0x48] sm:$0xff]
      %v246 = vld [vmem:[%s226 + $0x50] sm:$0xff]
      %v247 = vld [vmem:[%s226 + $0x58] sm:$0xff]
      %v248 = vld [vmem:[%s226 + $0x60] sm:$0xff]
      %v249 = vld [vmem:[%s226 + $0x68] sm:$0xff]
      %v250 = vld [vmem:[%s226 + $0x70] sm:$0xff]
      %v251 = vld [vmem:[%s226 + $0x78] sm:$0xff]
      %v252 = vld [vmem:[%s226 + $0x80] sm:$0xff]
      %v253 = vld [vmem:[%s226 + $0x88] sm:$0xff]
      %v254 = vld [vmem:[%s226 + $0x90] sm:$0xff]
      %v255 = vld [vmem:[%s226 + $0x98] sm:$0xff]
      %v256 = vld [vmem:[%s226 + $0xa0] sm:$0xff]
      %v257 = vld [vmem:[%s226 + $0xa8] sm:$0xff]
      %v258 = vld [vmem:[%s226 + $0xb0] sm:$0xff]
      %v259 = vld [vmem:[%s226 + $0xb8] sm:$0xff]
      %v260 = vld [vmem:[%s226 + $0xc0] sm:$0xff]
      %v261 = vld [vmem:[%s226 + $0xc8] sm:$0xff]
      %v262 = vld [vmem:[%s226 + $0xd0] sm:$0xff]
      %v263 = vld [vmem:[%s226 + $0xd8] sm:$0xff]
      %v264 = vld [vmem:[%s226 + $0xe0] sm:$0xff]
      %v265 = vld [vmem:[%s226 + $0xe8] sm:$0xff]
      %v266 = vld [vmem:[%s226 + $0xf0] sm:$0xff]
      %v267 = vld [vmem:[%s226 + $0xf8] sm:$0xff]
      %v268 = vld [vmem:[%s1] sm:$0x1]
      %v270 = vlaneseq
      %v271 = vshrl.u32 %v270, 7
      %v272 = vsub.s32 0, %v271
      %v273 = vrot.slane %v268, %v272
      %v275 = vmul.f32 %v236, %v273
      %v276 = vmul.f32 %v237, %v273
      %v277 = vmul.f32 %v238, %v273
      %v278 = vmul.f32 %v239, %v273
      %v279 = vmul.f32 %v240, %v273
      %v280 = vmul.f32 %v241, %v273
      %v281 = vmul.f32 %v242, %v273
      %v282 = vmul.f32 %v243, %v273
      %v283 = vmul.f32 %v244, %v273
      %v284 = vmul.f32 %v245, %v273
      %v285 = vmul.f32 %v246, %v273
      %v286 = vmul.f32 %v247, %v273
      %v287 = vmul.f32 %v248, %v273
      %v288 = vmul.f32 %v249, %v273
      %v289 = vmul.f32 %v250, %v273
      %v290 = vmul.f32 %v251, %v273
      %v291 = vmul.f32 %v252, %v273
      %v292 = vmul.f32 %v253, %v273
      %v293 = vmul.f32 %v254, %v273
      %v294 = vmul.f32 %v255, %v273
      %v295 = vmul.f32 %v256, %v273
      %v296 = vmul.f32 %v257, %v273
      %v297 = vmul.f32 %v258, %v273
      %v298 = vmul.f32 %v259, %v273
      %v299 = vmul.f32 %v260, %v273
      %v300 = vmul.f32 %v261, %v273
      %v301 = vmul.f32 %v262, %v273
      %v302 = vmul.f32 %v263, %v273
      %v303 = vmul.f32 %v264, %v273
      %v304 = vmul.f32 %v265, %v273
      %v305 = vmul.f32 %v266, %v273
      %v306 = vmul.f32 %v267, %v273
      %v307 = vld [vmem:[%s2] sm:$0x1]
      %v309 = vlaneseq
      %v310 = vshrl.u32 %v309, 7
      %v311 = vsub.s32 0, %v310
      %v312 = vrot.slane %v307, %v311
      %v314 = vadd.f32 %v275, %v312
      %v315 = vadd.f32 %v276, %v312
      %v316 = vadd.f32 %v277, %v312
      %v317 = vadd.f32 %v278, %v312
      %v318 = vadd.f32 %v279, %v312
      %v319 = vadd.f32 %v280, %v312
      %v320 = vadd.f32 %v281, %v312
      %v321 = vadd.f32 %v282, %v312
      %v322 = vadd.f32 %v283, %v312
      %v323 = vadd.f32 %v284, %v312
      %v324 = vadd.f32 %v285, %v312
      %v325 = vadd.f32 %v286, %v312
      %v326 = vadd.f32 %v287, %v312
      %v327 = vadd.f32 %v288, %v312
      %v328 = vadd.f32 %v289, %v312
      %v329 = vadd.f32 %v290, %v312
      %v330 = vadd.f32 %v291, %v312
      %v331 = vadd.f32 %v292, %v312
      %v332 = vadd.f32 %v293, %v312
      %v333 = vadd.f32 %v294, %v312
      %v334 = vadd.f32 %v295, %v312
      %v335 = vadd.f32 %v296, %v312
      %v336 = vadd.f32 %v297, %v312
      %v337 = vadd.f32 %v298, %v312
      %v338 = vadd.f32 %v299, %v312
      %v339 = vadd.f32 %v300, %v312
      %v340 = vadd.f32 %v301, %v312
      %v341 = vadd.f32 %v302, %v312
      %v342 = vadd.f32 %v303, %v312
      %v343 = vadd.f32 %v304, %v312
      %v344 = vadd.f32 %v305, %v312
      %v345 = vadd.f32 %v306, %v312
      %v346 = vmax.f32 %v314, 0.0
      %v347 = vmax.f32 %v315, 0.0
      %v348 = vmax.f32 %v316, 0.0
      %v349 = vmax.f32 %v317, 0.0
      %v350 = vmax.f32 %v318, 0.0
      %v351 = vmax.f32 %v319, 0.0
      %v352 = vmax.f32 %v320, 0.0
      %v353 = vmax.f32 %v321, 0.0
      %v354 = vmax.f32 %v322, 0.0
      %v355 = vmax.f32 %v323, 0.0
      %v356 = vmax.f32 %v324, 0.0
      %v357 = vmax.f32 %v325, 0.0
      %v358 = vmax.f32 %v326, 0.0
      %v359 = vmax.f32 %v327, 0.0
      %v360 = vmax.f32 %v328, 0.0
      %v361 = vmax.f32 %v329, 0.0
      %v362 = vmax.f32 %v330, 0.0
      %v363 = vmax.f32 %v331, 0.0
      %v364 = vmax.f32 %v332, 0.0
      %v365 = vmax.f32 %v333, 0.0
      %v366 = vmax.f32 %v334, 0.0
      %v367 = vmax.f32 %v335, 0.0
      %v368 = vmax.f32 %v336, 0.0
      %v369 = vmax.f32 %v337, 0.0
      %v370 = vmax.f32 %v338, 0.0
      %v371 = vmax.f32 %v339, 0.0
      %v372 = vmax.f32 %v340, 0.0
      %v373 = vmax.f32 %v341, 0.0
      %v374 = vmax.f32 %v342, 0.0
      %v375 = vmax.f32 %v343, 0.0
      %v376 = vmax.f32 %v344, 0.0
      %v377 = vmax.f32 %v345, 0.0
      %vm378 = vcmask 64512
      %379 = vst.msk [vmem:[#allocation2] sm:$0xff] %vm378, 0.0
      %380 = vst.msk [vmem:[#allocation2 + $0x8] sm:$0xff] %vm378, 0.0
      %vm381 = vcmask 58368
      %382 = vst.msk [vmem:[#allocation2 + $0x10] sm:$0x3] %vm381, 0.0
      %383 = vst.msk [vmem:[#allocation2 + $0x18] sm:$0xff] %vm378, 0.0
      %384 = vst.msk [vmem:[#allocation2 + $0x20] sm:$0xff] %vm378, 0.0
      %385 = vst.msk [vmem:[#allocation2 + $0x28] sm:$0x3] %vm381, 0.0
      %386 = vst.msk [vmem:[#allocation2 + $0x30] sm:$0xff] %vm378, 0.0
      %387 = vst.msk [vmem:[#allocation2 + $0x38] sm:$0xff] %vm378, 0.0
      %388 = vst.msk [vmem:[#allocation2 + $0x40] sm:$0x3] %vm381, 0.0
      %389 = vst.msk [vmem:[#allocation2 + $0x48] sm:$0xff] %vm378, 0.0
      %390 = vst.msk [vmem:[#allocation2 + $0x50] sm:$0xff] %vm378, 0.0
      %391 = vst.msk [vmem:[#allocation2 + $0x58] sm:$0x3] %vm381, 0.0
      %392 = vst.msk [vmem:[#allocation2 + $0x60] sm:$0xff] %vm378, 0.0
      %393 = vst.msk [vmem:[#allocation2 + $0x68] sm:$0xff] %vm378, 0.0
      %394 = vst.msk [vmem:[#allocation2 + $0x70] sm:$0x3] %vm381, 0.0
      %395 = vst.msk [vmem:[#allocation2 + $0x78] sm:$0xff] %vm378, 0.0
      %396 = vst.msk [vmem:[#allocation2 + $0x80] sm:$0xff] %vm378, 0.0
      %397 = vst.msk [vmem:[#allocation2 + $0x88] sm:$0x3] %vm381, 0.0
      %398 = vst.msk [vmem:[#allocation2 + $0x90] sm:$0xff] %vm378, 0.0
      %399 = vst.msk [vmem:[#allocation2 + $0x98] sm:$0xff] %vm378, 0.0
      %400 = vst.msk [vmem:[#allocation2 + $0xa0] sm:$0x3] %vm381, 0.0
      %401 = vst.msk [vmem:[#allocation2 + $0xa8] sm:$0xff] %vm378, 0.0
      %402 = vst.msk [vmem:[#allocation2 + $0xb0] sm:$0xff] %vm378, 0.0
      %403 = vst.msk [vmem:[#allocation2 + $0xb8] sm:$0x3] %vm381, 0.0
      %404 = vst.msk [vmem:[#allocation2 + $0xc0] sm:$0xff] %vm378, 0.0
      %405 = vst.msk [vmem:[#allocation2 + $0xc8] sm:$0xff] %vm378, 0.0
      %406 = vst.msk [vmem:[#allocation2 + $0xd0] sm:$0x3] %vm381, 0.0
      %407 = vst.msk [vmem:[#allocation2 + $0xd8] sm:$0xff] %vm378, 0.0
      %408 = vst.msk [vmem:[#allocation2 + $0xe0] sm:$0xff] %vm378, 0.0
      %409 = vst.msk [vmem:[#allocation2 + $0xe8] sm:$0x3] %vm381, 0.0
      %410 = vst.msk [vmem:[#allocation2 + $0xf0] sm:$0xff] %vm378, 0.0
      %411 = vst.msk [vmem:[#allocation2 + $0xf8] sm:$0xff] %vm378, 0.0
      %412 = vst.msk [vmem:[#allocation2 + $0x100] sm:$0x3] %vm381, 0.0
      %413 = vst.msk [vmem:[#allocation2 + $0x108] sm:$0xff] %vm378, 0.0
      %414 = vst.msk [vmem:[#allocation2 + $0x110] sm:$0xff] %vm378, 0.0
      %415 = vst.msk [vmem:[#allocation2 + $0x118] sm:$0x3] %vm381, 0.0
      %416 = vst.msk [vmem:[#allocation2 + $0x120] sm:$0xff] %vm378, 0.0
      %417 = vst.msk [vmem:[#allocation2 + $0x128] sm:$0xff] %vm378, 0.0
      %418 = vst.msk [vmem:[#allocation2 + $0x130] sm:$0x3] %vm381, 0.0
      %419 = vst.msk [vmem:[#allocation2 + $0x138] sm:$0xff] %vm378, 0.0
      %420 = vst.msk [vmem:[#allocation2 + $0x140] sm:$0xff] %vm378, 0.0
      %421 = vst.msk [vmem:[#allocation2 + $0x148] sm:$0x3] %vm381, 0.0
      %422 = vst.msk [vmem:[#allocation2 + $0x150] sm:$0xff] %vm378, 0.0
      %423 = vst.msk [vmem:[#allocation2 + $0x158] sm:$0xff] %vm378, 0.0
      %424 = vst.msk [vmem:[#allocation2 + $0x160] sm:$0x3] %vm381, 0.0
      %425 = vst.msk [vmem:[#allocation2 + $0x168] sm:$0xff] %vm378, 0.0
      %426 = vst.msk [vmem:[#allocation2 + $0x170] sm:$0xff] %vm378, 0.0
      %427 = vst.msk [vmem:[#allocation2 + $0x178] sm:$0x3] %vm381, 0.0
      %428 = vst.msk [vmem:[#allocation2 + $0x180] sm:$0xff] %vm378, 0.0
      %429 = vst.msk [vmem:[#allocation2 + $0x188] sm:$0xff] %vm378, 0.0
      %430 = vst.msk [vmem:[#allocation2 + $0x190] sm:$0x3] %vm381, 0.0
      %431 = vst.msk [vmem:[#allocation2 + $0x198] sm:$0xff] %vm378, 0.0
      %432 = vst.msk [vmem:[#allocation2 + $0x1a0] sm:$0xff] %vm378, 0.0
      %433 = vst.msk [vmem:[#allocation2 + $0x1a8] sm:$0x3] %vm381, 0.0
      %s434 = scalar_lea.vmem [#allocation2], 24
      %435 = vst.msk [vmem:[%s434 + $0x1] sm:$0xff] %vm378, %v346
      %436 = vst.msk [vmem:[%s434 + $0x9] sm:$0xff] %vm378, %v347
      %437 = vst.msk [vmem:[%s434 + $0x19] sm:$0xff] %vm378, %v348
      %438 = vst.msk [vmem:[%s434 + $0x21] sm:$0xff] %vm378, %v349
      %439 = vst.msk [vmem:[%s434 + $0x31] sm:$0xff] %vm378, %v350
      %440 = vst.msk [vmem:[%s434 + $0x39] sm:$0xff] %vm378, %v351
      %441 = vst.msk [vmem:[%s434 + $0x49] sm:$0xff] %vm378, %v352
      %442 = vst.msk [vmem:[%s434 + $0x51] sm:$0xff] %vm378, %v353
      %443 = vst.msk [vmem:[%s434 + $0x61] sm:$0xff] %vm378, %v354
      %444 = vst.msk [vmem:[%s434 + $0x69] sm:$0xff] %vm378, %v355
      %445 = vst.msk [vmem:[%s434 + $0x79] sm:$0xff] %vm378, %v356
      %446 = vst.msk [vmem:[%s434 + $0x81] sm:$0xff] %vm378, %v357
      %447 = vst.msk [vmem:[%s434 + $0x91] sm:$0xff] %vm378, %v358
      %448 = vst.msk [vmem:[%s434 + $0x99] sm:$0xff] %vm378, %v359
      %449 = vst.msk [vmem:[%s434 + $0xa9] sm:$0xff] %vm378, %v360
      %450 = vst.msk [vmem:[%s434 + $0xb1] sm:$0xff] %vm378, %v361
      %451 = vst.msk [vmem:[%s434 + $0xc1] sm:$0xff] %vm378, %v362
      %452 = vst.msk [vmem:[%s434 + $0xc9] sm:$0xff] %vm378, %v363
      %453 = vst.msk [vmem:[%s434 + $0xd9] sm:$0xff] %vm378, %v364
      %454 = vst.msk [vmem:[%s434 + $0xe1] sm:$0xff] %vm378, %v365
      %455 = vst.msk [vmem:[%s434 + $0xf1] sm:$0xff] %vm378, %v366
      %456 = vst.msk [vmem:[%s434 + $0xf9] sm:$0xff] %vm378, %v367
      %457 = vst.msk [vmem:[%s434 + $0x109] sm:$0xff] %vm378, %v368
      %458 = vst.msk [vmem:[%s434 + $0x111] sm:$0xff] %vm378, %v369
      %459 = vst.msk [vmem:[%s434 + $0x121] sm:$0xff] %vm378, %v370
      %460 = vst.msk [vmem:[%s434 + $0x129] sm:$0xff] %vm378, %v371
      %461 = vst.msk [vmem:[%s434 + $0x139] sm:$0xff] %vm378, %v372
      %462 = vst.msk [vmem:[%s434 + $0x141] sm:$0xff] %vm378, %v373
      %463 = vst.msk [vmem:[%s434 + $0x151] sm:$0xff] %vm378, %v374
      %464 = vst.msk [vmem:[%s434 + $0x159] sm:$0xff] %vm378, %v375
      %465 = vst.msk [vmem:[%s434 + $0x169] sm:$0xff] %vm378, %v376
      %466 = vst.msk [vmem:[%s434 + $0x171] sm:$0xff] %vm378, %v377
      %467 = vst.msk [vmem:[#allocation3] sm:$0xff] %vm378, 0.0
      %468 = vst.msk [vmem:[#allocation3 + $0x8] sm:$0xff] %vm378, 0.0
      %469 = vst.msk [vmem:[#allocation3 + $0x10] sm:$0xff] %vm378, 0.0
      %470 = vst.msk [vmem:[#allocation3 + $0x18] sm:$0xff] %vm378, 0.0
      %471 = vst.msk [vmem:[#allocation3 + $0x20] sm:$0xff] %vm378, 0.0
      %472 = vst.msk [vmem:[#allocation3 + $0x28] sm:$0xff] %vm378, 0.0
      %473 = vst.msk [vmem:[#allocation3 + $0x30] sm:$0xff] %vm378, 0.0
      %474 = vst.msk [vmem:[#allocation3 + $0x38] sm:$0xff] %vm378, 0.0
      %475 = vst.msk [vmem:[#allocation3 + $0x40] sm:$0xff] %vm378, 0.0
      %476 = vst.msk [vmem:[#allocation3 + $0x48] sm:$0xff] %vm378, 0.0
      %477 = vst.msk [vmem:[#allocation3 + $0x50] sm:$0xff] %vm378, 0.0
      %478 = vst.msk [vmem:[#allocation3 + $0x58] sm:$0xff] %vm378, 0.0
      %479 = vst.msk [vmem:[#allocation3 + $0x60] sm:$0xff] %vm378, 0.0
      %480 = vst.msk [vmem:[#allocation3 + $0x68] sm:$0xff] %vm378, 0.0
      %481 = vst.msk [vmem:[#allocation3 + $0x70] sm:$0xff] %vm378, 0.0
      %482 = vst.msk [vmem:[#allocation3 + $0x78] sm:$0xff] %vm378, 0.0
      %483 = vst.msk [vmem:[#allocation3 + $0x80] sm:$0xff] %vm378, 0.0
      %484 = vst.msk [vmem:[#allocation3 + $0x88] sm:$0xff] %vm378, 0.0
      %485 = vst.msk [vmem:[#allocation3 + $0x90] sm:$0xff] %vm378, 0.0
      %486 = vst.msk [vmem:[#allocation3 + $0x98] sm:$0xff] %vm378, 0.0
      %487 = vst.msk [vmem:[#allocation3 + $0xa0] sm:$0xff] %vm378, 0.0
      %488 = vst.msk [vmem:[#allocation3 + $0xa8] sm:$0xff] %vm378, 0.0
      %489 = vst.msk [vmem:[#allocation3 + $0xb0] sm:$0xff] %vm378, 0.0
      %490 = vst.msk [vmem:[#allocation3 + $0xb8] sm:$0xff] %vm378, 0.0
      %491 = vst.msk [vmem:[#allocation3 + $0xc0] sm:$0xff] %vm378, 0.0
      %492 = vst.msk [vmem:[#allocation3 + $0xc8] sm:$0xff] %vm378, 0.0
      %493 = vst.msk [vmem:[#allocation3 + $0xd0] sm:$0xff] %vm378, 0.0
      %494 = vst.msk [vmem:[#allocation3 + $0xd8] sm:$0xff] %vm378, 0.0
      %495 = vst.msk [vmem:[#allocation3 + $0xe0] sm:$0xff] %vm378, 0.0
      %496 = vst.msk [vmem:[#allocation3 + $0xe8] sm:$0xff] %vm378, 0.0
      %497 = vst.msk [vmem:[#allocation3 + $0xf0] sm:$0xff] %vm378, 0.0
      %498 = vst.msk [vmem:[#allocation3 + $0xf8] sm:$0xff] %vm378, 0.0
      %v499 = vld [vmem:[#allocation2] sm:$0xff]
      %v500 = vld [vmem:[#allocation2 + $0x8] sm:$0xff]
      %v501 = vld [vmem:[#allocation2 + $0x18] sm:$0xff]
      %v502 = vld [vmem:[#allocation2 + $0x20] sm:$0xff]
      %v503 = vld [vmem:[#allocation2 + $0x30] sm:$0xff]
      %v504 = vld [vmem:[#allocation2 + $0x38] sm:$0xff]
      %v505 = vld [vmem:[#allocation2 + $0x48] sm:$0xff]
      %v506 = vld [vmem:[#allocation2 + $0x50] sm:$0xff]
      %v507 = vld [vmem:[#allocation2 + $0x60] sm:$0xff]
      %v508 = vld [vmem:[#allocation2 + $0x68] sm:$0xff]
      %v509 = vld [vmem:[#allocation2 + $0x78] sm:$0xff]
      %v510 = vld [vmem:[#allocation2 + $0x80] sm:$0xff]
      %v511 = vld [vmem:[#allocation2 + $0x90] sm:$0xff]
      %v512 = vld [vmem:[#allocation2 + $0x98] sm:$0xff]
      %v513 = vld [vmem:[#allocation2 + $0xa8] sm:$0xff]
      %v514 = vld [vmem:[#allocation2 + $0xb0] sm:$0xff]
      %v515 = vld [vmem:[#allocation2 + $0xc0] sm:$0xff]
      %v516 = vld [vmem:[#allocation2 + $0xc8] sm:$0xff]
      %v517 = vld [vmem:[#allocation2 + $0xd8] sm:$0xff]
      %v518 = vld [vmem:[#allocation2 + $0xe0] sm:$0xff]
      %v519 = vld [vmem:[#allocation2 + $0xf0] sm:$0xff]
      %v520 = vld [vmem:[#allocation2 + $0xf8] sm:$0xff]
      %v521 = vld [vmem:[#allocation2 + $0x108] sm:$0xff]
      %v522 = vld [vmem:[#allocation2 + $0x110] sm:$0xff]
      %v523 = vld [vmem:[#allocation2 + $0x120] sm:$0xff]
      %v524 = vld [vmem:[#allocation2 + $0x128] sm:$0xff]
      %v525 = vld [vmem:[#allocation2 + $0x138] sm:$0xff]
      %v526 = vld [vmem:[#allocation2 + $0x140] sm:$0xff]
      %v527 = vld [vmem:[#allocation2 + $0x150] sm:$0xff]
      %v528 = vld [vmem:[#allocation2 + $0x158] sm:$0xff]
      %v529 = vld [vmem:[#allocation2 + $0x168] sm:$0xff]
      %v530 = vld [vmem:[#allocation2 + $0x170] sm:$0xff]
      %v531 = vld [vmem:[%s3] sm:$0xff]
      %v532 = vld [vmem:[#allocation3] sm:$0xff]
      %v533 = vld [vmem:[#allocation3 + $0x8] sm:$0xff]
      %v534 = vld [vmem:[#allocation3 + $0x10] sm:$0xff]
      %v535 = vld [vmem:[#allocation3 + $0x18] sm:$0xff]
      %v536 = vld [vmem:[#allocation3 + $0x20] sm:$0xff]
      %v537 = vld [vmem:[#allocation3 + $0x28] sm:$0xff]
      %v538 = vld [vmem:[#allocation3 + $0x30] sm:$0xff]
      %v539 = vld [vmem:[#allocation3 + $0x38] sm:$0xff]
      %v540 = vld [vmem:[#allocation3 + $0x40] sm:$0xff]
      %v541 = vld [vmem:[#allocation3 + $0x48] sm:$0xff]
      %v542 = vld [vmem:[#allocation3 + $0x50] sm:$0xff]
      %v543 = vld [vmem:[#allocation3 + $0x58] sm:$0xff]
      %v544 = vld [vmem:[#allocation3 + $0x60] sm:$0xff]
      %v545 = vld [vmem:[#allocation3 + $0x68] sm:$0xff]
      %v546 = vld [vmem:[#allocation3 + $0x70] sm:$0xff]
      %v547 = vld [vmem:[#allocation3 + $0x78] sm:$0xff]
      %v548 = vld [vmem:[#allocation3 + $0x80] sm:$0xff]
      %v549 = vld [vmem:[#allocation3 + $0x88] sm:$0xff]
      %v550 = vld [vmem:[#allocation3 + $0x90] sm:$0xff]
      %v551 = vld [vmem:[#allocation3 + $0x98] sm:$0xff]
      %v552 = vld [vmem:[#allocation3 + $0xa0] sm:$0xff]
      %v553 = vld [vmem:[#allocation3 + $0xa8] sm:$0xff]
      %v554 = vld [vmem:[#allocation3 + $0xb0] sm:$0xff]
      %v555 = vld [vmem:[#allocation3 + $0xb8] sm:$0xff]
      %v556 = vld [vmem:[#allocation3 + $0xc0] sm:$0xff]
      %v557 = vld [vmem:[#allocation3 + $0xc8] sm:$0xff]
      %v558 = vld [vmem:[#allocation3 + $0xd0] sm:$0xff]
      %v559 = vld [vmem:[#allocation3 + $0xd8] sm:$0xff]
      %v560 = vld [vmem:[#allocation3 + $0xe0] sm:$0xff]
      %v561 = vld [vmem:[#allocation3 + $0xe8] sm:$0xff]
      %v562 = vld [vmem:[#allocation3 + $0xf0] sm:$0xff]
      %v563 = vld [vmem:[#allocation3 + $0xf8] sm:$0xff]
      %v565 = vsel %vm378, %v499, 0
      %v568 = vsel %vm378, %v500, 0
      %v571 = vsel %vm378, %v501, 0
      %v574 = vsel %vm378, %v502, 0
      %v577 = vsel %vm378, %v503, 0
      %v580 = vsel %vm378, %v504, 0
      %v583 = vsel %vm378, %v505, 0
      %v586 = vsel %vm378, %v506, 0
      %v589 = vsel %vm378, %v507, 0
      %v592 = vsel %vm378, %v508, 0
      %v595 = vsel %vm378, %v509, 0
      %v598 = vsel %vm378, %v510, 0
      %v601 = vsel %vm378, %v511, 0
      %v604 = vsel %vm378, %v512, 0
      %v607 = vsel %vm378, %v513, 0
      %v610 = vsel %vm378, %v514, 0
      %v613 = vsel %vm378, %v515, 0
      %v616 = vsel %vm378, %v516, 0
      %v619 = vsel %vm378, %v517, 0
      %v622 = vsel %vm378, %v518, 0
      %v625 = vsel %vm378, %v519, 0
      %v628 = vsel %vm378, %v520, 0
      %v631 = vsel %vm378, %v521, 0
      %v634 = vsel %vm378, %v522, 0
      %v637 = vsel %vm378, %v523, 0
      %v640 = vsel %vm378, %v524, 0
      %v643 = vsel %vm378, %v525, 0
      %v646 = vsel %vm378, %v526, 0
      %v649 = vsel %vm378, %v527, 0
      %v652 = vsel %vm378, %v528, 0
      %v655 = vsel %vm378, %v529, 0
      %v658 = vsel %vm378, %v530, 0
      %660 = vmatprep.subr.mxu0 0.0
      %661 = vmatpush1.msra.mxu0 %v531
      %662 = vmatprep.subr.mxu0 0.0
      %663 = vmatpush1.msra.mxu0 0.0
      %664 = vmatprep.subr.mxu0 0.0
      %665 = vmatpush1.msra.mxu0 0.0
      %666 = vmatprep.subr.mxu0 0.0
      %667 = vmatpush1.msra.mxu0 0.0
      %668 = vmatprep.subr.mxu0 0.0
      %669 = vmatpush1.msra.mxu0 0.0
      %670 = vmatprep.subr.mxu0 0.0
      %671 = vmatpush1.msra.mxu0 0.0
      %672 = vmatprep.subr.mxu0 0.0
      %673 = vmatpush1.msra.mxu0 0.0
      %674 = vmatprep.subr.mxu0 0.0
      %675 = vmatpush1.msra.mxu0 0.0
      %676 = vmatprep.subr.mxu0 0.0
      %677 = vmatpush1.msra.mxu0 0.0
      %678 = vmatprep.subr.mxu0 0.0
      %679 = vmatpush1.msra.mxu0 0.0
      %680 = vmatprep.subr.mxu0 0.0
      %681 = vmatpush1.msra.mxu0 0.0
      %682 = vmatprep.subr.mxu0 0.0
      %683 = vmatpush1.msra.mxu0 0.0
      %684 = vmatprep.subr.mxu0 0.0
      %685 = vmatpush1.msra.mxu0 0.0
      %686 = vmatprep.subr.mxu0 0.0
      %687 = vmatpush1.msra.mxu0 0.0
      %688 = vmatprep.subr.mxu0 0.0
      %689 = vmatpush1.msra.mxu0 0.0
      %690 = vmatprep.subr.mxu0 0.0
      %691 = vmatpush1.msra.mxu0 0.0
      %692 = vmatprep.subr.mxu0 0.0
      %693 = vmatpush1.msra.mxu0 0.0
      %694 = vmatprep.subr.mxu0 0.0
      %695 = vmatpush1.msra.mxu0 0.0
      %696 = vmatprep.subr.mxu0 0.0
      %697 = vmatpush1.msra.mxu0 0.0
      %698 = vmatprep.subr.mxu0 0.0
      %699 = vmatpush1.msra.mxu0 0.0
      %700 = vmatprep.subr.mxu0 0.0
      %701 = vmatpush1.msra.mxu0 0.0
      %702 = vmatprep.subr.mxu0 0.0
      %703 = vmatpush1.msra.mxu0 0.0
      %704 = vmatprep.subr.mxu0 0.0
      %705 = vmatpush1.msra.mxu0 0.0
      %706 = vmatprep.subr.mxu0 0.0
      %707 = vmatpush1.msra.mxu0 0.0
      %708 = vmatprep.subr.mxu0 0.0
      %709 = vmatpush1.msra.mxu0 0.0
      %710 = vmatprep.subr.mxu0 0.0
      %711 = vmatpush1.msra.mxu0 0.0
      %712 = vmatprep.subr.mxu0 0.0
      %713 = vmatpush1.msra.mxu0 0.0
      %714 = vmatprep.subr.mxu0 0.0
      %715 = vmatpush1.msra.mxu0 0.0
      %716 = vmatprep.subr.mxu0 0.0
      %717 = vmatpush1.msra.mxu0 0.0
      %718 = vmatprep.subr.mxu0 0.0
      %719 = vmatpush1.msra.mxu0 0.0
      %720 = vmatprep.subr.mxu0 0.0
      %721 = vmatpush1.msra.mxu0 0.0
      %722 = vmatprep.subr.mxu0 0.0
      %723 = vmatpush1.msra.mxu0 0.0
      %724 = vmatprep.mubr.f32.mxu0 0.0
      %725 = vmatmul.mubr.f32.gmra.mrb[0].mxu0 %v565
      %v726 = vpop.f32.mrb[0].mxu0
      %v727 = vadd.f32 0.0, %v726
      %v728 = vpop.f32.mrb[0].mxu0
      %729 = vmatprep.mubr.f32.mxu0 0.0
      %730 = vmatmul.mubr.f32.gmra.mrb[0].mxu0 %v568
      %v731 = vpop.f32.mrb[0].mxu0
      %v732 = vadd.f32 0.0, %v731
      %v733 = vpop.f32.mrb[0].mxu0
      %734 = vmatprep.mubr.f32.mxu0 0.0
      %735 = vmatmul.mubr.f32.gmra.mrb[0].mxu0 %v571
      %v736 = vpop.f32.mrb[0].mxu0
      %v737 = vadd.f32 0.0, %v736
      %v738 = vpop.f32.mrb[0].mxu0
      %739 = vmatprep.mubr.f32.mxu0 0.0
      %740 = vmatmul.mubr.f32.gmra.mrb[0].mxu0 %v574
      %v741 = vpop.f32.mrb[0].mxu0
      %v742 = vadd.f32 0.0, %v741
      %v743 = vpop.f32.mrb[0].mxu0
      %744 = vmatprep.mubr.f32.mxu0 0.0
      %745 = vmatmul.mubr.f32.gmra.mrb[0].mxu0 %v577
      %v746 = vpop.f32.mrb[0].mxu0
      %v747 = vadd.f32 0.0, %v746
      %v748 = vpop.f32.mrb[0].mxu0
      %749 = vmatprep.mubr.f32.mxu0 0.0
      %750 = vmatmul.mubr.f32.gmra.mrb[0].mxu0 %v580
      %v751 = vpop.f32.mrb[0].mxu0
      %v752 = vadd.f32 0.0, %v751
      %v753 = vpop.f32.mrb[0].mxu0
      %754 = vmatprep.mubr.f32.mxu0 0.0
      %755 = vmatmul.mubr.f32.gmra.mrb[0].mxu0 %v583
      %v756 = vpop.f32.mrb[0].mxu0
      %v757 = vadd.f32 0.0, %v756
      %v758 = vpop.f32.mrb[0].mxu0
      %759 = vmatprep.mubr.f32.mxu0 0.0
      %760 = vmatmul.mubr.f32.gmra.mrb[0].mxu0 %v586
      %v761 = vpop.f32.mrb[0].mxu0
      %v762 = vadd.f32 0.0, %v761
      %v763 = vpop.f32.mrb[0].mxu0
      %764 = vmatprep.mubr.f32.mxu0 0.0
      %765 = vmatmul.mubr.f32.gmra.mrb[0].mxu0 %v589
      %v766 = vpop.f32.mrb[0].mxu0
      %v767 = vadd.f32 0.0, %v766
      %v768 = vpop.f32.mrb[0].mxu0
      %769 = vmatprep.mubr.f32.mxu0 0.0
      %770 = vmatmul.mubr.f32.gmra.mrb[0].mxu0 %v592
      %v771 = vpop.f32.mrb[0].mxu0
      %v772 = vadd.f32 0.0, %v771
      %v773 = vpop.f32.mrb[0].mxu0
      %774 = vmatprep.mubr.f32.mxu0 0.0
      %775 = vmatmul.mubr.f32.gmra.mrb[0].mxu0 %v595
      %v776 = vpop.f32.mrb[0].mxu0
      %v777 = vadd.f32 0.0, %v776
      %v778 = vpop.f32.mrb[0].mxu0
      %779 = vmatprep.mubr.f32.mxu0 0.0
      %780 = vmatmul.mubr.f32.gmra.mrb[0].mxu0 %v598
      %v781 = vpop.f32.mrb[0].mxu0
      %v782 = vadd.f32 0.0, %v781
      %v783 = vpop.f32.mrb[0].mxu0
      %784 = vmatprep.mubr.f32.mxu0 0.0
      %785 = vmatmul.mubr.f32.gmra.mrb[0].mxu0 %v601
      %v786 = vpop.f32.mrb[0].mxu0
      %v787 = vadd.f32 0.0, %v786
      %v788 = vpop.f32.mrb[0].mxu0
      %789 = vmatprep.mubr.f32.mxu0 0.0
      %790 = vmatmul.mubr.f32.gmra.mrb[0].mxu0 %v604
      %v791 = vpop.f32.mrb[0].mxu0
      %v792 = vadd.f32 0.0, %v791
      %v793 = vpop.f32.mrb[0].mxu0
      %794 = vmatprep.mubr.f32.mxu0 0.0
      %795 = vmatmul.mubr.f32.gmra.mrb[0].mxu0 %v607
      %v796 = vpop.f32.mrb[0].mxu0
      %v797 = vadd.f32 0.0, %v796
      %v798 = vpop.f32.mrb[0].mxu0
      %799 = vmatprep.mubr.f32.mxu0 0.0
      %800 = vmatmul.mubr.f32.gmra.mrb[0].mxu0 %v610
      %v801 = vpop.f32.mrb[0].mxu0
      %v802 = vadd.f32 0.0, %v801
      %v803 = vpop.f32.mrb[0].mxu0
      %804 = vmatprep.mubr.f32.mxu0 0.0
      %805 = vmatmul.mubr.f32.gmra.mrb[0].mxu0 %v613
      %v806 = vpop.f32.mrb[0].mxu0
      %v807 = vadd.f32 0.0, %v806
      %v808 = vpop.f32.mrb[0].mxu0
      %809 = vmatprep.mubr.f32.mxu0 0.0
      %810 = vmatmul.mubr.f32.gmra.mrb[0].mxu0 %v616
      %v811 = vpop.f32.mrb[0].mxu0
      %v812 = vadd.f32 0.0, %v811
      %v813 = vpop.f32.mrb[0].mxu0
      %814 = vmatprep.mubr.f32.mxu0 0.0
      %815 = vmatmul.mubr.f32.gmra.mrb[0].mxu0 %v619
      %v816 = vpop.f32.mrb[0].mxu0
      %v817 = vadd.f32 0.0, %v816
      %v818 = vpop.f32.mrb[0].mxu0
      %819 = vmatprep.mubr.f32.mxu0 0.0
      %820 = vmatmul.mubr.f32.gmra.mrb[0].mxu0 %v622
      %v821 = vpop.f32.mrb[0].mxu0
      %v822 = vadd.f32 0.0, %v821
      %v823 = vpop.f32.mrb[0].mxu0
      %824 = vmatprep.mubr.f32.mxu0 0.0
      %825 = vmatmul.mubr.f32.gmra.mrb[0].mxu0 %v625
      %v826 = vpop.f32.mrb[0].mxu0
      %v827 = vadd.f32 0.0, %v826
      %v828 = vpop.f32.mrb[0].mxu0
      %829 = vmatprep.mubr.f32.mxu0 0.0
      %830 = vmatmul.mubr.f32.gmra.mrb[0].mxu0 %v628
      %v831 = vpop.f32.mrb[0].mxu0
      %v832 = vadd.f32 0.0, %v831
      %v833 = vpop.f32.mrb[0].mxu0
      %834 = vmatprep.mubr.f32.mxu0 0.0
      %835 = vmatmul.mubr.f32.gmra.mrb[0].mxu0 %v631
      %v836 = vpop.f32.mrb[0].mxu0
      %v837 = vadd.f32 0.0, %v836
      %v838 = vpop.f32.mrb[0].mxu0
      %839 = vmatprep.mubr.f32.mxu0 0.0
      %840 = vmatmul.mubr.f32.gmra.mrb[0].mxu0 %v634
      %v841 = vpop.f32.mrb[0].mxu0
      %v842 = vadd.f32 0.0, %v841
      %v843 = vpop.f32.mrb[0].mxu0
      %844 = vmatprep.mubr.f32.mxu0 0.0
      %845 = vmatmul.mubr.f32.gmra.mrb[0].mxu0 %v637
      %v846 = vpop.f32.mrb[0].mxu0
      %v847 = vadd.f32 0.0, %v846
      %v848 = vpop.f32.mrb[0].mxu0
      %849 = vmatprep.mubr.f32.mxu0 0.0
      %850 = vmatmul.mubr.f32.gmra.mrb[0].mxu0 %v640
      %v851 = vpop.f32.mrb[0].mxu0
      %v852 = vadd.f32 0.0, %v851
      %v853 = vpop.f32.mrb[0].mxu0
      %854 = vmatprep.mubr.f32.mxu0 0.0
      %855 = vmatmul.mubr.f32.gmra.mrb[0].mxu0 %v643
      %v856 = vpop.f32.mrb[0].mxu0
      %v857 = vadd.f32 0.0, %v856
      %v858 = vpop.f32.mrb[0].mxu0
      %859 = vmatprep.mubr.f32.mxu0 0.0
      %860 = vmatmul.mubr.f32.gmra.mrb[0].mxu0 %v646
      %v861 = vpop.f32.mrb[0].mxu0
      %v862 = vadd.f32 0.0, %v861
      %v863 = vpop.f32.mrb[0].mxu0
      %864 = vmatprep.mubr.f32.mxu0 0.0
      %865 = vmatmul.mubr.f32.gmra.mrb[0].mxu0 %v649
      %v866 = vpop.f32.mrb[0].mxu0
      %v867 = vadd.f32 0.0, %v866
      %v868 = vpop.f32.mrb[0].mxu0
      %869 = vmatprep.mubr.f32.mxu0 0.0
      %870 = vmatmul.mubr.f32.gmra.mrb[0].mxu0 %v652
      %v871 = vpop.f32.mrb[0].mxu0
      %v872 = vadd.f32 0.0, %v871
      %v873 = vpop.f32.mrb[0].mxu0
      %874 = vmatprep.mubr.f32.mxu0 0.0
      %875 = vmatmul.mubr.f32.gmra.mrb[0].mxu0 %v655
      %v876 = vpop.f32.mrb[0].mxu0
      %v877 = vadd.f32 0.0, %v876
      %v878 = vpop.f32.mrb[0].mxu0
      %879 = vmatprep.mubr.f32.mxu0 0.0
      %880 = vmatmul.mubr.f32.gmra.mrb[0].mxu0 %v658
      %v881 = vpop.f32.mrb[0].mxu0
      %v882 = vadd.f32 0.0, %v881
      %v883 = vpop.f32.mrb[0].mxu0
      %884 = vdwg.mxu0
      %v885 = vadd.f32 %v532, %v727
      %v886 = vadd.f32 %v533, %v732
      %v887 = vadd.f32 %v534, %v737
      %v888 = vadd.f32 %v535, %v742
      %v889 = vadd.f32 %v536, %v747
      %v890 = vadd.f32 %v537, %v752
      %v891 = vadd.f32 %v538, %v757
      %v892 = vadd.f32 %v539, %v762
      %v893 = vadd.f32 %v540, %v767
      %v894 = vadd.f32 %v541, %v772
      %v895 = vadd.f32 %v542, %v777
      %v896 = vadd.f32 %v543, %v782
      %v897 = vadd.f32 %v544, %v787
      %v898 = vadd.f32 %v545, %v792
      %v899 = vadd.f32 %v546, %v797
      %v900 = vadd.f32 %v547, %v802
      %v901 = vadd.f32 %v548, %v807
      %v902 = vadd.f32 %v549, %v812
      %v903 = vadd.f32 %v550, %v817
      %v904 = vadd.f32 %v551, %v822
      %v905 = vadd.f32 %v552, %v827
      %v906 = vadd.f32 %v553, %v832
      %v907 = vadd.f32 %v554, %v837
      %v908 = vadd.f32 %v555, %v842
      %v909 = vadd.f32 %v556, %v847
      %v910 = vadd.f32 %v557, %v852
      %v911 = vadd.f32 %v558, %v857
      %v912 = vadd.f32 %v559, %v862
      %v913 = vadd.f32 %v560, %v867
      %v914 = vadd.f32 %v561, %v872
      %v915 = vadd.f32 %v562, %v877
      %v916 = vadd.f32 %v563, %v882
      %917 = vst.msk [vmem:[#allocation3] sm:$0xff] %vm378, %v885
      %918 = vst.msk [vmem:[#allocation3 + $0x8] sm:$0xff] %vm378, %v886
      %919 = vst.msk [vmem:[#allocation3 + $0x10] sm:$0xff] %vm378, %v887
      %920 = vst.msk [vmem:[#allocation3 + $0x18] sm:$0xff] %vm378, %v888
      %921 = vst.msk [vmem:[#allocation3 + $0x20] sm:$0xff] %vm378, %v889
      %922 = vst.msk [vmem:[#allocation3 + $0x28] sm:$0xff] %vm378, %v890
      %923 = vst.msk [vmem:[#allocation3 + $0x30] sm:$0xff] %vm378, %v891
      %924 = vst.msk [vmem:[#allocation3 + $0x38] sm:$0xff] %vm378, %v892
      %925 = vst.msk [vmem:[#allocation3 + $0x40] sm:$0xff] %vm378, %v893
      %926 = vst.msk [vmem:[#allocation3 + $0x48] sm:$0xff] %vm378, %v894
      %927 = vst.msk [vmem:[#allocation3 + $0x50] sm:$0xff] %vm378, %v895
      %928 = vst.msk [vmem:[#allocation3 + $0x58] sm:$0xff] %vm378, %v896
      %929 = vst.msk [vmem:[#allocation3 + $0x60] sm:$0xff] %vm378, %v897
      %930 = vst.msk [vmem:[#allocation3 + $0x68] sm:$0xff] %vm378, %v898
      %931 = vst.msk [vmem:[#allocation3 + $0x70] sm:$0xff] %vm378, %v899
      %932 = vst.msk [vmem:[#allocation3 + $0x78] sm:$0xff] %vm378, %v900
      %933 = vst.msk [vmem:[#allocation3 + $0x80] sm:$0xff] %vm378, %v901
      %934 = vst.msk [vmem:[#allocation3 + $0x88] sm:$0xff] %vm378, %v902
      %935 = vst.msk [vmem:[#allocation3 + $0x90] sm:$0xff] %vm378, %v903
      %936 = vst.msk [vmem:[#allocation3 + $0x98] sm:$0xff] %vm378, %v904
      %937 = vst.msk [vmem:[#allocation3 + $0xa0] sm:$0xff] %vm378, %v905
      %938 = vst.msk [vmem:[#allocation3 + $0xa8] sm:$0xff] %vm378, %v906
      %939 = vst.msk [vmem:[#allocation3 + $0xb0] sm:$0xff] %vm378, %v907
      %940 = vst.msk [vmem:[#allocation3 + $0xb8] sm:$0xff] %vm378, %v908
      %941 = vst.msk [vmem:[#allocation3 + $0xc0] sm:$0xff] %vm378, %v909
      %942 = vst.msk [vmem:[#allocation3 + $0xc8] sm:$0xff] %vm378, %v910
      %943 = vst.msk [vmem:[#allocation3 + $0xd0] sm:$0xff] %vm378, %v911
      %944 = vst.msk [vmem:[#allocation3 + $0xd8] sm:$0xff] %vm378, %v912
      %945 = vst.msk [vmem:[#allocation3 + $0xe0] sm:$0xff] %vm378, %v913
      %946 = vst.msk [vmem:[#allocation3 + $0xe8] sm:$0xff] %vm378, %v914
      %947 = vst.msk [vmem:[#allocation3 + $0xf0] sm:$0xff] %vm378, %v915
      %948 = vst.msk [vmem:[#allocation3 + $0xf8] sm:$0xff] %vm378, %v916
      %v949 = vld [vmem:[#allocation2 + $0x1] sm:$0xff]
      %v950 = vld [vmem:[#allocation2 + $0x9] sm:$0xff]
      %v951 = vld [vmem:[#allocation2 + $0x19] sm:$0xff]
      %v952 = vld [vmem:[#allocation2 + $0x21] sm:$0xff]
      %v953 = vld [vmem:[#allocation2 + $0x31] sm:$0xff]
      %v954 = vld [vmem:[#allocation2 + $0x39] sm:$0xff]
      %v955 = vld [vmem:[#allocation2 + $0x49] sm:$0xff]
      %v956 = vld [vmem:[#allocation2 + $0x51] sm:$0xff]
      %v957 = vld [vmem:[#allocation2 + $0x61] sm:$0xff]
      %v958 = vld [vmem:[#allocation2 + $0x69] sm:$0xff]
      %v959 = vld [vmem:[#allocation2 + $0x79] sm:$0xff]
      %v960 = vld [vmem:[#allocation2 + $0x81] sm:$0xff]
      %v961 = vld [vmem:[#allocation2 + $0x91] sm:$0xff]
      %v962 = vld [vmem:[#allocation2 + $0x99] sm:$0xff]
      %v963 = vld [vmem:[#allocation2 + $0xa9] sm:$0xff]
      %v964 = vld [vmem:[#allocation2 + $0xb1] sm:$0xff]
      %v965 = vld [vmem:[#allocation2 + $0xc1] sm:$0xff]
      %v966 = vld [vmem:[#allocation2 + $0xc9] sm:$0xff]
      %v967 = vld [vmem:[#allocation2 + $0xd9] sm:$0xff]
      %v968 = vld [vmem:[#allocation2 + $0xe1] sm:$0xff]
      %v969 = vld [vmem:[#allocation2 + $0xf1] sm:$0xff]
      %v970 = vld [vmem:[#allocation2 + $0xf9] sm:$0xff]
      %v971 = vld [vmem:[#allocation2 + $0x109] sm:$0xff]
      %v972 = vld [vmem:[#allocation2 + $0x111] sm:$0xff]
      %v973 = vld [vmem:[#allocation2 + $0x121] sm:$0xff]
      %v974 = vld [vmem:[#allocation2 + $0x129] sm:$0xff]
      %v975 = vld [vmem:[#allocation2 + $0x139] sm:$0xff]
      %v976 = vld [vmem:[#allocation2 + $0x141] sm:$0xff]
      %v977 = vld [vmem:[#allocation2 + $0x151] sm:$0xff]
      %v978 = vld [vmem:[#allocation2 + $0x159] sm:$0xff]
      %v979 = vld [vmem:[#allocation2 + $0x169] sm:$0xff]
      %v980 = vld [vmem:[#allocation2 + $0x171] sm:$0xff]
      %v981 = vld [vmem:[%s3 + $0x8] sm:$0xff]
      %v982 = vld [vmem:[#allocation3] sm:$0xff]
      %v983 = vld [vmem:[#allocation3 + $0x8] sm:$0xff]
      %v984 = vld [vmem:[#allocation3 + $0x10] sm:$0xff]
      %v985 = vld [vmem:[#allocation3 + $0x18] sm:$0xff]
      %v986 = vld [vmem:[#allocation3 + $0x20] sm:$0xff]
      %v987 = vld [vmem:[#allocation3 + $0x28] sm:$0xff]
      %v988 = vld [vmem:[#allocation3 + $0x30] sm:$0xff]
      %v989 = vld [vmem:[#allocation3 + $0x38] sm:$0xff]
      %v990 = vld [vmem:[#allocation3 + $0x40] sm:$0xff]
      %v991 = vld [vmem:[#allocation3 + $0x48] sm:$0xff]
      %v992 = vld [vmem:[#allocation3 + $0x50] sm:$0xff]
      %v993 = vld [vmem:[#allocation3 + $0x58] sm:$0xff]
      %v994 = vld [vmem:[#allocation3 + $0x60] sm:$0xff]
      %v995 = vld [vmem:[#allocation3 + $0x68] sm:$0xff]
      %v996 = vld [vmem:[#allocation3 + $0x70] sm:$0xff]
      %v997 = vld [vmem:[#allocation3 + $0x78] sm:$0xff]
      %v998 = vld [vmem:[#allocation3 + $0x80] sm:$0xff]
      %v999 = vld [vmem:[#allocation3 + $0x88] sm:$0xff]
      %v1000 = vld [vmem:[#allocation3 + $0x90] sm:$0xff]
      %v1001 = vld [vmem:[#allocation3 + $0x98] sm:$0xff]
      %v1002 = vld [vmem:[#allocation3 + $0xa0] sm:$0xff]
      %v1003 = vld [vmem:[#allocation3 + $0xa8] sm:$0xff]
      %v1004 = vld [vmem:[#allocation3 + $0xb0] sm:$0xff]
      %v1005 = vld [vmem:[#allocation3 + $0xb8] sm:$0xff]
      %v1006 = vld [vmem:[#allocation3 + $0xc0] sm:$0xff]
      %v1007 = vld [vmem:[#allocation3 + $0xc8] sm:$0xff]
      %v1008 = vld [vmem:[#allocation3 + $0xd0] sm:$0xff]
      %v1009 = vld [vmem:[#allocation3 + $0xd8] sm:$0xff]
      %v1010 = vld [vmem:[#allocation3 + $0xe0] sm:$0xff]
      %v1011 = vld [vmem:[#allocation3 + $0xe8] sm:$0xff]
      %v1012 = vld [vmem:[#allocation3 + $0xf0] sm:$0xff]
      %v1013 = vld [vmem:[#allocation3 + $0xf8] sm:$0xff]
      %v1015 = vsel %vm378, %v949, 0
      %v1018 = vsel %vm378, %v950, 0
      %v1021 = vsel %vm378, %v951, 0
      %v1024 = vsel %vm378, %v952, 0
      %v1027 = vsel %vm378, %v953, 0
      %v1030 = vsel %vm378, %v954, 0
      %v1033 = vsel %vm378, %v955, 0
      %v1036 = vsel %vm378, %v956, 0
      %v1039 = vsel %vm378, %v957, 0
      %v1042 = vsel %vm378, %v958, 0
      %v1045 = vsel %vm378, %v959, 0
      %v1048 = vsel %vm378, %v960, 0
      %v1051 = vsel %vm378, %v961, 0
      %v1054 = vsel %vm378, %v962, 0
      %v1057 = vsel %vm378, %v963, 0
      %v1060 = vsel %vm378, %v964, 0
      %v1063 = vsel %vm378, %v965, 0
      %v1066 = vsel %vm378, %v966, 0
      %v1069 = vsel %vm378, %v967, 0
      %v1072 = vsel %vm378, %v968, 0
      %v1075 = vsel %vm378, %v969, 0
      %v1078 = vsel %vm378, %v970, 0
      %v1081 = vsel %vm378, %v971, 0
      %v1084 = vsel %vm378, %v972, 0
      %v1087 = vsel %vm378, %v973, 0
      %v1090 = vsel %vm378, %v974, 0
      %v1093 = vsel %vm378, %v975, 0
      %v1096 = vsel %vm378, %v976, 0
      %v1099 = vsel %vm378, %v977, 0
      %v1102 = vsel %vm378, %v978, 0
      %v1105 = vsel %vm378, %v979, 0
      %v1108 = vsel %vm378, %v980, 0
      %1110 = vmatprep.subr.mxu0 0.0
      %1111 = vmatpush1.msra.mxu0 %v981
      %1112 = vmatprep.subr.mxu0 0.0
      %1113 = vmatpush1.msra.mxu0 0.0
      %1114 = vmatprep.subr.mxu0 0.0
      %1115 = vmatpush1.msra.mxu0 0.0
      %1116 = vmatprep.subr.mxu0 0.0
      %1117 = vmatpush1.msra.mxu0 0.0
      %1118 = vmatprep.subr.mxu0 0.0
      %1119 = vmatpush1.msra.mxu0 0.0
      %1120 = vmatprep.subr.mxu0 0.0
      %1121 = vmatpush1.msra.mxu0 0.0
      %1122 = vmatprep.subr.mxu0 0.0
      %1123 = vmatpush1.msra.mxu0 0.0
      %1124 = vmatprep.subr.mxu0 0.0
      %1125 = vmatpush1.msra.mxu0 0.0
      %1126 = vmatprep.subr.mxu0 0.0
      %1127 = vmatpush1.msra.mxu0 0.0
      %1128 = vmatprep.subr.mxu0 0.0
      %1129 = vmatpush1.msra.mxu0 0.0
      %1130 = vmatprep.subr.mxu0 0.0
      %1131 = vmatpush1.msra.mxu0 0.0
      %1132 = vmatprep.subr.mxu0 0.0
      %1133 = vmatpush1.msra.mxu0 0.0
      %1134 = vmatprep.subr.mxu0 0.0
      %1135 = vmatpush1.msra.mxu0 0.0
      %1136 = vmatprep.subr.mxu0 0.0
      %1137 = vmatpush1.msra.mxu0 0.0
      %1138 = vmatprep.subr.mxu0 0.0
      %1139 = vmatpush1.msra.mxu0 0.0
      %1140 = vmatprep.subr.mxu0 0.0
      %1141 = vmatpush1.msra.mxu0 0.0
      %1142 = vmatprep.subr.mxu0 0.0
      %1143 = vmatpush1.msra.mxu0 0.0
      %1144 = vmatprep.subr.mxu0 0.0
      %1145 = vmatpush1.msra.mxu0 0.0
      %1146 = vmatprep.subr.mxu0 0.0
      %1147 = vmatpush1.msra.mxu0 0.0
      %1148 = vmatprep.subr.mxu0 0.0
      %1149 = vmatpush1.msra.mxu0 0.0
      %1150 = vmatprep.subr.mxu0 0.0
      %1151 = vmatpush1.msra.mxu0 0.0
      %1152 = vmatprep.subr.mxu0 0.0
      %1153 = vmatpush1.msra.mxu0 0.0
      %1154 = vmatprep.subr.mxu0 0.0
      %1155 = vmatpush1.msra.mxu0 0.0
      %1156 = vmatprep.subr.mxu0 0.0
      %1157 = vmatpush1.msra.mxu0 0.0
      %1158 = vmatprep.subr.mxu0 0.0
      %1159 = vmatpush1.msra.mxu0 0.0
      %1160 = vmatprep.subr.mxu0 0.0
      %1161 = vmatpush1.msra.mxu0 0.0
      %1162 = vmatprep.subr.mxu0 0.0
      %1163 = vmatpush1.msra.mxu0 0.0
      %1164 = vmatprep.subr.mxu0 0.0
      %1165 = vmatpush1.msra.mxu0 0.0
      %1166 = vmatprep.subr.mxu0 0.0
      %1167 = vmatpush1.msra.mxu0 0.0
      %1168 = vmatprep.subr.mxu0 0.0
      %1169 = vmatpush1.msra.mxu0 0.0
      %1170 = vmatprep.subr.mxu0 0.0
      %1171 = vmatpush1.msra.mxu0 0.0
      %1172 = vmatprep.subr.mxu0 0.0
      %1173 = vmatpush1.msra.mxu0 0.0
      %1174 = vmatprep.mubr.f32.mxu0 0.0
      %1175 = vmatmul.mubr.f32.gmra.mrb[0].mxu0 %v1015
      %v1176 = vpop.f32.mrb[0].mxu0
      %v1177 = vadd.f32 0.0, %v1176
      %v1178 = vpop.f32.mrb[0].mxu0
      %1179 = vmatprep.mubr.f32.mxu0 0.0
      %1180 = vmatmul.mubr.f32.gmra.mrb[0].mxu0 %v1018
      %v1181 = vpop.f32.mrb[0].mxu0
      %v1182 = vadd.f32 0.0, %v1181
      %v1183 = vpop.f32.mrb[0].mxu0
      %1184 = vmatprep.mubr.f32.mxu0 0.0
      %1185 = vmatmul.mubr.f32.gmra.mrb[0].mxu0 %v1021
      %v1186 = vpop.f32.mrb[0].mxu0
      %v1187 = vadd.f32 0.0, %v1186
      %v1188 = vpop.f32.mrb[0].mxu0
      %1189 = vmatprep.mubr.f32.mxu0 0.0
      %1190 = vmatmul.mubr.f32.gmra.mrb[0].mxu0 %v1024
      %v1191 = vpop.f32.mrb[0].mxu0
      %v1192 = vadd.f32 0.0, %v1191
      %v1193 = vpop.f32.mrb[0].mxu0
      %1194 = vmatprep.mubr.f32.mxu0 0.0
      %1195 = vmatmul.mubr.f32.gmra.mrb[0].mxu0 %v1027
      %v1196 = vpop.f32.mrb[0].mxu0
      %v1197 = vadd.f32 0.0, %v1196
      %v1198 = vpop.f32.mrb[0].mxu0
      %1199 = vmatprep.mubr.f32.mxu0 0.0
      %1200 = vmatmul.mubr.f32.gmra.mrb[0].mxu0 %v1030
      %v1201 = vpop.f32.mrb[0].mxu0
      %v1202 = vadd.f32 0.0, %v1201
      %v1203 = vpop.f32.mrb[0].mxu0
      %1204 = vmatprep.mubr.f32.mxu0 0.0
      %1205 = vmatmul.mubr.f32.gmra.mrb[0].mxu0 %v1033
      %v1206 = vpop.f32.mrb[0].mxu0
      %v1207 = vadd.f32 0.0, %v1206
      %v1208 = vpop.f32.mrb[0].mxu0
      %1209 = vmatprep.mubr.f32.mxu0 0.0
      %1210 = vmatmul.mubr.f32.gmra.mrb[0].mxu0 %v1036
      %v1211 = vpop.f32.mrb[0].mxu0
      %v1212 = vadd.f32 0.0, %v1211
      %v1213 = vpop.f32.mrb[0].mxu0
      %1214 = vmatprep.mubr.f32.mxu0 0.0
      %1215 = vmatmul.mubr.f32.gmra.mrb[0].mxu0 %v1039
      %v1216 = vpop.f32.mrb[0].mxu0
      %v1217 = vadd.f32 0.0, %v1216
      %v1218 = vpop.f32.mrb[0].mxu0
      %1219 = vmatprep.mubr.f32.mxu0 0.0
      %1220 = vmatmul.mubr.f32.gmra.mrb[0].mxu0 %v1042
      %v1221 = vpop.f32.mrb[0].mxu0
      %v1222 = vadd.f32 0.0, %v1221
      %v1223 = vpop.f32.mrb[0].mxu0
      %1224 = vmatprep.mubr.f32.mxu0 0.0
      %1225 = vmatmul.mubr.f32.gmra.mrb[0].mxu0 %v1045
      %v1226 = vpop.f32.mrb[0].mxu0
      %v1227 = vadd.f32 0.0, %v1226
      %v1228 = vpop.f32.mrb[0].mxu0
      %1229 = vmatprep.mubr.f32.mxu0 0.0
      %1230 = vmatmul.mubr.f32.gmra.mrb[0].mxu0 %v1048
      %v1231 = vpop.f32.mrb[0].mxu0
      %v1232 = vadd.f32 0.0, %v1231
      %v1233 = vpop.f32.mrb[0].mxu0
      %1234 = vmatprep.mubr.f32.mxu0 0.0
      %1235 = vmatmul.mubr.f32.gmra.mrb[0].mxu0 %v1051
      %v1236 = vpop.f32.mrb[0].mxu0
      %v1237 = vadd.f32 0.0, %v1236
      %v1238 = vpop.f32.mrb[0].mxu0
      %1239 = vmatprep.mubr.f32.mxu0 0.0
      %1240 = vmatmul.mubr.f32.gmra.mrb[0].mxu0 %v1054
      %v1241 = vpop.f32.mrb[0].mxu0
      %v1242 = vadd.f32 0.0, %v1241
      %v1243 = vpop.f32.mrb[0].mxu0
      %1244 = vmatprep.mubr.f32.mxu0 0.0
      %1245 = vmatmul.mubr.f32.gmra.mrb[0].mxu0 %v1057
      %v1246 = vpop.f32.mrb[0].mxu0
      %v1247 = vadd.f32 0.0, %v1246
      %v1248 = vpop.f32.mrb[0].mxu0
      %1249 = vmatprep.mubr.f32.mxu0 0.0
      %1250 = vmatmul.mubr.f32.gmra.mrb[0].mxu0 %v1060
      %v1251 = vpop.f32.mrb[0].mxu0
      %v1252 = vadd.f32 0.0, %v1251
      %v1253 = vpop.f32.mrb[0].mxu0
      %1254 = vmatprep.mubr.f32.mxu0 0.0
      %1255 = vmatmul.mubr.f32.gmra.mrb[0].mxu0 %v1063
      %v1256 = vpop.f32.mrb[0].mxu0
      %v1257 = vadd.f32 0.0, %v1256
      %v1258 = vpop.f32.mrb[0].mxu0
      %1259 = vmatprep.mubr.f32.mxu0 0.0
      %1260 = vmatmul.mubr.f32.gmra.mrb[0].mxu0 %v1066
      %v1261 = vpop.f32.mrb[0].mxu0
      %v1262 = vadd.f32 0.0, %v1261
      %v1263 = vpop.f32.mrb[0].mxu0
      %1264 = vmatprep.mubr.f32.mxu0 0.0
      %1265 = vmatmul.mubr.f32.gmra.mrb[0].mxu0 %v1069
      %v1266 = vpop.f32.mrb[0].mxu0
      %v1267 = vadd.f32 0.0, %v1266
      %v1268 = vpop.f32.mrb[0].mxu0
      %1269 = vmatprep.mubr.f32.mxu0 0.0
      %1270 = vmatmul.mubr.f32.gmra.mrb[0].mxu0 %v1072
      %v1271 = vpop.f32.mrb[0].mxu0
      %v1272 = vadd.f32 0.0, %v1271
      %v1273 = vpop.f32.mrb[0].mxu0
      %1274 = vmatprep.mubr.f32.mxu0 0.0
      %1275 = vmatmul.mubr.f32.gmra.mrb[0].mxu0 %v1075
      %v1276 = vpop.f32.mrb[0].mxu0
      %v1277 = vadd.f32 0.0, %v1276
      %v1278 = vpop.f32.mrb[0].mxu0
      %1279 = vmatprep.mubr.f32.mxu0 0.0
      %1280 = vmatmul.mubr.f32.gmra.mrb[0].mxu0 %v1078
      %v1281 = vpop.f32.mrb[0].mxu0
      %v1282 = vadd.f32 0.0, %v1281
      %v1283 = vpop.f32.mrb[0].mxu0
      %1284 = vmatprep.mubr.f32.mxu0 0.0
      %1285 = vmatmul.mubr.f32.gmra.mrb[0].mxu0 %v1081
      %v1286 = vpop.f32.mrb[0].mxu0
      %v1287 = vadd.f32 0.0, %v1286
      %v1288 = vpop.f32.mrb[0].mxu0
      %1289 = vmatprep.mubr.f32.mxu0 0.0
      %1290 = vmatmul.mubr.f32.gmra.mrb[0].mxu0 %v1084
      %v1291 = vpop.f32.mrb[0].mxu0
      %v1292 = vadd.f32 0.0, %v1291
      %v1293 = vpop.f32.mrb[0].mxu0
      %1294 = vmatprep.mubr.f32.mxu0 0.0
      %1295 = vmatmul.mubr.f32.gmra.mrb[0].mxu0 %v1087
      %v1296 = vpop.f32.mrb[0].mxu0
      %v1297 = vadd.f32 0.0, %v1296
      %v1298 = vpop.f32.mrb[0].mxu0
      %1299 = vmatprep.mubr.f32.mxu0 0.0
      %1300 = vmatmul.mubr.f32.gmra.mrb[0].mxu0 %v1090
      %v1301 = vpop.f32.mrb[0].mxu0
      %v1302 = vadd.f32 0.0, %v1301
      %v1303 = vpop.f32.mrb[0].mxu0
      %1304 = vmatprep.mubr.f32.mxu0 0.0
      %1305 = vmatmul.mubr.f32.gmra.mrb[0].mxu0 %v1093
      %v1306 = vpop.f32.mrb[0].mxu0
      %v1307 = vadd.f32 0.0, %v1306
      %v1308 = vpop.f32.mrb[0].mxu0
      %1309 = vmatprep.mubr.f32.mxu0 0.0
      %1310 = vmatmul.mubr.f32.gmra.mrb[0].mxu0 %v1096
      %v1311 = vpop.f32.mrb[0].mxu0
      %v1312 = vadd.f32 0.0, %v1311
      %v1313 = vpop.f32.mrb[0].mxu0
      %1314 = vmatprep.mubr.f32.mxu0 0.0
      %1315 = vmatmul.mubr.f32.gmra.mrb[0].mxu0 %v1099
      %v1316 = vpop.f32.mrb[0].mxu0
      %v1317 = vadd.f32 0.0, %v1316
      %v1318 = vpop.f32.mrb[0].mxu0
      %1319 = vmatprep.mubr.f32.mxu0 0.0
      %1320 = vmatmul.mubr.f32.gmra.mrb[0].mxu0 %v1102
      %v1321 = vpop.f32.mrb[0].mxu0
      %v1322 = vadd.f32 0.0, %v1321
      %v1323 = vpop.f32.mrb[0].mxu0
      %1324 = vmatprep.mubr.f32.mxu0 0.0
      %1325 = vmatmul.mubr.f32.gmra.mrb[0].mxu0 %v1105
      %v1326 = vpop.f32.mrb[0].mxu0
      %v1327 = vadd.f32 0.0, %v1326
      %v1328 = vpop.f32.mrb[0].mxu0
      %1329 = vmatprep.mubr.f32.mxu0 0.0
      %1330 = vmatmul.mubr.f32.gmra.mrb[0].mxu0 %v1108
      %v1331 = vpop.f32.mrb[0].mxu0
      %v1332 = vadd.f32 0.0, %v1331
      %v1333 = vpop.f32.mrb[0].mxu0
      %1334 = vdwg.mxu0
      %v1335 = vadd.f32 %v982, %v1177
      %v1336 = vadd.f32 %v983, %v1182
      %v1337 = vadd.f32 %v984, %v1187
      %v1338 = vadd.f32 %v985, %v1192
      %v1339 = vadd.f32 %v986, %v1197
      %v1340 = vadd.f32 %v987, %v1202
      %v1341 = vadd.f32 %v988, %v1207
      %v1342 = vadd.f32 %v989, %v1212
      %v1343 = vadd.f32 %v990, %v1217
      %v1344 = vadd.f32 %v991, %v1222
      %v1345 = vadd.f32 %v992, %v1227
      %v1346 = vadd.f32 %v993, %v1232
      %v1347 = vadd.f32 %v994, %v1237
      %v1348 = vadd.f32 %v995, %v1242
      %v1349 = vadd.f32 %v996, %v1247
      %v1350 = vadd.f32 %v997, %v1252
      %v1351 = vadd.f32 %v998, %v1257
      %v1352 = vadd.f32 %v999, %v1262
      %v1353 = vadd.f32 %v1000, %v1267
      %v1354 = vadd.f32 %v1001, %v1272
      %v1355 = vadd.f32 %v1002, %v1277
      %v1356 = vadd.f32 %v1003, %v1282
      %v1357 = vadd.f32 %v1004, %v1287
      %v1358 = vadd.f32 %v1005, %v1292
      %v1359 = vadd.f32 %v1006, %v1297
      %v1360 = vadd.f32 %v1007, %v1302
      %v1361 = vadd.f32 %v1008, %v1307
      %v1362 = vadd.f32 %v1009, %v1312
      %v1363 = vadd.f32 %v1010, %v1317
      %v1364 = vadd.f32 %v1011, %v1322
      %v1365 = vadd.f32 %v1012, %v1327
      %v1366 = vadd.f32 %v1013, %v1332
      %1367 = vst.msk [vmem:[#allocation3] sm:$0xff] %vm378, %v1335
      %1368 = vst.msk [vmem:[#allocation3 + $0x8] sm:$0xff] %vm378, %v1336
      %1369 = vst.msk [vmem:[#allocation3 + $0x10] sm:$0xff] %vm378, %v1337
      %1370 = vst.msk [vmem:[#allocation3 + $0x18] sm:$0xff] %vm378, %v1338
      %1371 = vst.msk [vmem:[#allocation3 + $0x20] sm:$0xff] %vm378, %v1339
      %1372 = vst.msk [vmem:[#allocation3 + $0x28] sm:$0xff] %vm378, %v1340
      %1373 = vst.msk [vmem:[#allocation3 + $0x30] sm:$0xff] %vm378, %v1341
      %1374 = vst.msk [vmem:[#allocation3 + $0x38] sm:$0xff] %vm378, %v1342
      %1375 = vst.msk [vmem:[#allocation3 + $0x40] sm:$0xff] %vm378, %v1343
      %1376 = vst.msk [vmem:[#allocation3 + $0x48] sm:$0xff] %vm378, %v1344
      %1377 = vst.msk [vmem:[#allocation3 + $0x50] sm:$0xff] %vm378, %v1345
      %1378 = vst.msk [vmem:[#allocation3 + $0x58] sm:$0xff] %vm378, %v1346
      %1379 = vst.msk [vmem:[#allocation3 + $0x60] sm:$0xff] %vm378, %v1347
      %1380 = vst.msk [vmem:[#allocation3 + $0x68] sm:$0xff] %vm378, %v1348
      %1381 = vst.msk [vmem:[#allocation3 + $0x70] sm:$0xff] %vm378, %v1349
      %1382 = vst.msk [vmem:[#allocation3 + $0x78] sm:$0xff] %vm378, %v1350
      %1383 = vst.msk [vmem:[#allocation3 + $0x80] sm:$0xff] %vm378, %v1351
      %1384 = vst.msk [vmem:[#allocation3 + $0x88] sm:$0xff] %vm378, %v1352
      %1385 = vst.msk [vmem:[#allocation3 + $0x90] sm:$0xff] %vm378, %v1353
      %1386 = vst.msk [vmem:[#allocation3 + $0x98] sm:$0xff] %vm378, %v1354
      %1387 = vst.msk [vmem:[#allocation3 + $0xa0] sm:$0xff] %vm378, %v1355
      %1388 = vst.msk [vmem:[#allocation3 + $0xa8] sm:$0xff] %vm378, %v1356
      %1389 = vst.msk [vmem:[#allocation3 + $0xb0] sm:$0xff] %vm378, %v1357
      %1390 = vst.msk [vmem:[#allocation3 + $0xb8] sm:$0xff] %vm378, %v1358
      %1391 = vst.msk [vmem:[#allocation3 + $0xc0] sm:$0xff] %vm378, %v1359
      %1392 = vst.msk [vmem:[#allocation3 + $0xc8] sm:$0xff] %vm378, %v1360
      %1393 = vst.msk [vmem:[#allocation3 + $0xd0] sm:$0xff] %vm378, %v1361
      %1394 = vst.msk [vmem:[#allocation3 + $0xd8] sm:$0xff] %vm378, %v1362
      %1395 = vst.msk [vmem:[#allocation3 + $0xe0] sm:$0xff] %vm378, %v1363
      %1396 = vst.msk [vmem:[#allocation3 + $0xe8] sm:$0xff] %vm378, %v1364
      %1397 = vst.msk [vmem:[#allocation3 + $0xf0] sm:$0xff] %vm378, %v1365
      %1398 = vst.msk [vmem:[#allocation3 + $0xf8] sm:$0xff] %vm378, %v1366
      %v1399 = vld [vmem:[#allocation2 + $0x2] sm:$0xff]
      %v1400 = vld [vmem:[#allocation2 + $0xa] sm:$0xff]
      %v1401 = vld [vmem:[#allocation2 + $0x1a] sm:$0xff]
      %v1402 = vld [vmem:[#allocation2 + $0x22] sm:$0xff]
      %v1403 = vld [vmem:[#allocation2 + $0x32] sm:$0xff]
      %v1404 = vld [vmem:[#allocation2 + $0x3a] sm:$0xff]
      %v1405 = vld [vmem:[#allocation2 + $0x4a] sm:$0xff]
      %v1406 = vld [vmem:[#allocation2 + $0x52] sm:$0xff]
      %v1407 = vld [vmem:[#allocation2 + $0x62] sm:$0xff]
      %v1408 = vld [vmem:[#allocation2 + $0x6a] sm:$0xff]
      %v1409 = vld [vmem:[#allocation2 + $0x7a] sm:$0xff]
      %v1410 = vld [vmem:[#allocation2 + $0x82] sm:$0xff]
      %v1411 = vld [vmem:[#allocation2 + $0x92] sm:$0xff]
      %v1412 = vld [vmem:[#allocation2 + $0x9a] sm:$0xff]
      %v1413 = vld [vmem:[#allocation2 + $0xaa] sm:$0xff]
      %v1414 = vld [vmem:[#allocation2 + $0xb2] sm:$0xff]
      %v1415 = vld [vmem:[#allocation2 + $0xc2] sm:$0xff]
      %v1416 = vld [vmem:[#allocation2 + $0xca] sm:$0xff]
      %v1417 = vld [vmem:[#allocation2 + $0xda] sm:$0xff]
      %v1418 = vld [vmem:[#allocation2 + $0xe2] sm:$0xff]
      %v1419 = vld [vmem:[#allocation2 + $0xf2] sm:$0xff]
      %v1420 = vld [vmem:[#allocation2 + $0xfa] sm:$0xff]
      %v1421 = vld [vmem:[#allocation2 + $0x10a] sm:$0xff]
      %v1422 = vld [vmem:[#allocation2 + $0x112] sm:$0xff]
      %v1423 = vld [vmem:[#allocation2 + $0x122] sm:$0xff]
      %v1424 = vld [vmem:[#allocation2 + $0x12a] sm:$0xff]
      %v1425 = vld [vmem:[#allocation2 + $0x13a] sm:$0xff]
      %v1426 = vld [vmem:[#allocation2 + $0x142] sm:$0xff]
      %v1427 = vld [vmem:[#allocation2 + $0x152] sm:$0xff]
      %v1428 = vld [vmem:[#allocation2 + $0x15a] sm:$0xff]
      %v1429 = vld [vmem:[#allocation2 + $0x16a] sm:$0xff]
      %v1430 = vld [vmem:[#allocation2 + $0x172] sm:$0xff]
      %v1431 = vld [vmem:[%s3 + $0x10] sm:$0xff]
      %v1432 = vld [vmem:[#allocation3] sm:$0xff]
      %v1433 = vld [vmem:[#allocation3 + $0x8] sm:$0xff]
      %v1434 = vld [vmem:[#allocation3 + $0x10] sm:$0xff]
      %v1435 = vld [vmem:[#allocation3 + $0x18] sm:$0xff]
      %v1436 = vld [vmem:[#allocation3 + $0x20] sm:$0xff]
      %v1437 = vld [vmem:[#allocation3 + $0x28] sm:$0xff]
      %v1438 = vld [vmem:[#allocation3 + $0x30] sm:$0xff]
      %v1439 = vld [vmem:[#allocation3 + $0x38] sm:$0xff]
      %v1440 = vld [vmem:[#allocation3 + $0x40] sm:$0xff]
      %v1441 = vld [vmem:[#allocation3 + $0x48] sm:$0xff]
      %v1442 = vld [vmem:[#allocation3 + $0x50] sm:$0xff]
      %v1443 = vld [vmem:[#allocation3 + $0x58] sm:$0xff]
      %v1444 = vld [vmem:[#allocation3 + $0x60] sm:$0xff]
      %v1445 = vld [vmem:[#allocation3 + $0x68] sm:$0xff]
      %v1446 = vld [vmem:[#allocation3 + $0x70] sm:$0xff]
      %v1447 = vld [vmem:[#allocation3 + $0x78] sm:$0xff]
      %v1448 = vld [vmem:[#allocation3 + $0x80] sm:$0xff]
      %v1449 = vld [vmem:[#allocation3 + $0x88] sm:$0xff]
      %v1450 = vld [vmem:[#allocation3 + $0x90] sm:$0xff]
      %v1451 = vld [vmem:[#allocation3 + $0x98] sm:$0xff]
      %v1452 = vld [vmem:[#allocation3 + $0xa0] sm:$0xff]
      %v1453 = vld [vmem:[#allocation3 + $0xa8] sm:$0xff]
      %v1454 = vld [vmem:[#allocation3 + $0xb0] sm:$0xff]
      %v1455 = vld [vmem:[#allocation3 + $0xb8] sm:$0xff]
      %v1456 = vld [vmem:[#allocation3 + $0xc0] sm:$0xff]
      %v1457 = vld [vmem:[#allocation3 + $0xc8] sm:$0xff]
      %v1458 = vld [vmem:[#allocation3 + $0xd0] sm:$0xff]
      %v1459 = vld [vmem:[#allocation3 + $0xd8] sm:$0xff]
      %v1460 = vld [vmem:[#allocation3 + $0xe0] sm:$0xff]
      %v1461 = vld [vmem:[#allocation3 + $0xe8] sm:$0xff]
      %v1462 = vld [vmem:[#allocation3 + $0xf0] sm:$0xff]
      %v1463 = vld [vmem:[#allocation3 + $0xf8] sm:$0xff]
      %v1465 = vsel %vm378, %v1399, 0
      %v1468 = vsel %vm378, %v1400, 0
      %v1471 = vsel %vm378, %v1401, 0
      %v1474 = vsel %vm378, %v1402, 0
      %v1477 = vsel %vm378, %v1403, 0
      %v1480 = vsel %vm378, %v1404, 0
      %v1483 = vsel %vm378, %v1405, 0
      %v1486 = vsel %vm378, %v1406, 0
      %v1489 = vsel %vm378, %v1407, 0
      %v1492 = vsel %vm378, %v1408, 0
      %v1495 = vsel %vm378, %v1409, 0
      %v1498 = vsel %vm378, %v1410, 0
      %v1501 = vsel %vm378, %v1411, 0
      %v1504 = vsel %vm378, %v1412, 0
      %v1507 = vsel %vm378, %v1413, 0
      %v1510 = vsel %vm378, %v1414, 0
      %v1513 = vsel %vm378, %v1415, 0
      %v1516 = vsel %vm378, %v1416, 0
      %v1519 = vsel %vm378, %v1417, 0
      %v1522 = vsel %vm378, %v1418, 0
      %v1525 = vsel %vm378, %v1419, 0
      %v1528 = vsel %vm378, %v1420, 0
      %v1531 = vsel %vm378, %v1421, 0
      %v1534 = vsel %vm378, %v1422, 0
      %v1537 = vsel %vm378, %v1423, 0
      %v1540 = vsel %vm378, %v1424, 0
      %v1543 = vsel %vm378, %v1425, 0
      %v1546 = vsel %vm378, %v1426, 0
      %v1549 = vsel %vm378, %v1427, 0
      %v1552 = vsel %vm378, %v1428, 0
      %v1555 = vsel %vm378, %v1429, 0
      %v1558 = vsel %vm378, %v1430, 0
      %1560 = vmatprep.subr.mxu0 0.0
      %1561 = vmatpush1.msra.mxu0 %v1431
      %1562 = vmatprep.subr.mxu0 0.0
      %1563 = vmatpush1.msra.mxu0 0.0
      %1564 = vmatprep.subr.mxu0 0.0
      %1565 = vmatpush1.msra.mxu0 0.0
      %1566 = vmatprep.subr.mxu0 0.0
      %1567 = vmatpush1.msra.mxu0 0.0
      %1568 = vmatprep.subr.mxu0 0.0
      %1569 = vmatpush1.msra.mxu0 0.0
      %1570 = vmatprep.subr.mxu0 0.0
      %1571 = vmatpush1.msra.mxu0 0.0
      %1572 = vmatprep.subr.mxu0 0.0
      %1573 = vmatpush1.msra.mxu0 0.0
      %1574 = vmatprep.subr.mxu0 0.0
      %1575 = vmatpush1.msra.mxu0 0.0
      %1576 = vmatprep.subr.mxu0 0.0
      %1577 = vmatpush1.msra.mxu0 0.0
      %1578 = vmatprep.subr.mxu0 0.0
      %1579 = vmatpush1.msra.mxu0 0.0
      %1580 = vmatprep.subr.mxu0 0.0
      %1581 = vmatpush1.msra.mxu0 0.0
      %1582 = vmatprep.subr.mxu0 0.0
      %1583 = vmatpush1.msra.mxu0 0.0
      %1584 = vmatprep.subr.mxu0 0.0
      %1585 = vmatpush1.msra.mxu0 0.0
      %1586 = vmatprep.subr.mxu0 0.0
      %1587 = vmatpush1.msra.mxu0 0.0
      %1588 = vmatprep.subr.mxu0 0.0
      %1589 = vmatpush1.msra.mxu0 0.0
      %1590 = vmatprep.subr.mxu0 0.0
      %1591 = vmatpush1.msra.mxu0 0.0
      %1592 = vmatprep.subr.mxu0 0.0
      %1593 = vmatpush1.msra.mxu0 0.0
      %1594 = vmatprep.subr.mxu0 0.0
      %1595 = vmatpush1.msra.mxu0 0.0
      %1596 = vmatprep.subr.mxu0 0.0
      %1597 = vmatpush1.msra.mxu0 0.0
      %1598 = vmatprep.subr.mxu0 0.0
      %1599 = vmatpush1.msra.mxu0 0.0
      %1600 = vmatprep.subr.mxu0 0.0
      %1601 = vmatpush1.msra.mxu0 0.0
      %1602 = vmatprep.subr.mxu0 0.0
      %1603 = vmatpush1.msra.mxu0 0.0
      %1604 = vmatprep.subr.mxu0 0.0
      %1605 = vmatpush1.msra.mxu0 0.0
      %1606 = vmatprep.subr.mxu0 0.0
      %1607 = vmatpush1.msra.mxu0 0.0
      %1608 = vmatprep.subr.mxu0 0.0
      %1609 = vmatpush1.msra.mxu0 0.0
      %1610 = vmatprep.subr.mxu0 0.0
      %1611 = vmatpush1.msra.mxu0 0.0
      %1612 = vmatprep.subr.mxu0 0.0
      %1613 = vmatpush1.msra.mxu0 0.0
      %1614 = vmatprep.subr.mxu0 0.0
      %1615 = vmatpush1.msra.mxu0 0.0
      %1616 = vmatprep.subr.mxu0 0.0
      %1617 = vmatpush1.msra.mxu0 0.0
      %1618 = vmatprep.subr.mxu0 0.0
      %1619 = vmatpush1.msra.mxu0 0.0
      %1620 = vmatprep.subr.mxu0 0.0
      %1621 = vmatpush1.msra.mxu0 0.0
      %1622 = vmatprep.subr.mxu0 0.0
      %1623 = vmatpush1.msra.mxu0 0.0
      %1624 = vmatprep.mubr.f32.mxu0 0.0
      %1625 = vmatmul.mubr.f32.gmra.mrb[0].mxu0 %v1465
      %v1626 = vpop.f32.mrb[0].mxu0
      %v1627 = vadd.f32 0.0, %v1626
      %v1628 = vpop.f32.mrb[0].mxu0
      %1629 = vmatprep.mubr.f32.mxu0 0.0
      %1630 = vmatmul.mubr.f32.gmra.mrb[0].mxu0 %v1468
      %v1631 = vpop.f32.mrb[0].mxu0
      %v1632 = vadd.f32 0.0, %v1631
      %v1633 = vpop.f32.mrb[0].mxu0
      %1634 = vmatprep.mubr.f32.mxu0 0.0
      %1635 = vmatmul.mubr.f32.gmra.mrb[0].mxu0 %v1471
      %v1636 = vpop.f32.mrb[0].mxu0
      %v1637 = vadd.f32 0.0, %v1636
      %v1638 = vpop.f32.mrb[0].mxu0
      %1639 = vmatprep.mubr.f32.mxu0 0.0
      %1640 = vmatmul.mubr.f32.gmra.mrb[0].mxu0 %v1474
      %v1641 = vpop.f32.mrb[0].mxu0
      %v1642 = vadd.f32 0.0, %v1641
      %v1643 = vpop.f32.mrb[0].mxu0
      %1644 = vmatprep.mubr.f32.mxu0 0.0
      %1645 = vmatmul.mubr.f32.gmra.mrb[0].mxu0 %v1477
      %v1646 = vpop.f32.mrb[0].mxu0
      %v1647 = vadd.f32 0.0, %v1646
      %v1648 = vpop.f32.mrb[0].mxu0
      %1649 = vmatprep.mubr.f32.mxu0 0.0
      %1650 = vmatmul.mubr.f32.gmra.mrb[0].mxu0 %v1480
      %v1651 = vpop.f32.mrb[0].mxu0
      %v1652 = vadd.f32 0.0, %v1651
      %v1653 = vpop.f32.mrb[0].mxu0
      %1654 = vmatprep.mubr.f32.mxu0 0.0
      %1655 = vmatmul.mubr.f32.gmra.mrb[0].mxu0 %v1483
      %v1656 = vpop.f32.mrb[0].mxu0
      %v1657 = vadd.f32 0.0, %v1656
      %v1658 = vpop.f32.mrb[0].mxu0
      %1659 = vmatprep.mubr.f32.mxu0 0.0
      %1660 = vmatmul.mubr.f32.gmra.mrb[0].mxu0 %v1486
      %v1661 = vpop.f32.mrb[0].mxu0
      %v1662 = vadd.f32 0.0, %v1661
      %v1663 = vpop.f32.mrb[0].mxu0
      %1664 = vmatprep.mubr.f32.mxu0 0.0
      %1665 = vmatmul.mubr.f32.gmra.mrb[0].mxu0 %v1489
      %v1666 = vpop.f32.mrb[0].mxu0
      %v1667 = vadd.f32 0.0, %v1666
      %v1668 = vpop.f32.mrb[0].mxu0
      %1669 = vmatprep.mubr.f32.mxu0 0.0
      %1670 = vmatmul.mubr.f32.gmra.mrb[0].mxu0 %v1492
      %v1671 = vpop.f32.mrb[0].mxu0
      %v1672 = vadd.f32 0.0, %v1671
      %v1673 = vpop.f32.mrb[0].mxu0
      %1674 = vmatprep.mubr.f32.mxu0 0.0
      %1675 = vmatmul.mubr.f32.gmra.mrb[0].mxu0 %v1495
      %v1676 = vpop.f32.mrb[0].mxu0
      %v1677 = vadd.f32 0.0, %v1676
      %v1678 = vpop.f32.mrb[0].mxu0
      %1679 = vmatprep.mubr.f32.mxu0 0.0
      %1680 = vmatmul.mubr.f32.gmra.mrb[0].mxu0 %v1498
      %v1681 = vpop.f32.mrb[0].mxu0
      %v1682 = vadd.f32 0.0, %v1681
      %v1683 = vpop.f32.mrb[0].mxu0
      %1684 = vmatprep.mubr.f32.mxu0 0.0
      %1685 = vmatmul.mubr.f32.gmra.mrb[0].mxu0 %v1501
      %v1686 = vpop.f32.mrb[0].mxu0
      %v1687 = vadd.f32 0.0, %v1686
      %v1688 = vpop.f32.mrb[0].mxu0
      %1689 = vmatprep.mubr.f32.mxu0 0.0
      %1690 = vmatmul.mubr.f32.gmra.mrb[0].mxu0 %v1504
      %v1691 = vpop.f32.mrb[0].mxu0
      %v1692 = vadd.f32 0.0, %v1691
      %v1693 = vpop.f32.mrb[0].mxu0
      %1694 = vmatprep.mubr.f32.mxu0 0.0
      %1695 = vmatmul.mubr.f32.gmra.mrb[0].mxu0 %v1507
      %v1696 = vpop.f32.mrb[0].mxu0
      %v1697 = vadd.f32 0.0, %v1696
      %v1698 = vpop.f32.mrb[0].mxu0
      %1699 = vmatprep.mubr.f32.mxu0 0.0
      %1700 = vmatmul.mubr.f32.gmra.mrb[0].mxu0 %v1510
      %v1701 = vpop.f32.mrb[0].mxu0
      %v1702 = vadd.f32 0.0, %v1701
      %v1703 = vpop.f32.mrb[0].mxu0
      %1704 = vmatprep.mubr.f32.mxu0 0.0
      %1705 = vmatmul.mubr.f32.gmra.mrb[0].mxu0 %v1513
      %v1706 = vpop.f32.mrb[0].mxu0
      %v1707 = vadd.f32 0.0, %v1706
      %v1708 = vpop.f32.mrb[0].mxu0
      %1709 = vmatprep.mubr.f32.mxu0 0.0
      %1710 = vmatmul.mubr.f32.gmra.mrb[0].mxu0 %v1516
      %v1711 = vpop.f32.mrb[0].mxu0
      %v1712 = vadd.f32 0.0, %v1711
      %v1713 = vpop.f32.mrb[0].mxu0
      %1714 = vmatprep.mubr.f32.mxu0 0.0
      %1715 = vmatmul.mubr.f32.gmra.mrb[0].mxu0 %v1519
      %v1716 = vpop.f32.mrb[0].mxu0
      %v1717 = vadd.f32 0.0, %v1716
      %v1718 = vpop.f32.mrb[0].mxu0
      %1719 = vmatprep.mubr.f32.mxu0 0.0
      %1720 = vmatmul.mubr.f32.gmra.mrb[0].mxu0 %v1522
      %v1721 = vpop.f32.mrb[0].mxu0
      %v1722 = vadd.f32 0.0, %v1721
      %v1723 = vpop.f32.mrb[0].mxu0
      %1724 = vmatprep.mubr.f32.mxu0 0.0
      %1725 = vmatmul.mubr.f32.gmra.mrb[0].mxu0 %v1525
      %v1726 = vpop.f32.mrb[0].mxu0
      %v1727 = vadd.f32 0.0, %v1726
      %v1728 = vpop.f32.mrb[0].mxu0
      %1729 = vmatprep.mubr.f32.mxu0 0.0
      %1730 = vmatmul.mubr.f32.gmra.mrb[0].mxu0 %v1528
      %v1731 = vpop.f32.mrb[0].mxu0
      %v1732 = vadd.f32 0.0, %v1731
      %v1733 = vpop.f32.mrb[0].mxu0
      %1734 = vmatprep.mubr.f32.mxu0 0.0
      %1735 = vmatmul.mubr.f32.gmra.mrb[0].mxu0 %v1531
      %v1736 = vpop.f32.mrb[0].mxu0
      %v1737 = vadd.f32 0.0, %v1736
      %v1738 = vpop.f32.mrb[0].mxu0
      %1739 = vmatprep.mubr.f32.mxu0 0.0
      %1740 = vmatmul.mubr.f32.gmra.mrb[0].mxu0 %v1534
      %v1741 = vpop.f32.mrb[0].mxu0
      %v1742 = vadd.f32 0.0, %v1741
      %v1743 = vpop.f32.mrb[0].mxu0
      %1744 = vmatprep.mubr.f32.mxu0 0.0
      %1745 = vmatmul.mubr.f32.gmra.mrb[0].mxu0 %v1537
      %v1746 = vpop.f32.mrb[0].mxu0
      %v1747 = vadd.f32 0.0, %v1746
      %v1748 = vpop.f32.mrb[0].mxu0
      %1749 = vmatprep.mubr.f32.mxu0 0.0
      %1750 = vmatmul.mubr.f32.gmra.mrb[0].mxu0 %v1540
      %v1751 = vpop.f32.mrb[0].mxu0
      %v1752 = vadd.f32 0.0, %v1751
      %v1753 = vpop.f32.mrb[0].mxu0
      %1754 = vmatprep.mubr.f32.mxu0 0.0
      %1755 = vmatmul.mubr.f32.gmra.mrb[0].mxu0 %v1543
      %v1756 = vpop.f32.mrb[0].mxu0
      %v1757 = vadd.f32 0.0, %v1756
      %v1758 = vpop.f32.mrb[0].mxu0
      %1759 = vmatprep.mubr.f32.mxu0 0.0
      %1760 = vmatmul.mubr.f32.gmra.mrb[0].mxu0 %v1546
      %v1761 = vpop.f32.mrb[0].mxu0
      %v1762 = vadd.f32 0.0, %v1761
      %v1763 = vpop.f32.mrb[0].mxu0
      %1764 = vmatprep.mubr.f32.mxu0 0.0
      %1765 = vmatmul.mubr.f32.gmra.mrb[0].mxu0 %v1549
      %v1766 = vpop.f32.mrb[0].mxu0
      %v1767 = vadd.f32 0.0, %v1766
      %v1768 = vpop.f32.mrb[0].mxu0
      %1769 = vmatprep.mubr.f32.mxu0 0.0
      %1770 = vmatmul.mubr.f32.gmra.mrb[0].mxu0 %v1552
      %v1771 = vpop.f32.mrb[0].mxu0
      %v1772 = vadd.f32 0.0, %v1771
      %v1773 = vpop.f32.mrb[0].mxu0
      %1774 = vmatprep.mubr.f32.mxu0 0.0
      %1775 = vmatmul.mubr.f32.gmra.mrb[0].mxu0 %v1555
      %v1776 = vpop.f32.mrb[0].mxu0
      %v1777 = vadd.f32 0.0, %v1776
      %v1778 = vpop.f32.mrb[0].mxu0
      %1779 = vmatprep.mubr.f32.mxu0 0.0
      %1780 = vmatmul.mubr.f32.gmra.mrb[0].mxu0 %v1558
      %v1781 = vpop.f32.mrb[0].mxu0
      %v1782 = vadd.f32 0.0, %v1781
      %v1783 = vpop.f32.mrb[0].mxu0
      %1784 = vdwg.mxu0
      %v1785 = vadd.f32 %v1432, %v1627
      %v1786 = vadd.f32 %v1433, %v1632
      %v1787 = vadd.f32 %v1434, %v1637
      %v1788 = vadd.f32 %v1435, %v1642
      %v1789 = vadd.f32 %v1436, %v1647
      %v1790 = vadd.f32 %v1437, %v1652
      %v1791 = vadd.f32 %v1438, %v1657
      %v1792 = vadd.f32 %v1439, %v1662
      %v1793 = vadd.f32 %v1440, %v1667
      %v1794 = vadd.f32 %v1441, %v1672
      %v1795 = vadd.f32 %v1442, %v1677
      %v1796 = vadd.f32 %v1443, %v1682
      %v1797 = vadd.f32 %v1444, %v1687
      %v1798 = vadd.f32 %v1445, %v1692
      %v1799 = vadd.f32 %v1446, %v1697
      %v1800 = vadd.f32 %v1447, %v1702
      %v1801 = vadd.f32 %v1448, %v1707
      %v1802 = vadd.f32 %v1449, %v1712
      %v1803 = vadd.f32 %v1450, %v1717
      %v1804 = vadd.f32 %v1451, %v1722
      %v1805 = vadd.f32 %v1452, %v1727
      %v1806 = vadd.f32 %v1453, %v1732
      %v1807 = vadd.f32 %v1454, %v1737
      %v1808 = vadd.f32 %v1455, %v1742
      %v1809 = vadd.f32 %v1456, %v1747
      %v1810 = vadd.f32 %v1457, %v1752
      %v1811 = vadd.f32 %v1458, %v1757
      %v1812 = vadd.f32 %v1459, %v1762
      %v1813 = vadd.f32 %v1460, %v1767
      %v1814 = vadd.f32 %v1461, %v1772
      %v1815 = vadd.f32 %v1462, %v1777
      %v1816 = vadd.f32 %v1463, %v1782
      %1817 = vst.msk [vmem:[#allocation3] sm:$0xff] %vm378, %v1785
      %1818 = vst.msk [vmem:[#allocation3 + $0x8] sm:$0xff] %vm378, %v1786
      %1819 = vst.msk [vmem:[#allocation3 + $0x10] sm:$0xff] %vm378, %v1787
      %1820 = vst.msk [vmem:[#allocation3 + $0x18] sm:$0xff] %vm378, %v1788
      %1821 = vst.msk [vmem:[#allocation3 + $0x20] sm:$0xff] %vm378, %v1789
      %1822 = vst.msk [vmem:[#allocation3 + $0x28] sm:$0xff] %vm378, %v1790
      %1823 = vst.msk [vmem:[#allocation3 + $0x30] sm:$0xff] %vm378, %v1791
      %1824 = vst.msk [vmem:[#allocation3 + $0x38] sm:$0xff] %vm378, %v1792
      %1825 = vst.msk [vmem:[#allocation3 + $0x40] sm:$0xff] %vm378, %v1793
      %1826 = vst.msk [vmem:[#allocation3 + $0x48] sm:$0xff] %vm378, %v1794
      %1827 = vst.msk [vmem:[#allocation3 + $0x50] sm:$0xff] %vm378, %v1795
      %1828 = vst.msk [vmem:[#allocation3 + $0x58] sm:$0xff] %vm378, %v1796
      %1829 = vst.msk [vmem:[#allocation3 + $0x60] sm:$0xff] %vm378, %v1797
      %1830 = vst.msk [vmem:[#allocation3 + $0x68] sm:$0xff] %vm378, %v1798
      %1831 = vst.msk [vmem:[#allocation3 + $0x70] sm:$0xff] %vm378, %v1799
      %1832 = vst.msk [vmem:[#allocation3 + $0x78] sm:$0xff] %vm378, %v1800
      %1833 = vst.msk [vmem:[#allocation3 + $0x80] sm:$0xff] %vm378, %v1801
      %1834 = vst.msk [vmem:[#allocation3 + $0x88] sm:$0xff] %vm378, %v1802
      %1835 = vst.msk [vmem:[#allocation3 + $0x90] sm:$0xff] %vm378, %v1803
      %1836 = vst.msk [vmem:[#allocation3 + $0x98] sm:$0xff] %vm378, %v1804
      %1837 = vst.msk [vmem:[#allocation3 + $0xa0] sm:$0xff] %vm378, %v1805
      %1838 = vst.msk [vmem:[#allocation3 + $0xa8] sm:$0xff] %vm378, %v1806
      %1839 = vst.msk [vmem:[#allocation3 + $0xb0] sm:$0xff] %vm378, %v1807
      %1840 = vst.msk [vmem:[#allocation3 + $0xb8] sm:$0xff] %vm378, %v1808
      %1841 = vst.msk [vmem:[#allocation3 + $0xc0] sm:$0xff] %vm378, %v1809
      %1842 = vst.msk [vmem:[#allocation3 + $0xc8] sm:$0xff] %vm378, %v1810
      %1843 = vst.msk [vmem:[#allocation3 + $0xd0] sm:$0xff] %vm378, %v1811
      %1844 = vst.msk [vmem:[#allocation3 + $0xd8] sm:$0xff] %vm378, %v1812
      %1845 = vst.msk [vmem:[#allocation3 + $0xe0] sm:$0xff] %vm378, %v1813
      %1846 = vst.msk [vmem:[#allocation3 + $0xe8] sm:$0xff] %vm378, %v1814
      %1847 = vst.msk [vmem:[#allocation3 + $0xf0] sm:$0xff] %vm378, %v1815
      %1848 = vst.msk [vmem:[#allocation3 + $0xf8] sm:$0xff] %vm378, %v1816
      %v1849 = vld [vmem:[%s434] sm:$0xff]
      %v1850 = vld [vmem:[%s434 + $0x8] sm:$0xff]
      %v1851 = vld [vmem:[%s434 + $0x18] sm:$0xff]
      %v1852 = vld [vmem:[%s434 + $0x20] sm:$0xff]
      %v1853 = vld [vmem:[%s434 + $0x30] sm:$0xff]
      %v1854 = vld [vmem:[%s434 + $0x38] sm:$0xff]
      %v1855 = vld [vmem:[%s434 + $0x48] sm:$0xff]
      %v1856 = vld [vmem:[%s434 + $0x50] sm:$0xff]
      %v1857 = vld [vmem:[%s434 + $0x60] sm:$0xff]
      %v1858 = vld [vmem:[%s434 + $0x68] sm:$0xff]
      %v1859 = vld [vmem:[%s434 + $0x78] sm:$0xff]
      %v1860 = vld [vmem:[%s434 + $0x80] sm:$0xff]
      %v1861 = vld [vmem:[%s434 + $0x90] sm:$0xff]
      %v1862 = vld [vmem:[%s434 + $0x98] sm:$0xff]
      %v1863 = vld [vmem:[%s434 + $0xa8] sm:$0xff]
      %v1864 = vld [vmem:[%s434 + $0xb0] sm:$0xff]
      %v1865 = vld [vmem:[%s434 + $0xc0] sm:$0xff]
      %v1866 = vld [vmem:[%s434 + $0xc8] sm:$0xff]
      %v1867 = vld [vmem:[%s434 + $0xd8] sm:$0xff]
      %v1868 = vld [vmem:[%s434 + $0xe0] sm:$0xff]
      %v1869 = vld [vmem:[%s434 + $0xf0] sm:$0xff]
      %v1870 = vld [vmem:[%s434 + $0xf8] sm:$0xff]
      %v1871 = vld [vmem:[%s434 + $0x108] sm:$0xff]
      %v1872 = vld [vmem:[%s434 + $0x110] sm:$0xff]
      %v1873 = vld [vmem:[%s434 + $0x120] sm:$0xff]
      %v1874 = vld [vmem:[%s434 + $0x128] sm:$0xff]
      %v1875 = vld [vmem:[%s434 + $0x138] sm:$0xff]
      %v1876 = vld [vmem:[%s434 + $0x140] sm:$0xff]
      %v1877 = vld [vmem:[%s434 + $0x150] sm:$0xff]
      %v1878 = vld [vmem:[%s434 + $0x158] sm:$0xff]
      %v1879 = vld [vmem:[%s434 + $0x168] sm:$0xff]
      %v1880 = vld [vmem:[%s434 + $0x170] sm:$0xff]
      %v1881 = vld [vmem:[%s3 + $0x18] sm:$0xff]
      %v1882 = vld [vmem:[#allocation3] sm:$0xff]
      %v1883 = vld [vmem:[#allocation3 + $0x8] sm:$0xff]
      %v1884 = vld [vmem:[#allocation3 + $0x10] sm:$0xff]
      %v1885 = vld [vmem:[#allocation3 + $0x18] sm:$0xff]
      %v1886 = vld [vmem:[#allocation3 + $0x20] sm:$0xff]
      %v1887 = vld [vmem:[#allocation3 + $0x28] sm:$0xff]
      %v1888 = vld [vmem:[#allocation3 + $0x30] sm:$0xff]
      %v1889 = vld [vmem:[#allocation3 + $0x38] sm:$0xff]
      %v1890 = vld [vmem:[#allocation3 + $0x40] sm:$0xff]
      %v1891 = vld [vmem:[#allocation3 + $0x48] sm:$0xff]
      %v1892 = vld [vmem:[#allocation3 + $0x50] sm:$0xff]
      %v1893 = vld [vmem:[#allocation3 + $0x58] sm:$0xff]
      %v1894 = vld [vmem:[#allocation3 + $0x60] sm:$0xff]
      %v1895 = vld [vmem:[#allocation3 + $0x68] sm:$0xff]
      %v1896 = vld [vmem:[#allocation3 + $0x70] sm:$0xff]
      %v1897 = vld [vmem:[#allocation3 + $0x78] sm:$0xff]
      %v1898 = vld [vmem:[#allocation3 + $0x80] sm:$0xff]
      %v1899 = vld [vmem:[#allocation3 + $0x88] sm:$0xff]
      %v1900 = vld [vmem:[#allocation3 + $0x90] sm:$0xff]
      %v1901 = vld [vmem:[#allocation3 + $0x98] sm:$0xff]
      %v1902 = vld [vmem:[#allocation3 + $0xa0] sm:$0xff]
      %v1903 = vld [vmem:[#allocation3 + $0xa8] sm:$0xff]
      %v1904 = vld [vmem:[#allocation3 + $0xb0] sm:$0xff]
      %v1905 = vld [vmem:[#allocation3 + $0xb8] sm:$0xff]
      %v1906 = vld [vmem:[#allocation3 + $0xc0] sm:$0xff]
      %v1907 = vld [vmem:[#allocation3 + $0xc8] sm:$0xff]
      %v1908 = vld [vmem:[#allocation3 + $0xd0] sm:$0xff]
      %v1909 = vld [vmem:[#allocation3 + $0xd8] sm:$0xff]
      %v1910 = vld [vmem:[#allocation3 + $0xe0] sm:$0xff]
      %v1911 = vld [vmem:[#allocation3 + $0xe8] sm:$0xff]
      %v1912 = vld [vmem:[#allocation3 + $0xf0] sm:$0xff]
      %v1913 = vld [vmem:[#allocation3 + $0xf8] sm:$0xff]
      %v1915 = vsel %vm378, %v1849, 0
      %v1918 = vsel %vm378, %v1850, 0
      %v1921 = vsel %vm378, %v1851, 0
      %v1924 = vsel %vm378, %v1852, 0
      %v1927 = vsel %vm378, %v1853, 0
      %v1930 = vsel %vm378, %v1854, 0
      %v1933 = vsel %vm378, %v1855, 0
      %v1936 = vsel %vm378, %v1856, 0
      %v1939 = vsel %vm378, %v1857, 0
      %v1942 = vsel %vm378, %v1858, 0
      %v1945 = vsel %vm378, %v1859, 0
      %v1948 = vsel %vm378, %v1860, 0
      %v1951 = vsel %vm378, %v1861, 0
      %v1954 = vsel %vm378, %v1862, 0
      %v1957 = vsel %vm378, %v1863, 0
      %v1960 = vsel %vm378, %v1864, 0
      %v1963 = vsel %vm378, %v1865, 0
      %v1966 = vsel %vm378, %v1866, 0
      %v1969 = vsel %vm378, %v1867, 0
      %v1972 = vsel %vm378, %v1868, 0
      %v1975 = vsel %vm378, %v1869, 0
      %v1978 = vsel %vm378, %v1870, 0
      %v1981 = vsel %vm378, %v1871, 0
      %v1984 = vsel %vm378, %v1872, 0
      %v1987 = vsel %vm378, %v1873, 0
      %v1990 = vsel %vm378, %v1874, 0
      %v1993 = vsel %vm378, %v1875, 0
      %v1996 = vsel %vm378, %v1876, 0
      %v1999 = vsel %vm378, %v1877, 0
      %v2002 = vsel %vm378, %v1878, 0
      %v2005 = vsel %vm378, %v1879, 0
      %v2008 = vsel %vm378, %v1880, 0
      %2010 = vmatprep.subr.mxu0 0.0
      %2011 = vmatpush1.msra.mxu0 %v1881
      %2012 = vmatprep.subr.mxu0 0.0
      %2013 = vmatpush1.msra.mxu0 0.0
      %2014 = vmatprep.subr.mxu0 0.0
      %2015 = vmatpush1.msra.mxu0 0.0
      %2016 = vmatprep.subr.mxu0 0.0
      %2017 = vmatpush1.msra.mxu0 0.0
      %2018 = vmatprep.subr.mxu0 0.0
      %2019 = vmatpush1.msra.mxu0 0.0
      %2020 = vmatprep.subr.mxu0 0.0
      %2021 = vmatpush1.msra.mxu0 0.0
      %2022 = vmatprep.subr.mxu0 0.0
      %2023 = vmatpush1.msra.mxu0 0.0
      %2024 = vmatprep.subr.mxu0 0.0
      %2025 = vmatpush1.msra.mxu0 0.0
      %2026 = vmatprep.subr.mxu0 0.0
      %2027 = vmatpush1.msra.mxu0 0.0
      %2028 = vmatprep.subr.mxu0 0.0
      %2029 = vmatpush1.msra.mxu0 0.0
      %2030 = vmatprep.subr.mxu0 0.0
      %2031 = vmatpush1.msra.mxu0 0.0
      %2032 = vmatprep.subr.mxu0 0.0
      %2033 = vmatpush1.msra.mxu0 0.0
      %2034 = vmatprep.subr.mxu0 0.0
      %2035 = vmatpush1.msra.mxu0 0.0
      %2036 = vmatprep.subr.mxu0 0.0
      %2037 = vmatpush1.msra.mxu0 0.0
      %2038 = vmatprep.subr.mxu0 0.0
      %2039 = vmatpush1.msra.mxu0 0.0
      %2040 = vmatprep.subr.mxu0 0.0
      %2041 = vmatpush1.msra.mxu0 0.0
      %2042 = vmatprep.subr.mxu0 0.0
      %2043 = vmatpush1.msra.mxu0 0.0
      %2044 = vmatprep.subr.mxu0 0.0
      %2045 = vmatpush1.msra.mxu0 0.0
      %2046 = vmatprep.subr.mxu0 0.0
      %2047 = vmatpush1.msra.mxu0 0.0
      %2048 = vmatprep.subr.mxu0 0.0
      %2049 = vmatpush1.msra.mxu0 0.0
      %2050 = vmatprep.subr.mxu0 0.0
      %2051 = vmatpush1.msra.mxu0 0.0
      %2052 = vmatprep.subr.mxu0 0.0
      %2053 = vmatpush1.msra.mxu0 0.0
      %2054 = vmatprep.subr.mxu0 0.0
      %2055 = vmatpush1.msra.mxu0 0.0
      %2056 = vmatprep.subr.mxu0 0.0
      %2057 = vmatpush1.msra.mxu0 0.0
      %2058 = vmatprep.subr.mxu0 0.0
      %2059 = vmatpush1.msra.mxu0 0.0
      %2060 = vmatprep.subr.mxu0 0.0
      %2061 = vmatpush1.msra.mxu0 0.0
      %2062 = vmatprep.subr.mxu0 0.0
      %2063 = vmatpush1.msra.mxu0 0.0
      %2064 = vmatprep.subr.mxu0 0.0
      %2065 = vmatpush1.msra.mxu0 0.0
      %2066 = vmatprep.subr.mxu0 0.0
      %2067 = vmatpush1.msra.mxu0 0.0
      %2068 = vmatprep.subr.mxu0 0.0
      %2069 = vmatpush1.msra.mxu0 0.0
      %2070 = vmatprep.subr.mxu0 0.0
      %2071 = vmatpush1.msra.mxu0 0.0
      %2072 = vmatprep.subr.mxu0 0.0
      %2073 = vmatpush1.msra.mxu0 0.0
      %2074 = vmatprep.mubr.f32.mxu0 0.0
      %2075 = vmatmul.mubr.f32.gmra.mrb[0].mxu0 %v1915
      %v2076 = vpop.f32.mrb[0].mxu0
      %v2077 = vadd.f32 0.0, %v2076
      %v2078 = vpop.f32.mrb[0].mxu0
      %2079 = vmatprep.mubr.f32.mxu0 0.0
      %2080 = vmatmul.mubr.f32.gmra.mrb[0].mxu0 %v1918
      %v2081 = vpop.f32.mrb[0].mxu0
      %v2082 = vadd.f32 0.0, %v2081
      %v2083 = vpop.f32.mrb[0].mxu0
      %2084 = vmatprep.mubr.f32.mxu0 0.0
      %2085 = vmatmul.mubr.f32.gmra.mrb[0].mxu0 %v1921
      %v2086 = vpop.f32.mrb[0].mxu0
      %v2087 = vadd.f32 0.0, %v2086
      %v2088 = vpop.f32.mrb[0].mxu0
      %2089 = vmatprep.mubr.f32.mxu0 0.0
      %2090 = vmatmul.mubr.f32.gmra.mrb[0].mxu0 %v1924
      %v2091 = vpop.f32.mrb[0].mxu0
      %v2092 = vadd.f32 0.0, %v2091
      %v2093 = vpop.f32.mrb[0].mxu0
      %2094 = vmatprep.mubr.f32.mxu0 0.0
      %2095 = vmatmul.mubr.f32.gmra.mrb[0].mxu0 %v1927
      %v2096 = vpop.f32.mrb[0].mxu0
      %v2097 = vadd.f32 0.0, %v2096
      %v2098 = vpop.f32.mrb[0].mxu0
      %2099 = vmatprep.mubr.f32.mxu0 0.0
      %2100 = vmatmul.mubr.f32.gmra.mrb[0].mxu0 %v1930
      %v2101 = vpop.f32.mrb[0].mxu0
      %v2102 = vadd.f32 0.0, %v2101
      %v2103 = vpop.f32.mrb[0].mxu0
      %2104 = vmatprep.mubr.f32.mxu0 0.0
      %2105 = vmatmul.mubr.f32.gmra.mrb[0].mxu0 %v1933
      %v2106 = vpop.f32.mrb[0].mxu0
      %v2107 = vadd.f32 0.0, %v2106
      %v2108 = vpop.f32.mrb[0].mxu0
      %2109 = vmatprep.mubr.f32.mxu0 0.0
      %2110 = vmatmul.mubr.f32.gmra.mrb[0].mxu0 %v1936
      %v2111 = vpop.f32.mrb[0].mxu0
      %v2112 = vadd.f32 0.0, %v2111
      %v2113 = vpop.f32.mrb[0].mxu0
      %2114 = vmatprep.mubr.f32.mxu0 0.0
      %2115 = vmatmul.mubr.f32.gmra.mrb[0].mxu0 %v1939
      %v2116 = vpop.f32.mrb[0].mxu0
      %v2117 = vadd.f32 0.0, %v2116
      %v2118 = vpop.f32.mrb[0].mxu0
      %2119 = vmatprep.mubr.f32.mxu0 0.0
      %2120 = vmatmul.mubr.f32.gmra.mrb[0].mxu0 %v1942
      %v2121 = vpop.f32.mrb[0].mxu0
      %v2122 = vadd.f32 0.0, %v2121
      %v2123 = vpop.f32.mrb[0].mxu0
      %2124 = vmatprep.mubr.f32.mxu0 0.0
      %2125 = vmatmul.mubr.f32.gmra.mrb[0].mxu0 %v1945
      %v2126 = vpop.f32.mrb[0].mxu0
      %v2127 = vadd.f32 0.0, %v2126
      %v2128 = vpop.f32.mrb[0].mxu0
      %2129 = vmatprep.mubr.f32.mxu0 0.0
      %2130 = vmatmul.mubr.f32.gmra.mrb[0].mxu0 %v1948
      %v2131 = vpop.f32.mrb[0].mxu0
      %v2132 = vadd.f32 0.0, %v2131
      %v2133 = vpop.f32.mrb[0].mxu0
      %2134 = vmatprep.mubr.f32.mxu0 0.0
      %2135 = vmatmul.mubr.f32.gmra.mrb[0].mxu0 %v1951
      %v2136 = vpop.f32.mrb[0].mxu0
      %v2137 = vadd.f32 0.0, %v2136
      %v2138 = vpop.f32.mrb[0].mxu0
      %2139 = vmatprep.mubr.f32.mxu0 0.0
      %2140 = vmatmul.mubr.f32.gmra.mrb[0].mxu0 %v1954
      %v2141 = vpop.f32.mrb[0].mxu0
      %v2142 = vadd.f32 0.0, %v2141
      %v2143 = vpop.f32.mrb[0].mxu0
      %2144 = vmatprep.mubr.f32.mxu0 0.0
      %2145 = vmatmul.mubr.f32.gmra.mrb[0].mxu0 %v1957
      %v2146 = vpop.f32.mrb[0].mxu0
      %v2147 = vadd.f32 0.0, %v2146
      %v2148 = vpop.f32.mrb[0].mxu0
      %2149 = vmatprep.mubr.f32.mxu0 0.0
      %2150 = vmatmul.mubr.f32.gmra.mrb[0].mxu0 %v1960
      %v2151 = vpop.f32.mrb[0].mxu0
      %v2152 = vadd.f32 0.0, %v2151
      %v2153 = vpop.f32.mrb[0].mxu0
      %2154 = vmatprep.mubr.f32.mxu0 0.0
      %2155 = vmatmul.mubr.f32.gmra.mrb[0].mxu0 %v1963
      %v2156 = vpop.f32.mrb[0].mxu0
      %v2157 = vadd.f32 0.0, %v2156
      %v2158 = vpop.f32.mrb[0].mxu0
      %2159 = vmatprep.mubr.f32.mxu0 0.0
      %2160 = vmatmul.mubr.f32.gmra.mrb[0].mxu0 %v1966
      %v2161 = vpop.f32.mrb[0].mxu0
      %v2162 = vadd.f32 0.0, %v2161
      %v2163 = vpop.f32.mrb[0].mxu0
      %2164 = vmatprep.mubr.f32.mxu0 0.0
      %2165 = vmatmul.mubr.f32.gmra.mrb[0].mxu0 %v1969
      %v2166 = vpop.f32.mrb[0].mxu0
      %v2167 = vadd.f32 0.0, %v2166
      %v2168 = vpop.f32.mrb[0].mxu0
      %2169 = vmatprep.mubr.f32.mxu0 0.0
      %2170 = vmatmul.mubr.f32.gmra.mrb[0].mxu0 %v1972
      %v2171 = vpop.f32.mrb[0].mxu0
      %v2172 = vadd.f32 0.0, %v2171
      %v2173 = vpop.f32.mrb[0].mxu0
      %2174 = vmatprep.mubr.f32.mxu0 0.0
      %2175 = vmatmul.mubr.f32.gmra.mrb[0].mxu0 %v1975
      %v2176 = vpop.f32.mrb[0].mxu0
      %v2177 = vadd.f32 0.0, %v2176
      %v2178 = vpop.f32.mrb[0].mxu0
      %2179 = vmatprep.mubr.f32.mxu0 0.0
      %2180 = vmatmul.mubr.f32.gmra.mrb[0].mxu0 %v1978
      %v2181 = vpop.f32.mrb[0].mxu0
      %v2182 = vadd.f32 0.0, %v2181
      %v2183 = vpop.f32.mrb[0].mxu0
      %2184 = vmatprep.mubr.f32.mxu0 0.0
      %2185 = vmatmul.mubr.f32.gmra.mrb[0].mxu0 %v1981
      %v2186 = vpop.f32.mrb[0].mxu0
      %v2187 = vadd.f32 0.0, %v2186
      %v2188 = vpop.f32.mrb[0].mxu0
      %2189 = vmatprep.mubr.f32.mxu0 0.0
      %2190 = vmatmul.mubr.f32.gmra.mrb[0].mxu0 %v1984
      %v2191 = vpop.f32.mrb[0].mxu0
      %v2192 = vadd.f32 0.0, %v2191
      %v2193 = vpop.f32.mrb[0].mxu0
      %2194 = vmatprep.mubr.f32.mxu0 0.0
      %2195 = vmatmul.mubr.f32.gmra.mrb[0].mxu0 %v1987
      %v2196 = vpop.f32.mrb[0].mxu0
      %v2197 = vadd.f32 0.0, %v2196
      %v2198 = vpop.f32.mrb[0].mxu0
      %2199 = vmatprep.mubr.f32.mxu0 0.0
      %2200 = vmatmul.mubr.f32.gmra.mrb[0].mxu0 %v1990
      %v2201 = vpop.f32.mrb[0].mxu0
      %v2202 = vadd.f32 0.0, %v2201
      %v2203 = vpop.f32.mrb[0].mxu0
      %2204 = vmatprep.mubr.f32.mxu0 0.0
      %2205 = vmatmul.mubr.f32.gmra.mrb[0].mxu0 %v1993
      %v2206 = vpop.f32.mrb[0].mxu0
      %v2207 = vadd.f32 0.0, %v2206
      %v2208 = vpop.f32.mrb[0].mxu0
      %2209 = vmatprep.mubr.f32.mxu0 0.0
      %2210 = vmatmul.mubr.f32.gmra.mrb[0].mxu0 %v1996
      %v2211 = vpop.f32.mrb[0].mxu0
      %v2212 = vadd.f32 0.0, %v2211
      %v2213 = vpop.f32.mrb[0].mxu0
      %2214 = vmatprep.mubr.f32.mxu0 0.0
      %2215 = vmatmul.mubr.f32.gmra.mrb[0].mxu0 %v1999
      %v2216 = vpop.f32.mrb[0].mxu0
      %v2217 = vadd.f32 0.0, %v2216
      %v2218 = vpop.f32.mrb[0].mxu0
      %2219 = vmatprep.mubr.f32.mxu0 0.0
      %2220 = vmatmul.mubr.f32.gmra.mrb[0].mxu0 %v2002
      %v2221 = vpop.f32.mrb[0].mxu0
      %v2222 = vadd.f32 0.0, %v2221
      %v2223 = vpop.f32.mrb[0].mxu0
      %2224 = vmatprep.mubr.f32.mxu0 0.0
      %2225 = vmatmul.mubr.f32.gmra.mrb[0].mxu0 %v2005
      %v2226 = vpop.f32.mrb[0].mxu0
      %v2227 = vadd.f32 0.0, %v2226
      %v2228 = vpop.f32.mrb[0].mxu0
      %2229 = vmatprep.mubr.f32.mxu0 0.0
      %2230 = vmatmul.mubr.f32.gmra.mrb[0].mxu0 %v2008
      %v2231 = vpop.f32.mrb[0].mxu0
      %v2232 = vadd.f32 0.0, %v2231
      %v2233 = vpop.f32.mrb[0].mxu0
      %2234 = vdwg.mxu0
      %v2235 = vadd.f32 %v1882, %v2077
      %v2236 = vadd.f32 %v1883, %v2082
      %v2237 = vadd.f32 %v1884, %v2087
      %v2238 = vadd.f32 %v1885, %v2092
      %v2239 = vadd.f32 %v1886, %v2097
      %v2240 = vadd.f32 %v1887, %v2102
      %v2241 = vadd.f32 %v1888, %v2107
      %v2242 = vadd.f32 %v1889, %v2112
      %v2243 = vadd.f32 %v1890, %v2117
      %v2244 = vadd.f32 %v1891, %v2122
      %v2245 = vadd.f32 %v1892, %v2127
      %v2246 = vadd.f32 %v1893, %v2132
      %v2247 = vadd.f32 %v1894, %v2137
      %v2248 = vadd.f32 %v1895, %v2142
      %v2249 = vadd.f32 %v1896, %v2147
      %v2250 = vadd.f32 %v1897, %v2152
      %v2251 = vadd.f32 %v1898, %v2157
      %v2252 = vadd.f32 %v1899, %v2162
      %v2253 = vadd.f32 %v1900, %v2167
      %v2254 = vadd.f32 %v1901, %v2172
      %v2255 = vadd.f32 %v1902, %v2177
      %v2256 = vadd.f32 %v1903, %v2182
      %v2257 = vadd.f32 %v1904, %v2187
      %v2258 = vadd.f32 %v1905, %v2192
      %v2259 = vadd.f32 %v1906, %v2197
      %v2260 = vadd.f32 %v1907, %v2202
      %v2261 = vadd.f32 %v1908, %v2207
      %v2262 = vadd.f32 %v1909, %v2212
      %v2263 = vadd.f32 %v1910, %v2217
      %v2264 = vadd.f32 %v1911, %v2222
      %v2265 = vadd.f32 %v1912, %v2227
      %v2266 = vadd.f32 %v1913, %v2232
      %2267 = vst.msk [vmem:[#allocation3] sm:$0xff] %vm378, %v2235
      %2268 = vst.msk [vmem:[#allocation3 + $0x8] sm:$0xff] %vm378, %v2236
      %2269 = vst.msk [vmem:[#allocation3 + $0x10] sm:$0xff] %vm378, %v2237
      %2270 = vst.msk [vmem:[#allocation3 + $0x18] sm:$0xff] %vm378, %v2238
      %2271 = vst.msk [vmem:[#allocation3 + $0x20] sm:$0xff] %vm378, %v2239
      %2272 = vst.msk [vmem:[#allocation3 + $0x28] sm:$0xff] %vm378, %v2240
      %2273 = vst.msk [vmem:[#allocation3 + $0x30] sm:$0xff] %vm378, %v2241
      %2274 = vst.msk [vmem:[#allocation3 + $0x38] sm:$0xff] %vm378, %v2242
      %2275 = vst.msk [vmem:[#allocation3 + $0x40] sm:$0xff] %vm378, %v2243
      %2276 = vst.msk [vmem:[#allocation3 + $0x48] sm:$0xff] %vm378, %v2244
      %2277 = vst.msk [vmem:[#allocation3 + $0x50] sm:$0xff] %vm378, %v2245
      %2278 = vst.msk [vmem:[#allocation3 + $0x58] sm:$0xff] %vm378, %v2246
      %2279 = vst.msk [vmem:[#allocation3 + $0x60] sm:$0xff] %vm378, %v2247
      %2280 = vst.msk [vmem:[#allocation3 + $0x68] sm:$0xff] %vm378, %v2248
      %2281 = vst.msk [vmem:[#allocation3 + $0x70] sm:$0xff] %vm378, %v2249
      %2282 = vst.msk [vmem:[#allocation3 + $0x78] sm:$0xff] %vm378, %v2250
      %2283 = vst.msk [vmem:[#allocation3 + $0x80] sm:$0xff] %vm378, %v2251
      %2284 = vst.msk [vmem:[#allocation3 + $0x88] sm:$0xff] %vm378, %v2252
      %2285 = vst.msk [vmem:[#allocation3 + $0x90] sm:$0xff] %vm378, %v2253
      %2286 = vst.msk [vmem:[#allocation3 + $0x98] sm:$0xff] %vm378, %v2254
      %2287 = vst.msk [vmem:[#allocation3 + $0xa0] sm:$0xff] %vm378, %v2255
      %2288 = vst.msk [vmem:[#allocation3 + $0xa8] sm:$0xff] %vm378, %v2256
      %2289 = vst.msk [vmem:[#allocation3 + $0xb0] sm:$0xff] %vm378, %v2257
      %2290 = vst.msk [vmem:[#allocation3 + $0xb8] sm:$0xff] %vm378, %v2258
      %2291 = vst.msk [vmem:[#allocation3 + $0xc0] sm:$0xff] %vm378, %v2259
      %2292 = vst.msk [vmem:[#allocation3 + $0xc8] sm:$0xff] %vm378, %v2260
      %2293 = vst.msk [vmem:[#allocation3 + $0xd0] sm:$0xff] %vm378, %v2261
      %2294 = vst.msk [vmem:[#allocation3 + $0xd8] sm:$0xff] %vm378, %v2262
      %2295 = vst.msk [vmem:[#allocation3 + $0xe0] sm:$0xff] %vm378, %v2263
      %2296 = vst.msk [vmem:[#allocation3 + $0xe8] sm:$0xff] %vm378, %v2264
      %2297 = vst.msk [vmem:[#allocation3 + $0xf0] sm:$0xff] %vm378, %v2265
      %2298 = vst.msk [vmem:[#allocation3 + $0xf8] sm:$0xff] %vm378, %v2266
      %v2299 = vld [vmem:[%s434 + $0x1] sm:$0xff]
      %v2300 = vld [vmem:[%s434 + $0x9] sm:$0xff]
      %v2301 = vld [vmem:[%s434 + $0x19] sm:$0xff]
      %v2302 = vld [vmem:[%s434 + $0x21] sm:$0xff]
      %v2303 = vld [vmem:[%s434 + $0x31] sm:$0xff]
      %v2304 = vld [vmem:[%s434 + $0x39] sm:$0xff]
      %v2305 = vld [vmem:[%s434 + $0x49] sm:$0xff]
      %v2306 = vld [vmem:[%s434 + $0x51] sm:$0xff]
      %v2307 = vld [vmem:[%s434 + $0x61] sm:$0xff]
      %v2308 = vld [vmem:[%s434 + $0x69] sm:$0xff]
      %v2309 = vld [vmem:[%s434 + $0x79] sm:$0xff]
      %v2310 = vld [vmem:[%s434 + $0x81] sm:$0xff]
      %v2311 = vld [vmem:[%s434 + $0x91] sm:$0xff]
      %v2312 = vld [vmem:[%s434 + $0x99] sm:$0xff]
      %v2313 = vld [vmem:[%s434 + $0xa9] sm:$0xff]
      %v2314 = vld [vmem:[%s434 + $0xb1] sm:$0xff]
      %v2315 = vld [vmem:[%s434 + $0xc1] sm:$0xff]
      %v2316 = vld [vmem:[%s434 + $0xc9] sm:$0xff]
      %v2317 = vld [vmem:[%s434 + $0xd9] sm:$0xff]
      %v2318 = vld [vmem:[%s434 + $0xe1] sm:$0xff]
      %v2319 = vld [vmem:[%s434 + $0xf1] sm:$0xff]
      %v2320 = vld [vmem:[%s434 + $0xf9] sm:$0xff]
      %v2321 = vld [vmem:[%s434 + $0x109] sm:$0xff]
      %v2322 = vld [vmem:[%s434 + $0x111] sm:$0xff]
      %v2323 = vld [vmem:[%s434 + $0x121] sm:$0xff]
      %v2324 = vld [vmem:[%s434 + $0x129] sm:$0xff]
      %v2325 = vld [vmem:[%s434 + $0x139] sm:$0xff]
      %v2326 = vld [vmem:[%s434 + $0x141] sm:$0xff]
      %v2327 = vld [vmem:[%s434 + $0x151] sm:$0xff]
      %v2328 = vld [vmem:[%s434 + $0x159] sm:$0xff]
      %v2329 = vld [vmem:[%s434 + $0x169] sm:$0xff]
      %v2330 = vld [vmem:[%s434 + $0x171] sm:$0xff]
      %v2331 = vld [vmem:[%s3 + $0x20] sm:$0xff]
      %v2332 = vld [vmem:[#allocation3] sm:$0xff]
      %v2333 = vld [vmem:[#allocation3 + $0x8] sm:$0xff]
      %v2334 = vld [vmem:[#allocation3 + $0x10] sm:$0xff]
      %v2335 = vld [vmem:[#allocation3 + $0x18] sm:$0xff]
      %v2336 = vld [vmem:[#allocation3 + $0x20] sm:$0xff]
      %v2337 = vld [vmem:[#allocation3 + $0x28] sm:$0xff]
      %v2338 = vld [vmem:[#allocation3 + $0x30] sm:$0xff]
      %v2339 = vld [vmem:[#allocation3 + $0x38] sm:$0xff]
      %v2340 = vld [vmem:[#allocation3 + $0x40] sm:$0xff]
      %v2341 = vld [vmem:[#allocation3 + $0x48] sm:$0xff]
      %v2342 = vld [vmem:[#allocation3 + $0x50] sm:$0xff]
      %v2343 = vld [vmem:[#allocation3 + $0x58] sm:$0xff]
      %v2344 = vld [vmem:[#allocation3 + $0x60] sm:$0xff]
      %v2345 = vld [vmem:[#allocation3 + $0x68] sm:$0xff]
      %v2346 = vld [vmem:[#allocation3 + $0x70] sm:$0xff]
      %v2347 = vld [vmem:[#allocation3 + $0x78] sm:$0xff]
      %v2348 = vld [vmem:[#allocation3 + $0x80] sm:$0xff]
      %v2349 = vld [vmem:[#allocation3 + $0x88] sm:$0xff]
      %v2350 = vld [vmem:[#allocation3 + $0x90] sm:$0xff]
      %v2351 = vld [vmem:[#allocation3 + $0x98] sm:$0xff]
      %v2352 = vld [vmem:[#allocation3 + $0xa0] sm:$0xff]
      %v2353 = vld [vmem:[#allocation3 + $0xa8] sm:$0xff]
      %v2354 = vld [vmem:[#allocation3 + $0xb0] sm:$0xff]
      %v2355 = vld [vmem:[#allocation3 + $0xb8] sm:$0xff]
      %v2356 = vld [vmem:[#allocation3 + $0xc0] sm:$0xff]
      %v2357 = vld [vmem:[#allocation3 + $0xc8] sm:$0xff]
      %v2358 = vld [vmem:[#allocation3 + $0xd0] sm:$0xff]
      %v2359 = vld [vmem:[#allocation3 + $0xd8] sm:$0xff]
      %v2360 = vld [vmem:[#allocation3 + $0xe0] sm:$0xff]
      %v2361 = vld [vmem:[#allocation3 + $0xe8] sm:$0xff]
      %v2362 = vld [vmem:[#allocation3 + $0xf0] sm:$0xff]
      %v2363 = vld [vmem:[#allocation3 + $0xf8] sm:$0xff]
      %v2365 = vsel %vm378, %v2299, 0
      %v2368 = vsel %vm378, %v2300, 0
      %v2371 = vsel %vm378, %v2301, 0
      %v2374 = vsel %vm378, %v2302, 0
      %v2377 = vsel %vm378, %v2303, 0
      %v2380 = vsel %vm378, %v2304, 0
      %v2383 = vsel %vm378, %v2305, 0
      %v2386 = vsel %vm378, %v2306, 0
      %v2389 = vsel %vm378, %v2307, 0
      %v2392 = vsel %vm378, %v2308, 0
      %v2395 = vsel %vm378, %v2309, 0
      %v2398 = vsel %vm378, %v2310, 0
      %v2401 = vsel %vm378, %v2311, 0
      %v2404 = vsel %vm378, %v2312, 0
      %v2407 = vsel %vm378, %v2313, 0
      %v2410 = vsel %vm378, %v2314, 0
      %v2413 = vsel %vm378, %v2315, 0
      %v2416 = vsel %vm378, %v2316, 0
      %v2419 = vsel %vm378, %v2317, 0
      %v2422 = vsel %vm378, %v2318, 0
      %v2425 = vsel %vm378, %v2319, 0
      %v2428 = vsel %vm378, %v2320, 0
      %v2431 = vsel %vm378, %v2321, 0
      %v2434 = vsel %vm378, %v2322, 0
      %v2437 = vsel %vm378, %v2323, 0
      %v2440 = vsel %vm378, %v2324, 0
      %v2443 = vsel %vm378, %v2325, 0
      %v2446 = vsel %vm378, %v2326, 0
      %v2449 = vsel %vm378, %v2327, 0
      %v2452 = vsel %vm378, %v2328, 0
      %v2455 = vsel %vm378, %v2329, 0
      %v2458 = vsel %vm378, %v2330, 0
      %2460 = vmatprep.subr.mxu0 0.0
      %2461 = vmatpush1.msra.mxu0 %v2331
      %2462 = vmatprep.subr.mxu0 0.0
      %2463 = vmatpush1.msra.mxu0 0.0
      %2464 = vmatprep.subr.mxu0 0.0
      %2465 = vmatpush1.msra.mxu0 0.0
      %2466 = vmatprep.subr.mxu0 0.0
      %2467 = vmatpush1.msra.mxu0 0.0
      %2468 = vmatprep.subr.mxu0 0.0
      %2469 = vmatpush1.msra.mxu0 0.0
      %2470 = vmatprep.subr.mxu0 0.0
      %2471 = vmatpush1.msra.mxu0 0.0
      %2472 = vmatprep.subr.mxu0 0.0
      %2473 = vmatpush1.msra.mxu0 0.0
      %2474 = vmatprep.subr.mxu0 0.0
      %2475 = vmatpush1.msra.mxu0 0.0
      %2476 = vmatprep.subr.mxu0 0.0
      %2477 = vmatpush1.msra.mxu0 0.0
      %2478 = vmatprep.subr.mxu0 0.0
      %2479 = vmatpush1.msra.mxu0 0.0
      %2480 = vmatprep.subr.mxu0 0.0
      %2481 = vmatpush1.msra.mxu0 0.0
      %2482 = vmatprep.subr.mxu0 0.0
      %2483 = vmatpush1.msra.mxu0 0.0
      %2484 = vmatprep.subr.mxu0 0.0
      %2485 = vmatpush1.msra.mxu0 0.0
      %2486 = vmatprep.subr.mxu0 0.0
      %2487 = vmatpush1.msra.mxu0 0.0
      %2488 = vmatprep.subr.mxu0 0.0
      %2489 = vmatpush1.msra.mxu0 0.0
      %2490 = vmatprep.subr.mxu0 0.0
      %2491 = vmatpush1.msra.mxu0 0.0
      %2492 = vmatprep.subr.mxu0 0.0
      %2493 = vmatpush1.msra.mxu0 0.0
      %2494 = vmatprep.subr.mxu0 0.0
      %2495 = vmatpush1.msra.mxu0 0.0
      %2496 = vmatprep.subr.mxu0 0.0
      %2497 = vmatpush1.msra.mxu0 0.0
      %2498 = vmatprep.subr.mxu0 0.0
      %2499 = vmatpush1.msra.mxu0 0.0
      %2500 = vmatprep.subr.mxu0 0.0
      %2501 = vmatpush1.msra.mxu0 0.0
      %2502 = vmatprep.subr.mxu0 0.0
      %2503 = vmatpush1.msra.mxu0 0.0
      %2504 = vmatprep.subr.mxu0 0.0
      %2505 = vmatpush1.msra.mxu0 0.0
      %2506 = vmatprep.subr.mxu0 0.0
      %2507 = vmatpush1.msra.mxu0 0.0
      %2508 = vmatprep.subr.mxu0 0.0
      %2509 = vmatpush1.msra.mxu0 0.0
      %2510 = vmatprep.subr.mxu0 0.0
      %2511 = vmatpush1.msra.mxu0 0.0
      %2512 = vmatprep.subr.mxu0 0.0
      %2513 = vmatpush1.msra.mxu0 0.0
      %2514 = vmatprep.subr.mxu0 0.0
      %2515 = vmatpush1.msra.mxu0 0.0
      %2516 = vmatprep.subr.mxu0 0.0
      %2517 = vmatpush1.msra.mxu0 0.0
      %2518 = vmatprep.subr.mxu0 0.0
      %2519 = vmatpush1.msra.mxu0 0.0
      %2520 = vmatprep.subr.mxu0 0.0
      %2521 = vmatpush1.msra.mxu0 0.0
      %2522 = vmatprep.subr.mxu0 0.0
      %2523 = vmatpush1.msra.mxu0 0.0
      %2524 = vmatprep.mubr.f32.mxu0 0.0
      %2525 = vmatmul.mubr.f32.gmra.mrb[0].mxu0 %v2365
      %v2526 = vpop.f32.mrb[0].mxu0
      %v2527 = vadd.f32 0.0, %v2526
      %v2528 = vpop.f32.mrb[0].mxu0
      %2529 = vmatprep.mubr.f32.mxu0 0.0
      %2530 = vmatmul.mubr.f32.gmra.mrb[0].mxu0 %v2368
      %v2531 = vpop.f32.mrb[0].mxu0
      %v2532 = vadd.f32 0.0, %v2531
      %v2533 = vpop.f32.mrb[0].mxu0
      %2534 = vmatprep.mubr.f32.mxu0 0.0
      %2535 = vmatmul.mubr.f32.gmra.mrb[0].mxu0 %v2371
      %v2536 = vpop.f32.mrb[0].mxu0
      %v2537 = vadd.f32 0.0, %v2536
      %v2538 = vpop.f32.mrb[0].mxu0
      %2539 = vmatprep.mubr.f32.mxu0 0.0
      %2540 = vmatmul.mubr.f32.gmra.mrb[0].mxu0 %v2374
      %v2541 = vpop.f32.mrb[0].mxu0
      %v2542 = vadd.f32 0.0, %v2541
      %v2543 = vpop.f32.mrb[0].mxu0
      %2544 = vmatprep.mubr.f32.mxu0 0.0
      %2545 = vmatmul.mubr.f32.gmra.mrb[0].mxu0 %v2377
      %v2546 = vpop.f32.mrb[0].mxu0
      %v2547 = vadd.f32 0.0, %v2546
      %v2548 = vpop.f32.mrb[0].mxu0
      %2549 = vmatprep.mubr.f32.mxu0 0.0
      %2550 = vmatmul.mubr.f32.gmra.mrb[0].mxu0 %v2380
      %v2551 = vpop.f32.mrb[0].mxu0
      %v2552 = vadd.f32 0.0, %v2551
      %v2553 = vpop.f32.mrb[0].mxu0
      %2554 = vmatprep.mubr.f32.mxu0 0.0
      %2555 = vmatmul.mubr.f32.gmra.mrb[0].mxu0 %v2383
      %v2556 = vpop.f32.mrb[0].mxu0
      %v2557 = vadd.f32 0.0, %v2556
      %v2558 = vpop.f32.mrb[0].mxu0
      %2559 = vmatprep.mubr.f32.mxu0 0.0
      %2560 = vmatmul.mubr.f32.gmra.mrb[0].mxu0 %v2386
      %v2561 = vpop.f32.mrb[0].mxu0
      %v2562 = vadd.f32 0.0, %v2561
      %v2563 = vpop.f32.mrb[0].mxu0
      %2564 = vmatprep.mubr.f32.mxu0 0.0
      %2565 = vmatmul.mubr.f32.gmra.mrb[0].mxu0 %v2389
      %v2566 = vpop.f32.mrb[0].mxu0
      %v2567 = vadd.f32 0.0, %v2566
      %v2568 = vpop.f32.mrb[0].mxu0
      %2569 = vmatprep.mubr.f32.mxu0 0.0
      %2570 = vmatmul.mubr.f32.gmra.mrb[0].mxu0 %v2392
      %v2571 = vpop.f32.mrb[0].mxu0
      %v2572 = vadd.f32 0.0, %v2571
      %v2573 = vpop.f32.mrb[0].mxu0
      %2574 = vmatprep.mubr.f32.mxu0 0.0
      %2575 = vmatmul.mubr.f32.gmra.mrb[0].mxu0 %v2395
      %v2576 = vpop.f32.mrb[0].mxu0
      %v2577 = vadd.f32 0.0, %v2576
      %v2578 = vpop.f32.mrb[0].mxu0
      %2579 = vmatprep.mubr.f32.mxu0 0.0
      %2580 = vmatmul.mubr.f32.gmra.mrb[0].mxu0 %v2398
      %v2581 = vpop.f32.mrb[0].mxu0
      %v2582 = vadd.f32 0.0, %v2581
      %v2583 = vpop.f32.mrb[0].mxu0
      %2584 = vmatprep.mubr.f32.mxu0 0.0
      %2585 = vmatmul.mubr.f32.gmra.mrb[0].mxu0 %v2401
      %v2586 = vpop.f32.mrb[0].mxu0
      %v2587 = vadd.f32 0.0, %v2586
      %v2588 = vpop.f32.mrb[0].mxu0
      %2589 = vmatprep.mubr.f32.mxu0 0.0
      %2590 = vmatmul.mubr.f32.gmra.mrb[0].mxu0 %v2404
      %v2591 = vpop.f32.mrb[0].mxu0
      %v2592 = vadd.f32 0.0, %v2591
      %v2593 = vpop.f32.mrb[0].mxu0
      %2594 = vmatprep.mubr.f32.mxu0 0.0
      %2595 = vmatmul.mubr.f32.gmra.mrb[0].mxu0 %v2407
      %v2596 = vpop.f32.mrb[0].mxu0
      %v2597 = vadd.f32 0.0, %v2596
      %v2598 = vpop.f32.mrb[0].mxu0
      %2599 = vmatprep.mubr.f32.mxu0 0.0
      %2600 = vmatmul.mubr.f32.gmra.mrb[0].mxu0 %v2410
      %v2601 = vpop.f32.mrb[0].mxu0
      %v2602 = vadd.f32 0.0, %v2601
      %v2603 = vpop.f32.mrb[0].mxu0
      %2604 = vmatprep.mubr.f32.mxu0 0.0
      %2605 = vmatmul.mubr.f32.gmra.mrb[0].mxu0 %v2413
      %v2606 = vpop.f32.mrb[0].mxu0
      %v2607 = vadd.f32 0.0, %v2606
      %v2608 = vpop.f32.mrb[0].mxu0
      %2609 = vmatprep.mubr.f32.mxu0 0.0
      %2610 = vmatmul.mubr.f32.gmra.mrb[0].mxu0 %v2416
      %v2611 = vpop.f32.mrb[0].mxu0
      %v2612 = vadd.f32 0.0, %v2611
      %v2613 = vpop.f32.mrb[0].mxu0
      %2614 = vmatprep.mubr.f32.mxu0 0.0
      %2615 = vmatmul.mubr.f32.gmra.mrb[0].mxu0 %v2419
      %v2616 = vpop.f32.mrb[0].mxu0
      %v2617 = vadd.f32 0.0, %v2616
      %v2618 = vpop.f32.mrb[0].mxu0
      %2619 = vmatprep.mubr.f32.mxu0 0.0
      %2620 = vmatmul.mubr.f32.gmra.mrb[0].mxu0 %v2422
      %v2621 = vpop.f32.mrb[0].mxu0
      %v2622 = vadd.f32 0.0, %v2621
      %v2623 = vpop.f32.mrb[0].mxu0
      %2624 = vmatprep.mubr.f32.mxu0 0.0
      %2625 = vmatmul.mubr.f32.gmra.mrb[0].mxu0 %v2425
      %v2626 = vpop.f32.mrb[0].mxu0
      %v2627 = vadd.f32 0.0, %v2626
      %v2628 = vpop.f32.mrb[0].mxu0
      %2629 = vmatprep.mubr.f32.mxu0 0.0
      %2630 = vmatmul.mubr.f32.gmra.mrb[0].mxu0 %v2428
      %v2631 = vpop.f32.mrb[0].mxu0
      %v2632 = vadd.f32 0.0, %v2631
      %v2633 = vpop.f32.mrb[0].mxu0
      %2634 = vmatprep.mubr.f32.mxu0 0.0
      %2635 = vmatmul.mubr.f32.gmra.mrb[0].mxu0 %v2431
      %v2636 = vpop.f32.mrb[0].mxu0
      %v2637 = vadd.f32 0.0, %v2636
      %v2638 = vpop.f32.mrb[0].mxu0
      %2639 = vmatprep.mubr.f32.mxu0 0.0
      %2640 = vmatmul.mubr.f32.gmra.mrb[0].mxu0 %v2434
      %v2641 = vpop.f32.mrb[0].mxu0
      %v2642 = vadd.f32 0.0, %v2641
      %v2643 = vpop.f32.mrb[0].mxu0
      %2644 = vmatprep.mubr.f32.mxu0 0.0
      %2645 = vmatmul.mubr.f32.gmra.mrb[0].mxu0 %v2437
      %v2646 = vpop.f32.mrb[0].mxu0
      %v2647 = vadd.f32 0.0, %v2646
      %v2648 = vpop.f32.mrb[0].mxu0
      %2649 = vmatprep.mubr.f32.mxu0 0.0
      %2650 = vmatmul.mubr.f32.gmra.mrb[0].mxu0 %v2440
      %v2651 = vpop.f32.mrb[0].mxu0
      %v2652 = vadd.f32 0.0, %v2651
      %v2653 = vpop.f32.mrb[0].mxu0
      %2654 = vmatprep.mubr.f32.mxu0 0.0
      %2655 = vmatmul.mubr.f32.gmra.mrb[0].mxu0 %v2443
      %v2656 = vpop.f32.mrb[0].mxu0
      %v2657 = vadd.f32 0.0, %v2656
      %v2658 = vpop.f32.mrb[0].mxu0
      %2659 = vmatprep.mubr.f32.mxu0 0.0
      %2660 = vmatmul.mubr.f32.gmra.mrb[0].mxu0 %v2446
      %v2661 = vpop.f32.mrb[0].mxu0
      %v2662 = vadd.f32 0.0, %v2661
      %v2663 = vpop.f32.mrb[0].mxu0
      %2664 = vmatprep.mubr.f32.mxu0 0.0
      %2665 = vmatmul.mubr.f32.gmra.mrb[0].mxu0 %v2449
      %v2666 = vpop.f32.mrb[0].mxu0
      %v2667 = vadd.f32 0.0, %v2666
      %v2668 = vpop.f32.mrb[0].mxu0
      %2669 = vmatprep.mubr.f32.mxu0 0.0
      %2670 = vmatmul.mubr.f32.gmra.mrb[0].mxu0 %v2452
      %v2671 = vpop.f32.mrb[0].mxu0
      %v2672 = vadd.f32 0.0, %v2671
      %v2673 = vpop.f32.mrb[0].mxu0
      %2674 = vmatprep.mubr.f32.mxu0 0.0
      %2675 = vmatmul.mubr.f32.gmra.mrb[0].mxu0 %v2455
      %v2676 = vpop.f32.mrb[0].mxu0
      %v2677 = vadd.f32 0.0, %v2676
      %v2678 = vpop.f32.mrb[0].mxu0
      %2679 = vmatprep.mubr.f32.mxu0 0.0
      %2680 = vmatmul.mubr.f32.gmra.mrb[0].mxu0 %v2458
      %v2681 = vpop.f32.mrb[0].mxu0
      %v2682 = vadd.f32 0.0, %v2681
      %v2683 = vpop.f32.mrb[0].mxu0
      %2684 = vdwg.mxu0
      %v2685 = vadd.f32 %v2332, %v2527
      %v2686 = vadd.f32 %v2333, %v2532
      %v2687 = vadd.f32 %v2334, %v2537
      %v2688 = vadd.f32 %v2335, %v2542
      %v2689 = vadd.f32 %v2336, %v2547
      %v2690 = vadd.f32 %v2337, %v2552
      %v2691 = vadd.f32 %v2338, %v2557
      %v2692 = vadd.f32 %v2339, %v2562
      %v2693 = vadd.f32 %v2340, %v2567
      %v2694 = vadd.f32 %v2341, %v2572
      %v2695 = vadd.f32 %v2342, %v2577
      %v2696 = vadd.f32 %v2343, %v2582
      %v2697 = vadd.f32 %v2344, %v2587
      %v2698 = vadd.f32 %v2345, %v2592
      %v2699 = vadd.f32 %v2346, %v2597
      %v2700 = vadd.f32 %v2347, %v2602
      %v2701 = vadd.f32 %v2348, %v2607
      %v2702 = vadd.f32 %v2349, %v2612
      %v2703 = vadd.f32 %v2350, %v2617
      %v2704 = vadd.f32 %v2351, %v2622
      %v2705 = vadd.f32 %v2352, %v2627
      %v2706 = vadd.f32 %v2353, %v2632
      %v2707 = vadd.f32 %v2354, %v2637
      %v2708 = vadd.f32 %v2355, %v2642
      %v2709 = vadd.f32 %v2356, %v2647
      %v2710 = vadd.f32 %v2357, %v2652
      %v2711 = vadd.f32 %v2358, %v2657
      %v2712 = vadd.f32 %v2359, %v2662
      %v2713 = vadd.f32 %v2360, %v2667
      %v2714 = vadd.f32 %v2361, %v2672
      %v2715 = vadd.f32 %v2362, %v2677
      %v2716 = vadd.f32 %v2363, %v2682
      %2717 = vst.msk [vmem:[#allocation3] sm:$0xff] %vm378, %v2685
      %2718 = vst.msk [vmem:[#allocation3 + $0x8] sm:$0xff] %vm378, %v2686
      %2719 = vst.msk [vmem:[#allocation3 + $0x10] sm:$0xff] %vm378, %v2687
      %2720 = vst.msk [vmem:[#allocation3 + $0x18] sm:$0xff] %vm378, %v2688
      %2721 = vst.msk [vmem:[#allocation3 + $0x20] sm:$0xff] %vm378, %v2689
      %2722 = vst.msk [vmem:[#allocation3 + $0x28] sm:$0xff] %vm378, %v2690
      %2723 = vst.msk [vmem:[#allocation3 + $0x30] sm:$0xff] %vm378, %v2691
      %2724 = vst.msk [vmem:[#allocation3 + $0x38] sm:$0xff] %vm378, %v2692
      %2725 = vst.msk [vmem:[#allocation3 + $0x40] sm:$0xff] %vm378, %v2693
      %2726 = vst.msk [vmem:[#allocation3 + $0x48] sm:$0xff] %vm378, %v2694
      %2727 = vst.msk [vmem:[#allocation3 + $0x50] sm:$0xff] %vm378, %v2695
      %2728 = vst.msk [vmem:[#allocation3 + $0x58] sm:$0xff] %vm378, %v2696
      %2729 = vst.msk [vmem:[#allocation3 + $0x60] sm:$0xff] %vm378, %v2697
      %2730 = vst.msk [vmem:[#allocation3 + $0x68] sm:$0xff] %vm378, %v2698
      %2731 = vst.msk [vmem:[#allocation3 + $0x70] sm:$0xff] %vm378, %v2699
      %2732 = vst.msk [vmem:[#allocation3 + $0x78] sm:$0xff] %vm378, %v2700
      %2733 = vst.msk [vmem:[#allocation3 + $0x80] sm:$0xff] %vm378, %v2701
      %2734 = vst.msk [vmem:[#allocation3 + $0x88] sm:$0xff] %vm378, %v2702
      %2735 = vst.msk [vmem:[#allocation3 + $0x90] sm:$0xff] %vm378, %v2703
      %2736 = vst.msk [vmem:[#allocation3 + $0x98] sm:$0xff] %vm378, %v2704
      %2737 = vst.msk [vmem:[#allocation3 + $0xa0] sm:$0xff] %vm378, %v2705
      %2738 = vst.msk [vmem:[#allocation3 + $0xa8] sm:$0xff] %vm378, %v2706
      %2739 = vst.msk [vmem:[#allocation3 + $0xb0] sm:$0xff] %vm378, %v2707
      %2740 = vst.msk [vmem:[#allocation3 + $0xb8] sm:$0xff] %vm378, %v2708
      %2741 = vst.msk [vmem:[#allocation3 + $0xc0] sm:$0xff] %vm378, %v2709
      %2742 = vst.msk [vmem:[#allocation3 + $0xc8] sm:$0xff] %vm378, %v2710
      %2743 = vst.msk [vmem:[#allocation3 + $0xd0] sm:$0xff] %vm378, %v2711
      %2744 = vst.msk [vmem:[#allocation3 + $0xd8] sm:$0xff] %vm378, %v2712
      %2745 = vst.msk [vmem:[#allocation3 + $0xe0] sm:$0xff] %vm378, %v2713
      %2746 = vst.msk [vmem:[#allocation3 + $0xe8] sm:$0xff] %vm378, %v2714
      %2747 = vst.msk [vmem:[#allocation3 + $0xf0] sm:$0xff] %vm378, %v2715
      %2748 = vst.msk [vmem:[#allocation3 + $0xf8] sm:$0xff] %vm378, %v2716
      %v2749 = vld [vmem:[%s434 + $0x2] sm:$0xff]
      %v2750 = vld [vmem:[%s434 + $0xa] sm:$0xff]
      %v2751 = vld [vmem:[%s434 + $0x1a] sm:$0xff]
      %v2752 = vld [vmem:[%s434 + $0x22] sm:$0xff]
      %v2753 = vld [vmem:[%s434 + $0x32] sm:$0xff]
      %v2754 = vld [vmem:[%s434 + $0x3a] sm:$0xff]
      %v2755 = vld [vmem:[%s434 + $0x4a] sm:$0xff]
      %v2756 = vld [vmem:[%s434 + $0x52] sm:$0xff]
      %v2757 = vld [vmem:[%s434 + $0x62] sm:$0xff]
      %v2758 = vld [vmem:[%s434 + $0x6a] sm:$0xff]
      %v2759 = vld [vmem:[%s434 + $0x7a] sm:$0xff]
      %v2760 = vld [vmem:[%s434 + $0x82] sm:$0xff]
      %v2761 = vld [vmem:[%s434 + $0x92] sm:$0xff]
      %v2762 = vld [vmem:[%s434 + $0x9a] sm:$0xff]
      %v2763 = vld [vmem:[%s434 + $0xaa] sm:$0xff]
      %v2764 = vld [vmem:[%s434 + $0xb2] sm:$0xff]
      %v2765 = vld [vmem:[%s434 + $0xc2] sm:$0xff]
      %v2766 = vld [vmem:[%s434 + $0xca] sm:$0xff]
      %v2767 = vld [vmem:[%s434 + $0xda] sm:$0xff]
      %v2768 = vld [vmem:[%s434 + $0xe2] sm:$0xff]
      %v2769 = vld [vmem:[%s434 + $0xf2] sm:$0xff]
      %v2770 = vld [vmem:[%s434 + $0xfa] sm:$0xff]
      %v2771 = vld [vmem:[%s434 + $0x10a] sm:$0xff]
      %v2772 = vld [vmem:[%s434 + $0x112] sm:$0xff]
      %v2773 = vld [vmem:[%s434 + $0x122] sm:$0xff]
      %v2774 = vld [vmem:[%s434 + $0x12a] sm:$0xff]
      %v2775 = vld [vmem:[%s434 + $0x13a] sm:$0xff]
      %v2776 = vld [vmem:[%s434 + $0x142] sm:$0xff]
      %v2777 = vld [vmem:[%s434 + $0x152] sm:$0xff]
      %v2778 = vld [vmem:[%s434 + $0x15a] sm:$0xff]
      %v2779 = vld [vmem:[%s434 + $0x16a] sm:$0xff]
      %v2780 = vld [vmem:[%s434 + $0x172] sm:$0xff]
      %v2781 = vld [vmem:[%s3 + $0x28] sm:$0xff]
      %v2782 = vld [vmem:[#allocation3] sm:$0xff]
      %v2783 = vld [vmem:[#allocation3 + $0x8] sm:$0xff]
      %v2784 = vld [vmem:[#allocation3 + $0x10] sm:$0xff]
      %v2785 = vld [vmem:[#allocation3 + $0x18] sm:$0xff]
      %v2786 = vld [vmem:[#allocation3 + $0x20] sm:$0xff]
      %v2787 = vld [vmem:[#allocation3 + $0x28] sm:$0xff]
      %v2788 = vld [vmem:[#allocation3 + $0x30] sm:$0xff]
      %v2789 = vld [vmem:[#allocation3 + $0x38] sm:$0xff]
      %v2790 = vld [vmem:[#allocation3 + $0x40] sm:$0xff]
      %v2791 = vld [vmem:[#allocation3 + $0x48] sm:$0xff]
      %v2792 = vld [vmem:[#allocation3 + $0x50] sm:$0xff]
      %v2793 = vld [vmem:[#allocation3 + $0x58] sm:$0xff]
      %v2794 = vld [vmem:[#allocation3 + $0x60] sm:$0xff]
      %v2795 = vld [vmem:[#allocation3 + $0x68] sm:$0xff]
      %v2796 = vld [vmem:[#allocation3 + $0x70] sm:$0xff]
      %v2797 = vld [vmem:[#allocation3 + $0x78] sm:$0xff]
      %v2798 = vld [vmem:[#allocation3 + $0x80] sm:$0xff]
      %v2799 = vld [vmem:[#allocation3 + $0x88] sm:$0xff]
      %v2800 = vld [vmem:[#allocation3 + $0x90] sm:$0xff]
      %v2801 = vld [vmem:[#allocation3 + $0x98] sm:$0xff]
      %v2802 = vld [vmem:[#allocation3 + $0xa0] sm:$0xff]
      %v2803 = vld [vmem:[#allocation3 + $0xa8] sm:$0xff]
      %v2804 = vld [vmem:[#allocation3 + $0xb0] sm:$0xff]
      %v2805 = vld [vmem:[#allocation3 + $0xb8] sm:$0xff]
      %v2806 = vld [vmem:[#allocation3 + $0xc0] sm:$0xff]
      %v2807 = vld [vmem:[#allocation3 + $0xc8] sm:$0xff]
      %v2808 = vld [vmem:[#allocation3 + $0xd0] sm:$0xff]
      %v2809 = vld [vmem:[#allocation3 + $0xd8] sm:$0xff]
      %v2810 = vld [vmem:[#allocation3 + $0xe0] sm:$0xff]
      %v2811 = vld [vmem:[#allocation3 + $0xe8] sm:$0xff]
      %v2812 = vld [vmem:[#allocation3 + $0xf0] sm:$0xff]
      %v2813 = vld [vmem:[#allocation3 + $0xf8] sm:$0xff]
      %v2815 = vsel %vm378, %v2749, 0
      %v2818 = vsel %vm378, %v2750, 0
      %v2821 = vsel %vm378, %v2751, 0
      %v2824 = vsel %vm378, %v2752, 0
      %v2827 = vsel %vm378, %v2753, 0
      %v2830 = vsel %vm378, %v2754, 0
      %v2833 = vsel %vm378, %v2755, 0
      %v2836 = vsel %vm378, %v2756, 0
      %v2839 = vsel %vm378, %v2757, 0
      %v2842 = vsel %vm378, %v2758, 0
      %v2845 = vsel %vm378, %v2759, 0
      %v2848 = vsel %vm378, %v2760, 0
      %v2851 = vsel %vm378, %v2761, 0
      %v2854 = vsel %vm378, %v2762, 0
      %v2857 = vsel %vm378, %v2763, 0
      %v2860 = vsel %vm378, %v2764, 0
      %v2863 = vsel %vm378, %v2765, 0
      %v2866 = vsel %vm378, %v2766, 0
      %v2869 = vsel %vm378, %v2767, 0
      %v2872 = vsel %vm378, %v2768, 0
      %v2875 = vsel %vm378, %v2769, 0
      %v2878 = vsel %vm378, %v2770, 0
      %v2881 = vsel %vm378, %v2771, 0
      %v2884 = vsel %vm378, %v2772, 0
      %v2887 = vsel %vm378, %v2773, 0
      %v2890 = vsel %vm378, %v2774, 0
      %v2893 = vsel %vm378, %v2775, 0
      %v2896 = vsel %vm378, %v2776, 0
      %v2899 = vsel %vm378, %v2777, 0
      %v2902 = vsel %vm378, %v2778, 0
      %v2905 = vsel %vm378, %v2779, 0
      %v2908 = vsel %vm378, %v2780, 0
      %2910 = vmatprep.subr.mxu0 0.0
      %2911 = vmatpush1.msra.mxu0 %v2781
      %2912 = vmatprep.subr.mxu0 0.0
      %2913 = vmatpush1.msra.mxu0 0.0
      %2914 = vmatprep.subr.mxu0 0.0
      %2915 = vmatpush1.msra.mxu0 0.0
      %2916 = vmatprep.subr.mxu0 0.0
      %2917 = vmatpush1.msra.mxu0 0.0
      %2918 = vmatprep.subr.mxu0 0.0
      %2919 = vmatpush1.msra.mxu0 0.0
      %2920 = vmatprep.subr.mxu0 0.0
      %2921 = vmatpush1.msra.mxu0 0.0
      %2922 = vmatprep.subr.mxu0 0.0
      %2923 = vmatpush1.msra.mxu0 0.0
      %2924 = vmatprep.subr.mxu0 0.0
      %2925 = vmatpush1.msra.mxu0 0.0
      %2926 = vmatprep.subr.mxu0 0.0
      %2927 = vmatpush1.msra.mxu0 0.0
      %2928 = vmatprep.subr.mxu0 0.0
      %2929 = vmatpush1.msra.mxu0 0.0
      %2930 = vmatprep.subr.mxu0 0.0
      %2931 = vmatpush1.msra.mxu0 0.0
      %2932 = vmatprep.subr.mxu0 0.0
      %2933 = vmatpush1.msra.mxu0 0.0
      %2934 = vmatprep.subr.mxu0 0.0
      %2935 = vmatpush1.msra.mxu0 0.0
      %2936 = vmatprep.subr.mxu0 0.0
      %2937 = vmatpush1.msra.mxu0 0.0
      %2938 = vmatprep.subr.mxu0 0.0
      %2939 = vmatpush1.msra.mxu0 0.0
      %2940 = vmatprep.subr.mxu0 0.0
      %2941 = vmatpush1.msra.mxu0 0.0
      %2942 = vmatprep.subr.mxu0 0.0
      %2943 = vmatpush1.msra.mxu0 0.0
      %2944 = vmatprep.subr.mxu0 0.0
      %2945 = vmatpush1.msra.mxu0 0.0
      %2946 = vmatprep.subr.mxu0 0.0
      %2947 = vmatpush1.msra.mxu0 0.0
      %2948 = vmatprep.subr.mxu0 0.0
      %2949 = vmatpush1.msra.mxu0 0.0
      %2950 = vmatprep.subr.mxu0 0.0
      %2951 = vmatpush1.msra.mxu0 0.0
      %2952 = vmatprep.subr.mxu0 0.0
      %2953 = vmatpush1.msra.mxu0 0.0
      %2954 = vmatprep.subr.mxu0 0.0
      %2955 = vmatpush1.msra.mxu0 0.0
      %2956 = vmatprep.subr.mxu0 0.0
      %2957 = vmatpush1.msra.mxu0 0.0
      %2958 = vmatprep.subr.mxu0 0.0
      %2959 = vmatpush1.msra.mxu0 0.0
      %2960 = vmatprep.subr.mxu0 0.0
      %2961 = vmatpush1.msra.mxu0 0.0
      %2962 = vmatprep.subr.mxu0 0.0
      %2963 = vmatpush1.msra.mxu0 0.0
      %2964 = vmatprep.subr.mxu0 0.0
      %2965 = vmatpush1.msra.mxu0 0.0
      %2966 = vmatprep.subr.mxu0 0.0
      %2967 = vmatpush1.msra.mxu0 0.0
      %2968 = vmatprep.subr.mxu0 0.0
      %2969 = vmatpush1.msra.mxu0 0.0
      %2970 = vmatprep.subr.mxu0 0.0
      %2971 = vmatpush1.msra.mxu0 0.0
      %2972 = vmatprep.subr.mxu0 0.0
      %2973 = vmatpush1.msra.mxu0 0.0
      %2974 = vmatprep.mubr.f32.mxu0 0.0
      %2975 = vmatmul.mubr.f32.gmra.mrb[0].mxu0 %v2815
      %v2976 = vpop.f32.mrb[0].mxu0
      %v2977 = vadd.f32 0.0, %v2976
      %v2978 = vpop.f32.mrb[0].mxu0
      %2979 = vmatprep.mubr.f32.mxu0 0.0
      %2980 = vmatmul.mubr.f32.gmra.mrb[0].mxu0 %v2818
      %v2981 = vpop.f32.mrb[0].mxu0
      %v2982 = vadd.f32 0.0, %v2981
      %v2983 = vpop.f32.mrb[0].mxu0
      %2984 = vmatprep.mubr.f32.mxu0 0.0
      %2985 = vmatmul.mubr.f32.gmra.mrb[0].mxu0 %v2821
      %v2986 = vpop.f32.mrb[0].mxu0
      %v2987 = vadd.f32 0.0, %v2986
      %v2988 = vpop.f32.mrb[0].mxu0
      %2989 = vmatprep.mubr.f32.mxu0 0.0
      %2990 = vmatmul.mubr.f32.gmra.mrb[0].mxu0 %v2824
      %v2991 = vpop.f32.mrb[0].mxu0
      %v2992 = vadd.f32 0.0, %v2991
      %v2993 = vpop.f32.mrb[0].mxu0
      %2994 = vmatprep.mubr.f32.mxu0 0.0
      %2995 = vmatmul.mubr.f32.gmra.mrb[0].mxu0 %v2827
      %v2996 = vpop.f32.mrb[0].mxu0
      %v2997 = vadd.f32 0.0, %v2996
      %v2998 = vpop.f32.mrb[0].mxu0
      %2999 = vmatprep.mubr.f32.mxu0 0.0
      %3000 = vmatmul.mubr.f32.gmra.mrb[0].mxu0 %v2830
      %v3001 = vpop.f32.mrb[0].mxu0
      %v3002 = vadd.f32 0.0, %v3001
      %v3003 = vpop.f32.mrb[0].mxu0
      %3004 = vmatprep.mubr.f32.mxu0 0.0
      %3005 = vmatmul.mubr.f32.gmra.mrb[0].mxu0 %v2833
      %v3006 = vpop.f32.mrb[0].mxu0
      %v3007 = vadd.f32 0.0, %v3006
      %v3008 = vpop.f32.mrb[0].mxu0
      %3009 = vmatprep.mubr.f32.mxu0 0.0
      %3010 = vmatmul.mubr.f32.gmra.mrb[0].mxu0 %v2836
      %v3011 = vpop.f32.mrb[0].mxu0
      %v3012 = vadd.f32 0.0, %v3011
      %v3013 = vpop.f32.mrb[0].mxu0
      %3014 = vmatprep.mubr.f32.mxu0 0.0
      %3015 = vmatmul.mubr.f32.gmra.mrb[0].mxu0 %v2839
      %v3016 = vpop.f32.mrb[0].mxu0
      %v3017 = vadd.f32 0.0, %v3016
      %v3018 = vpop.f32.mrb[0].mxu0
      %3019 = vmatprep.mubr.f32.mxu0 0.0
      %3020 = vmatmul.mubr.f32.gmra.mrb[0].mxu0 %v2842
      %v3021 = vpop.f32.mrb[0].mxu0
      %v3022 = vadd.f32 0.0, %v3021
      %v3023 = vpop.f32.mrb[0].mxu0
      %3024 = vmatprep.mubr.f32.mxu0 0.0
      %3025 = vmatmul.mubr.f32.gmra.mrb[0].mxu0 %v2845
      %v3026 = vpop.f32.mrb[0].mxu0
      %v3027 = vadd.f32 0.0, %v3026
      %v3028 = vpop.f32.mrb[0].mxu0
      %3029 = vmatprep.mubr.f32.mxu0 0.0
      %3030 = vmatmul.mubr.f32.gmra.mrb[0].mxu0 %v2848
      %v3031 = vpop.f32.mrb[0].mxu0
      %v3032 = vadd.f32 0.0, %v3031
      %v3033 = vpop.f32.mrb[0].mxu0
      %3034 = vmatprep.mubr.f32.mxu0 0.0
      %3035 = vmatmul.mubr.f32.gmra.mrb[0].mxu0 %v2851
      %v3036 = vpop.f32.mrb[0].mxu0
      %v3037 = vadd.f32 0.0, %v3036
      %v3038 = vpop.f32.mrb[0].mxu0
      %3039 = vmatprep.mubr.f32.mxu0 0.0
      %3040 = vmatmul.mubr.f32.gmra.mrb[0].mxu0 %v2854
      %v3041 = vpop.f32.mrb[0].mxu0
      %v3042 = vadd.f32 0.0, %v3041
      %v3043 = vpop.f32.mrb[0].mxu0
      %3044 = vmatprep.mubr.f32.mxu0 0.0
      %3045 = vmatmul.mubr.f32.gmra.mrb[0].mxu0 %v2857
      %v3046 = vpop.f32.mrb[0].mxu0
      %v3047 = vadd.f32 0.0, %v3046
      %v3048 = vpop.f32.mrb[0].mxu0
      %3049 = vmatprep.mubr.f32.mxu0 0.0
      %3050 = vmatmul.mubr.f32.gmra.mrb[0].mxu0 %v2860
      %v3051 = vpop.f32.mrb[0].mxu0
      %v3052 = vadd.f32 0.0, %v3051
      %v3053 = vpop.f32.mrb[0].mxu0
      %3054 = vmatprep.mubr.f32.mxu0 0.0
      %3055 = vmatmul.mubr.f32.gmra.mrb[0].mxu0 %v2863
      %v3056 = vpop.f32.mrb[0].mxu0
      %v3057 = vadd.f32 0.0, %v3056
      %v3058 = vpop.f32.mrb[0].mxu0
      %3059 = vmatprep.mubr.f32.mxu0 0.0
      %3060 = vmatmul.mubr.f32.gmra.mrb[0].mxu0 %v2866
      %v3061 = vpop.f32.mrb[0].mxu0
      %v3062 = vadd.f32 0.0, %v3061
      %v3063 = vpop.f32.mrb[0].mxu0
      %3064 = vmatprep.mubr.f32.mxu0 0.0
      %3065 = vmatmul.mubr.f32.gmra.mrb[0].mxu0 %v2869
      %v3066 = vpop.f32.mrb[0].mxu0
      %v3067 = vadd.f32 0.0, %v3066
      %v3068 = vpop.f32.mrb[0].mxu0
      %3069 = vmatprep.mubr.f32.mxu0 0.0
      %3070 = vmatmul.mubr.f32.gmra.mrb[0].mxu0 %v2872
      %v3071 = vpop.f32.mrb[0].mxu0
      %v3072 = vadd.f32 0.0, %v3071
      %v3073 = vpop.f32.mrb[0].mxu0
      %3074 = vmatprep.mubr.f32.mxu0 0.0
      %3075 = vmatmul.mubr.f32.gmra.mrb[0].mxu0 %v2875
      %v3076 = vpop.f32.mrb[0].mxu0
      %v3077 = vadd.f32 0.0, %v3076
      %v3078 = vpop.f32.mrb[0].mxu0
      %3079 = vmatprep.mubr.f32.mxu0 0.0
      %3080 = vmatmul.mubr.f32.gmra.mrb[0].mxu0 %v2878
      %v3081 = vpop.f32.mrb[0].mxu0
      %v3082 = vadd.f32 0.0, %v3081
      %v3083 = vpop.f32.mrb[0].mxu0
      %3084 = vmatprep.mubr.f32.mxu0 0.0
      %3085 = vmatmul.mubr.f32.gmra.mrb[0].mxu0 %v2881
      %v3086 = vpop.f32.mrb[0].mxu0
      %v3087 = vadd.f32 0.0, %v3086
      %v3088 = vpop.f32.mrb[0].mxu0
      %3089 = vmatprep.mubr.f32.mxu0 0.0
      %3090 = vmatmul.mubr.f32.gmra.mrb[0].mxu0 %v2884
      %v3091 = vpop.f32.mrb[0].mxu0
      %v3092 = vadd.f32 0.0, %v3091
      %v3093 = vpop.f32.mrb[0].mxu0
      %3094 = vmatprep.mubr.f32.mxu0 0.0
      %3095 = vmatmul.mubr.f32.gmra.mrb[0].mxu0 %v2887
      %v3096 = vpop.f32.mrb[0].mxu0
      %v3097 = vadd.f32 0.0, %v3096
      %v3098 = vpop.f32.mrb[0].mxu0
      %3099 = vmatprep.mubr.f32.mxu0 0.0
      %3100 = vmatmul.mubr.f32.gmra.mrb[0].mxu0 %v2890
      %v3101 = vpop.f32.mrb[0].mxu0
      %v3102 = vadd.f32 0.0, %v3101
      %v3103 = vpop.f32.mrb[0].mxu0
      %3104 = vmatprep.mubr.f32.mxu0 0.0
      %3105 = vmatmul.mubr.f32.gmra.mrb[0].mxu0 %v2893
      %v3106 = vpop.f32.mrb[0].mxu0
      %v3107 = vadd.f32 0.0, %v3106
      %v3108 = vpop.f32.mrb[0].mxu0
      %3109 = vmatprep.mubr.f32.mxu0 0.0
      %3110 = vmatmul.mubr.f32.gmra.mrb[0].mxu0 %v2896
      %v3111 = vpop.f32.mrb[0].mxu0
      %v3112 = vadd.f32 0.0, %v3111
      %v3113 = vpop.f32.mrb[0].mxu0
      %3114 = vmatprep.mubr.f32.mxu0 0.0
      %3115 = vmatmul.mubr.f32.gmra.mrb[0].mxu0 %v2899
      %v3116 = vpop.f32.mrb[0].mxu0
      %v3117 = vadd.f32 0.0, %v3116
      %v3118 = vpop.f32.mrb[0].mxu0
      %3119 = vmatprep.mubr.f32.mxu0 0.0
      %3120 = vmatmul.mubr.f32.gmra.mrb[0].mxu0 %v2902
      %v3121 = vpop.f32.mrb[0].mxu0
      %v3122 = vadd.f32 0.0, %v3121
      %v3123 = vpop.f32.mrb[0].mxu0
      %3124 = vmatprep.mubr.f32.mxu0 0.0
      %3125 = vmatmul.mubr.f32.gmra.mrb[0].mxu0 %v2905
      %v3126 = vpop.f32.mrb[0].mxu0
      %v3127 = vadd.f32 0.0, %v3126
      %v3128 = vpop.f32.mrb[0].mxu0
      %3129 = vmatprep.mubr.f32.mxu0 0.0
      %3130 = vmatmul.mubr.f32.gmra.mrb[0].mxu0 %v2908
      %v3131 = vpop.f32.mrb[0].mxu0
      %v3132 = vadd.f32 0.0, %v3131
      %v3133 = vpop.f32.mrb[0].mxu0
      %3134 = vdwg.mxu0
      %v3135 = vadd.f32 %v2782, %v2977
      %v3136 = vadd.f32 %v2783, %v2982
      %v3137 = vadd.f32 %v2784, %v2987
      %v3138 = vadd.f32 %v2785, %v2992
      %v3139 = vadd.f32 %v2786, %v2997
      %v3140 = vadd.f32 %v2787, %v3002
      %v3141 = vadd.f32 %v2788, %v3007
      %v3142 = vadd.f32 %v2789, %v3012
      %v3143 = vadd.f32 %v2790, %v3017
      %v3144 = vadd.f32 %v2791, %v3022
      %v3145 = vadd.f32 %v2792, %v3027
      %v3146 = vadd.f32 %v2793, %v3032
      %v3147 = vadd.f32 %v2794, %v3037
      %v3148 = vadd.f32 %v2795, %v3042
      %v3149 = vadd.f32 %v2796, %v3047
      %v3150 = vadd.f32 %v2797, %v3052
      %v3151 = vadd.f32 %v2798, %v3057
      %v3152 = vadd.f32 %v2799, %v3062
      %v3153 = vadd.f32 %v2800, %v3067
      %v3154 = vadd.f32 %v2801, %v3072
      %v3155 = vadd.f32 %v2802, %v3077
      %v3156 = vadd.f32 %v2803, %v3082
      %v3157 = vadd.f32 %v2804, %v3087
      %v3158 = vadd.f32 %v2805, %v3092
      %v3159 = vadd.f32 %v2806, %v3097
      %v3160 = vadd.f32 %v2807, %v3102
      %v3161 = vadd.f32 %v2808, %v3107
      %v3162 = vadd.f32 %v2809, %v3112
      %v3163 = vadd.f32 %v2810, %v3117
      %v3164 = vadd.f32 %v2811, %v3122
      %v3165 = vadd.f32 %v2812, %v3127
      %v3166 = vadd.f32 %v2813, %v3132
      %3167 = vst.msk [vmem:[#allocation3] sm:$0xff] %vm378, %v3135
      %3168 = vst.msk [vmem:[#allocation3 + $0x8] sm:$0xff] %vm378, %v3136
      %3169 = vst.msk [vmem:[#allocation3 + $0x10] sm:$0xff] %vm378, %v3137
      %3170 = vst.msk [vmem:[#allocation3 + $0x18] sm:$0xff] %vm378, %v3138
      %3171 = vst.msk [vmem:[#allocation3 + $0x20] sm:$0xff] %vm378, %v3139
      %3172 = vst.msk [vmem:[#allocation3 + $0x28] sm:$0xff] %vm378, %v3140
      %3173 = vst.msk [vmem:[#allocation3 + $0x30] sm:$0xff] %vm378, %v3141
      %3174 = vst.msk [vmem:[#allocation3 + $0x38] sm:$0xff] %vm378, %v3142
      %3175 = vst.msk [vmem:[#allocation3 + $0x40] sm:$0xff] %vm378, %v3143
      %3176 = vst.msk [vmem:[#allocation3 + $0x48] sm:$0xff] %vm378, %v3144
      %3177 = vst.msk [vmem:[#allocation3 + $0x50] sm:$0xff] %vm378, %v3145
      %3178 = vst.msk [vmem:[#allocation3 + $0x58] sm:$0xff] %vm378, %v3146
      %3179 = vst.msk [vmem:[#allocation3 + $0x60] sm:$0xff] %vm378, %v3147
      %3180 = vst.msk [vmem:[#allocation3 + $0x68] sm:$0xff] %vm378, %v3148
      %3181 = vst.msk [vmem:[#allocation3 + $0x70] sm:$0xff] %vm378, %v3149
      %3182 = vst.msk [vmem:[#allocation3 + $0x78] sm:$0xff] %vm378, %v3150
      %3183 = vst.msk [vmem:[#allocation3 + $0x80] sm:$0xff] %vm378, %v3151
      %3184 = vst.msk [vmem:[#allocation3 + $0x88] sm:$0xff] %vm378, %v3152
      %3185 = vst.msk [vmem:[#allocation3 + $0x90] sm:$0xff] %vm378, %v3153
      %3186 = vst.msk [vmem:[#allocation3 + $0x98] sm:$0xff] %vm378, %v3154
      %3187 = vst.msk [vmem:[#allocation3 + $0xa0] sm:$0xff] %vm378, %v3155
      %3188 = vst.msk [vmem:[#allocation3 + $0xa8] sm:$0xff] %vm378, %v3156
      %3189 = vst.msk [vmem:[#allocation3 + $0xb0] sm:$0xff] %vm378, %v3157
      %3190 = vst.msk [vmem:[#allocation3 + $0xb8] sm:$0xff] %vm378, %v3158
      %3191 = vst.msk [vmem:[#allocation3 + $0xc0] sm:$0xff] %vm378, %v3159
      %3192 = vst.msk [vmem:[#allocation3 + $0xc8] sm:$0xff] %vm378, %v3160
      %3193 = vst.msk [vmem:[#allocation3 + $0xd0] sm:$0xff] %vm378, %v3161
      %3194 = vst.msk [vmem:[#allocation3 + $0xd8] sm:$0xff] %vm378, %v3162
      %3195 = vst.msk [vmem:[#allocation3 + $0xe0] sm:$0xff] %vm378, %v3163
      %3196 = vst.msk [vmem:[#allocation3 + $0xe8] sm:$0xff] %vm378, %v3164
      %3197 = vst.msk [vmem:[#allocation3 + $0xf0] sm:$0xff] %vm378, %v3165
      %3198 = vst.msk [vmem:[#allocation3 + $0xf8] sm:$0xff] %vm378, %v3166
      %s3199 = scalar_lea.vmem [#allocation2], 48
      %v3200 = vld [vmem:[%s3199] sm:$0xff]
      %v3201 = vld [vmem:[%s3199 + $0x8] sm:$0xff]
      %v3202 = vld [vmem:[%s3199 + $0x18] sm:$0xff]
      %v3203 = vld [vmem:[%s3199 + $0x20] sm:$0xff]
      %v3204 = vld [vmem:[%s3199 + $0x30] sm:$0xff]
      %v3205 = vld [vmem:[%s3199 + $0x38] sm:$0xff]
      %v3206 = vld [vmem:[%s3199 + $0x48] sm:$0xff]
      %v3207 = vld [vmem:[%s3199 + $0x50] sm:$0xff]
      %v3208 = vld [vmem:[%s3199 + $0x60] sm:$0xff]
      %v3209 = vld [vmem:[%s3199 + $0x68] sm:$0xff]
      %v3210 = vld [vmem:[%s3199 + $0x78] sm:$0xff]
      %v3211 = vld [vmem:[%s3199 + $0x80] sm:$0xff]
      %v3212 = vld [vmem:[%s3199 + $0x90] sm:$0xff]
      %v3213 = vld [vmem:[%s3199 + $0x98] sm:$0xff]
      %v3214 = vld [vmem:[%s3199 + $0xa8] sm:$0xff]
      %v3215 = vld [vmem:[%s3199 + $0xb0] sm:$0xff]
      %v3216 = vld [vmem:[%s3199 + $0xc0] sm:$0xff]
      %v3217 = vld [vmem:[%s3199 + $0xc8] sm:$0xff]
      %v3218 = vld [vmem:[%s3199 + $0xd8] sm:$0xff]
      %v3219 = vld [vmem:[%s3199 + $0xe0] sm:$0xff]
      %v3220 = vld [vmem:[%s3199 + $0xf0] sm:$0xff]
      %v3221 = vld [vmem:[%s3199 + $0xf8] sm:$0xff]
      %v3222 = vld [vmem:[%s3199 + $0x108] sm:$0xff]
      %v3223 = vld [vmem:[%s3199 + $0x110] sm:$0xff]
      %v3224 = vld [vmem:[%s3199 + $0x120] sm:$0xff]
      %v3225 = vld [vmem:[%s3199 + $0x128] sm:$0xff]
      %v3226 = vld [vmem:[%s3199 + $0x138] sm:$0xff]
      %v3227 = vld [vmem:[%s3199 + $0x140] sm:$0xff]
      %v3228 = vld [vmem:[%s3199 + $0x150] sm:$0xff]
      %v3229 = vld [vmem:[%s3199 + $0x158] sm:$0xff]
      %v3230 = vld [vmem:[%s3199 + $0x168] sm:$0xff]
      %v3231 = vld [vmem:[%s3199 + $0x170] sm:$0xff]
      %v3232 = vld [vmem:[%s3 + $0x30] sm:$0xff]
      %v3233 = vld [vmem:[#allocation3] sm:$0xff]
      %v3234 = vld [vmem:[#allocation3 + $0x8] sm:$0xff]
      %v3235 = vld [vmem:[#allocation3 + $0x10] sm:$0xff]
      %v3236 = vld [vmem:[#allocation3 + $0x18] sm:$0xff]
      %v3237 = vld [vmem:[#allocation3 + $0x20] sm:$0xff]
      %v3238 = vld [vmem:[#allocation3 + $0x28] sm:$0xff]
      %v3239 = vld [vmem:[#allocation3 + $0x30] sm:$0xff]
      %v3240 = vld [vmem:[#allocation3 + $0x38] sm:$0xff]
      %v3241 = vld [vmem:[#allocation3 + $0x40] sm:$0xff]
      %v3242 = vld [vmem:[#allocation3 + $0x48] sm:$0xff]
      %v3243 = vld [vmem:[#allocation3 + $0x50] sm:$0xff]
      %v3244 = vld [vmem:[#allocation3 + $0x58] sm:$0xff]
      %v3245 = vld [vmem:[#allocation3 + $0x60] sm:$0xff]
      %v3246 = vld [vmem:[#allocation3 + $0x68] sm:$0xff]
      %v3247 = vld [vmem:[#allocation3 + $0x70] sm:$0xff]
      %v3248 = vld [vmem:[#allocation3 + $0x78] sm:$0xff]
      %v3249 = vld [vmem:[#allocation3 + $0x80] sm:$0xff]
      %v3250 = vld [vmem:[#allocation3 + $0x88] sm:$0xff]
      %v3251 = vld [vmem:[#allocation3 + $0x90] sm:$0xff]
      %v3252 = vld [vmem:[#allocation3 + $0x98] sm:$0xff]
      %v3253 = vld [vmem:[#allocation3 + $0xa0] sm:$0xff]
      %v3254 = vld [vmem:[#allocation3 + $0xa8] sm:$0xff]
      %v3255 = vld [vmem:[#allocation3 + $0xb0] sm:$0xff]
      %v3256 = vld [vmem:[#allocation3 + $0xb8] sm:$0xff]
      %v3257 = vld [vmem:[#allocation3 + $0xc0] sm:$0xff]
      %v3258 = vld [vmem:[#allocation3 + $0xc8] sm:$0xff]
      %v3259 = vld [vmem:[#allocation3 + $0xd0] sm:$0xff]
      %v3260 = vld [vmem:[#allocation3 + $0xd8] sm:$0xff]
      %v3261 = vld [vmem:[#allocation3 + $0xe0] sm:$0xff]
      %v3262 = vld [vmem:[#allocation3 + $0xe8] sm:$0xff]
      %v3263 = vld [vmem:[#allocation3 + $0xf0] sm:$0xff]
      %v3264 = vld [vmem:[#allocation3 + $0xf8] sm:$0xff]
      %v3266 = vsel %vm378, %v3200, 0
      %v3269 = vsel %vm378, %v3201, 0
      %v3272 = vsel %vm378, %v3202, 0
      %v3275 = vsel %vm378, %v3203, 0
      %v3278 = vsel %vm378, %v3204, 0
      %v3281 = vsel %vm378, %v3205, 0
      %v3284 = vsel %vm378, %v3206, 0
      %v3287 = vsel %vm378, %v3207, 0
      %v3290 = vsel %vm378, %v3208, 0
      %v3293 = vsel %vm378, %v3209, 0
      %v3296 = vsel %vm378, %v3210, 0
      %v3299 = vsel %vm378, %v3211, 0
      %v3302 = vsel %vm378, %v3212, 0
      %v3305 = vsel %vm378, %v3213, 0
      %v3308 = vsel %vm378, %v3214, 0
      %v3311 = vsel %vm378, %v3215, 0
      %v3314 = vsel %vm378, %v3216, 0
      %v3317 = vsel %vm378, %v3217, 0
      %v3320 = vsel %vm378, %v3218, 0
      %v3323 = vsel %vm378, %v3219, 0
      %v3326 = vsel %vm378, %v3220, 0
      %v3329 = vsel %vm378, %v3221, 0
      %v3332 = vsel %vm378, %v3222, 0
      %v3335 = vsel %vm378, %v3223, 0
      %v3338 = vsel %vm378, %v3224, 0
      %v3341 = vsel %vm378, %v3225, 0
      %v3344 = vsel %vm378, %v3226, 0
      %v3347 = vsel %vm378, %v3227, 0
      %v3350 = vsel %vm378, %v3228, 0
      %v3353 = vsel %vm378, %v3229, 0
      %v3356 = vsel %vm378, %v3230, 0
      %v3359 = vsel %vm378, %v3231, 0
      %3361 = vmatprep.subr.mxu0 0.0
      %3362 = vmatpush1.msra.mxu0 %v3232
      %3363 = vmatprep.subr.mxu0 0.0
      %3364 = vmatpush1.msra.mxu0 0.0
      %3365 = vmatprep.subr.mxu0 0.0
      %3366 = vmatpush1.msra.mxu0 0.0
      %3367 = vmatprep.subr.mxu0 0.0
      %3368 = vmatpush1.msra.mxu0 0.0
      %3369 = vmatprep.subr.mxu0 0.0
      %3370 = vmatpush1.msra.mxu0 0.0
      %3371 = vmatprep.subr.mxu0 0.0
      %3372 = vmatpush1.msra.mxu0 0.0
      %3373 = vmatprep.subr.mxu0 0.0
      %3374 = vmatpush1.msra.mxu0 0.0
      %3375 = vmatprep.subr.mxu0 0.0
      %3376 = vmatpush1.msra.mxu0 0.0
      %3377 = vmatprep.subr.mxu0 0.0
      %3378 = vmatpush1.msra.mxu0 0.0
      %3379 = vmatprep.subr.mxu0 0.0
      %3380 = vmatpush1.msra.mxu0 0.0
      %3381 = vmatprep.subr.mxu0 0.0
      %3382 = vmatpush1.msra.mxu0 0.0
      %3383 = vmatprep.subr.mxu0 0.0
      %3384 = vmatpush1.msra.mxu0 0.0
      %3385 = vmatprep.subr.mxu0 0.0
      %3386 = vmatpush1.msra.mxu0 0.0
      %3387 = vmatprep.subr.mxu0 0.0
      %3388 = vmatpush1.msra.mxu0 0.0
      %3389 = vmatprep.subr.mxu0 0.0
      %3390 = vmatpush1.msra.mxu0 0.0
      %3391 = vmatprep.subr.mxu0 0.0
      %3392 = vmatpush1.msra.mxu0 0.0
      %3393 = vmatprep.subr.mxu0 0.0
      %3394 = vmatpush1.msra.mxu0 0.0
      %3395 = vmatprep.subr.mxu0 0.0
      %3396 = vmatpush1.msra.mxu0 0.0
      %3397 = vmatprep.subr.mxu0 0.0
      %3398 = vmatpush1.msra.mxu0 0.0
      %3399 = vmatprep.subr.mxu0 0.0
      %3400 = vmatpush1.msra.mxu0 0.0
      %3401 = vmatprep.subr.mxu0 0.0
      %3402 = vmatpush1.msra.mxu0 0.0
      %3403 = vmatprep.subr.mxu0 0.0
      %3404 = vmatpush1.msra.mxu0 0.0
      %3405 = vmatprep.subr.mxu0 0.0
      %3406 = vmatpush1.msra.mxu0 0.0
      %3407 = vmatprep.subr.mxu0 0.0
      %3408 = vmatpush1.msra.mxu0 0.0
      %3409 = vmatprep.subr.mxu0 0.0
      %3410 = vmatpush1.msra.mxu0 0.0
      %3411 = vmatprep.subr.mxu0 0.0
      %3412 = vmatpush1.msra.mxu0 0.0
      %3413 = vmatprep.subr.mxu0 0.0
      %3414 = vmatpush1.msra.mxu0 0.0
      %3415 = vmatprep.subr.mxu0 0.0
      %3416 = vmatpush1.msra.mxu0 0.0
      %3417 = vmatprep.subr.mxu0 0.0
      %3418 = vmatpush1.msra.mxu0 0.0
      %3419 = vmatprep.subr.mxu0 0.0
      %3420 = vmatpush1.msra.mxu0 0.0
      %3421 = vmatprep.subr.mxu0 0.0
      %3422 = vmatpush1.msra.mxu0 0.0
      %3423 = vmatprep.subr.mxu0 0.0
      %3424 = vmatpush1.msra.mxu0 0.0
      %3425 = vmatprep.mubr.f32.mxu0 0.0
      %3426 = vmatmul.mubr.f32.gmra.mrb[0].mxu0 %v3266
      %v3427 = vpop.f32.mrb[0].mxu0
      %v3428 = vadd.f32 0.0, %v3427
      %v3429 = vpop.f32.mrb[0].mxu0
      %3430 = vmatprep.mubr.f32.mxu0 0.0
      %3431 = vmatmul.mubr.f32.gmra.mrb[0].mxu0 %v3269
      %v3432 = vpop.f32.mrb[0].mxu0
      %v3433 = vadd.f32 0.0, %v3432
      %v3434 = vpop.f32.mrb[0].mxu0
      %3435 = vmatprep.mubr.f32.mxu0 0.0
      %3436 = vmatmul.mubr.f32.gmra.mrb[0].mxu0 %v3272
      %v3437 = vpop.f32.mrb[0].mxu0
      %v3438 = vadd.f32 0.0, %v3437
      %v3439 = vpop.f32.mrb[0].mxu0
      %3440 = vmatprep.mubr.f32.mxu0 0.0
      %3441 = vmatmul.mubr.f32.gmra.mrb[0].mxu0 %v3275
      %v3442 = vpop.f32.mrb[0].mxu0
      %v3443 = vadd.f32 0.0, %v3442
      %v3444 = vpop.f32.mrb[0].mxu0
      %3445 = vmatprep.mubr.f32.mxu0 0.0
      %3446 = vmatmul.mubr.f32.gmra.mrb[0].mxu0 %v3278
      %v3447 = vpop.f32.mrb[0].mxu0
      %v3448 = vadd.f32 0.0, %v3447
      %v3449 = vpop.f32.mrb[0].mxu0
      %3450 = vmatprep.mubr.f32.mxu0 0.0
      %3451 = vmatmul.mubr.f32.gmra.mrb[0].mxu0 %v3281
      %v3452 = vpop.f32.mrb[0].mxu0
      %v3453 = vadd.f32 0.0, %v3452
      %v3454 = vpop.f32.mrb[0].mxu0
      %3455 = vmatprep.mubr.f32.mxu0 0.0
      %3456 = vmatmul.mubr.f32.gmra.mrb[0].mxu0 %v3284
      %v3457 = vpop.f32.mrb[0].mxu0
      %v3458 = vadd.f32 0.0, %v3457
      %v3459 = vpop.f32.mrb[0].mxu0
      %3460 = vmatprep.mubr.f32.mxu0 0.0
      %3461 = vmatmul.mubr.f32.gmra.mrb[0].mxu0 %v3287
      %v3462 = vpop.f32.mrb[0].mxu0
      %v3463 = vadd.f32 0.0, %v3462
      %v3464 = vpop.f32.mrb[0].mxu0
      %3465 = vmatprep.mubr.f32.mxu0 0.0
      %3466 = vmatmul.mubr.f32.gmra.mrb[0].mxu0 %v3290
      %v3467 = vpop.f32.mrb[0].mxu0
      %v3468 = vadd.f32 0.0, %v3467
      %v3469 = vpop.f32.mrb[0].mxu0
      %3470 = vmatprep.mubr.f32.mxu0 0.0
      %3471 = vmatmul.mubr.f32.gmra.mrb[0].mxu0 %v3293
      %v3472 = vpop.f32.mrb[0].mxu0
      %v3473 = vadd.f32 0.0, %v3472
      %v3474 = vpop.f32.mrb[0].mxu0
      %3475 = vmatprep.mubr.f32.mxu0 0.0
      %3476 = vmatmul.mubr.f32.gmra.mrb[0].mxu0 %v3296
      %v3477 = vpop.f32.mrb[0].mxu0
      %v3478 = vadd.f32 0.0, %v3477
      %v3479 = vpop.f32.mrb[0].mxu0
      %3480 = vmatprep.mubr.f32.mxu0 0.0
      %3481 = vmatmul.mubr.f32.gmra.mrb[0].mxu0 %v3299
      %v3482 = vpop.f32.mrb[0].mxu0
      %v3483 = vadd.f32 0.0, %v3482
      %v3484 = vpop.f32.mrb[0].mxu0
      %3485 = vmatprep.mubr.f32.mxu0 0.0
      %3486 = vmatmul.mubr.f32.gmra.mrb[0].mxu0 %v3302
      %v3487 = vpop.f32.mrb[0].mxu0
      %v3488 = vadd.f32 0.0, %v3487
      %v3489 = vpop.f32.mrb[0].mxu0
      %3490 = vmatprep.mubr.f32.mxu0 0.0
      %3491 = vmatmul.mubr.f32.gmra.mrb[0].mxu0 %v3305
      %v3492 = vpop.f32.mrb[0].mxu0
      %v3493 = vadd.f32 0.0, %v3492
      %v3494 = vpop.f32.mrb[0].mxu0
      %3495 = vmatprep.mubr.f32.mxu0 0.0
      %3496 = vmatmul.mubr.f32.gmra.mrb[0].mxu0 %v3308
      %v3497 = vpop.f32.mrb[0].mxu0
      %v3498 = vadd.f32 0.0, %v3497
      %v3499 = vpop.f32.mrb[0].mxu0
      %3500 = vmatprep.mubr.f32.mxu0 0.0
      %3501 = vmatmul.mubr.f32.gmra.mrb[0].mxu0 %v3311
      %v3502 = vpop.f32.mrb[0].mxu0
      %v3503 = vadd.f32 0.0, %v3502
      %v3504 = vpop.f32.mrb[0].mxu0
      %3505 = vmatprep.mubr.f32.mxu0 0.0
      %3506 = vmatmul.mubr.f32.gmra.mrb[0].mxu0 %v3314
      %v3507 = vpop.f32.mrb[0].mxu0
      %v3508 = vadd.f32 0.0, %v3507
      %v3509 = vpop.f32.mrb[0].mxu0
      %3510 = vmatprep.mubr.f32.mxu0 0.0
      %3511 = vmatmul.mubr.f32.gmra.mrb[0].mxu0 %v3317
      %v3512 = vpop.f32.mrb[0].mxu0
      %v3513 = vadd.f32 0.0, %v3512
      %v3514 = vpop.f32.mrb[0].mxu0
      %3515 = vmatprep.mubr.f32.mxu0 0.0
      %3516 = vmatmul.mubr.f32.gmra.mrb[0].mxu0 %v3320
      %v3517 = vpop.f32.mrb[0].mxu0
      %v3518 = vadd.f32 0.0, %v3517
      %v3519 = vpop.f32.mrb[0].mxu0
      %3520 = vmatprep.mubr.f32.mxu0 0.0
      %3521 = vmatmul.mubr.f32.gmra.mrb[0].mxu0 %v3323
      %v3522 = vpop.f32.mrb[0].mxu0
      %v3523 = vadd.f32 0.0, %v3522
      %v3524 = vpop.f32.mrb[0].mxu0
      %3525 = vmatprep.mubr.f32.mxu0 0.0
      %3526 = vmatmul.mubr.f32.gmra.mrb[0].mxu0 %v3326
      %v3527 = vpop.f32.mrb[0].mxu0
      %v3528 = vadd.f32 0.0, %v3527
      %v3529 = vpop.f32.mrb[0].mxu0
      %3530 = vmatprep.mubr.f32.mxu0 0.0
      %3531 = vmatmul.mubr.f32.gmra.mrb[0].mxu0 %v3329
      %v3532 = vpop.f32.mrb[0].mxu0
      %v3533 = vadd.f32 0.0, %v3532
      %v3534 = vpop.f32.mrb[0].mxu0
      %3535 = vmatprep.mubr.f32.mxu0 0.0
      %3536 = vmatmul.mubr.f32.gmra.mrb[0].mxu0 %v3332
      %v3537 = vpop.f32.mrb[0].mxu0
      %v3538 = vadd.f32 0.0, %v3537
      %v3539 = vpop.f32.mrb[0].mxu0
      %3540 = vmatprep.mubr.f32.mxu0 0.0
      %3541 = vmatmul.mubr.f32.gmra.mrb[0].mxu0 %v3335
      %v3542 = vpop.f32.mrb[0].mxu0
      %v3543 = vadd.f32 0.0, %v3542
      %v3544 = vpop.f32.mrb[0].mxu0
      %3545 = vmatprep.mubr.f32.mxu0 0.0
      %3546 = vmatmul.mubr.f32.gmra.mrb[0].mxu0 %v3338
      %v3547 = vpop.f32.mrb[0].mxu0
      %v3548 = vadd.f32 0.0, %v3547
      %v3549 = vpop.f32.mrb[0].mxu0
      %3550 = vmatprep.mubr.f32.mxu0 0.0
      %3551 = vmatmul.mubr.f32.gmra.mrb[0].mxu0 %v3341
      %v3552 = vpop.f32.mrb[0].mxu0
      %v3553 = vadd.f32 0.0, %v3552
      %v3554 = vpop.f32.mrb[0].mxu0
      %3555 = vmatprep.mubr.f32.mxu0 0.0
      %3556 = vmatmul.mubr.f32.gmra.mrb[0].mxu0 %v3344
      %v3557 = vpop.f32.mrb[0].mxu0
      %v3558 = vadd.f32 0.0, %v3557
      %v3559 = vpop.f32.mrb[0].mxu0
      %3560 = vmatprep.mubr.f32.mxu0 0.0
      %3561 = vmatmul.mubr.f32.gmra.mrb[0].mxu0 %v3347
      %v3562 = vpop.f32.mrb[0].mxu0
      %v3563 = vadd.f32 0.0, %v3562
      %v3564 = vpop.f32.mrb[0].mxu0
      %3565 = vmatprep.mubr.f32.mxu0 0.0
      %3566 = vmatmul.mubr.f32.gmra.mrb[0].mxu0 %v3350
      %v3567 = vpop.f32.mrb[0].mxu0
      %v3568 = vadd.f32 0.0, %v3567
      %v3569 = vpop.f32.mrb[0].mxu0
      %3570 = vmatprep.mubr.f32.mxu0 0.0
      %3571 = vmatmul.mubr.f32.gmra.mrb[0].mxu0 %v3353
      %v3572 = vpop.f32.mrb[0].mxu0
      %v3573 = vadd.f32 0.0, %v3572
      %v3574 = vpop.f32.mrb[0].mxu0
      %3575 = vmatprep.mubr.f32.mxu0 0.0
      %3576 = vmatmul.mubr.f32.gmra.mrb[0].mxu0 %v3356
      %v3577 = vpop.f32.mrb[0].mxu0
      %v3578 = vadd.f32 0.0, %v3577
      %v3579 = vpop.f32.mrb[0].mxu0
      %3580 = vmatprep.mubr.f32.mxu0 0.0
      %3581 = vmatmul.mubr.f32.gmra.mrb[0].mxu0 %v3359
      %v3582 = vpop.f32.mrb[0].mxu0
      %v3583 = vadd.f32 0.0, %v3582
      %v3584 = vpop.f32.mrb[0].mxu0
      %3585 = vdwg.mxu0
      %v3586 = vadd.f32 %v3233, %v3428
      %v3587 = vadd.f32 %v3234, %v3433
      %v3588 = vadd.f32 %v3235, %v3438
      %v3589 = vadd.f32 %v3236, %v3443
      %v3590 = vadd.f32 %v3237, %v3448
      %v3591 = vadd.f32 %v3238, %v3453
      %v3592 = vadd.f32 %v3239, %v3458
      %v3593 = vadd.f32 %v3240, %v3463
      %v3594 = vadd.f32 %v3241, %v3468
      %v3595 = vadd.f32 %v3242, %v3473
      %v3596 = vadd.f32 %v3243, %v3478
      %v3597 = vadd.f32 %v3244, %v3483
      %v3598 = vadd.f32 %v3245, %v3488
      %v3599 = vadd.f32 %v3246, %v3493
      %v3600 = vadd.f32 %v3247, %v3498
      %v3601 = vadd.f32 %v3248, %v3503
      %v3602 = vadd.f32 %v3249, %v3508
      %v3603 = vadd.f32 %v3250, %v3513
      %v3604 = vadd.f32 %v3251, %v3518
      %v3605 = vadd.f32 %v3252, %v3523
      %v3606 = vadd.f32 %v3253, %v3528
      %v3607 = vadd.f32 %v3254, %v3533
      %v3608 = vadd.f32 %v3255, %v3538
      %v3609 = vadd.f32 %v3256, %v3543
      %v3610 = vadd.f32 %v3257, %v3548
      %v3611 = vadd.f32 %v3258, %v3553
      %v3612 = vadd.f32 %v3259, %v3558
      %v3613 = vadd.f32 %v3260, %v3563
      %v3614 = vadd.f32 %v3261, %v3568
      %v3615 = vadd.f32 %v3262, %v3573
      %v3616 = vadd.f32 %v3263, %v3578
      %v3617 = vadd.f32 %v3264, %v3583
      %3618 = vst.msk [vmem:[#allocation3] sm:$0xff] %vm378, %v3586
      %3619 = vst.msk [vmem:[#allocation3 + $0x8] sm:$0xff] %vm378, %v3587
      %3620 = vst.msk [vmem:[#allocation3 + $0x10] sm:$0xff] %vm378, %v3588
      %3621 = vst.msk [vmem:[#allocation3 + $0x18] sm:$0xff] %vm378, %v3589
      %3622 = vst.msk [vmem:[#allocation3 + $0x20] sm:$0xff] %vm378, %v3590
      %3623 = vst.msk [vmem:[#allocation3 + $0x28] sm:$0xff] %vm378, %v3591
      %3624 = vst.msk [vmem:[#allocation3 + $0x30] sm:$0xff] %vm378, %v3592
      %3625 = vst.msk [vmem:[#allocation3 + $0x38] sm:$0xff] %vm378, %v3593
      %3626 = vst.msk [vmem:[#allocation3 + $0x40] sm:$0xff] %vm378, %v3594
      %3627 = vst.msk [vmem:[#allocation3 + $0x48] sm:$0xff] %vm378, %v3595
      %3628 = vst.msk [vmem:[#allocation3 + $0x50] sm:$0xff] %vm378, %v3596
      %3629 = vst.msk [vmem:[#allocation3 + $0x58] sm:$0xff] %vm378, %v3597
      %3630 = vst.msk [vmem:[#allocation3 + $0x60] sm:$0xff] %vm378, %v3598
      %3631 = vst.msk [vmem:[#allocation3 + $0x68] sm:$0xff] %vm378, %v3599
      %3632 = vst.msk [vmem:[#allocation3 + $0x70] sm:$0xff] %vm378, %v3600
      %3633 = vst.msk [vmem:[#allocation3 + $0x78] sm:$0xff] %vm378, %v3601
      %3634 = vst.msk [vmem:[#allocation3 + $0x80] sm:$0xff] %vm378, %v3602
      %3635 = vst.msk [vmem:[#allocation3 + $0x88] sm:$0xff] %vm378, %v3603
      %3636 = vst.msk [vmem:[#allocation3 + $0x90] sm:$0xff] %vm378, %v3604
      %3637 = vst.msk [vmem:[#allocation3 + $0x98] sm:$0xff] %vm378, %v3605
      %3638 = vst.msk [vmem:[#allocation3 + $0xa0] sm:$0xff] %vm378, %v3606
      %3639 = vst.msk [vmem:[#allocation3 + $0xa8] sm:$0xff] %vm378, %v3607
      %3640 = vst.msk [vmem:[#allocation3 + $0xb0] sm:$0xff] %vm378, %v3608
      %3641 = vst.msk [vmem:[#allocation3 + $0xb8] sm:$0xff] %vm378, %v3609
      %3642 = vst.msk [vmem:[#allocation3 + $0xc0] sm:$0xff] %vm378, %v3610
      %3643 = vst.msk [vmem:[#allocation3 + $0xc8] sm:$0xff] %vm378, %v3611
      %3644 = vst.msk [vmem:[#allocation3 + $0xd0] sm:$0xff] %vm378, %v3612
      %3645 = vst.msk [vmem:[#allocation3 + $0xd8] sm:$0xff] %vm378, %v3613
      %3646 = vst.msk [vmem:[#allocation3 + $0xe0] sm:$0xff] %vm378, %v3614
      %3647 = vst.msk [vmem:[#allocation3 + $0xe8] sm:$0xff] %vm378, %v3615
      %3648 = vst.msk [vmem:[#allocation3 + $0xf0] sm:$0xff] %vm378, %v3616
      %3649 = vst.msk [vmem:[#allocation3 + $0xf8] sm:$0xff] %vm378, %v3617
      %v3650 = vld [vmem:[%s3199 + $0x1] sm:$0xff]
      %v3651 = vld [vmem:[%s3199 + $0x9] sm:$0xff]
      %v3652 = vld [vmem:[%s3199 + $0x19] sm:$0xff]
      %v3653 = vld [vmem:[%s3199 + $0x21] sm:$0xff]
      %v3654 = vld [vmem:[%s3199 + $0x31] sm:$0xff]
      %v3655 = vld [vmem:[%s3199 + $0x39] sm:$0xff]
      %v3656 = vld [vmem:[%s3199 + $0x49] sm:$0xff]
      %v3657 = vld [vmem:[%s3199 + $0x51] sm:$0xff]
      %v3658 = vld [vmem:[%s3199 + $0x61] sm:$0xff]
      %v3659 = vld [vmem:[%s3199 + $0x69] sm:$0xff]
      %v3660 = vld [vmem:[%s3199 + $0x79] sm:$0xff]
      %v3661 = vld [vmem:[%s3199 + $0x81] sm:$0xff]
      %v3662 = vld [vmem:[%s3199 + $0x91] sm:$0xff]
      %v3663 = vld [vmem:[%s3199 + $0x99] sm:$0xff]
      %v3664 = vld [vmem:[%s3199 + $0xa9] sm:$0xff]
      %v3665 = vld [vmem:[%s3199 + $0xb1] sm:$0xff]
      %v3666 = vld [vmem:[%s3199 + $0xc1] sm:$0xff]
      %v3667 = vld [vmem:[%s3199 + $0xc9] sm:$0xff]
      %v3668 = vld [vmem:[%s3199 + $0xd9] sm:$0xff]
      %v3669 = vld [vmem:[%s3199 + $0xe1] sm:$0xff]
      %v3670 = vld [vmem:[%s3199 + $0xf1] sm:$0xff]
      %v3671 = vld [vmem:[%s3199 + $0xf9] sm:$0xff]
      %v3672 = vld [vmem:[%s3199 + $0x109] sm:$0xff]
      %v3673 = vld [vmem:[%s3199 + $0x111] sm:$0xff]
      %v3674 = vld [vmem:[%s3199 + $0x121] sm:$0xff]
      %v3675 = vld [vmem:[%s3199 + $0x129] sm:$0xff]
      %v3676 = vld [vmem:[%s3199 + $0x139] sm:$0xff]
      %v3677 = vld [vmem:[%s3199 + $0x141] sm:$0xff]
      %v3678 = vld [vmem:[%s3199 + $0x151] sm:$0xff]
      %v3679 = vld [vmem:[%s3199 + $0x159] sm:$0xff]
      %v3680 = vld [vmem:[%s3199 + $0x169] sm:$0xff]
      %v3681 = vld [vmem:[%s3199 + $0x171] sm:$0xff]
      %v3682 = vld [vmem:[%s3 + $0x38] sm:$0xff]
      %v3683 = vld [vmem:[#allocation3] sm:$0xff]
      %v3684 = vld [vmem:[#allocation3 + $0x8] sm:$0xff]
      %v3685 = vld [vmem:[#allocation3 + $0x10] sm:$0xff]
      %v3686 = vld [vmem:[#allocation3 + $0x18] sm:$0xff]
      %v3687 = vld [vmem:[#allocation3 + $0x20] sm:$0xff]
      %v3688 = vld [vmem:[#allocation3 + $0x28] sm:$0xff]
      %v3689 = vld [vmem:[#allocation3 + $0x30] sm:$0xff]
      %v3690 = vld [vmem:[#allocation3 + $0x38] sm:$0xff]
      %v3691 = vld [vmem:[#allocation3 + $0x40] sm:$0xff]
      %v3692 = vld [vmem:[#allocation3 + $0x48] sm:$0xff]
      %v3693 = vld [vmem:[#allocation3 + $0x50] sm:$0xff]
      %v3694 = vld [vmem:[#allocation3 + $0x58] sm:$0xff]
      %v3695 = vld [vmem:[#allocation3 + $0x60] sm:$0xff]
      %v3696 = vld [vmem:[#allocation3 + $0x68] sm:$0xff]
      %v3697 = vld [vmem:[#allocation3 + $0x70] sm:$0xff]
      %v3698 = vld [vmem:[#allocation3 + $0x78] sm:$0xff]
      %v3699 = vld [vmem:[#allocation3 + $0x80] sm:$0xff]
      %v3700 = vld [vmem:[#allocation3 + $0x88] sm:$0xff]
      %v3701 = vld [vmem:[#allocation3 + $0x90] sm:$0xff]
      %v3702 = vld [vmem:[#allocation3 + $0x98] sm:$0xff]
      %v3703 = vld [vmem:[#allocation3 + $0xa0] sm:$0xff]
      %v3704 = vld [vmem:[#allocation3 + $0xa8] sm:$0xff]
      %v3705 = vld [vmem:[#allocation3 + $0xb0] sm:$0xff]
      %v3706 = vld [vmem:[#allocation3 + $0xb8] sm:$0xff]
      %v3707 = vld [vmem:[#allocation3 + $0xc0] sm:$0xff]
      %v3708 = vld [vmem:[#allocation3 + $0xc8] sm:$0xff]
      %v3709 = vld [vmem:[#allocation3 + $0xd0] sm:$0xff]
      %v3710 = vld [vmem:[#allocation3 + $0xd8] sm:$0xff]
      %v3711 = vld [vmem:[#allocation3 + $0xe0] sm:$0xff]
      %v3712 = vld [vmem:[#allocation3 + $0xe8] sm:$0xff]
      %v3713 = vld [vmem:[#allocation3 + $0xf0] sm:$0xff]
      %v3714 = vld [vmem:[#allocation3 + $0xf8] sm:$0xff]
      %v3716 = vsel %vm378, %v3650, 0
      %v3719 = vsel %vm378, %v3651, 0
      %v3722 = vsel %vm378, %v3652, 0
      %v3725 = vsel %vm378, %v3653, 0
      %v3728 = vsel %vm378, %v3654, 0
      %v3731 = vsel %vm378, %v3655, 0
      %v3734 = vsel %vm378, %v3656, 0
      %v3737 = vsel %vm378, %v3657, 0
      %v3740 = vsel %vm378, %v3658, 0
      %v3743 = vsel %vm378, %v3659, 0
      %v3746 = vsel %vm378, %v3660, 0
      %v3749 = vsel %vm378, %v3661, 0
      %v3752 = vsel %vm378, %v3662, 0
      %v3755 = vsel %vm378, %v3663, 0
      %v3758 = vsel %vm378, %v3664, 0
      %v3761 = vsel %vm378, %v3665, 0
      %v3764 = vsel %vm378, %v3666, 0
      %v3767 = vsel %vm378, %v3667, 0
      %v3770 = vsel %vm378, %v3668, 0
      %v3773 = vsel %vm378, %v3669, 0
      %v3776 = vsel %vm378, %v3670, 0
      %v3779 = vsel %vm378, %v3671, 0
      %v3782 = vsel %vm378, %v3672, 0
      %v3785 = vsel %vm378, %v3673, 0
      %v3788 = vsel %vm378, %v3674, 0
      %v3791 = vsel %vm378, %v3675, 0
      %v3794 = vsel %vm378, %v3676, 0
      %v3797 = vsel %vm378, %v3677, 0
      %v3800 = vsel %vm378, %v3678, 0
      %v3803 = vsel %vm378, %v3679, 0
      %v3806 = vsel %vm378, %v3680, 0
      %v3809 = vsel %vm378, %v3681, 0
      %3811 = vmatprep.subr.mxu0 0.0
      %3812 = vmatpush1.msra.mxu0 %v3682
      %3813 = vmatprep.subr.mxu0 0.0
      %3814 = vmatpush1.msra.mxu0 0.0
      %3815 = vmatprep.subr.mxu0 0.0
      %3816 = vmatpush1.msra.mxu0 0.0
      %3817 = vmatprep.subr.mxu0 0.0
      %3818 = vmatpush1.msra.mxu0 0.0
      %3819 = vmatprep.subr.mxu0 0.0
      %3820 = vmatpush1.msra.mxu0 0.0
      %3821 = vmatprep.subr.mxu0 0.0
      %3822 = vmatpush1.msra.mxu0 0.0
      %3823 = vmatprep.subr.mxu0 0.0
      %3824 = vmatpush1.msra.mxu0 0.0
      %3825 = vmatprep.subr.mxu0 0.0
      %3826 = vmatpush1.msra.mxu0 0.0
      %3827 = vmatprep.subr.mxu0 0.0
      %3828 = vmatpush1.msra.mxu0 0.0
      %3829 = vmatprep.subr.mxu0 0.0
      %3830 = vmatpush1.msra.mxu0 0.0
      %3831 = vmatprep.subr.mxu0 0.0
      %3832 = vmatpush1.msra.mxu0 0.0
      %3833 = vmatprep.subr.mxu0 0.0
      %3834 = vmatpush1.msra.mxu0 0.0
      %3835 = vmatprep.subr.mxu0 0.0
      %3836 = vmatpush1.msra.mxu0 0.0
      %3837 = vmatprep.subr.mxu0 0.0
      %3838 = vmatpush1.msra.mxu0 0.0
      %3839 = vmatprep.subr.mxu0 0.0
      %3840 = vmatpush1.msra.mxu0 0.0
      %3841 = vmatprep.subr.mxu0 0.0
      %3842 = vmatpush1.msra.mxu0 0.0
      %3843 = vmatprep.subr.mxu0 0.0
      %3844 = vmatpush1.msra.mxu0 0.0
      %3845 = vmatprep.subr.mxu0 0.0
      %3846 = vmatpush1.msra.mxu0 0.0
      %3847 = vmatprep.subr.mxu0 0.0
      %3848 = vmatpush1.msra.mxu0 0.0
      %3849 = vmatprep.subr.mxu0 0.0
      %3850 = vmatpush1.msra.mxu0 0.0
      %3851 = vmatprep.subr.mxu0 0.0
      %3852 = vmatpush1.msra.mxu0 0.0
      %3853 = vmatprep.subr.mxu0 0.0
      %3854 = vmatpush1.msra.mxu0 0.0
      %3855 = vmatprep.subr.mxu0 0.0
      %3856 = vmatpush1.msra.mxu0 0.0
      %3857 = vmatprep.subr.mxu0 0.0
      %3858 = vmatpush1.msra.mxu0 0.0
      %3859 = vmatprep.subr.mxu0 0.0
      %3860 = vmatpush1.msra.mxu0 0.0
      %3861 = vmatprep.subr.mxu0 0.0
      %3862 = vmatpush1.msra.mxu0 0.0
      %3863 = vmatprep.subr.mxu0 0.0
      %3864 = vmatpush1.msra.mxu0 0.0
      %3865 = vmatprep.subr.mxu0 0.0
      %3866 = vmatpush1.msra.mxu0 0.0
      %3867 = vmatprep.subr.mxu0 0.0
      %3868 = vmatpush1.msra.mxu0 0.0
      %3869 = vmatprep.subr.mxu0 0.0
      %3870 = vmatpush1.msra.mxu0 0.0
      %3871 = vmatprep.subr.mxu0 0.0
      %3872 = vmatpush1.msra.mxu0 0.0
      %3873 = vmatprep.subr.mxu0 0.0
      %3874 = vmatpush1.msra.mxu0 0.0
      %3875 = vmatprep.mubr.f32.mxu0 0.0
      %3876 = vmatmul.mubr.f32.gmra.mrb[0].mxu0 %v3716
      %v3877 = vpop.f32.mrb[0].mxu0
      %v3878 = vadd.f32 0.0, %v3877
      %v3879 = vpop.f32.mrb[0].mxu0
      %3880 = vmatprep.mubr.f32.mxu0 0.0
      %3881 = vmatmul.mubr.f32.gmra.mrb[0].mxu0 %v3719
      %v3882 = vpop.f32.mrb[0].mxu0
      %v3883 = vadd.f32 0.0, %v3882
      %v3884 = vpop.f32.mrb[0].mxu0
      %3885 = vmatprep.mubr.f32.mxu0 0.0
      %3886 = vmatmul.mubr.f32.gmra.mrb[0].mxu0 %v3722
      %v3887 = vpop.f32.mrb[0].mxu0
      %v3888 = vadd.f32 0.0, %v3887
      %v3889 = vpop.f32.mrb[0].mxu0
      %3890 = vmatprep.mubr.f32.mxu0 0.0
      %3891 = vmatmul.mubr.f32.gmra.mrb[0].mxu0 %v3725
      %v3892 = vpop.f32.mrb[0].mxu0
      %v3893 = vadd.f32 0.0, %v3892
      %v3894 = vpop.f32.mrb[0].mxu0
      %3895 = vmatprep.mubr.f32.mxu0 0.0
      %3896 = vmatmul.mubr.f32.gmra.mrb[0].mxu0 %v3728
      %v3897 = vpop.f32.mrb[0].mxu0
      %v3898 = vadd.f32 0.0, %v3897
      %v3899 = vpop.f32.mrb[0].mxu0
      %3900 = vmatprep.mubr.f32.mxu0 0.0
      %3901 = vmatmul.mubr.f32.gmra.mrb[0].mxu0 %v3731
      %v3902 = vpop.f32.mrb[0].mxu0
      %v3903 = vadd.f32 0.0, %v3902
      %v3904 = vpop.f32.mrb[0].mxu0
      %3905 = vmatprep.mubr.f32.mxu0 0.0
      %3906 = vmatmul.mubr.f32.gmra.mrb[0].mxu0 %v3734
      %v3907 = vpop.f32.mrb[0].mxu0
      %v3908 = vadd.f32 0.0, %v3907
      %v3909 = vpop.f32.mrb[0].mxu0
      %3910 = vmatprep.mubr.f32.mxu0 0.0
      %3911 = vmatmul.mubr.f32.gmra.mrb[0].mxu0 %v3737
      %v3912 = vpop.f32.mrb[0].mxu0
      %v3913 = vadd.f32 0.0, %v3912
      %v3914 = vpop.f32.mrb[0].mxu0
      %3915 = vmatprep.mubr.f32.mxu0 0.0
      %3916 = vmatmul.mubr.f32.gmra.mrb[0].mxu0 %v3740
      %v3917 = vpop.f32.mrb[0].mxu0
      %v3918 = vadd.f32 0.0, %v3917
      %v3919 = vpop.f32.mrb[0].mxu0
      %3920 = vmatprep.mubr.f32.mxu0 0.0
      %3921 = vmatmul.mubr.f32.gmra.mrb[0].mxu0 %v3743
      %v3922 = vpop.f32.mrb[0].mxu0
      %v3923 = vadd.f32 0.0, %v3922
      %v3924 = vpop.f32.mrb[0].mxu0
      %3925 = vmatprep.mubr.f32.mxu0 0.0
      %3926 = vmatmul.mubr.f32.gmra.mrb[0].mxu0 %v3746
      %v3927 = vpop.f32.mrb[0].mxu0
      %v3928 = vadd.f32 0.0, %v3927
      %v3929 = vpop.f32.mrb[0].mxu0
      %3930 = vmatprep.mubr.f32.mxu0 0.0
      %3931 = vmatmul.mubr.f32.gmra.mrb[0].mxu0 %v3749
      %v3932 = vpop.f32.mrb[0].mxu0
      %v3933 = vadd.f32 0.0, %v3932
      %v3934 = vpop.f32.mrb[0].mxu0
      %3935 = vmatprep.mubr.f32.mxu0 0.0
      %3936 = vmatmul.mubr.f32.gmra.mrb[0].mxu0 %v3752
      %v3937 = vpop.f32.mrb[0].mxu0
      %v3938 = vadd.f32 0.0, %v3937
      %v3939 = vpop.f32.mrb[0].mxu0
      %3940 = vmatprep.mubr.f32.mxu0 0.0
      %3941 = vmatmul.mubr.f32.gmra.mrb[0].mxu0 %v3755
      %v3942 = vpop.f32.mrb[0].mxu0
      %v3943 = vadd.f32 0.0, %v3942
      %v3944 = vpop.f32.mrb[0].mxu0
      %3945 = vmatprep.mubr.f32.mxu0 0.0
      %3946 = vmatmul.mubr.f32.gmra.mrb[0].mxu0 %v3758
      %v3947 = vpop.f32.mrb[0].mxu0
      %v3948 = vadd.f32 0.0, %v3947
      %v3949 = vpop.f32.mrb[0].mxu0
      %3950 = vmatprep.mubr.f32.mxu0 0.0
      %3951 = vmatmul.mubr.f32.gmra.mrb[0].mxu0 %v3761
      %v3952 = vpop.f32.mrb[0].mxu0
      %v3953 = vadd.f32 0.0, %v3952
      %v3954 = vpop.f32.mrb[0].mxu0
      %3955 = vmatprep.mubr.f32.mxu0 0.0
      %3956 = vmatmul.mubr.f32.gmra.mrb[0].mxu0 %v3764
      %v3957 = vpop.f32.mrb[0].mxu0
      %v3958 = vadd.f32 0.0, %v3957
      %v3959 = vpop.f32.mrb[0].mxu0
      %3960 = vmatprep.mubr.f32.mxu0 0.0
      %3961 = vmatmul.mubr.f32.gmra.mrb[0].mxu0 %v3767
      %v3962 = vpop.f32.mrb[0].mxu0
      %v3963 = vadd.f32 0.0, %v3962
      %v3964 = vpop.f32.mrb[0].mxu0
      %3965 = vmatprep.mubr.f32.mxu0 0.0
      %3966 = vmatmul.mubr.f32.gmra.mrb[0].mxu0 %v3770
      %v3967 = vpop.f32.mrb[0].mxu0
      %v3968 = vadd.f32 0.0, %v3967
      %v3969 = vpop.f32.mrb[0].mxu0
      %3970 = vmatprep.mubr.f32.mxu0 0.0
      %3971 = vmatmul.mubr.f32.gmra.mrb[0].mxu0 %v3773
      %v3972 = vpop.f32.mrb[0].mxu0
      %v3973 = vadd.f32 0.0, %v3972
      %v3974 = vpop.f32.mrb[0].mxu0
      %3975 = vmatprep.mubr.f32.mxu0 0.0
      %3976 = vmatmul.mubr.f32.gmra.mrb[0].mxu0 %v3776
      %v3977 = vpop.f32.mrb[0].mxu0
      %v3978 = vadd.f32 0.0, %v3977
      %v3979 = vpop.f32.mrb[0].mxu0
      %3980 = vmatprep.mubr.f32.mxu0 0.0
      %3981 = vmatmul.mubr.f32.gmra.mrb[0].mxu0 %v3779
      %v3982 = vpop.f32.mrb[0].mxu0
      %v3983 = vadd.f32 0.0, %v3982
      %v3984 = vpop.f32.mrb[0].mxu0
      %3985 = vmatprep.mubr.f32.mxu0 0.0
      %3986 = vmatmul.mubr.f32.gmra.mrb[0].mxu0 %v3782
      %v3987 = vpop.f32.mrb[0].mxu0
      %v3988 = vadd.f32 0.0, %v3987
      %v3989 = vpop.f32.mrb[0].mxu0
      %3990 = vmatprep.mubr.f32.mxu0 0.0
      %3991 = vmatmul.mubr.f32.gmra.mrb[0].mxu0 %v3785
      %v3992 = vpop.f32.mrb[0].mxu0
      %v3993 = vadd.f32 0.0, %v3992
      %v3994 = vpop.f32.mrb[0].mxu0
      %3995 = vmatprep.mubr.f32.mxu0 0.0
      %3996 = vmatmul.mubr.f32.gmra.mrb[0].mxu0 %v3788
      %v3997 = vpop.f32.mrb[0].mxu0
      %v3998 = vadd.f32 0.0, %v3997
      %v3999 = vpop.f32.mrb[0].mxu0
      %4000 = vmatprep.mubr.f32.mxu0 0.0
      %4001 = vmatmul.mubr.f32.gmra.mrb[0].mxu0 %v3791
      %v4002 = vpop.f32.mrb[0].mxu0
      %v4003 = vadd.f32 0.0, %v4002
      %v4004 = vpop.f32.mrb[0].mxu0
      %4005 = vmatprep.mubr.f32.mxu0 0.0
      %4006 = vmatmul.mubr.f32.gmra.mrb[0].mxu0 %v3794
      %v4007 = vpop.f32.mrb[0].mxu0
      %v4008 = vadd.f32 0.0, %v4007
      %v4009 = vpop.f32.mrb[0].mxu0
      %4010 = vmatprep.mubr.f32.mxu0 0.0
      %4011 = vmatmul.mubr.f32.gmra.mrb[0].mxu0 %v3797
      %v4012 = vpop.f32.mrb[0].mxu0
      %v4013 = vadd.f32 0.0, %v4012
      %v4014 = vpop.f32.mrb[0].mxu0
      %4015 = vmatprep.mubr.f32.mxu0 0.0
      %4016 = vmatmul.mubr.f32.gmra.mrb[0].mxu0 %v3800
      %v4017 = vpop.f32.mrb[0].mxu0
      %v4018 = vadd.f32 0.0, %v4017
      %v4019 = vpop.f32.mrb[0].mxu0
      %4020 = vmatprep.mubr.f32.mxu0 0.0
      %4021 = vmatmul.mubr.f32.gmra.mrb[0].mxu0 %v3803
      %v4022 = vpop.f32.mrb[0].mxu0
      %v4023 = vadd.f32 0.0, %v4022
      %v4024 = vpop.f32.mrb[0].mxu0
      %4025 = vmatprep.mubr.f32.mxu0 0.0
      %4026 = vmatmul.mubr.f32.gmra.mrb[0].mxu0 %v3806
      %v4027 = vpop.f32.mrb[0].mxu0
      %v4028 = vadd.f32 0.0, %v4027
      %v4029 = vpop.f32.mrb[0].mxu0
      %4030 = vmatprep.mubr.f32.mxu0 0.0
      %4031 = vmatmul.mubr.f32.gmra.mrb[0].mxu0 %v3809
      %v4032 = vpop.f32.mrb[0].mxu0
      %v4033 = vadd.f32 0.0, %v4032
      %v4034 = vpop.f32.mrb[0].mxu0
      %4035 = vdwg.mxu0
      %v4036 = vadd.f32 %v3683, %v3878
      %v4037 = vadd.f32 %v3684, %v3883
      %v4038 = vadd.f32 %v3685, %v3888
      %v4039 = vadd.f32 %v3686, %v3893
      %v4040 = vadd.f32 %v3687, %v3898
      %v4041 = vadd.f32 %v3688, %v3903
      %v4042 = vadd.f32 %v3689, %v3908
      %v4043 = vadd.f32 %v3690, %v3913
      %v4044 = vadd.f32 %v3691, %v3918
      %v4045 = vadd.f32 %v3692, %v3923
      %v4046 = vadd.f32 %v3693, %v3928
      %v4047 = vadd.f32 %v3694, %v3933
      %v4048 = vadd.f32 %v3695, %v3938
      %v4049 = vadd.f32 %v3696, %v3943
      %v4050 = vadd.f32 %v3697, %v3948
      %v4051 = vadd.f32 %v3698, %v3953
      %v4052 = vadd.f32 %v3699, %v3958
      %v4053 = vadd.f32 %v3700, %v3963
      %v4054 = vadd.f32 %v3701, %v3968
      %v4055 = vadd.f32 %v3702, %v3973
      %v4056 = vadd.f32 %v3703, %v3978
      %v4057 = vadd.f32 %v3704, %v3983
      %v4058 = vadd.f32 %v3705, %v3988
      %v4059 = vadd.f32 %v3706, %v3993
      %v4060 = vadd.f32 %v3707, %v3998
      %v4061 = vadd.f32 %v3708, %v4003
      %v4062 = vadd.f32 %v3709, %v4008
      %v4063 = vadd.f32 %v3710, %v4013
      %v4064 = vadd.f32 %v3711, %v4018
      %v4065 = vadd.f32 %v3712, %v4023
      %v4066 = vadd.f32 %v3713, %v4028
      %v4067 = vadd.f32 %v3714, %v4033
      %4068 = vst.msk [vmem:[#allocation3] sm:$0xff] %vm378, %v4036
      %4069 = vst.msk [vmem:[#allocation3 + $0x8] sm:$0xff] %vm378, %v4037
      %4070 = vst.msk [vmem:[#allocation3 + $0x10] sm:$0xff] %vm378, %v4038
      %4071 = vst.msk [vmem:[#allocation3 + $0x18] sm:$0xff] %vm378, %v4039
      %4072 = vst.msk [vmem:[#allocation3 + $0x20] sm:$0xff] %vm378, %v4040
      %4073 = vst.msk [vmem:[#allocation3 + $0x28] sm:$0xff] %vm378, %v4041
      %4074 = vst.msk [vmem:[#allocation3 + $0x30] sm:$0xff] %vm378, %v4042
      %4075 = vst.msk [vmem:[#allocation3 + $0x38] sm:$0xff] %vm378, %v4043
      %4076 = vst.msk [vmem:[#allocation3 + $0x40] sm:$0xff] %vm378, %v4044
      %4077 = vst.msk [vmem:[#allocation3 + $0x48] sm:$0xff] %vm378, %v4045
      %4078 = vst.msk [vmem:[#allocation3 + $0x50] sm:$0xff] %vm378, %v4046
      %4079 = vst.msk [vmem:[#allocation3 + $0x58] sm:$0xff] %vm378, %v4047
      %4080 = vst.msk [vmem:[#allocation3 + $0x60] sm:$0xff] %vm378, %v4048
      %4081 = vst.msk [vmem:[#allocation3 + $0x68] sm:$0xff] %vm378, %v4049
      %4082 = vst.msk [vmem:[#allocation3 + $0x70] sm:$0xff] %vm378, %v4050
      %4083 = vst.msk [vmem:[#allocation3 + $0x78] sm:$0xff] %vm378, %v4051
      %4084 = vst.msk [vmem:[#allocation3 + $0x80] sm:$0xff] %vm378, %v4052
      %4085 = vst.msk [vmem:[#allocation3 + $0x88] sm:$0xff] %vm378, %v4053
      %4086 = vst.msk [vmem:[#allocation3 + $0x90] sm:$0xff] %vm378, %v4054
      %4087 = vst.msk [vmem:[#allocation3 + $0x98] sm:$0xff] %vm378, %v4055
      %4088 = vst.msk [vmem:[#allocation3 + $0xa0] sm:$0xff] %vm378, %v4056
      %4089 = vst.msk [vmem:[#allocation3 + $0xa8] sm:$0xff] %vm378, %v4057
      %4090 = vst.msk [vmem:[#allocation3 + $0xb0] sm:$0xff] %vm378, %v4058
      %4091 = vst.msk [vmem:[#allocation3 + $0xb8] sm:$0xff] %vm378, %v4059
      %4092 = vst.msk [vmem:[#allocation3 + $0xc0] sm:$0xff] %vm378, %v4060
      %4093 = vst.msk [vmem:[#allocation3 + $0xc8] sm:$0xff] %vm378, %v4061
      %4094 = vst.msk [vmem:[#allocation3 + $0xd0] sm:$0xff] %vm378, %v4062
      %4095 = vst.msk [vmem:[#allocation3 + $0xd8] sm:$0xff] %vm378, %v4063
      %4096 = vst.msk [vmem:[#allocation3 + $0xe0] sm:$0xff] %vm378, %v4064
      %4097 = vst.msk [vmem:[#allocation3 + $0xe8] sm:$0xff] %vm378, %v4065
      %4098 = vst.msk [vmem:[#allocation3 + $0xf0] sm:$0xff] %vm378, %v4066
      %4099 = vst.msk [vmem:[#allocation3 + $0xf8] sm:$0xff] %vm378, %v4067
      %v4100 = vld [vmem:[%s3199 + $0x2] sm:$0xff]
      %v4101 = vld [vmem:[%s3199 + $0xa] sm:$0xff]
      %v4102 = vld [vmem:[%s3199 + $0x1a] sm:$0xff]
      %v4103 = vld [vmem:[%s3199 + $0x22] sm:$0xff]
      %v4104 = vld [vmem:[%s3199 + $0x32] sm:$0xff]
      %v4105 = vld [vmem:[%s3199 + $0x3a] sm:$0xff]
      %v4106 = vld [vmem:[%s3199 + $0x4a] sm:$0xff]
      %v4107 = vld [vmem:[%s3199 + $0x52] sm:$0xff]
      %v4108 = vld [vmem:[%s3199 + $0x62] sm:$0xff]
      %v4109 = vld [vmem:[%s3199 + $0x6a] sm:$0xff]
      %v4110 = vld [vmem:[%s3199 + $0x7a] sm:$0xff]
      %v4111 = vld [vmem:[%s3199 + $0x82] sm:$0xff]
      %v4112 = vld [vmem:[%s3199 + $0x92] sm:$0xff]
      %v4113 = vld [vmem:[%s3199 + $0x9a] sm:$0xff]
      %v4114 = vld [vmem:[%s3199 + $0xaa] sm:$0xff]
      %v4115 = vld [vmem:[%s3199 + $0xb2] sm:$0xff]
      %v4116 = vld [vmem:[%s3199 + $0xc2] sm:$0xff]
      %v4117 = vld [vmem:[%s3199 + $0xca] sm:$0xff]
      %v4118 = vld [vmem:[%s3199 + $0xda] sm:$0xff]
      %v4119 = vld [vmem:[%s3199 + $0xe2] sm:$0xff]
      %v4120 = vld [vmem:[%s3199 + $0xf2] sm:$0xff]
      %v4121 = vld [vmem:[%s3199 + $0xfa] sm:$0xff]
      %v4122 = vld [vmem:[%s3199 + $0x10a] sm:$0xff]
      %v4123 = vld [vmem:[%s3199 + $0x112] sm:$0xff]
      %v4124 = vld [vmem:[%s3199 + $0x122] sm:$0xff]
      %v4125 = vld [vmem:[%s3199 + $0x12a] sm:$0xff]
      %v4126 = vld [vmem:[%s3199 + $0x13a] sm:$0xff]
      %v4127 = vld [vmem:[%s3199 + $0x142] sm:$0xff]
      %v4128 = vld [vmem:[%s3199 + $0x152] sm:$0xff]
      %v4129 = vld [vmem:[%s3199 + $0x15a] sm:$0xff]
      %v4130 = vld [vmem:[%s3199 + $0x16a] sm:$0xff]
      %v4131 = vld [vmem:[%s3199 + $0x172] sm:$0xff]
      %v4132 = vld [vmem:[%s3 + $0x40] sm:$0xff]
      %v4133 = vld [vmem:[#allocation3] sm:$0xff]
      %v4134 = vld [vmem:[#allocation3 + $0x8] sm:$0xff]
      %v4135 = vld [vmem:[#allocation3 + $0x10] sm:$0xff]
      %v4136 = vld [vmem:[#allocation3 + $0x18] sm:$0xff]
      %v4137 = vld [vmem:[#allocation3 + $0x20] sm:$0xff]
      %v4138 = vld [vmem:[#allocation3 + $0x28] sm:$0xff]
      %v4139 = vld [vmem:[#allocation3 + $0x30] sm:$0xff]
      %v4140 = vld [vmem:[#allocation3 + $0x38] sm:$0xff]
      %v4141 = vld [vmem:[#allocation3 + $0x40] sm:$0xff]
      %v4142 = vld [vmem:[#allocation3 + $0x48] sm:$0xff]
      %v4143 = vld [vmem:[#allocation3 + $0x50] sm:$0xff]
      %v4144 = vld [vmem:[#allocation3 + $0x58] sm:$0xff]
      %v4145 = vld [vmem:[#allocation3 + $0x60] sm:$0xff]
      %v4146 = vld [vmem:[#allocation3 + $0x68] sm:$0xff]
      %v4147 = vld [vmem:[#allocation3 + $0x70] sm:$0xff]
      %v4148 = vld [vmem:[#allocation3 + $0x78] sm:$0xff]
      %v4149 = vld [vmem:[#allocation3 + $0x80] sm:$0xff]
      %v4150 = vld [vmem:[#allocation3 + $0x88] sm:$0xff]
      %v4151 = vld [vmem:[#allocation3 + $0x90] sm:$0xff]
      %v4152 = vld [vmem:[#allocation3 + $0x98] sm:$0xff]
      %v4153 = vld [vmem:[#allocation3 + $0xa0] sm:$0xff]
      %v4154 = vld [vmem:[#allocation3 + $0xa8] sm:$0xff]
      %v4155 = vld [vmem:[#allocation3 + $0xb0] sm:$0xff]
      %v4156 = vld [vmem:[#allocation3 + $0xb8] sm:$0xff]
      %v4157 = vld [vmem:[#allocation3 + $0xc0] sm:$0xff]
      %v4158 = vld [vmem:[#allocation3 + $0xc8] sm:$0xff]
      %v4159 = vld [vmem:[#allocation3 + $0xd0] sm:$0xff]
      %v4160 = vld [vmem:[#allocation3 + $0xd8] sm:$0xff]
      %v4161 = vld [vmem:[#allocation3 + $0xe0] sm:$0xff]
      %v4162 = vld [vmem:[#allocation3 + $0xe8] sm:$0xff]
      %v4163 = vld [vmem:[#allocation3 + $0xf0] sm:$0xff]
      %v4164 = vld [vmem:[#allocation3 + $0xf8] sm:$0xff]
      %v4166 = vsel %vm378, %v4100, 0
      %v4169 = vsel %vm378, %v4101, 0
      %v4172 = vsel %vm378, %v4102, 0
      %v4175 = vsel %vm378, %v4103, 0
      %v4178 = vsel %vm378, %v4104, 0
      %v4181 = vsel %vm378, %v4105, 0
      %v4184 = vsel %vm378, %v4106, 0
      %v4187 = vsel %vm378, %v4107, 0
      %v4190 = vsel %vm378, %v4108, 0
      %v4193 = vsel %vm378, %v4109, 0
      %v4196 = vsel %vm378, %v4110, 0
      %v4199 = vsel %vm378, %v4111, 0
      %v4202 = vsel %vm378, %v4112, 0
      %v4205 = vsel %vm378, %v4113, 0
      %v4208 = vsel %vm378, %v4114, 0
      %v4211 = vsel %vm378, %v4115, 0
      %v4214 = vsel %vm378, %v4116, 0
      %v4217 = vsel %vm378, %v4117, 0
      %v4220 = vsel %vm378, %v4118, 0
      %v4223 = vsel %vm378, %v4119, 0
      %v4226 = vsel %vm378, %v4120, 0
      %v4229 = vsel %vm378, %v4121, 0
      %v4232 = vsel %vm378, %v4122, 0
      %v4235 = vsel %vm378, %v4123, 0
      %v4238 = vsel %vm378, %v4124, 0
      %v4241 = vsel %vm378, %v4125, 0
      %v4244 = vsel %vm378, %v4126, 0
      %v4247 = vsel %vm378, %v4127, 0
      %v4250 = vsel %vm378, %v4128, 0
      %v4253 = vsel %vm378, %v4129, 0
      %v4256 = vsel %vm378, %v4130, 0
      %v4259 = vsel %vm378, %v4131, 0
      %4261 = vmatprep.subr.mxu0 0.0
      %4262 = vmatpush1.msra.mxu0 %v4132
      %4263 = vmatprep.subr.mxu0 0.0
      %4264 = vmatpush1.msra.mxu0 0.0
      %4265 = vmatprep.subr.mxu0 0.0
      %4266 = vmatpush1.msra.mxu0 0.0
      %4267 = vmatprep.subr.mxu0 0.0
      %4268 = vmatpush1.msra.mxu0 0.0
      %4269 = vmatprep.subr.mxu0 0.0
      %4270 = vmatpush1.msra.mxu0 0.0
      %4271 = vmatprep.subr.mxu0 0.0
      %4272 = vmatpush1.msra.mxu0 0.0
      %4273 = vmatprep.subr.mxu0 0.0
      %4274 = vmatpush1.msra.mxu0 0.0
      %4275 = vmatprep.subr.mxu0 0.0
      %4276 = vmatpush1.msra.mxu0 0.0
      %4277 = vmatprep.subr.mxu0 0.0
      %4278 = vmatpush1.msra.mxu0 0.0
      %4279 = vmatprep.subr.mxu0 0.0
      %4280 = vmatpush1.msra.mxu0 0.0
      %4281 = vmatprep.subr.mxu0 0.0
      %4282 = vmatpush1.msra.mxu0 0.0
      %4283 = vmatprep.subr.mxu0 0.0
      %4284 = vmatpush1.msra.mxu0 0.0
      %4285 = vmatprep.subr.mxu0 0.0
      %4286 = vmatpush1.msra.mxu0 0.0
      %4287 = vmatprep.subr.mxu0 0.0
      %4288 = vmatpush1.msra.mxu0 0.0
      %4289 = vmatprep.subr.mxu0 0.0
      %4290 = vmatpush1.msra.mxu0 0.0
      %4291 = vmatprep.subr.mxu0 0.0
      %4292 = vmatpush1.msra.mxu0 0.0
      %4293 = vmatprep.subr.mxu0 0.0
      %4294 = vmatpush1.msra.mxu0 0.0
      %4295 = vmatprep.subr.mxu0 0.0
      %4296 = vmatpush1.msra.mxu0 0.0
      %4297 = vmatprep.subr.mxu0 0.0
      %4298 = vmatpush1.msra.mxu0 0.0
      %4299 = vmatprep.subr.mxu0 0.0
      %4300 = vmatpush1.msra.mxu0 0.0
      %4301 = vmatprep.subr.mxu0 0.0
      %4302 = vmatpush1.msra.mxu0 0.0
      %4303 = vmatprep.subr.mxu0 0.0
      %4304 = vmatpush1.msra.mxu0 0.0
      %4305 = vmatprep.subr.mxu0 0.0
      %4306 = vmatpush1.msra.mxu0 0.0
      %4307 = vmatprep.subr.mxu0 0.0
      %4308 = vmatpush1.msra.mxu0 0.0
      %4309 = vmatprep.subr.mxu0 0.0
      %4310 = vmatpush1.msra.mxu0 0.0
      %4311 = vmatprep.subr.mxu0 0.0
      %4312 = vmatpush1.msra.mxu0 0.0
      %4313 = vmatprep.subr.mxu0 0.0
      %4314 = vmatpush1.msra.mxu0 0.0
      %4315 = vmatprep.subr.mxu0 0.0
      %4316 = vmatpush1.msra.mxu0 0.0
      %4317 = vmatprep.subr.mxu0 0.0
      %4318 = vmatpush1.msra.mxu0 0.0
      %4319 = vmatprep.subr.mxu0 0.0
      %4320 = vmatpush1.msra.mxu0 0.0
      %4321 = vmatprep.subr.mxu0 0.0
      %4322 = vmatpush1.msra.mxu0 0.0
      %4323 = vmatprep.subr.mxu0 0.0
      %4324 = vmatpush1.msra.mxu0 0.0
      %4325 = vmatprep.mubr.f32.mxu0 0.0
      %4326 = vmatmul.mubr.f32.gmra.mrb[0].mxu0 %v4166
      %v4327 = vpop.f32.mrb[0].mxu0
      %v4328 = vadd.f32 0.0, %v4327
      %v4329 = vpop.f32.mrb[0].mxu0
      %4330 = vmatprep.mubr.f32.mxu0 0.0
      %4331 = vmatmul.mubr.f32.gmra.mrb[0].mxu0 %v4169
      %v4332 = vpop.f32.mrb[0].mxu0
      %v4333 = vadd.f32 0.0, %v4332
      %v4334 = vpop.f32.mrb[0].mxu0
      %4335 = vmatprep.mubr.f32.mxu0 0.0
      %4336 = vmatmul.mubr.f32.gmra.mrb[0].mxu0 %v4172
      %v4337 = vpop.f32.mrb[0].mxu0
      %v4338 = vadd.f32 0.0, %v4337
      %v4339 = vpop.f32.mrb[0].mxu0
      %4340 = vmatprep.mubr.f32.mxu0 0.0
      %4341 = vmatmul.mubr.f32.gmra.mrb[0].mxu0 %v4175
      %v4342 = vpop.f32.mrb[0].mxu0
      %v4343 = vadd.f32 0.0, %v4342
      %v4344 = vpop.f32.mrb[0].mxu0
      %4345 = vmatprep.mubr.f32.mxu0 0.0
      %4346 = vmatmul.mubr.f32.gmra.mrb[0].mxu0 %v4178
      %v4347 = vpop.f32.mrb[0].mxu0
      %v4348 = vadd.f32 0.0, %v4347
      %v4349 = vpop.f32.mrb[0].mxu0
      %4350 = vmatprep.mubr.f32.mxu0 0.0
      %4351 = vmatmul.mubr.f32.gmra.mrb[0].mxu0 %v4181
      %v4352 = vpop.f32.mrb[0].mxu0
      %v4353 = vadd.f32 0.0, %v4352
      %v4354 = vpop.f32.mrb[0].mxu0
      %4355 = vmatprep.mubr.f32.mxu0 0.0
      %4356 = vmatmul.mubr.f32.gmra.mrb[0].mxu0 %v4184
      %v4357 = vpop.f32.mrb[0].mxu0
      %v4358 = vadd.f32 0.0, %v4357
      %v4359 = vpop.f32.mrb[0].mxu0
      %4360 = vmatprep.mubr.f32.mxu0 0.0
      %4361 = vmatmul.mubr.f32.gmra.mrb[0].mxu0 %v4187
      %v4362 = vpop.f32.mrb[0].mxu0
      %v4363 = vadd.f32 0.0, %v4362
      %v4364 = vpop.f32.mrb[0].mxu0
      %4365 = vmatprep.mubr.f32.mxu0 0.0
      %4366 = vmatmul.mubr.f32.gmra.mrb[0].mxu0 %v4190
      %v4367 = vpop.f32.mrb[0].mxu0
      %v4368 = vadd.f32 0.0, %v4367
      %v4369 = vpop.f32.mrb[0].mxu0
      %4370 = vmatprep.mubr.f32.mxu0 0.0
      %4371 = vmatmul.mubr.f32.gmra.mrb[0].mxu0 %v4193
      %v4372 = vpop.f32.mrb[0].mxu0
      %v4373 = vadd.f32 0.0, %v4372
      %v4374 = vpop.f32.mrb[0].mxu0
      %4375 = vmatprep.mubr.f32.mxu0 0.0
      %4376 = vmatmul.mubr.f32.gmra.mrb[0].mxu0 %v4196
      %v4377 = vpop.f32.mrb[0].mxu0
      %v4378 = vadd.f32 0.0, %v4377
      %v4379 = vpop.f32.mrb[0].mxu0
      %4380 = vmatprep.mubr.f32.mxu0 0.0
      %4381 = vmatmul.mubr.f32.gmra.mrb[0].mxu0 %v4199
      %v4382 = vpop.f32.mrb[0].mxu0
      %v4383 = vadd.f32 0.0, %v4382
      %v4384 = vpop.f32.mrb[0].mxu0
      %4385 = vmatprep.mubr.f32.mxu0 0.0
      %4386 = vmatmul.mubr.f32.gmra.mrb[0].mxu0 %v4202
      %v4387 = vpop.f32.mrb[0].mxu0
      %v4388 = vadd.f32 0.0, %v4387
      %v4389 = vpop.f32.mrb[0].mxu0
      %4390 = vmatprep.mubr.f32.mxu0 0.0
      %4391 = vmatmul.mubr.f32.gmra.mrb[0].mxu0 %v4205
      %v4392 = vpop.f32.mrb[0].mxu0
      %v4393 = vadd.f32 0.0, %v4392
      %v4394 = vpop.f32.mrb[0].mxu0
      %4395 = vmatprep.mubr.f32.mxu0 0.0
      %4396 = vmatmul.mubr.f32.gmra.mrb[0].mxu0 %v4208
      %v4397 = vpop.f32.mrb[0].mxu0
      %v4398 = vadd.f32 0.0, %v4397
      %v4399 = vpop.f32.mrb[0].mxu0
      %4400 = vmatprep.mubr.f32.mxu0 0.0
      %4401 = vmatmul.mubr.f32.gmra.mrb[0].mxu0 %v4211
      %v4402 = vpop.f32.mrb[0].mxu0
      %v4403 = vadd.f32 0.0, %v4402
      %v4404 = vpop.f32.mrb[0].mxu0
      %4405 = vmatprep.mubr.f32.mxu0 0.0
      %4406 = vmatmul.mubr.f32.gmra.mrb[0].mxu0 %v4214
      %v4407 = vpop.f32.mrb[0].mxu0
      %v4408 = vadd.f32 0.0, %v4407
      %v4409 = vpop.f32.mrb[0].mxu0
      %4410 = vmatprep.mubr.f32.mxu0 0.0
      %4411 = vmatmul.mubr.f32.gmra.mrb[0].mxu0 %v4217
      %v4412 = vpop.f32.mrb[0].mxu0
      %v4413 = vadd.f32 0.0, %v4412
      %v4414 = vpop.f32.mrb[0].mxu0
      %4415 = vmatprep.mubr.f32.mxu0 0.0
      %4416 = vmatmul.mubr.f32.gmra.mrb[0].mxu0 %v4220
      %v4417 = vpop.f32.mrb[0].mxu0
      %v4418 = vadd.f32 0.0, %v4417
      %v4419 = vpop.f32.mrb[0].mxu0
      %4420 = vmatprep.mubr.f32.mxu0 0.0
      %4421 = vmatmul.mubr.f32.gmra.mrb[0].mxu0 %v4223
      %v4422 = vpop.f32.mrb[0].mxu0
      %v4423 = vadd.f32 0.0, %v4422
      %v4424 = vpop.f32.mrb[0].mxu0
      %4425 = vmatprep.mubr.f32.mxu0 0.0
      %4426 = vmatmul.mubr.f32.gmra.mrb[0].mxu0 %v4226
      %v4427 = vpop.f32.mrb[0].mxu0
      %v4428 = vadd.f32 0.0, %v4427
      %v4429 = vpop.f32.mrb[0].mxu0
      %4430 = vmatprep.mubr.f32.mxu0 0.0
      %4431 = vmatmul.mubr.f32.gmra.mrb[0].mxu0 %v4229
      %v4432 = vpop.f32.mrb[0].mxu0
      %v4433 = vadd.f32 0.0, %v4432
      %v4434 = vpop.f32.mrb[0].mxu0
      %4435 = vmatprep.mubr.f32.mxu0 0.0
      %4436 = vmatmul.mubr.f32.gmra.mrb[0].mxu0 %v4232
      %v4437 = vpop.f32.mrb[0].mxu0
      %v4438 = vadd.f32 0.0, %v4437
      %v4439 = vpop.f32.mrb[0].mxu0
      %4440 = vmatprep.mubr.f32.mxu0 0.0
      %4441 = vmatmul.mubr.f32.gmra.mrb[0].mxu0 %v4235
      %v4442 = vpop.f32.mrb[0].mxu0
      %v4443 = vadd.f32 0.0, %v4442
      %v4444 = vpop.f32.mrb[0].mxu0
      %4445 = vmatprep.mubr.f32.mxu0 0.0
      %4446 = vmatmul.mubr.f32.gmra.mrb[0].mxu0 %v4238
      %v4447 = vpop.f32.mrb[0].mxu0
      %v4448 = vadd.f32 0.0, %v4447
      %v4449 = vpop.f32.mrb[0].mxu0
      %4450 = vmatprep.mubr.f32.mxu0 0.0
      %4451 = vmatmul.mubr.f32.gmra.mrb[0].mxu0 %v4241
      %v4452 = vpop.f32.mrb[0].mxu0
      %v4453 = vadd.f32 0.0, %v4452
      %v4454 = vpop.f32.mrb[0].mxu0
      %4455 = vmatprep.mubr.f32.mxu0 0.0
      %4456 = vmatmul.mubr.f32.gmra.mrb[0].mxu0 %v4244
      %v4457 = vpop.f32.mrb[0].mxu0
      %v4458 = vadd.f32 0.0, %v4457
      %v4459 = vpop.f32.mrb[0].mxu0
      %4460 = vmatprep.mubr.f32.mxu0 0.0
      %4461 = vmatmul.mubr.f32.gmra.mrb[0].mxu0 %v4247
      %v4462 = vpop.f32.mrb[0].mxu0
      %v4463 = vadd.f32 0.0, %v4462
      %v4464 = vpop.f32.mrb[0].mxu0
      %4465 = vmatprep.mubr.f32.mxu0 0.0
      %4466 = vmatmul.mubr.f32.gmra.mrb[0].mxu0 %v4250
      %v4467 = vpop.f32.mrb[0].mxu0
      %v4468 = vadd.f32 0.0, %v4467
      %v4469 = vpop.f32.mrb[0].mxu0
      %4470 = vmatprep.mubr.f32.mxu0 0.0
      %4471 = vmatmul.mubr.f32.gmra.mrb[0].mxu0 %v4253
      %v4472 = vpop.f32.mrb[0].mxu0
      %v4473 = vadd.f32 0.0, %v4472
      %v4474 = vpop.f32.mrb[0].mxu0
      %4475 = vmatprep.mubr.f32.mxu0 0.0
      %4476 = vmatmul.mubr.f32.gmra.mrb[0].mxu0 %v4256
      %v4477 = vpop.f32.mrb[0].mxu0
      %v4478 = vadd.f32 0.0, %v4477
      %v4479 = vpop.f32.mrb[0].mxu0
      %4480 = vmatprep.mubr.f32.mxu0 0.0
      %4481 = vmatmul.mubr.f32.gmra.mrb[0].mxu0 %v4259
      %v4482 = vpop.f32.mrb[0].mxu0
      %v4483 = vadd.f32 0.0, %v4482
      %v4484 = vpop.f32.mrb[0].mxu0
      %4485 = vdwg.mxu0
      %v4486 = vadd.f32 %v4133, %v4328
      %v4487 = vadd.f32 %v4134, %v4333
      %v4488 = vadd.f32 %v4135, %v4338
      %v4489 = vadd.f32 %v4136, %v4343
      %v4490 = vadd.f32 %v4137, %v4348
      %v4491 = vadd.f32 %v4138, %v4353
      %v4492 = vadd.f32 %v4139, %v4358
      %v4493 = vadd.f32 %v4140, %v4363
      %v4494 = vadd.f32 %v4141, %v4368
      %v4495 = vadd.f32 %v4142, %v4373
      %v4496 = vadd.f32 %v4143, %v4378
      %v4497 = vadd.f32 %v4144, %v4383
      %v4498 = vadd.f32 %v4145, %v4388
      %v4499 = vadd.f32 %v4146, %v4393
      %v4500 = vadd.f32 %v4147, %v4398
      %v4501 = vadd.f32 %v4148, %v4403
      %v4502 = vadd.f32 %v4149, %v4408
      %v4503 = vadd.f32 %v4150, %v4413
      %v4504 = vadd.f32 %v4151, %v4418
      %v4505 = vadd.f32 %v4152, %v4423
      %v4506 = vadd.f32 %v4153, %v4428
      %v4507 = vadd.f32 %v4154, %v4433
      %v4508 = vadd.f32 %v4155, %v4438
      %v4509 = vadd.f32 %v4156, %v4443
      %v4510 = vadd.f32 %v4157, %v4448
      %v4511 = vadd.f32 %v4158, %v4453
      %v4512 = vadd.f32 %v4159, %v4458
      %v4513 = vadd.f32 %v4160, %v4463
      %v4514 = vadd.f32 %v4161, %v4468
      %v4515 = vadd.f32 %v4162, %v4473
      %v4516 = vadd.f32 %v4163, %v4478
      %v4517 = vadd.f32 %v4164, %v4483
      %4518 = vst.msk [vmem:[#allocation3] sm:$0xff] %vm378, %v4486
      %4519 = vst.msk [vmem:[#allocation3 + $0x8] sm:$0xff] %vm378, %v4487
      %4520 = vst.msk [vmem:[#allocation3 + $0x10] sm:$0xff] %vm378, %v4488
      %4521 = vst.msk [vmem:[#allocation3 + $0x18] sm:$0xff] %vm378, %v4489
      %4522 = vst.msk [vmem:[#allocation3 + $0x20] sm:$0xff] %vm378, %v4490
      %4523 = vst.msk [vmem:[#allocation3 + $0x28] sm:$0xff] %vm378, %v4491
      %4524 = vst.msk [vmem:[#allocation3 + $0x30] sm:$0xff] %vm378, %v4492
      %4525 = vst.msk [vmem:[#allocation3 + $0x38] sm:$0xff] %vm378, %v4493
      %4526 = vst.msk [vmem:[#allocation3 + $0x40] sm:$0xff] %vm378, %v4494
      %4527 = vst.msk [vmem:[#allocation3 + $0x48] sm:$0xff] %vm378, %v4495
      %4528 = vst.msk [vmem:[#allocation3 + $0x50] sm:$0xff] %vm378, %v4496
      %4529 = vst.msk [vmem:[#allocation3 + $0x58] sm:$0xff] %vm378, %v4497
      %4530 = vst.msk [vmem:[#allocation3 + $0x60] sm:$0xff] %vm378, %v4498
      %4531 = vst.msk [vmem:[#allocation3 + $0x68] sm:$0xff] %vm378, %v4499
      %4532 = vst.msk [vmem:[#allocation3 + $0x70] sm:$0xff] %vm378, %v4500
      %4533 = vst.msk [vmem:[#allocation3 + $0x78] sm:$0xff] %vm378, %v4501
      %4534 = vst.msk [vmem:[#allocation3 + $0x80] sm:$0xff] %vm378, %v4502
      %4535 = vst.msk [vmem:[#allocation3 + $0x88] sm:$0xff] %vm378, %v4503
      %4536 = vst.msk [vmem:[#allocation3 + $0x90] sm:$0xff] %vm378, %v4504
      %4537 = vst.msk [vmem:[#allocation3 + $0x98] sm:$0xff] %vm378, %v4505
      %4538 = vst.msk [vmem:[#allocation3 + $0xa0] sm:$0xff] %vm378, %v4506
      %4539 = vst.msk [vmem:[#allocation3 + $0xa8] sm:$0xff] %vm378, %v4507
      %4540 = vst.msk [vmem:[#allocation3 + $0xb0] sm:$0xff] %vm378, %v4508
      %4541 = vst.msk [vmem:[#allocation3 + $0xb8] sm:$0xff] %vm378, %v4509
      %4542 = vst.msk [vmem:[#allocation3 + $0xc0] sm:$0xff] %vm378, %v4510
      %4543 = vst.msk [vmem:[#allocation3 + $0xc8] sm:$0xff] %vm378, %v4511
      %4544 = vst.msk [vmem:[#allocation3 + $0xd0] sm:$0xff] %vm378, %v4512
      %4545 = vst.msk [vmem:[#allocation3 + $0xd8] sm:$0xff] %vm378, %v4513
      %4546 = vst.msk [vmem:[#allocation3 + $0xe0] sm:$0xff] %vm378, %v4514
      %4547 = vst.msk [vmem:[#allocation3 + $0xe8] sm:$0xff] %vm378, %v4515
      %4548 = vst.msk [vmem:[#allocation3 + $0xf0] sm:$0xff] %vm378, %v4516
      %4549 = vst.msk [vmem:[#allocation3 + $0xf8] sm:$0xff] %vm378, %v4517
      %v4550 = vld [vmem:[#allocation3] sm:$0xff]
      %v4551 = vld [vmem:[#allocation3 + $0x8] sm:$0xff]
      %v4552 = vld [vmem:[#allocation3 + $0x10] sm:$0xff]
      %v4553 = vld [vmem:[#allocation3 + $0x18] sm:$0xff]
      %v4554 = vld [vmem:[#allocation3 + $0x20] sm:$0xff]
      %v4555 = vld [vmem:[#allocation3 + $0x28] sm:$0xff]
      %v4556 = vld [vmem:[#allocation3 + $0x30] sm:$0xff]
      %v4557 = vld [vmem:[#allocation3 + $0x38] sm:$0xff]
      %v4558 = vld [vmem:[#allocation3 + $0x40] sm:$0xff]
      %v4559 = vld [vmem:[#allocation3 + $0x48] sm:$0xff]
      %v4560 = vld [vmem:[#allocation3 + $0x50] sm:$0xff]
      %v4561 = vld [vmem:[#allocation3 + $0x58] sm:$0xff]
      %v4562 = vld [vmem:[#allocation3 + $0x60] sm:$0xff]
      %v4563 = vld [vmem:[#allocation3 + $0x68] sm:$0xff]
      %v4564 = vld [vmem:[#allocation3 + $0x70] sm:$0xff]
      %v4565 = vld [vmem:[#allocation3 + $0x78] sm:$0xff]
      %v4566 = vld [vmem:[#allocation3 + $0x80] sm:$0xff]
      %v4567 = vld [vmem:[#allocation3 + $0x88] sm:$0xff]
      %v4568 = vld [vmem:[#allocation3 + $0x90] sm:$0xff]
      %v4569 = vld [vmem:[#allocation3 + $0x98] sm:$0xff]
      %v4570 = vld [vmem:[#allocation3 + $0xa0] sm:$0xff]
      %v4571 = vld [vmem:[#allocation3 + $0xa8] sm:$0xff]
      %v4572 = vld [vmem:[#allocation3 + $0xb0] sm:$0xff]
      %v4573 = vld [vmem:[#allocation3 + $0xb8] sm:$0xff]
      %v4574 = vld [vmem:[#allocation3 + $0xc0] sm:$0xff]
      %v4575 = vld [vmem:[#allocation3 + $0xc8] sm:$0xff]
      %v4576 = vld [vmem:[#allocation3 + $0xd0] sm:$0xff]
      %v4577 = vld [vmem:[#allocation3 + $0xd8] sm:$0xff]
      %v4578 = vld [vmem:[#allocation3 + $0xe0] sm:$0xff]
      %v4579 = vld [vmem:[#allocation3 + $0xe8] sm:$0xff]
      %v4580 = vld [vmem:[#allocation3 + $0xf0] sm:$0xff]
      %v4581 = vld [vmem:[#allocation3 + $0xf8] sm:$0xff]
      %4582 = vst.msk [vmem:[%s231] sm:$0xff] %vm378, %v4550
      %4583 = vst.msk [vmem:[%s231 + $0x8] sm:$0xff] %vm378, %v4551
      %4584 = vst.msk [vmem:[%s231 + $0x10] sm:$0xff] %vm378, %v4552
      %4585 = vst.msk [vmem:[%s231 + $0x18] sm:$0xff] %vm378, %v4553
      %4586 = vst.msk [vmem:[%s231 + $0x20] sm:$0xff] %vm378, %v4554
      %4587 = vst.msk [vmem:[%s231 + $0x28] sm:$0xff] %vm378, %v4555
      %4588 = vst.msk [vmem:[%s231 + $0x30] sm:$0xff] %vm378, %v4556
      %4589 = vst.msk [vmem:[%s231 + $0x38] sm:$0xff] %vm378, %v4557
      %4590 = vst.msk [vmem:[%s231 + $0x40] sm:$0xff] %vm378, %v4558
      %4591 = vst.msk [vmem:[%s231 + $0x48] sm:$0xff] %vm378, %v4559
      %4592 = vst.msk [vmem:[%s231 + $0x50] sm:$0xff] %vm378, %v4560
      %4593 = vst.msk [vmem:[%s231 + $0x58] sm:$0xff] %vm378, %v4561
      %4594 = vst.msk [vmem:[%s231 + $0x60] sm:$0xff] %vm378, %v4562
      %4595 = vst.msk [vmem:[%s231 + $0x68] sm:$0xff] %vm378, %v4563
      %4596 = vst.msk [vmem:[%s231 + $0x70] sm:$0xff] %vm378, %v4564
      %4597 = vst.msk [vmem:[%s231 + $0x78] sm:$0xff] %vm378, %v4565
      %4598 = vst.msk [vmem:[%s231 + $0x80] sm:$0xff] %vm378, %v4566
      %4599 = vst.msk [vmem:[%s231 + $0x88] sm:$0xff] %vm378, %v4567
      %4600 = vst.msk [vmem:[%s231 + $0x90] sm:$0xff] %vm378, %v4568
      %4601 = vst.msk [vmem:[%s231 + $0x98] sm:$0xff] %vm378, %v4569
      %4602 = vst.msk [vmem:[%s231 + $0xa0] sm:$0xff] %vm378, %v4570
      %4603 = vst.msk [vmem:[%s231 + $0xa8] sm:$0xff] %vm378, %v4571
      %4604 = vst.msk [vmem:[%s231 + $0xb0] sm:$0xff] %vm378, %v4572
      %4605 = vst.msk [vmem:[%s231 + $0xb8] sm:$0xff] %vm378, %v4573
      %4606 = vst.msk [vmem:[%s231 + $0xc0] sm:$0xff] %vm378, %v4574
      %4607 = vst.msk [vmem:[%s231 + $0xc8] sm:$0xff] %vm378, %v4575
      %4608 = vst.msk [vmem:[%s231 + $0xd0] sm:$0xff] %vm378, %v4576
      %4609 = vst.msk [vmem:[%s231 + $0xd8] sm:$0xff] %vm378, %v4577
      %4610 = vst.msk [vmem:[%s231 + $0xe0] sm:$0xff] %vm378, %v4578
      %4611 = vst.msk [vmem:[%s231 + $0xe8] sm:$0xff] %vm378, %v4579
      %4612 = vst.msk [vmem:[%s231 + $0xf0] sm:$0xff] %vm378, %v4580
      %4613 = vst.msk [vmem:[%s231 + $0xf8] sm:$0xff] %vm378, %v4581
      %v4614 = vsel %vm378, %v4550, 0.0
      %v4615 = vsel %vm378, %v4551, 0.0
      %v4616 = vadd.f32 %v4614, %v4615
      %v4617 = vsel %vm378, %v4552, 0.0
      %v4618 = vadd.f32 %v4616, %v4617
      %v4619 = vsel %vm378, %v4553, 0.0
      %v4620 = vadd.f32 %v4618, %v4619
      %v4621 = vsel %vm378, %v4554, 0.0
      %v4622 = vadd.f32 %v4620, %v4621
      %v4623 = vsel %vm378, %v4555, 0.0
      %v4624 = vadd.f32 %v4622, %v4623
      %v4625 = vsel %vm378, %v4556, 0.0
      %v4626 = vadd.f32 %v4624, %v4625
      %v4627 = vsel %vm378, %v4557, 0.0
      %v4628 = vadd.f32 %v4626, %v4627
      %v4629 = vsel %vm378, %v4558, 0.0
      %v4630 = vadd.f32 %v4628, %v4629
      %v4631 = vsel %vm378, %v4559, 0.0
      %v4632 = vadd.f32 %v4630, %v4631
      %v4633 = vsel %vm378, %v4560, 0.0
      %v4634 = vadd.f32 %v4632, %v4633
      %v4635 = vsel %vm378, %v4561, 0.0
      %v4636 = vadd.f32 %v4634, %v4635
      %v4637 = vsel %vm378, %v4562, 0.0
      %v4638 = vadd.f32 %v4636, %v4637
      %v4639 = vsel %vm378, %v4563, 0.0
      %v4640 = vadd.f32 %v4638, %v4639
      %v4641 = vsel %vm378, %v4564, 0.0
      %v4642 = vadd.f32 %v4640, %v4641
      %v4643 = vsel %vm378, %v4565, 0.0
      %v4644 = vadd.f32 %v4642, %v4643
      %v4645 = vsel %vm378, %v4566, 0.0
      %v4646 = vadd.f32 %v4644, %v4645
      %v4647 = vsel %vm378, %v4567, 0.0
      %v4648 = vadd.f32 %v4646, %v4647
      %v4649 = vsel %vm378, %v4568, 0.0
      %v4650 = vadd.f32 %v4648, %v4649
      %v4651 = vsel %vm378, %v4569, 0.0
      %v4652 = vadd.f32 %v4650, %v4651
      %v4653 = vsel %vm378, %v4570, 0.0
      %v4654 = vadd.f32 %v4652, %v4653
      %v4655 = vsel %vm378, %v4571, 0.0
      %v4656 = vadd.f32 %v4654, %v4655
      %v4657 = vsel %vm378, %v4572, 0.0
      %v4658 = vadd.f32 %v4656, %v4657
      %v4659 = vsel %vm378, %v4573, 0.0
      %v4660 = vadd.f32 %v4658, %v4659
      %v4661 = vsel %vm378, %v4574, 0.0
      %v4662 = vadd.f32 %v4660, %v4661
      %v4663 = vsel %vm378, %v4575, 0.0
      %v4664 = vadd.f32 %v4662, %v4663
      %v4665 = vsel %vm378, %v4576, 0.0
      %v4666 = vadd.f32 %v4664, %v4665
      %v4667 = vsel %vm378, %v4577, 0.0
      %v4668 = vadd.f32 %v4666, %v4667
      %v4669 = vsel %vm378, %v4578, 0.0
      %v4670 = vadd.f32 %v4668, %v4669
      %v4671 = vsel %vm378, %v4579, 0.0
      %v4672 = vadd.f32 %v4670, %v4671
      %v4673 = vsel %vm378, %v4580, 0.0
      %v4674 = vadd.f32 %v4672, %v4673
      %v4675 = vsel %vm378, %v4581, 0.0
      %v4676 = vadd.f32 %v4674, %v4675
      %v4677 = vrot.slane %v4676, 4
      %v4678 = vadd.f32 %v4676, %v4677
      %v4679 = vrot.slane %v4678, 2
      %v4680 = vadd.f32 %v4678, %v4679
      %v4681 = vrot.slane %v4680, 1
      %v4682 = vadd.f32 %v4680, %v4681
      %v4683 = vmul.f32 %v4550, %v4550
      %v4684 = vmul.f32 %v4551, %v4551
      %v4685 = vmul.f32 %v4552, %v4552
      %v4686 = vmul.f32 %v4553, %v4553
      %v4687 = vmul.f32 %v4554, %v4554
      %v4688 = vmul.f32 %v4555, %v4555
      %v4689 = vmul.f32 %v4556, %v4556
      %v4690 = vmul.f32 %v4557, %v4557
      %v4691 = vmul.f32 %v4558, %v4558
      %v4692 = vmul.f32 %v4559, %v4559
      %v4693 = vmul.f32 %v4560, %v4560
      %v4694 = vmul.f32 %v4561, %v4561
      %v4695 = vmul.f32 %v4562, %v4562
      %v4696 = vmul.f32 %v4563, %v4563
      %v4697 = vmul.f32 %v4564, %v4564
      %v4698 = vmul.f32 %v4565, %v4565
      %v4699 = vmul.f32 %v4566, %v4566
      %v4700 = vmul.f32 %v4567, %v4567
      %v4701 = vmul.f32 %v4568, %v4568
      %v4702 = vmul.f32 %v4569, %v4569
      %v4703 = vmul.f32 %v4570, %v4570
      %v4704 = vmul.f32 %v4571, %v4571
      %v4705 = vmul.f32 %v4572, %v4572
      %v4706 = vmul.f32 %v4573, %v4573
      %v4707 = vmul.f32 %v4574, %v4574
      %v4708 = vmul.f32 %v4575, %v4575
      %v4709 = vmul.f32 %v4576, %v4576
      %v4710 = vmul.f32 %v4577, %v4577
      %v4711 = vmul.f32 %v4578, %v4578
      %v4712 = vmul.f32 %v4579, %v4579
      %v4713 = vmul.f32 %v4580, %v4580
      %v4714 = vmul.f32 %v4581, %v4581
      %v4715 = vsel %vm378, %v4683, 0.0
      %v4716 = vsel %vm378, %v4684, 0.0
      %v4717 = vadd.f32 %v4715, %v4716
      %v4718 = vsel %vm378, %v4685, 0.0
      %v4719 = vadd.f32 %v4717, %v4718
      %v4720 = vsel %vm378, %v4686, 0.0
      %v4721 = vadd.f32 %v4719, %v4720
      %v4722 = vsel %vm378, %v4687, 0.0
      %v4723 = vadd.f32 %v4721, %v4722
      %v4724 = vsel %vm378, %v4688, 0.0
      %v4725 = vadd.f32 %v4723, %v4724
      %v4726 = vsel %vm378, %v4689, 0.0
      %v4727 = vadd.f32 %v4725, %v4726
      %v4728 = vsel %vm378, %v4690, 0.0
      %v4729 = vadd.f32 %v4727, %v4728
      %v4730 = vsel %vm378, %v4691, 0.0
      %v4731 = vadd.f32 %v4729, %v4730
      %v4732 = vsel %vm378, %v4692, 0.0
      %v4733 = vadd.f32 %v4731, %v4732
      %v4734 = vsel %vm378, %v4693, 0.0
      %v4735 = vadd.f32 %v4733, %v4734
      %v4736 = vsel %vm378, %v4694, 0.0
      %v4737 = vadd.f32 %v4735, %v4736
      %v4738 = vsel %vm378, %v4695, 0.0
      %v4739 = vadd.f32 %v4737, %v4738
      %v4740 = vsel %vm378, %v4696, 0.0
      %v4741 = vadd.f32 %v4739, %v4740
      %v4742 = vsel %vm378, %v4697, 0.0
      %v4743 = vadd.f32 %v4741, %v4742
      %v4744 = vsel %vm378, %v4698, 0.0
      %v4745 = vadd.f32 %v4743, %v4744
      %v4746 = vsel %vm378, %v4699, 0.0
      %v4747 = vadd.f32 %v4745, %v4746
      %v4748 = vsel %vm378, %v4700, 0.0
      %v4749 = vadd.f32 %v4747, %v4748
      %v4750 = vsel %vm378, %v4701, 0.0
      %v4751 = vadd.f32 %v4749, %v4750
      %v4752 = vsel %vm378, %v4702, 0.0
      %v4753 = vadd.f32 %v4751, %v4752
      %v4754 = vsel %vm378, %v4703, 0.0
      %v4755 = vadd.f32 %v4753, %v4754
      %v4756 = vsel %vm378, %v4704, 0.0
      %v4757 = vadd.f32 %v4755, %v4756
      %v4758 = vsel %vm378, %v4705, 0.0
      %v4759 = vadd.f32 %v4757, %v4758
      %v4760 = vsel %vm378, %v4706, 0.0
      %v4761 = vadd.f32 %v4759, %v4760
      %v4762 = vsel %vm378, %v4707, 0.0
      %v4763 = vadd.f32 %v4761, %v4762
      %v4764 = vsel %vm378, %v4708, 0.0
      %v4765 = vadd.f32 %v4763, %v4764
      %v4766 = vsel %vm378, %v4709, 0.0
      %v4767 = vadd.f32 %v4765, %v4766
      %v4768 = vsel %vm378, %v4710, 0.0
      %v4769 = vadd.f32 %v4767, %v4768
      %v4770 = vsel %vm378, %v4711, 0.0
      %v4771 = vadd.f32 %v4769, %v4770
      %v4772 = vsel %vm378, %v4712, 0.0
      %v4773 = vadd.f32 %v4771, %v4772
      %v4774 = vsel %vm378, %v4713, 0.0
      %v4775 = vadd.f32 %v4773, %v4774
      %v4776 = vsel %vm378, %v4714, 0.0
      %v4777 = vadd.f32 %v4775, %v4776
      %v4778 = vrot.slane %v4777, 4
      %v4779 = vadd.f32 %v4777, %v4778
      %v4780 = vrot.slane %v4779, 2
      %v4781 = vadd.f32 %v4779, %v4780
      %v4782 = vrot.slane %v4781, 1
      %v4783 = vadd.f32 %v4781, %v4782
      %vm4784 = vcmask 1040384
      %v4785 = vsel %vm4784, %v4682, %v4783
      %4786 = vst.msk [vmem:[%s235] sm:$0x3] %vm381, %v4785
      %p4787 = scmp.lt.s32.totalorder %s17, 1
      %s4788 = scalar_select %p4787, %s17, 1
      %s4789 = smul.addr %s4788, 32
      %s4790 = smul.addr %s4789, 8
      %s4791 = scalar_lea.vmem %s4, %s4790
      %p4792 = scmp.lt.s32.totalorder %s17, 1
      %s4793 = scalar_select %p4792, %s17, 1
      %s4794 = smul.addr %s4793, 2
      %s4795 = scalar_lea.vmem %s5, %s4794
      // Predicated region
      $region37: #{double_conv.4} parent=35 // pred_check
        %p4796 = pneg %p124
      $region38: #{double_conv.4} parent=35 // pred_check_branch
        %4798 = sbr.rel (%p4796) target = $region40
      $region39: #{double_conv.4} parent=35 // pred_region
        _
      $region40: #{double_conv.4} parent=35 // pred_fallthru
        _
      // Predicated region
      $region41: #{double_conv.4} parent=35 // pred_check
        %p4799 = pneg %p150
      $region42: #{double_conv.4} parent=35 // pred_check_branch
        %4801 = sbr.rel (%p4799) target = $region44
      $region43: #{double_conv.4} parent=35 // pred_region
        _
      $region44: #{double_conv.4} parent=35 // pred_fallthru
        _
    $region36: #{double_conv.4} parent=5 // pred_fallthru
      _
    %p4802 = scmp.le.s32.totalorder 2, %s12
    // Predicated region
    $region45: #{double_conv.4} parent=5 // pred_check
      %p4803 = pneg %p4802
    $region46: #{double_conv.4} parent=5 // pred_check_branch
      %4805 = sbr.rel (%p4803) target = $region48
    $region47: #{double_conv.4} parent=5 // pred_region
      %s4806 = ssub.s32 %s12, 2
      // Predicated region
      $region49: #{double_conv.4} parent=47 // pred_check
        %p4807 = pneg %p130
      $region50: #{double_conv.4} parent=47 // pred_check_branch
        %4809 = sbr.rel (%p4807) target = $region52
      $region51: #{double_conv.4} parent=47 // pred_region
        %p4810 = scmp.lt.s32.totalorder %s18, 1
        %s4811 = scalar_select %p4810, %s18, 1
        %s4812 = smul.addr %s4811, 32
        %s4813 = smul.addr %s4812, 8
        %s4814 = scalar_lea.vmem %s4, %s4813
      $region52: #{double_conv.4} parent=47 // pred_fallthru
        _
      // Predicated region
      $region53: #{double_conv.4} parent=47 // pred_check
        %p4815 = pneg %p156
      $region54: #{double_conv.4} parent=47 // pred_check_branch
        %4817 = sbr.rel (%p4815) target = $region56
      $region55: #{double_conv.4} parent=47 // pred_region
        %p4818 = scmp.lt.s32.totalorder %s18, 1
        %s4819 = scalar_select %p4818, %s18, 1
        %s4820 = smul.addr %s4819, 2
        %s4821 = scalar_lea.vmem %s5, %s4820
      $region56: #{double_conv.4} parent=47 // pred_fallthru
        _
    $region48: #{double_conv.4} parent=5 // pred_fallthru
      _
  $region6: #{double_conv.4} parent=0 // loop_footer
    %s16 = sadd.s32 1, %s12
  $region7: #{double_conv.4} parent=0 // loop_footer_branch
    %11 = sbr.rel target = $region3
  $region8: #{double_conv.4} parent=0 // loop_exit
    _

</llo_original>
